<compile_context>
chip_gen: v6e
topology: v6e:2x2x1
jax: 0.10.0
libtpu: 0.0.40
codegen_flags: <defaults>
</compile_context>

<pallas_src>
import jax
import jax.numpy as jnp
import numpy as np
from jax import lax
from jax.experimental import pallas as pl
from jax.experimental.pallas import tpu as pltpu

N_EMBED = 40
HEAD_SIZE = 10
N_HEADS = 4
BLOCK_SIZE = 32
N_LAYERS = 4
VOCAB_SIZE = 60
EPS = 1e-5
CLS_OUT = 2
LANE = 128                       # lane-dense pad width for slabs / classifier output

_BF = jnp.bfloat16
_F32 = jnp.float32
_PREC = jax.lax.Precision.HIGHEST        # used only by the pure-JAX reference

# ---- packed-slab row layout --------------------------------------------------
W_ROWS_PER_LAYER = 4 * N_EMBED           # wqkv | wproj | w1 | w2 (40 rows each)
W_ROW_WQKV = 0
W_ROW_WPROJ = N_EMBED
W_ROW_W1 = 2 * N_EMBED
W_ROW_W2 = 3 * N_EMBED
W_ROW_WCL = N_LAYERS * W_ROWS_PER_LAYER
W_TOTAL_ROWS = W_ROW_WCL + N_EMBED       # 680

V_ROWS_PER_LAYER = 7                     # ln1_g ln1_b ln2_g ln2_b bproj b1 b2
ROW_LNF_G = N_LAYERS * V_ROWS_PER_LAYER
ROW_LNF_B = ROW_LNF_G + 1
ROW_BCL = ROW_LNF_G + 2
V_TOTAL_ROWS = ((ROW_BCL + 1 + 7) // 8) * 8   # 32


def _layernorm(v, g, b):
    # f32 elementwise (safe on v5e which has no bf16 VPU/EUP path).
    mu = jnp.mean(v, axis=-1, keepdims=True)
    var = jnp.mean((v - mu) ** 2, axis=-1, keepdims=True)
    return (v - mu) * lax.rsqrt(var + EPS) * g + b


def encoder_kernel(x_ref, w_ref, v_ref, mask_ref, out_ref):
    """Full 4-layer encoder stack for one (Bt, T, D) batch tile, fused in VMEM."""
    Bt, T, D = x_ref.shape
    N = Bt * T
    H, HS = N_HEADS, HEAD_SIZE
    M = H * N                                    # fused-attention row count

    vall = v_ref[...]                            # (V_TOTAL_ROWS, 128) f32 vector slab
    bias = mask_ref[...]                         # (M, M) block-diagonal additive mask

    def vec(r):                                  # (D,) f32 LN / bias vector
        return vall[r, :D]

    # flatten batch rows into sublanes: (Bt, T, D) -> (N, D) (free reshape)
    x = x_ref[...].reshape(N, D)

    for l in range(N_LAYERS):
        wb = l * W_ROWS_PER_LAYER
        vb = l * V_ROWS_PER_LAYER

        # --- Block: x = ln1(x); x = x + multihead(x) ---
        xn = _layernorm(x, vec(vb + 0), vec(vb + 1))

        # ONE lane-dense QKV matmul: (N,40) @ (40,128 [q|k|v in 0:120]) -> (N,128)
        qkv = jnp.dot(xn.astype(_BF),
                      w_ref[wb + W_ROW_WQKV:wb + W_ROW_WQKV + D, :],
                      preferred_element_type=_F32)

        # head-major row stacking: (N, H*HS) lanes -> (H*N, HS) rows
        def head_rows(off):
            return jnp.concatenate(
                [qkv[:, off + h * HS: off + (h + 1) * HS] for h in range(H)], axis=0)

        q_all = head_rows(0).astype(_BF)         # (M, HS)
        k_all = head_rows(D).astype(_BF)
        v_all = head_rows(2 * D).astype(_BF)

        # fused attention over all (head, batch) blocks.
        # matches reference: scores = k @ q^T, softmax over query index, out = p @ v
        s = lax.dot_general(k_all, q_all, (((1,), (1,)), ((), ())),
                            preferred_element_type=_F32) + bias       # (M, M) f32
        p = jax.nn.softmax(s, axis=-1).astype(_BF)
        o_all = jnp.dot(p, v_all, preferred_element_type=_F32)        # (M, HS) f32

        # (H*N, HS) rows -> (N, H*HS) lanes, then ONE (N,40)@(40,40) projection
        o = jnp.concatenate([o_all[h * N:(h + 1) * N, :] for h in range(H)], axis=1)
        att = jnp.dot(o.astype(_BF),
                      w_ref[wb + W_ROW_WPROJ:wb + W_ROW_WPROJ + D, :D],
                      preferred_element_type=_F32) + vec(vb + 4)
        x = xn + att

        # --- x = ln2(x); x = x + ffwd(x) ---
        xn = _layernorm(x, vec(vb + 2), vec(vb + 3))
        h1 = jnp.dot(xn.astype(_BF),
                     w_ref[wb + W_ROW_W1:wb + W_ROW_W1 + D, :D],
                     preferred_element_type=_F32) + vec(vb + 5)
        h1 = jnp.maximum(h1, 0.0)
        ff = jnp.dot(h1.astype(_BF),
                     w_ref[wb + W_ROW_W2:wb + W_ROW_W2 + D, :D],
                     preferred_element_type=_F32) + vec(vb + 6)
        x = xn + ff

    # --- final LayerNorm + classification head (lane-dense, 128-wide padded) ---
    xn = _layernorm(x, vec(ROW_LNF_G), vec(ROW_LNF_B))
    logits = jnp.dot(xn.astype(_BF), w_ref[W_ROW_WCL:W_ROW_WCL + D, :],
                     preferred_element_type=_F32) + vall[ROW_BCL]      # (N, 128)
    out_ref[...] = logits.reshape(Bt, T, LANE)


def pack_params(params):
    """Pack all parameters into two DMA-friendly slabs. Call ONCE at init."""
    D, L = N_EMBED, N_LAYERS

    wslab = jnp.zeros((W_TOTAL_ROWS, LANE), _F32)
    for l in range(L):
        wb = l * W_ROWS_PER_LAYER
        wqkv = jnp.concatenate(
            [params["wq"][l], params["wk"][l], params["wv"][l]], axis=1)   # (40, 120)
        wslab = wslab.at[wb + W_ROW_WQKV:wb + W_ROW_WQKV + D, :3 * D].set(wqkv)
        wslab = wslab.at[wb + W_ROW_WPROJ:wb + W_ROW_WPROJ + D, :D].set(params["wproj"][l])
        wslab = wslab.at[wb + W_ROW_W1:wb + W_ROW_W1 + D, :D].set(params["w1"][l])
        wslab = wslab.at[wb + W_ROW_W2:wb + W_ROW_W2 + D, :D].set(params["w2"][l])
    wslab = wslab.at[W_ROW_WCL:W_ROW_WCL + D, :CLS_OUT].set(params["wcl"])
    wslab = wslab.astype(_BF)

    vslab = jnp.zeros((V_TOTAL_ROWS, LANE), _F32)
    for l in range(L):
        vb = l * V_ROWS_PER_LAYER
        vslab = vslab.at[vb + 0, :D].set(params["ln1_g"][l, 0])
        vslab = vslab.at[vb + 1, :D].set(params["ln1_b"][l, 0])
        vslab = vslab.at[vb + 2, :D].set(params["ln2_g"][l, 0])
        vslab = vslab.at[vb + 3, :D].set(params["ln2_b"][l, 0])
        vslab = vslab.at[vb + 4, :D].set(params["bproj"][l, 0])
        vslab = vslab.at[vb + 5, :D].set(params["b1"][l, 0])
        vslab = vslab.at[vb + 6, :D].set(params["b2"][l, 0])
    vslab = vslab.at[ROW_LNF_G, :D].set(params["lnf_g"][0])
    vslab = vslab.at[ROW_LNF_B, :D].set(params["lnf_b"][0])
    vslab = vslab.at[ROW_BCL, :CLS_OUT].set(params["bcl"][0])

    return dict(wslab=wslab, vslab=vslab,
                tok_emb=params["tok_emb"].astype(_F32),
                pos_emb=params["pos_emb"].astype(_F32))


def _choose_bt(B):
    kind = ""
    try:
        kind = jax.devices()[0].device_kind.lower()
    except Exception:
        pass
    bt = B
    if "v7" in kind and B % 2 == 0:
        bt = B // 2            # >= 2 parallel grid steps -> both v7x TensorCores busy
    # cap the batch tile so the fused (H*Bt*T)^2 score matrix stays small
    while bt > 4 or B % bt != 0:
        bt -= 1
    return max(bt, 1)


def encoder_forward(token_ids, packed):
    B, T = token_ids.shape
    assert T == BLOCK_SIZE
    D = N_EMBED

    # Embedding gathers are glue (plain JAX); the whole transformer runs in-kernel.
    x = (packed["tok_emb"][token_ids] + packed["pos_emb"][jnp.arange(T)]).astype(_F32)

    Bt = _choose_bt(B)
    M = N_HEADS * Bt * T
    blk = jnp.arange(M, dtype=jnp.int32) // T
    mask = jnp.where(blk[:, None] == blk[None, :], 0.0, -1e30).astype(_F32)

    def full(a):
        return pl.BlockSpec(a.shape, lambda g, _n=a.ndim: (0,) * _n)

    out = pl.pallas_call(
        encoder_kernel,
        out_shape=jax.ShapeDtypeStruct((B, T, LANE), jnp.float32),
        grid=(B // Bt,),
        in_specs=[pl.BlockSpec((Bt, T, D), lambda g: (g, 0, 0)),
                  full(packed["wslab"]),
                  full(packed["vslab"]),
                  full(mask)],
        out_specs=pl.BlockSpec((Bt, T, LANE), lambda g: (g, 0, 0)),
        compiler_params=pltpu.CompilerParams(dimension_semantics=("parallel",)),
    )(x, packed["wslab"], packed["vslab"], mask)
    return out[..., :CLS_OUT]


def init_params(key):
    ks = jax.random.split(key, 16)
    s = 0.02
    D, L = N_EMBED, N_LAYERS
    return {
        "tok_emb": s * jax.random.normal(ks[0], (VOCAB_SIZE, D), jnp.float32),
        "pos_emb": s * jax.random.normal(ks[1], (BLOCK_SIZE, D), jnp.float32),
        "ln1_g": jnp.ones((L, 1, D), jnp.float32),
        "ln1_b": jnp.zeros((L, 1, D), jnp.float32),
        # q/k/v projections packed along columns: head h -> cols [h*10, (h+1)*10)
        "wq": s * jax.random.normal(ks[2], (L, D, N_HEADS * HEAD_SIZE), jnp.float32),
        "wk": s * jax.random.normal(ks[3], (L, D, N_HEADS * HEAD_SIZE), jnp.float32),
        "wv": s * jax.random.normal(ks[4], (L, D, N_HEADS * HEAD_SIZE), jnp.float32),
        "wproj": s * jax.random.normal(ks[5], (L, D, D), jnp.float32),
        "bproj": s * jax.random.normal(ks[6], (L, 1, D), jnp.float32),
        "ln2_g": jnp.ones((L, 1, D), jnp.float32),
        "ln2_b": jnp.zeros((L, 1, D), jnp.float32),
        "w1": s * jax.random.normal(ks[7], (L, D, D), jnp.float32),
        "b1": s * jax.random.normal(ks[8], (L, 1, D), jnp.float32),
        "w2": s * jax.random.normal(ks[9], (L, D, D), jnp.float32),
        "b2": s * jax.random.normal(ks[10], (L, 1, D), jnp.float32),
        "lnf_g": jnp.ones((1, D), jnp.float32),
        "lnf_b": jnp.zeros((1, D), jnp.float32),
        "wcl": s * jax.random.normal(ks[11], (D, 2), jnp.float32),
        "bcl": s * jax.random.normal(ks[12], (1, 2), jnp.float32),
    }


def reference_forward(token_ids, params):
    """Pure-JAX f32 (HIGHEST precision) reference reproducing the PyTorch forward."""
    def ln(v, g, b):
        mu = jnp.mean(v, axis=-1, keepdims=True)
        var = jnp.mean((v - mu) ** 2, axis=-1, keepdims=True)
        return (v - mu) * jax.lax.rsqrt(var + EPS) * g + b

    x = params["tok_emb"][token_ids] + params["pos_emb"][jnp.arange(BLOCK_SIZE)]
    for l in range(N_LAYERS):
        x = ln(x, params["ln1_g"][l, 0], params["ln1_b"][l, 0])
        q = jnp.einsum("btd,df->btf", x, params["wq"][l], precision=_PREC)
        k = jnp.einsum("btd,df->btf", x, params["wk"][l], precision=_PREC)
        v = jnp.einsum("btd,df->btf", x, params["wv"][l], precision=_PREC)
        outs = []
        for h in range(N_HEADS):
            lo, hi = h * HEAD_SIZE, (h + 1) * HEAD_SIZE
            w = jnp.einsum("bik,bjk->bij", k[..., lo:hi], q[..., lo:hi], precision=_PREC)
            w = jax.nn.softmax(w, axis=-1)
            outs.append(jnp.einsum("bij,bjk->bik", w, v[..., lo:hi], precision=_PREC))
        att = jnp.concatenate(outs, axis=-1)
        att = jnp.einsum("btd,df->btf", att, params["wproj"][l], precision=_PREC) \
            + params["bproj"][l, 0]
        x = x + att
        x = ln(x, params["ln2_g"][l, 0], params["ln2_b"][l, 0])
        h1 = jnp.maximum(jnp.einsum("btd,df->btf", x, params["w1"][l], precision=_PREC)
                         + params["b1"][l, 0], 0.0)
        ff = jnp.einsum("btd,df->btf", h1, params["w2"][l], precision=_PREC) \
            + params["b2"][l, 0]
        x = x + ff
    x = ln(x, params["lnf_g"][0], params["lnf_b"][0])
    return jnp.einsum("btd,dc->btc", x, params["wcl"], precision=_PREC) + params["bcl"][0]


if __name__ == "__main__":
    key = jax.random.PRNGKey(0)
    k_param, k_tok = jax.random.split(key)
    params = init_params(k_param)
    packed = pack_params(params)        # packed once at init (hoisted out of the step)

    B = 2
    token_ids = jax.random.randint(k_tok, (B, BLOCK_SIZE), 0, VOCAB_SIZE, dtype=jnp.int32)

    fwd = jax.jit(encoder_forward)
    out = jax.block_until_ready(fwd(token_ids, packed))
    assert out.shape == (B, BLOCK_SIZE, CLS_OUT) and out.dtype == jnp.float32

    ref = jax.block_until_ready(reference_forward(token_ids, params))
    # Kernel feeds the MXU bf16 inputs with f32 accumulation; tolerance reflects
    # bf16 input rounding vs. the f32 HIGHEST-precision reference.
    np.testing.assert_allclose(np.asarray(out), np.asarray(ref), rtol=2e-2, atol=5e-3)

    print("KERNEL_OK")
</pallas_src>

<mosaic_0001>
module attributes {stable_mosaic.version = 11 : i64} {
  func.func @encoder_kernel(%arg0: i32, %arg1: memref<2x32x40xf32, #tpu.memory_space<vmem>>, %arg2: memref<680x128xbf16, #tpu.memory_space<vmem>>, %arg3: memref<32x128xf32, #tpu.memory_space<vmem>>, %arg4: memref<256x256xf32, #tpu.memory_space<vmem>>, %arg5: memref<2x32x128xf32, #tpu.memory_space<vmem>>) attributes {dimension_semantics = [#tpu.dimension_semantics<parallel>], iteration_bounds = array<i64: 1>, scalar_prefetch = 0 : i64, scratch_operands = 0 : i64, tpu.core_type = #tpu.core_type<tc>, window_params = [{transform_indices = @transform_0, window_bounds = array<i64: 2, 32, 40>}, {pipeline_mode = #tpu.pipeline_mode<synchronous>, transform_indices = @transform_1, window_bounds = array<i64: 680, 128>}, {pipeline_mode = #tpu.pipeline_mode<synchronous>, transform_indices = @transform_2, window_bounds = array<i64: 32, 128>}, {pipeline_mode = #tpu.pipeline_mode<synchronous>, transform_indices = @transform_3, window_bounds = array<i64: 256, 256>}, {transform_indices = @transform_4, window_bounds = array<i64: 2, 32, 128>}]} {
    %c0 = arith.constant 0 : index
    %c0_0 = arith.constant 0 : index
    %0 = vector.load %arg3[%c0, %c0_0] : memref<32x128xf32, #tpu.memory_space<vmem>>, vector<32x128xf32>
    %c0_1 = arith.constant 0 : index
    %c0_2 = arith.constant 0 : index
    %1 = vector.load %arg4[%c0_1, %c0_2] : memref<256x256xf32, #tpu.memory_space<vmem>>, vector<256x256xf32>
    %c0_3 = arith.constant 0 : index
    %c0_4 = arith.constant 0 : index
    %c0_5 = arith.constant 0 : index
    %2 = vector.load %arg1[%c0_3, %c0_4, %c0_5] : memref<2x32x40xf32, #tpu.memory_space<vmem>>, vector<2x32x40xf32>
    %3 = vector.shape_cast %2 : vector<2x32x40xf32> to vector<64x40xf32>
    %4 = vector.extract_strided_slice %0 {offsets = [0, 0], sizes = [1, 40], strides = [1, 1]} : vector<32x128xf32> to vector<1x40xf32>
    %5 = vector.shape_cast %4 : vector<1x40xf32> to vector<40xf32>
    %6 = vector.extract_strided_slice %0 {offsets = [1, 0], sizes = [1, 40], strides = [1, 1]} : vector<32x128xf32> to vector<1x40xf32>
    %7 = vector.shape_cast %6 : vector<1x40xf32> to vector<40xf32>
    %cst = arith.constant dense<0.000000e+00> : vector<64xf32>
    %8 = vector.multi_reduction <add>, %3, %cst [1] : vector<64x40xf32> to vector<64xf32>
    %9 = vector.shape_cast %8 : vector<64xf32> to vector<64x1xf32>
    %cst_6 = arith.constant 4.000000e+01 : f32
    %10 = vector.broadcast %cst_6 : f32 to vector<64x1xf32>
    %11 = arith.divf %9, %10 : vector<64x1xf32>
    %12 = vector.broadcast %11 : vector<64x1xf32> to vector<64x40xf32>
    %13 = arith.subf %3, %12 : vector<64x40xf32>
    %14 = arith.mulf %13, %13 : vector<64x40xf32>
    %cst_7 = arith.constant dense<0.000000e+00> : vector<64xf32>
    %15 = vector.multi_reduction <add>, %14, %cst_7 [1] : vector<64x40xf32> to vector<64xf32>
    %16 = vector.shape_cast %15 : vector<64xf32> to vector<64x1xf32>
    %cst_8 = arith.constant 4.000000e+01 : f32
    %17 = vector.broadcast %cst_8 : f32 to vector<64x1xf32>
    %18 = arith.divf %16, %17 : vector<64x1xf32>
    %19 = vector.broadcast %11 : vector<64x1xf32> to vector<64x40xf32>
    %20 = arith.subf %3, %19 : vector<64x40xf32>
    %cst_9 = arith.constant 9.99999974E-6 : f32
    %21 = vector.broadcast %cst_9 : f32 to vector<64x1xf32>
    %22 = arith.addf %18, %21 : vector<64x1xf32>
    %23 = math.rsqrt %22 : vector<64x1xf32>
    %24 = vector.broadcast %23 : vector<64x1xf32> to vector<64x40xf32>
    %25 = arith.mulf %20, %24 : vector<64x40xf32>
    %26 = vector.shape_cast %5 : vector<40xf32> to vector<1x40xf32>
    %27 = vector.broadcast %26 : vector<1x40xf32> to vector<64x40xf32>
    %28 = arith.mulf %25, %27 : vector<64x40xf32>
    %29 = vector.shape_cast %7 : vector<40xf32> to vector<1x40xf32>
    %30 = vector.broadcast %29 : vector<1x40xf32> to vector<64x40xf32>
    %31 = arith.addf %28, %30 : vector<64x40xf32>
    %32 = arith.truncf %31 : vector<64x40xf32> to vector<64x40xbf16>
    %c0_10 = arith.constant 0 : index
    %c0_11 = arith.constant 0 : index
    %33 = vector.load %arg2[%c0_10, %c0_11] : memref<680x128xbf16, #tpu.memory_space<vmem>>, vector<40x128xbf16>
    %cst_12 = arith.constant dense<0.000000e+00> : vector<64x128xf32>
    %34 = tpu.matmul %32, %33, %cst_12 {dimension_numbers = #tpu.dot_dimension_numbers<[1], [0], [0], [1], [0, 0, 1, 1], [], []>} : vector<64x40xbf16>, vector<40x128xbf16>, vector<64x128xf32> -> vector<64x128xf32>
    %35 = vector.extract_strided_slice %34 {offsets = [0, 0], sizes = [64, 10], strides = [1, 1]} : vector<64x128xf32> to vector<64x10xf32>
    %36 = vector.extract_strided_slice %34 {offsets = [0, 10], sizes = [64, 10], strides = [1, 1]} : vector<64x128xf32> to vector<64x10xf32>
    %37 = vector.extract_strided_slice %34 {offsets = [0, 20], sizes = [64, 10], strides = [1, 1]} : vector<64x128xf32> to vector<64x10xf32>
    %38 = vector.extract_strided_slice %34 {offsets = [0, 30], sizes = [64, 10], strides = [1, 1]} : vector<64x128xf32> to vector<64x10xf32>
    %39 = tpu.concatenate %35, %36, %37, %38 in 0 : vector<64x10xf32>, vector<64x10xf32>, vector<64x10xf32>, vector<64x10xf32> -> vector<256x10xf32>
    %40 = arith.truncf %39 : vector<256x10xf32> to vector<256x10xbf16>
    %41 = vector.extract_strided_slice %34 {offsets = [0, 40], sizes = [64, 10], strides = [1, 1]} : vector<64x128xf32> to vector<64x10xf32>
    %42 = vector.extract_strided_slice %34 {offsets = [0, 50], sizes = [64, 10], strides = [1, 1]} : vector<64x128xf32> to vector<64x10xf32>
    %43 = vector.extract_strided_slice %34 {offsets = [0, 60], sizes = [64, 10], strides = [1, 1]} : vector<64x128xf32> to vector<64x10xf32>
    %44 = vector.extract_strided_slice %34 {offsets = [0, 70], sizes = [64, 10], strides = [1, 1]} : vector<64x128xf32> to vector<64x10xf32>
    %45 = tpu.concatenate %41, %42, %43, %44 in 0 : vector<64x10xf32>, vector<64x10xf32>, vector<64x10xf32>, vector<64x10xf32> -> vector<256x10xf32>
    %46 = arith.truncf %45 : vector<256x10xf32> to vector<256x10xbf16>
    %47 = vector.extract_strided_slice %34 {offsets = [0, 80], sizes = [64, 10], strides = [1, 1]} : vector<64x128xf32> to vector<64x10xf32>
    %48 = vector.extract_strided_slice %34 {offsets = [0, 90], sizes = [64, 10], strides = [1, 1]} : vector<64x128xf32> to vector<64x10xf32>
    %49 = vector.extract_strided_slice %34 {offsets = [0, 100], sizes = [64, 10], strides = [1, 1]} : vector<64x128xf32> to vector<64x10xf32>
    %50 = vector.extract_strided_slice %34 {offsets = [0, 110], sizes = [64, 10], strides = [1, 1]} : vector<64x128xf32> to vector<64x10xf32>
    %51 = tpu.concatenate %47, %48, %49, %50 in 0 : vector<64x10xf32>, vector<64x10xf32>, vector<64x10xf32>, vector<64x10xf32> -> vector<256x10xf32>
    %52 = arith.truncf %51 : vector<256x10xf32> to vector<256x10xbf16>
    %cst_13 = arith.constant dense<0.000000e+00> : vector<256x256xf32>
    %53 = tpu.matmul %46, %40, %cst_13 {dimension_numbers = #tpu.dot_dimension_numbers<[1], [1], [0], [0], [0, 0, 1, 0], [], []>} : vector<256x10xbf16>, vector<256x10xbf16>, vector<256x256xf32> -> vector<256x256xf32>
    %54 = arith.addf %53, %1 : vector<256x256xf32>
    %cst_14 = arith.constant dense<0xFF800000> : vector<256xf32>
    %55 = vector.multi_reduction <maximumf>, %54, %cst_14 [1] : vector<256x256xf32> to vector<256xf32>
    %cst_15 = arith.constant 0xFF800000 : f32
    %56 = vector.broadcast %cst_15 : f32 to vector<256xf32>
    %57 = arith.maximumf %56, %55 : vector<256xf32>
    %58 = vector.shape_cast %57 : vector<256xf32> to vector<256x1xf32>
    %59 = vector.broadcast %58 : vector<256x1xf32> to vector<256x256xf32>
    %60 = arith.subf %54, %59 : vector<256x256xf32>
    %61 = math.exp %60 : vector<256x256xf32>
    %cst_16 = arith.constant dense<0.000000e+00> : vector<256xf32>
    %62 = vector.multi_reduction <add>, %61, %cst_16 [1] : vector<256x256xf32> to vector<256xf32>
    %63 = vector.shape_cast %62 : vector<256xf32> to vector<256x1xf32>
    %64 = vector.broadcast %63 : vector<256x1xf32> to vector<256x256xf32>
    %65 = arith.divf %61, %64 : vector<256x256xf32>
    %66 = arith.truncf %65 : vector<256x256xf32> to vector<256x256xbf16>
    %cst_17 = arith.constant dense<0.000000e+00> : vector<256x10xf32>
    %67 = tpu.matmul %66, %52, %cst_17 {dimension_numbers = #tpu.dot_dimension_numbers<[1], [0], [0], [1], [0, 0, 1, 1], [], []>} : vector<256x256xbf16>, vector<256x10xbf16>, vector<256x10xf32> -> vector<256x10xf32>
    %68 = vector.extract_strided_slice %67 {offsets = [0, 0], sizes = [64, 10], strides = [1, 1]} : vector<256x10xf32> to vector<64x10xf32>
    %69 = vector.extract_strided_slice %67 {offsets = [64, 0], sizes = [64, 10], strides = [1, 1]} : vector<256x10xf32> to vector<64x10xf32>
    %70 = vector.extract_strided_slice %67 {offsets = [128, 0], sizes = [64, 10], strides = [1, 1]} : vector<256x10xf32> to vector<64x10xf32>
    %71 = vector.extract_strided_slice %67 {offsets = [192, 0], sizes = [64, 10], strides = [1, 1]} : vector<256x10xf32> to vector<64x10xf32>
    %72 = tpu.concatenate %68, %69, %70, %71 in 1 : vector<64x10xf32>, vector<64x10xf32>, vector<64x10xf32>, vector<64x10xf32> -> vector<64x40xf32>
    %73 = arith.truncf %72 : vector<64x40xf32> to vector<64x40xbf16>
    %c40 = arith.constant 40 : index
    %c0_18 = arith.constant 0 : index
    %74 = vector.load %arg2[%c40, %c0_18] : memref<680x128xbf16, #tpu.memory_space<vmem>>, vector<40x40xbf16>
    %cst_19 = arith.constant dense<0.000000e+00> : vector<64x40xf32>
    %75 = tpu.matmul %73, %74, %cst_19 {dimension_numbers = #tpu.dot_dimension_numbers<[1], [0], [0], [1], [0, 0, 1, 1], [], []>} : vector<64x40xbf16>, vector<40x40xbf16>, vector<64x40xf32> -> vector<64x40xf32>
    %76 = vector.extract_strided_slice %0 {offsets = [4, 0], sizes = [1, 40], strides = [1, 1]} : vector<32x128xf32> to vector<1x40xf32>
    %77 = vector.shape_cast %76 : vector<1x40xf32> to vector<40xf32>
    %78 = vector.shape_cast %77 : vector<40xf32> to vector<1x40xf32>
    %79 = vector.broadcast %78 : vector<1x40xf32> to vector<64x40xf32>
    %80 = arith.addf %75, %79 : vector<64x40xf32>
    %81 = arith.addf %31, %80 : vector<64x40xf32>
    %82 = vector.extract_strided_slice %0 {offsets = [2, 0], sizes = [1, 40], strides = [1, 1]} : vector<32x128xf32> to vector<1x40xf32>
    %83 = vector.shape_cast %82 : vector<1x40xf32> to vector<40xf32>
    %84 = vector.extract_strided_slice %0 {offsets = [3, 0], sizes = [1, 40], strides = [1, 1]} : vector<32x128xf32> to vector<1x40xf32>
    %85 = vector.shape_cast %84 : vector<1x40xf32> to vector<40xf32>
    %cst_20 = arith.constant dense<0.000000e+00> : vector<64xf32>
    %86 = vector.multi_reduction <add>, %81, %cst_20 [1] : vector<64x40xf32> to vector<64xf32>
    %87 = vector.shape_cast %86 : vector<64xf32> to vector<64x1xf32>
    %cst_21 = arith.constant 4.000000e+01 : f32
    %88 = vector.broadcast %cst_21 : f32 to vector<64x1xf32>
    %89 = arith.divf %87, %88 : vector<64x1xf32>
    %90 = vector.broadcast %89 : vector<64x1xf32> to vector<64x40xf32>
    %91 = arith.subf %81, %90 : vector<64x40xf32>
    %92 = arith.mulf %91, %91 : vector<64x40xf32>
    %cst_22 = arith.constant dense<0.000000e+00> : vector<64xf32>
    %93 = vector.multi_reduction <add>, %92, %cst_22 [1] : vector<64x40xf32> to vector<64xf32>
    %94 = vector.shape_cast %93 : vector<64xf32> to vector<64x1xf32>
    %cst_23 = arith.constant 4.000000e+01 : f32
    %95 = vector.broadcast %cst_23 : f32 to vector<64x1xf32>
    %96 = arith.divf %94, %95 : vector<64x1xf32>
    %97 = vector.broadcast %89 : vector<64x1xf32> to vector<64x40xf32>
    %98 = arith.subf %81, %97 : vector<64x40xf32>
    %cst_24 = arith.constant 9.99999974E-6 : f32
    %99 = vector.broadcast %cst_24 : f32 to vector<64x1xf32>
    %100 = arith.addf %96, %99 : vector<64x1xf32>
    %101 = math.rsqrt %100 : vector<64x1xf32>
    %102 = vector.broadcast %101 : vector<64x1xf32> to vector<64x40xf32>
    %103 = arith.mulf %98, %102 : vector<64x40xf32>
    %104 = vector.shape_cast %83 : vector<40xf32> to vector<1x40xf32>
    %105 = vector.broadcast %104 : vector<1x40xf32> to vector<64x40xf32>
    %106 = arith.mulf %103, %105 : vector<64x40xf32>
    %107 = vector.shape_cast %85 : vector<40xf32> to vector<1x40xf32>
    %108 = vector.broadcast %107 : vector<1x40xf32> to vector<64x40xf32>
    %109 = arith.addf %106, %108 : vector<64x40xf32>
    %110 = arith.truncf %109 : vector<64x40xf32> to vector<64x40xbf16>
    %c80 = arith.constant 80 : index
    %c0_25 = arith.constant 0 : index
    %111 = vector.load %arg2[%c80, %c0_25] : memref<680x128xbf16, #tpu.memory_space<vmem>>, vector<40x40xbf16>
    %cst_26 = arith.constant dense<0.000000e+00> : vector<64x40xf32>
    %112 = tpu.matmul %110, %111, %cst_26 {dimension_numbers = #tpu.dot_dimension_numbers<[1], [0], [0], [1], [0, 0, 1, 1], [], []>} : vector<64x40xbf16>, vector<40x40xbf16>, vector<64x40xf32> -> vector<64x40xf32>
    %113 = vector.extract_strided_slice %0 {offsets = [5, 0], sizes = [1, 40], strides = [1, 1]} : vector<32x128xf32> to vector<1x40xf32>
    %114 = vector.shape_cast %113 : vector<1x40xf32> to vector<40xf32>
    %115 = vector.shape_cast %114 : vector<40xf32> to vector<1x40xf32>
    %116 = vector.broadcast %115 : vector<1x40xf32> to vector<64x40xf32>
    %117 = arith.addf %112, %116 : vector<64x40xf32>
    %cst_27 = arith.constant 0.000000e+00 : f32
    %118 = vector.broadcast %cst_27 : f32 to vector<64x40xf32>
    %119 = arith.maximumf %117, %118 : vector<64x40xf32>
    %120 = arith.truncf %119 : vector<64x40xf32> to vector<64x40xbf16>
    %c120 = arith.constant 120 : index
    %c0_28 = arith.constant 0 : index
    %121 = vector.load %arg2[%c120, %c0_28] : memref<680x128xbf16, #tpu.memory_space<vmem>>, vector<40x40xbf16>
    %cst_29 = arith.constant dense<0.000000e+00> : vector<64x40xf32>
    %122 = tpu.matmul %120, %121, %cst_29 {dimension_numbers = #tpu.dot_dimension_numbers<[1], [0], [0], [1], [0, 0, 1, 1], [], []>} : vector<64x40xbf16>, vector<40x40xbf16>, vector<64x40xf32> -> vector<64x40xf32>
    %123 = vector.extract_strided_slice %0 {offsets = [6, 0], sizes = [1, 40], strides = [1, 1]} : vector<32x128xf32> to vector<1x40xf32>
    %124 = vector.shape_cast %123 : vector<1x40xf32> to vector<40xf32>
    %125 = vector.shape_cast %124 : vector<40xf32> to vector<1x40xf32>
    %126 = vector.broadcast %125 : vector<1x40xf32> to vector<64x40xf32>
    %127 = arith.addf %122, %126 : vector<64x40xf32>
    %128 = arith.addf %109, %127 : vector<64x40xf32>
    %129 = vector.extract_strided_slice %0 {offsets = [7, 0], sizes = [1, 40], strides = [1, 1]} : vector<32x128xf32> to vector<1x40xf32>
    %130 = vector.shape_cast %129 : vector<1x40xf32> to vector<40xf32>
    %131 = vector.extract_strided_slice %0 {offsets = [8, 0], sizes = [1, 40], strides = [1, 1]} : vector<32x128xf32> to vector<1x40xf32>
    %132 = vector.shape_cast %131 : vector<1x40xf32> to vector<40xf32>
    %cst_30 = arith.constant dense<0.000000e+00> : vector<64xf32>
    %133 = vector.multi_reduction <add>, %128, %cst_30 [1] : vector<64x40xf32> to vector<64xf32>
    %134 = vector.shape_cast %133 : vector<64xf32> to vector<64x1xf32>
    %cst_31 = arith.constant 4.000000e+01 : f32
    %135 = vector.broadcast %cst_31 : f32 to vector<64x1xf32>
    %136 = arith.divf %134, %135 : vector<64x1xf32>
    %137 = vector.broadcast %136 : vector<64x1xf32> to vector<64x40xf32>
    %138 = arith.subf %128, %137 : vector<64x40xf32>
    %139 = arith.mulf %138, %138 : vector<64x40xf32>
    %cst_32 = arith.constant dense<0.000000e+00> : vector<64xf32>
    %140 = vector.multi_reduction <add>, %139, %cst_32 [1] : vector<64x40xf32> to vector<64xf32>
    %141 = vector.shape_cast %140 : vector<64xf32> to vector<64x1xf32>
    %cst_33 = arith.constant 4.000000e+01 : f32
    %142 = vector.broadcast %cst_33 : f32 to vector<64x1xf32>
    %143 = arith.divf %141, %142 : vector<64x1xf32>
    %144 = vector.broadcast %136 : vector<64x1xf32> to vector<64x40xf32>
    %145 = arith.subf %128, %144 : vector<64x40xf32>
    %cst_34 = arith.constant 9.99999974E-6 : f32
    %146 = vector.broadcast %cst_34 : f32 to vector<64x1xf32>
    %147 = arith.addf %143, %146 : vector<64x1xf32>
    %148 = math.rsqrt %147 : vector<64x1xf32>
    %149 = vector.broadcast %148 : vector<64x1xf32> to vector<64x40xf32>
    %150 = arith.mulf %145, %149 : vector<64x40xf32>
    %151 = vector.shape_cast %130 : vector<40xf32> to vector<1x40xf32>
    %152 = vector.broadcast %151 : vector<1x40xf32> to vector<64x40xf32>
    %153 = arith.mulf %150, %152 : vector<64x40xf32>
    %154 = vector.shape_cast %132 : vector<40xf32> to vector<1x40xf32>
    %155 = vector.broadcast %154 : vector<1x40xf32> to vector<64x40xf32>
    %156 = arith.addf %153, %155 : vector<64x40xf32>
    %157 = arith.truncf %156 : vector<64x40xf32> to vector<64x40xbf16>
    %c160 = arith.constant 160 : index
    %c0_35 = arith.constant 0 : index
    %158 = vector.load %arg2[%c160, %c0_35] : memref<680x128xbf16, #tpu.memory_space<vmem>>, vector<40x128xbf16>
    %cst_36 = arith.constant dense<0.000000e+00> : vector<64x128xf32>
    %159 = tpu.matmul %157, %158, %cst_36 {dimension_numbers = #tpu.dot_dimension_numbers<[1], [0], [0], [1], [0, 0, 1, 1], [], []>} : vector<64x40xbf16>, vector<40x128xbf16>, vector<64x128xf32> -> vector<64x128xf32>
    %160 = vector.extract_strided_slice %159 {offsets = [0, 0], sizes = [64, 10], strides = [1, 1]} : vector<64x128xf32> to vector<64x10xf32>
    %161 = vector.extract_strided_slice %159 {offsets = [0, 10], sizes = [64, 10], strides = [1, 1]} : vector<64x128xf32> to vector<64x10xf32>
    %162 = vector.extract_strided_slice %159 {offsets = [0, 20], sizes = [64, 10], strides = [1, 1]} : vector<64x128xf32> to vector<64x10xf32>
    %163 = vector.extract_strided_slice %159 {offsets = [0, 30], sizes = [64, 10], strides = [1, 1]} : vector<64x128xf32> to vector<64x10xf32>
    %164 = tpu.concatenate %160, %161, %162, %163 in 0 : vector<64x10xf32>, vector<64x10xf32>, vector<64x10xf32>, vector<64x10xf32> -> vector<256x10xf32>
    %165 = arith.truncf %164 : vector<256x10xf32> to vector<256x10xbf16>
    %166 = vector.extract_strided_slice %159 {offsets = [0, 40], sizes = [64, 10], strides = [1, 1]} : vector<64x128xf32> to vector<64x10xf32>
    %167 = vector.extract_strided_slice %159 {offsets = [0, 50], sizes = [64, 10], strides = [1, 1]} : vector<64x128xf32> to vector<64x10xf32>
    %168 = vector.extract_strided_slice %159 {offsets = [0, 60], sizes = [64, 10], strides = [1, 1]} : vector<64x128xf32> to vector<64x10xf32>
    %169 = vector.extract_strided_slice %159 {offsets = [0, 70], sizes = [64, 10], strides = [1, 1]} : vector<64x128xf32> to vector<64x10xf32>
    %170 = tpu.concatenate %166, %167, %168, %169 in 0 : vector<64x10xf32>, vector<64x10xf32>, vector<64x10xf32>, vector<64x10xf32> -> vector<256x10xf32>
    %171 = arith.truncf %170 : vector<256x10xf32> to vector<256x10xbf16>
    %172 = vector.extract_strided_slice %159 {offsets = [0, 80], sizes = [64, 10], strides = [1, 1]} : vector<64x128xf32> to vector<64x10xf32>
    %173 = vector.extract_strided_slice %159 {offsets = [0, 90], sizes = [64, 10], strides = [1, 1]} : vector<64x128xf32> to vector<64x10xf32>
    %174 = vector.extract_strided_slice %159 {offsets = [0, 100], sizes = [64, 10], strides = [1, 1]} : vector<64x128xf32> to vector<64x10xf32>
    %175 = vector.extract_strided_slice %159 {offsets = [0, 110], sizes = [64, 10], strides = [1, 1]} : vector<64x128xf32> to vector<64x10xf32>
    %176 = tpu.concatenate %172, %173, %174, %175 in 0 : vector<64x10xf32>, vector<64x10xf32>, vector<64x10xf32>, vector<64x10xf32> -> vector<256x10xf32>
    %177 = arith.truncf %176 : vector<256x10xf32> to vector<256x10xbf16>
    %cst_37 = arith.constant dense<0.000000e+00> : vector<256x256xf32>
    %178 = tpu.matmul %171, %165, %cst_37 {dimension_numbers = #tpu.dot_dimension_numbers<[1], [1], [0], [0], [0, 0, 1, 0], [], []>} : vector<256x10xbf16>, vector<256x10xbf16>, vector<256x256xf32> -> vector<256x256xf32>
    %179 = arith.addf %178, %1 : vector<256x256xf32>
    %cst_38 = arith.constant dense<0xFF800000> : vector<256xf32>
    %180 = vector.multi_reduction <maximumf>, %179, %cst_38 [1] : vector<256x256xf32> to vector<256xf32>
    %cst_39 = arith.constant 0xFF800000 : f32
    %181 = vector.broadcast %cst_39 : f32 to vector<256xf32>
    %182 = arith.maximumf %181, %180 : vector<256xf32>
    %183 = vector.shape_cast %182 : vector<256xf32> to vector<256x1xf32>
    %184 = vector.broadcast %183 : vector<256x1xf32> to vector<256x256xf32>
    %185 = arith.subf %179, %184 : vector<256x256xf32>
    %186 = math.exp %185 : vector<256x256xf32>
    %cst_40 = arith.constant dense<0.000000e+00> : vector<256xf32>
    %187 = vector.multi_reduction <add>, %186, %cst_40 [1] : vector<256x256xf32> to vector<256xf32>
    %188 = vector.shape_cast %187 : vector<256xf32> to vector<256x1xf32>
    %189 = vector.broadcast %188 : vector<256x1xf32> to vector<256x256xf32>
    %190 = arith.divf %186, %189 : vector<256x256xf32>
    %191 = arith.truncf %190 : vector<256x256xf32> to vector<256x256xbf16>
    %cst_41 = arith.constant dense<0.000000e+00> : vector<256x10xf32>
    %192 = tpu.matmul %191, %177, %cst_41 {dimension_numbers = #tpu.dot_dimension_numbers<[1], [0], [0], [1], [0, 0, 1, 1], [], []>} : vector<256x256xbf16>, vector<256x10xbf16>, vector<256x10xf32> -> vector<256x10xf32>
    %193 = vector.extract_strided_slice %192 {offsets = [0, 0], sizes = [64, 10], strides = [1, 1]} : vector<256x10xf32> to vector<64x10xf32>
    %194 = vector.extract_strided_slice %192 {offsets = [64, 0], sizes = [64, 10], strides = [1, 1]} : vector<256x10xf32> to vector<64x10xf32>
    %195 = vector.extract_strided_slice %192 {offsets = [128, 0], sizes = [64, 10], strides = [1, 1]} : vector<256x10xf32> to vector<64x10xf32>
    %196 = vector.extract_strided_slice %192 {offsets = [192, 0], sizes = [64, 10], strides = [1, 1]} : vector<256x10xf32> to vector<64x10xf32>
    %197 = tpu.concatenate %193, %194, %195, %196 in 1 : vector<64x10xf32>, vector<64x10xf32>, vector<64x10xf32>, vector<64x10xf32> -> vector<64x40xf32>
    %198 = arith.truncf %197 : vector<64x40xf32> to vector<64x40xbf16>
    %c200 = arith.constant 200 : index
    %c0_42 = arith.constant 0 : index
    %199 = vector.load %arg2[%c200, %c0_42] : memref<680x128xbf16, #tpu.memory_space<vmem>>, vector<40x40xbf16>
    %cst_43 = arith.constant dense<0.000000e+00> : vector<64x40xf32>
    %200 = tpu.matmul %198, %199, %cst_43 {dimension_numbers = #tpu.dot_dimension_numbers<[1], [0], [0], [1], [0, 0, 1, 1], [], []>} : vector<64x40xbf16>, vector<40x40xbf16>, vector<64x40xf32> -> vector<64x40xf32>
    %201 = vector.extract_strided_slice %0 {offsets = [11, 0], sizes = [1, 40], strides = [1, 1]} : vector<32x128xf32> to vector<1x40xf32>
    %202 = vector.shape_cast %201 : vector<1x40xf32> to vector<40xf32>
    %203 = vector.shape_cast %202 : vector<40xf32> to vector<1x40xf32>
    %204 = vector.broadcast %203 : vector<1x40xf32> to vector<64x40xf32>
    %205 = arith.addf %200, %204 : vector<64x40xf32>
    %206 = arith.addf %156, %205 : vector<64x40xf32>
    %207 = vector.extract_strided_slice %0 {offsets = [9, 0], sizes = [1, 40], strides = [1, 1]} : vector<32x128xf32> to vector<1x40xf32>
    %208 = vector.shape_cast %207 : vector<1x40xf32> to vector<40xf32>
    %209 = vector.extract_strided_slice %0 {offsets = [10, 0], sizes = [1, 40], strides = [1, 1]} : vector<32x128xf32> to vector<1x40xf32>
    %210 = vector.shape_cast %209 : vector<1x40xf32> to vector<40xf32>
    %cst_44 = arith.constant dense<0.000000e+00> : vector<64xf32>
    %211 = vector.multi_reduction <add>, %206, %cst_44 [1] : vector<64x40xf32> to vector<64xf32>
    %212 = vector.shape_cast %211 : vector<64xf32> to vector<64x1xf32>
    %cst_45 = arith.constant 4.000000e+01 : f32
    %213 = vector.broadcast %cst_45 : f32 to vector<64x1xf32>
    %214 = arith.divf %212, %213 : vector<64x1xf32>
    %215 = vector.broadcast %214 : vector<64x1xf32> to vector<64x40xf32>
    %216 = arith.subf %206, %215 : vector<64x40xf32>
    %217 = arith.mulf %216, %216 : vector<64x40xf32>
    %cst_46 = arith.constant dense<0.000000e+00> : vector<64xf32>
    %218 = vector.multi_reduction <add>, %217, %cst_46 [1] : vector<64x40xf32> to vector<64xf32>
    %219 = vector.shape_cast %218 : vector<64xf32> to vector<64x1xf32>
    %cst_47 = arith.constant 4.000000e+01 : f32
    %220 = vector.broadcast %cst_47 : f32 to vector<64x1xf32>
    %221 = arith.divf %219, %220 : vector<64x1xf32>
    %222 = vector.broadcast %214 : vector<64x1xf32> to vector<64x40xf32>
    %223 = arith.subf %206, %222 : vector<64x40xf32>
    %cst_48 = arith.constant 9.99999974E-6 : f32
    %224 = vector.broadcast %cst_48 : f32 to vector<64x1xf32>
    %225 = arith.addf %221, %224 : vector<64x1xf32>
    %226 = math.rsqrt %225 : vector<64x1xf32>
    %227 = vector.broadcast %226 : vector<64x1xf32> to vector<64x40xf32>
    %228 = arith.mulf %223, %227 : vector<64x40xf32>
    %229 = vector.shape_cast %208 : vector<40xf32> to vector<1x40xf32>
    %230 = vector.broadcast %229 : vector<1x40xf32> to vector<64x40xf32>
    %231 = arith.mulf %228, %230 : vector<64x40xf32>
    %232 = vector.shape_cast %210 : vector<40xf32> to vector<1x40xf32>
    %233 = vector.broadcast %232 : vector<1x40xf32> to vector<64x40xf32>
    %234 = arith.addf %231, %233 : vector<64x40xf32>
    %235 = arith.truncf %234 : vector<64x40xf32> to vector<64x40xbf16>
    %c240 = arith.constant 240 : index
    %c0_49 = arith.constant 0 : index
    %236 = vector.load %arg2[%c240, %c0_49] : memref<680x128xbf16, #tpu.memory_space<vmem>>, vector<40x40xbf16>
    %cst_50 = arith.constant dense<0.000000e+00> : vector<64x40xf32>
    %237 = tpu.matmul %235, %236, %cst_50 {dimension_numbers = #tpu.dot_dimension_numbers<[1], [0], [0], [1], [0, 0, 1, 1], [], []>} : vector<64x40xbf16>, vector<40x40xbf16>, vector<64x40xf32> -> vector<64x40xf32>
    %238 = vector.extract_strided_slice %0 {offsets = [12, 0], sizes = [1, 40], strides = [1, 1]} : vector<32x128xf32> to vector<1x40xf32>
    %239 = vector.shape_cast %238 : vector<1x40xf32> to vector<40xf32>
    %240 = vector.shape_cast %239 : vector<40xf32> to vector<1x40xf32>
    %241 = vector.broadcast %240 : vector<1x40xf32> to vector<64x40xf32>
    %242 = arith.addf %237, %241 : vector<64x40xf32>
    %cst_51 = arith.constant 0.000000e+00 : f32
    %243 = vector.broadcast %cst_51 : f32 to vector<64x40xf32>
    %244 = arith.maximumf %242, %243 : vector<64x40xf32>
    %245 = arith.truncf %244 : vector<64x40xf32> to vector<64x40xbf16>
    %c280 = arith.constant 280 : index
    %c0_52 = arith.constant 0 : index
    %246 = vector.load %arg2[%c280, %c0_52] : memref<680x128xbf16, #tpu.memory_space<vmem>>, vector<40x40xbf16>
    %cst_53 = arith.constant dense<0.000000e+00> : vector<64x40xf32>
    %247 = tpu.matmul %245, %246, %cst_53 {dimension_numbers = #tpu.dot_dimension_numbers<[1], [0], [0], [1], [0, 0, 1, 1], [], []>} : vector<64x40xbf16>, vector<40x40xbf16>, vector<64x40xf32> -> vector<64x40xf32>
    %248 = vector.extract_strided_slice %0 {offsets = [13, 0], sizes = [1, 40], strides = [1, 1]} : vector<32x128xf32> to vector<1x40xf32>
    %249 = vector.shape_cast %248 : vector<1x40xf32> to vector<40xf32>
    %250 = vector.shape_cast %249 : vector<40xf32> to vector<1x40xf32>
    %251 = vector.broadcast %250 : vector<1x40xf32> to vector<64x40xf32>
    %252 = arith.addf %247, %251 : vector<64x40xf32>
    %253 = arith.addf %234, %252 : vector<64x40xf32>
    %254 = vector.extract_strided_slice %0 {offsets = [14, 0], sizes = [1, 40], strides = [1, 1]} : vector<32x128xf32> to vector<1x40xf32>
    %255 = vector.shape_cast %254 : vector<1x40xf32> to vector<40xf32>
    %256 = vector.extract_strided_slice %0 {offsets = [15, 0], sizes = [1, 40], strides = [1, 1]} : vector<32x128xf32> to vector<1x40xf32>
    %257 = vector.shape_cast %256 : vector<1x40xf32> to vector<40xf32>
    %cst_54 = arith.constant dense<0.000000e+00> : vector<64xf32>
    %258 = vector.multi_reduction <add>, %253, %cst_54 [1] : vector<64x40xf32> to vector<64xf32>
    %259 = vector.shape_cast %258 : vector<64xf32> to vector<64x1xf32>
    %cst_55 = arith.constant 4.000000e+01 : f32
    %260 = vector.broadcast %cst_55 : f32 to vector<64x1xf32>
    %261 = arith.divf %259, %260 : vector<64x1xf32>
    %262 = vector.broadcast %261 : vector<64x1xf32> to vector<64x40xf32>
    %263 = arith.subf %253, %262 : vector<64x40xf32>
    %264 = arith.mulf %263, %263 : vector<64x40xf32>
    %cst_56 = arith.constant dense<0.000000e+00> : vector<64xf32>
    %265 = vector.multi_reduction <add>, %264, %cst_56 [1] : vector<64x40xf32> to vector<64xf32>
    %266 = vector.shape_cast %265 : vector<64xf32> to vector<64x1xf32>
    %cst_57 = arith.constant 4.000000e+01 : f32
    %267 = vector.broadcast %cst_57 : f32 to vector<64x1xf32>
    %268 = arith.divf %266, %267 : vector<64x1xf32>
    %269 = vector.broadcast %261 : vector<64x1xf32> to vector<64x40xf32>
    %270 = arith.subf %253, %269 : vector<64x40xf32>
    %cst_58 = arith.constant 9.99999974E-6 : f32
    %271 = vector.broadcast %cst_58 : f32 to vector<64x1xf32>
    %272 = arith.addf %268, %271 : vector<64x1xf32>
    %273 = math.rsqrt %272 : vector<64x1xf32>
    %274 = vector.broadcast %273 : vector<64x1xf32> to vector<64x40xf32>
    %275 = arith.mulf %270, %274 : vector<64x40xf32>
    %276 = vector.shape_cast %255 : vector<40xf32> to vector<1x40xf32>
    %277 = vector.broadcast %276 : vector<1x40xf32> to vector<64x40xf32>
    %278 = arith.mulf %275, %277 : vector<64x40xf32>
    %279 = vector.shape_cast %257 : vector<40xf32> to vector<1x40xf32>
    %280 = vector.broadcast %279 : vector<1x40xf32> to vector<64x40xf32>
    %281 = arith.addf %278, %280 : vector<64x40xf32>
    %282 = arith.truncf %281 : vector<64x40xf32> to vector<64x40xbf16>
    %c320 = arith.constant 320 : index
    %c0_59 = arith.constant 0 : index
    %283 = vector.load %arg2[%c320, %c0_59] : memref<680x128xbf16, #tpu.memory_space<vmem>>, vector<40x128xbf16>
    %cst_60 = arith.constant dense<0.000000e+00> : vector<64x128xf32>
    %284 = tpu.matmul %282, %283, %cst_60 {dimension_numbers = #tpu.dot_dimension_numbers<[1], [0], [0], [1], [0, 0, 1, 1], [], []>} : vector<64x40xbf16>, vector<40x128xbf16>, vector<64x128xf32> -> vector<64x128xf32>
    %285 = vector.extract_strided_slice %284 {offsets = [0, 0], sizes = [64, 10], strides = [1, 1]} : vector<64x128xf32> to vector<64x10xf32>
    %286 = vector.extract_strided_slice %284 {offsets = [0, 10], sizes = [64, 10], strides = [1, 1]} : vector<64x128xf32> to vector<64x10xf32>
    %287 = vector.extract_strided_slice %284 {offsets = [0, 20], sizes = [64, 10], strides = [1, 1]} : vector<64x128xf32> to vector<64x10xf32>
    %288 = vector.extract_strided_slice %284 {offsets = [0, 30], sizes = [64, 10], strides = [1, 1]} : vector<64x128xf32> to vector<64x10xf32>
    %289 = tpu.concatenate %285, %286, %287, %288 in 0 : vector<64x10xf32>, vector<64x10xf32>, vector<64x10xf32>, vector<64x10xf32> -> vector<256x10xf32>
    %290 = arith.truncf %289 : vector<256x10xf32> to vector<256x10xbf16>
    %291 = vector.extract_strided_slice %284 {offsets = [0, 40], sizes = [64, 10], strides = [1, 1]} : vector<64x128xf32> to vector<64x10xf32>
    %292 = vector.extract_strided_slice %284 {offsets = [0, 50], sizes = [64, 10], strides = [1, 1]} : vector<64x128xf32> to vector<64x10xf32>
    %293 = vector.extract_strided_slice %284 {offsets = [0, 60], sizes = [64, 10], strides = [1, 1]} : vector<64x128xf32> to vector<64x10xf32>
    %294 = vector.extract_strided_slice %284 {offsets = [0, 70], sizes = [64, 10], strides = [1, 1]} : vector<64x128xf32> to vector<64x10xf32>
    %295 = tpu.concatenate %291, %292, %293, %294 in 0 : vector<64x10xf32>, vector<64x10xf32>, vector<64x10xf32>, vector<64x10xf32> -> vector<256x10xf32>
    %296 = arith.truncf %295 : vector<256x10xf32> to vector<256x10xbf16>
    %297 = vector.extract_strided_slice %284 {offsets = [0, 80], sizes = [64, 10], strides = [1, 1]} : vector<64x128xf32> to vector<64x10xf32>
    %298 = vector.extract_strided_slice %284 {offsets = [0, 90], sizes = [64, 10], strides = [1, 1]} : vector<64x128xf32> to vector<64x10xf32>
    %299 = vector.extract_strided_slice %284 {offsets = [0, 100], sizes = [64, 10], strides = [1, 1]} : vector<64x128xf32> to vector<64x10xf32>
    %300 = vector.extract_strided_slice %284 {offsets = [0, 110], sizes = [64, 10], strides = [1, 1]} : vector<64x128xf32> to vector<64x10xf32>
    %301 = tpu.concatenate %297, %298, %299, %300 in 0 : vector<64x10xf32>, vector<64x10xf32>, vector<64x10xf32>, vector<64x10xf32> -> vector<256x10xf32>
    %302 = arith.truncf %301 : vector<256x10xf32> to vector<256x10xbf16>
    %cst_61 = arith.constant dense<0.000000e+00> : vector<256x256xf32>
    %303 = tpu.matmul %296, %290, %cst_61 {dimension_numbers = #tpu.dot_dimension_numbers<[1], [1], [0], [0], [0, 0, 1, 0], [], []>} : vector<256x10xbf16>, vector<256x10xbf16>, vector<256x256xf32> -> vector<256x256xf32>
    %304 = arith.addf %303, %1 : vector<256x256xf32>
    %cst_62 = arith.constant dense<0xFF800000> : vector<256xf32>
    %305 = vector.multi_reduction <maximumf>, %304, %cst_62 [1] : vector<256x256xf32> to vector<256xf32>
    %cst_63 = arith.constant 0xFF800000 : f32
    %306 = vector.broadcast %cst_63 : f32 to vector<256xf32>
    %307 = arith.maximumf %306, %305 : vector<256xf32>
    %308 = vector.shape_cast %307 : vector<256xf32> to vector<256x1xf32>
    %309 = vector.broadcast %308 : vector<256x1xf32> to vector<256x256xf32>
    %310 = arith.subf %304, %309 : vector<256x256xf32>
    %311 = math.exp %310 : vector<256x256xf32>
    %cst_64 = arith.constant dense<0.000000e+00> : vector<256xf32>
    %312 = vector.multi_reduction <add>, %311, %cst_64 [1] : vector<256x256xf32> to vector<256xf32>
    %313 = vector.shape_cast %312 : vector<256xf32> to vector<256x1xf32>
    %314 = vector.broadcast %313 : vector<256x1xf32> to vector<256x256xf32>
    %315 = arith.divf %311, %314 : vector<256x256xf32>
    %316 = arith.truncf %315 : vector<256x256xf32> to vector<256x256xbf16>
    %cst_65 = arith.constant dense<0.000000e+00> : vector<256x10xf32>
    %317 = tpu.matmul %316, %302, %cst_65 {dimension_numbers = #tpu.dot_dimension_numbers<[1], [0], [0], [1], [0, 0, 1, 1], [], []>} : vector<256x256xbf16>, vector<256x10xbf16>, vector<256x10xf32> -> vector<256x10xf32>
    %318 = vector.extract_strided_slice %317 {offsets = [0, 0], sizes = [64, 10], strides = [1, 1]} : vector<256x10xf32> to vector<64x10xf32>
    %319 = vector.extract_strided_slice %317 {offsets = [64, 0], sizes = [64, 10], strides = [1, 1]} : vector<256x10xf32> to vector<64x10xf32>
    %320 = vector.extract_strided_slice %317 {offsets = [128, 0], sizes = [64, 10], strides = [1, 1]} : vector<256x10xf32> to vector<64x10xf32>
    %321 = vector.extract_strided_slice %317 {offsets = [192, 0], sizes = [64, 10], strides = [1, 1]} : vector<256x10xf32> to vector<64x10xf32>
    %322 = tpu.concatenate %318, %319, %320, %321 in 1 : vector<64x10xf32>, vector<64x10xf32>, vector<64x10xf32>, vector<64x10xf32> -> vector<64x40xf32>
    %323 = arith.truncf %322 : vector<64x40xf32> to vector<64x40xbf16>
    %c360 = arith.constant 360 : index
    %c0_66 = arith.constant 0 : index
    %324 = vector.load %arg2[%c360, %c0_66] : memref<680x128xbf16, #tpu.memory_space<vmem>>, vector<40x40xbf16>
    %cst_67 = arith.constant dense<0.000000e+00> : vector<64x40xf32>
    %325 = tpu.matmul %323, %324, %cst_67 {dimension_numbers = #tpu.dot_dimension_numbers<[1], [0], [0], [1], [0, 0, 1, 1], [], []>} : vector<64x40xbf16>, vector<40x40xbf16>, vector<64x40xf32> -> vector<64x40xf32>
    %326 = vector.extract_strided_slice %0 {offsets = [18, 0], sizes = [1, 40], strides = [1, 1]} : vector<32x128xf32> to vector<1x40xf32>
    %327 = vector.shape_cast %326 : vector<1x40xf32> to vector<40xf32>
    %328 = vector.shape_cast %327 : vector<40xf32> to vector<1x40xf32>
    %329 = vector.broadcast %328 : vector<1x40xf32> to vector<64x40xf32>
    %330 = arith.addf %325, %329 : vector<64x40xf32>
    %331 = arith.addf %281, %330 : vector<64x40xf32>
    %332 = vector.extract_strided_slice %0 {offsets = [16, 0], sizes = [1, 40], strides = [1, 1]} : vector<32x128xf32> to vector<1x40xf32>
    %333 = vector.shape_cast %332 : vector<1x40xf32> to vector<40xf32>
    %334 = vector.extract_strided_slice %0 {offsets = [17, 0], sizes = [1, 40], strides = [1, 1]} : vector<32x128xf32> to vector<1x40xf32>
    %335 = vector.shape_cast %334 : vector<1x40xf32> to vector<40xf32>
    %cst_68 = arith.constant dense<0.000000e+00> : vector<64xf32>
    %336 = vector.multi_reduction <add>, %331, %cst_68 [1] : vector<64x40xf32> to vector<64xf32>
    %337 = vector.shape_cast %336 : vector<64xf32> to vector<64x1xf32>
    %cst_69 = arith.constant 4.000000e+01 : f32
    %338 = vector.broadcast %cst_69 : f32 to vector<64x1xf32>
    %339 = arith.divf %337, %338 : vector<64x1xf32>
    %340 = vector.broadcast %339 : vector<64x1xf32> to vector<64x40xf32>
    %341 = arith.subf %331, %340 : vector<64x40xf32>
    %342 = arith.mulf %341, %341 : vector<64x40xf32>
    %cst_70 = arith.constant dense<0.000000e+00> : vector<64xf32>
    %343 = vector.multi_reduction <add>, %342, %cst_70 [1] : vector<64x40xf32> to vector<64xf32>
    %344 = vector.shape_cast %343 : vector<64xf32> to vector<64x1xf32>
    %cst_71 = arith.constant 4.000000e+01 : f32
    %345 = vector.broadcast %cst_71 : f32 to vector<64x1xf32>
    %346 = arith.divf %344, %345 : vector<64x1xf32>
    %347 = vector.broadcast %339 : vector<64x1xf32> to vector<64x40xf32>
    %348 = arith.subf %331, %347 : vector<64x40xf32>
    %cst_72 = arith.constant 9.99999974E-6 : f32
    %349 = vector.broadcast %cst_72 : f32 to vector<64x1xf32>
    %350 = arith.addf %346, %349 : vector<64x1xf32>
    %351 = math.rsqrt %350 : vector<64x1xf32>
    %352 = vector.broadcast %351 : vector<64x1xf32> to vector<64x40xf32>
    %353 = arith.mulf %348, %352 : vector<64x40xf32>
    %354 = vector.shape_cast %333 : vector<40xf32> to vector<1x40xf32>
    %355 = vector.broadcast %354 : vector<1x40xf32> to vector<64x40xf32>
    %356 = arith.mulf %353, %355 : vector<64x40xf32>
    %357 = vector.shape_cast %335 : vector<40xf32> to vector<1x40xf32>
    %358 = vector.broadcast %357 : vector<1x40xf32> to vector<64x40xf32>
    %359 = arith.addf %356, %358 : vector<64x40xf32>
    %360 = arith.truncf %359 : vector<64x40xf32> to vector<64x40xbf16>
    %c400 = arith.constant 400 : index
    %c0_73 = arith.constant 0 : index
    %361 = vector.load %arg2[%c400, %c0_73] : memref<680x128xbf16, #tpu.memory_space<vmem>>, vector<40x40xbf16>
    %cst_74 = arith.constant dense<0.000000e+00> : vector<64x40xf32>
    %362 = tpu.matmul %360, %361, %cst_74 {dimension_numbers = #tpu.dot_dimension_numbers<[1], [0], [0], [1], [0, 0, 1, 1], [], []>} : vector<64x40xbf16>, vector<40x40xbf16>, vector<64x40xf32> -> vector<64x40xf32>
    %363 = vector.extract_strided_slice %0 {offsets = [19, 0], sizes = [1, 40], strides = [1, 1]} : vector<32x128xf32> to vector<1x40xf32>
    %364 = vector.shape_cast %363 : vector<1x40xf32> to vector<40xf32>
    %365 = vector.shape_cast %364 : vector<40xf32> to vector<1x40xf32>
    %366 = vector.broadcast %365 : vector<1x40xf32> to vector<64x40xf32>
    %367 = arith.addf %362, %366 : vector<64x40xf32>
    %cst_75 = arith.constant 0.000000e+00 : f32
    %368 = vector.broadcast %cst_75 : f32 to vector<64x40xf32>
    %369 = arith.maximumf %367, %368 : vector<64x40xf32>
    %370 = arith.truncf %369 : vector<64x40xf32> to vector<64x40xbf16>
    %c440 = arith.constant 440 : index
    %c0_76 = arith.constant 0 : index
    %371 = vector.load %arg2[%c440, %c0_76] : memref<680x128xbf16, #tpu.memory_space<vmem>>, vector<40x40xbf16>
    %cst_77 = arith.constant dense<0.000000e+00> : vector<64x40xf32>
    %372 = tpu.matmul %370, %371, %cst_77 {dimension_numbers = #tpu.dot_dimension_numbers<[1], [0], [0], [1], [0, 0, 1, 1], [], []>} : vector<64x40xbf16>, vector<40x40xbf16>, vector<64x40xf32> -> vector<64x40xf32>
    %373 = vector.extract_strided_slice %0 {offsets = [20, 0], sizes = [1, 40], strides = [1, 1]} : vector<32x128xf32> to vector<1x40xf32>
    %374 = vector.shape_cast %373 : vector<1x40xf32> to vector<40xf32>
    %375 = vector.shape_cast %374 : vector<40xf32> to vector<1x40xf32>
    %376 = vector.broadcast %375 : vector<1x40xf32> to vector<64x40xf32>
    %377 = arith.addf %372, %376 : vector<64x40xf32>
    %378 = arith.addf %359, %377 : vector<64x40xf32>
    %379 = vector.extract_strided_slice %0 {offsets = [21, 0], sizes = [1, 40], strides = [1, 1]} : vector<32x128xf32> to vector<1x40xf32>
    %380 = vector.shape_cast %379 : vector<1x40xf32> to vector<40xf32>
    %381 = vector.extract_strided_slice %0 {offsets = [22, 0], sizes = [1, 40], strides = [1, 1]} : vector<32x128xf32> to vector<1x40xf32>
    %382 = vector.shape_cast %381 : vector<1x40xf32> to vector<40xf32>
    %cst_78 = arith.constant dense<0.000000e+00> : vector<64xf32>
    %383 = vector.multi_reduction <add>, %378, %cst_78 [1] : vector<64x40xf32> to vector<64xf32>
    %384 = vector.shape_cast %383 : vector<64xf32> to vector<64x1xf32>
    %cst_79 = arith.constant 4.000000e+01 : f32
    %385 = vector.broadcast %cst_79 : f32 to vector<64x1xf32>
    %386 = arith.divf %384, %385 : vector<64x1xf32>
    %387 = vector.broadcast %386 : vector<64x1xf32> to vector<64x40xf32>
    %388 = arith.subf %378, %387 : vector<64x40xf32>
    %389 = arith.mulf %388, %388 : vector<64x40xf32>
    %cst_80 = arith.constant dense<0.000000e+00> : vector<64xf32>
    %390 = vector.multi_reduction <add>, %389, %cst_80 [1] : vector<64x40xf32> to vector<64xf32>
    %391 = vector.shape_cast %390 : vector<64xf32> to vector<64x1xf32>
    %cst_81 = arith.constant 4.000000e+01 : f32
    %392 = vector.broadcast %cst_81 : f32 to vector<64x1xf32>
    %393 = arith.divf %391, %392 : vector<64x1xf32>
    %394 = vector.broadcast %386 : vector<64x1xf32> to vector<64x40xf32>
    %395 = arith.subf %378, %394 : vector<64x40xf32>
    %cst_82 = arith.constant 9.99999974E-6 : f32
    %396 = vector.broadcast %cst_82 : f32 to vector<64x1xf32>
    %397 = arith.addf %393, %396 : vector<64x1xf32>
    %398 = math.rsqrt %397 : vector<64x1xf32>
    %399 = vector.broadcast %398 : vector<64x1xf32> to vector<64x40xf32>
    %400 = arith.mulf %395, %399 : vector<64x40xf32>
    %401 = vector.shape_cast %380 : vector<40xf32> to vector<1x40xf32>
    %402 = vector.broadcast %401 : vector<1x40xf32> to vector<64x40xf32>
    %403 = arith.mulf %400, %402 : vector<64x40xf32>
    %404 = vector.shape_cast %382 : vector<40xf32> to vector<1x40xf32>
    %405 = vector.broadcast %404 : vector<1x40xf32> to vector<64x40xf32>
    %406 = arith.addf %403, %405 : vector<64x40xf32>
    %407 = arith.truncf %406 : vector<64x40xf32> to vector<64x40xbf16>
    %c480 = arith.constant 480 : index
    %c0_83 = arith.constant 0 : index
    %408 = vector.load %arg2[%c480, %c0_83] : memref<680x128xbf16, #tpu.memory_space<vmem>>, vector<40x128xbf16>
    %cst_84 = arith.constant dense<0.000000e+00> : vector<64x128xf32>
    %409 = tpu.matmul %407, %408, %cst_84 {dimension_numbers = #tpu.dot_dimension_numbers<[1], [0], [0], [1], [0, 0, 1, 1], [], []>} : vector<64x40xbf16>, vector<40x128xbf16>, vector<64x128xf32> -> vector<64x128xf32>
    %410 = vector.extract_strided_slice %409 {offsets = [0, 0], sizes = [64, 10], strides = [1, 1]} : vector<64x128xf32> to vector<64x10xf32>
    %411 = vector.extract_strided_slice %409 {offsets = [0, 10], sizes = [64, 10], strides = [1, 1]} : vector<64x128xf32> to vector<64x10xf32>
    %412 = vector.extract_strided_slice %409 {offsets = [0, 20], sizes = [64, 10], strides = [1, 1]} : vector<64x128xf32> to vector<64x10xf32>
    %413 = vector.extract_strided_slice %409 {offsets = [0, 30], sizes = [64, 10], strides = [1, 1]} : vector<64x128xf32> to vector<64x10xf32>
    %414 = tpu.concatenate %410, %411, %412, %413 in 0 : vector<64x10xf32>, vector<64x10xf32>, vector<64x10xf32>, vector<64x10xf32> -> vector<256x10xf32>
    %415 = arith.truncf %414 : vector<256x10xf32> to vector<256x10xbf16>
    %416 = vector.extract_strided_slice %409 {offsets = [0, 40], sizes = [64, 10], strides = [1, 1]} : vector<64x128xf32> to vector<64x10xf32>
    %417 = vector.extract_strided_slice %409 {offsets = [0, 50], sizes = [64, 10], strides = [1, 1]} : vector<64x128xf32> to vector<64x10xf32>
    %418 = vector.extract_strided_slice %409 {offsets = [0, 60], sizes = [64, 10], strides = [1, 1]} : vector<64x128xf32> to vector<64x10xf32>
    %419 = vector.extract_strided_slice %409 {offsets = [0, 70], sizes = [64, 10], strides = [1, 1]} : vector<64x128xf32> to vector<64x10xf32>
    %420 = tpu.concatenate %416, %417, %418, %419 in 0 : vector<64x10xf32>, vector<64x10xf32>, vector<64x10xf32>, vector<64x10xf32> -> vector<256x10xf32>
    %421 = arith.truncf %420 : vector<256x10xf32> to vector<256x10xbf16>
    %422 = vector.extract_strided_slice %409 {offsets = [0, 80], sizes = [64, 10], strides = [1, 1]} : vector<64x128xf32> to vector<64x10xf32>
    %423 = vector.extract_strided_slice %409 {offsets = [0, 90], sizes = [64, 10], strides = [1, 1]} : vector<64x128xf32> to vector<64x10xf32>
    %424 = vector.extract_strided_slice %409 {offsets = [0, 100], sizes = [64, 10], strides = [1, 1]} : vector<64x128xf32> to vector<64x10xf32>
    %425 = vector.extract_strided_slice %409 {offsets = [0, 110], sizes = [64, 10], strides = [1, 1]} : vector<64x128xf32> to vector<64x10xf32>
    %426 = tpu.concatenate %422, %423, %424, %425 in 0 : vector<64x10xf32>, vector<64x10xf32>, vector<64x10xf32>, vector<64x10xf32> -> vector<256x10xf32>
    %427 = arith.truncf %426 : vector<256x10xf32> to vector<256x10xbf16>
    %cst_85 = arith.constant dense<0.000000e+00> : vector<256x256xf32>
    %428 = tpu.matmul %421, %415, %cst_85 {dimension_numbers = #tpu.dot_dimension_numbers<[1], [1], [0], [0], [0, 0, 1, 0], [], []>} : vector<256x10xbf16>, vector<256x10xbf16>, vector<256x256xf32> -> vector<256x256xf32>
    %429 = arith.addf %428, %1 : vector<256x256xf32>
    %cst_86 = arith.constant dense<0xFF800000> : vector<256xf32>
    %430 = vector.multi_reduction <maximumf>, %429, %cst_86 [1] : vector<256x256xf32> to vector<256xf32>
    %cst_87 = arith.constant 0xFF800000 : f32
    %431 = vector.broadcast %cst_87 : f32 to vector<256xf32>
    %432 = arith.maximumf %431, %430 : vector<256xf32>
    %433 = vector.shape_cast %432 : vector<256xf32> to vector<256x1xf32>
    %434 = vector.broadcast %433 : vector<256x1xf32> to vector<256x256xf32>
    %435 = arith.subf %429, %434 : vector<256x256xf32>
    %436 = math.exp %435 : vector<256x256xf32>
    %cst_88 = arith.constant dense<0.000000e+00> : vector<256xf32>
    %437 = vector.multi_reduction <add>, %436, %cst_88 [1] : vector<256x256xf32> to vector<256xf32>
    %438 = vector.shape_cast %437 : vector<256xf32> to vector<256x1xf32>
    %439 = vector.broadcast %438 : vector<256x1xf32> to vector<256x256xf32>
    %440 = arith.divf %436, %439 : vector<256x256xf32>
    %441 = arith.truncf %440 : vector<256x256xf32> to vector<256x256xbf16>
    %cst_89 = arith.constant dense<0.000000e+00> : vector<256x10xf32>
    %442 = tpu.matmul %441, %427, %cst_89 {dimension_numbers = #tpu.dot_dimension_numbers<[1], [0], [0], [1], [0, 0, 1, 1], [], []>} : vector<256x256xbf16>, vector<256x10xbf16>, vector<256x10xf32> -> vector<256x10xf32>
    %443 = vector.extract_strided_slice %442 {offsets = [0, 0], sizes = [64, 10], strides = [1, 1]} : vector<256x10xf32> to vector<64x10xf32>
    %444 = vector.extract_strided_slice %442 {offsets = [64, 0], sizes = [64, 10], strides = [1, 1]} : vector<256x10xf32> to vector<64x10xf32>
    %445 = vector.extract_strided_slice %442 {offsets = [128, 0], sizes = [64, 10], strides = [1, 1]} : vector<256x10xf32> to vector<64x10xf32>
    %446 = vector.extract_strided_slice %442 {offsets = [192, 0], sizes = [64, 10], strides = [1, 1]} : vector<256x10xf32> to vector<64x10xf32>
    %447 = tpu.concatenate %443, %444, %445, %446 in 1 : vector<64x10xf32>, vector<64x10xf32>, vector<64x10xf32>, vector<64x10xf32> -> vector<64x40xf32>
    %448 = arith.truncf %447 : vector<64x40xf32> to vector<64x40xbf16>
    %c520 = arith.constant 520 : index
    %c0_90 = arith.constant 0 : index
    %449 = vector.load %arg2[%c520, %c0_90] : memref<680x128xbf16, #tpu.memory_space<vmem>>, vector<40x40xbf16>
    %cst_91 = arith.constant dense<0.000000e+00> : vector<64x40xf32>
    %450 = tpu.matmul %448, %449, %cst_91 {dimension_numbers = #tpu.dot_dimension_numbers<[1], [0], [0], [1], [0, 0, 1, 1], [], []>} : vector<64x40xbf16>, vector<40x40xbf16>, vector<64x40xf32> -> vector<64x40xf32>
    %451 = vector.extract_strided_slice %0 {offsets = [25, 0], sizes = [1, 40], strides = [1, 1]} : vector<32x128xf32> to vector<1x40xf32>
    %452 = vector.shape_cast %451 : vector<1x40xf32> to vector<40xf32>
    %453 = vector.shape_cast %452 : vector<40xf32> to vector<1x40xf32>
    %454 = vector.broadcast %453 : vector<1x40xf32> to vector<64x40xf32>
    %455 = arith.addf %450, %454 : vector<64x40xf32>
    %456 = arith.addf %406, %455 : vector<64x40xf32>
    %457 = vector.extract_strided_slice %0 {offsets = [23, 0], sizes = [1, 40], strides = [1, 1]} : vector<32x128xf32> to vector<1x40xf32>
    %458 = vector.shape_cast %457 : vector<1x40xf32> to vector<40xf32>
    %459 = vector.extract_strided_slice %0 {offsets = [24, 0], sizes = [1, 40], strides = [1, 1]} : vector<32x128xf32> to vector<1x40xf32>
    %460 = vector.shape_cast %459 : vector<1x40xf32> to vector<40xf32>
    %cst_92 = arith.constant dense<0.000000e+00> : vector<64xf32>
    %461 = vector.multi_reduction <add>, %456, %cst_92 [1] : vector<64x40xf32> to vector<64xf32>
    %462 = vector.shape_cast %461 : vector<64xf32> to vector<64x1xf32>
    %cst_93 = arith.constant 4.000000e+01 : f32
    %463 = vector.broadcast %cst_93 : f32 to vector<64x1xf32>
    %464 = arith.divf %462, %463 : vector<64x1xf32>
    %465 = vector.broadcast %464 : vector<64x1xf32> to vector<64x40xf32>
    %466 = arith.subf %456, %465 : vector<64x40xf32>
    %467 = arith.mulf %466, %466 : vector<64x40xf32>
    %cst_94 = arith.constant dense<0.000000e+00> : vector<64xf32>
    %468 = vector.multi_reduction <add>, %467, %cst_94 [1] : vector<64x40xf32> to vector<64xf32>
    %469 = vector.shape_cast %468 : vector<64xf32> to vector<64x1xf32>
    %cst_95 = arith.constant 4.000000e+01 : f32
    %470 = vector.broadcast %cst_95 : f32 to vector<64x1xf32>
    %471 = arith.divf %469, %470 : vector<64x1xf32>
    %472 = vector.broadcast %464 : vector<64x1xf32> to vector<64x40xf32>
    %473 = arith.subf %456, %472 : vector<64x40xf32>
    %cst_96 = arith.constant 9.99999974E-6 : f32
    %474 = vector.broadcast %cst_96 : f32 to vector<64x1xf32>
    %475 = arith.addf %471, %474 : vector<64x1xf32>
    %476 = math.rsqrt %475 : vector<64x1xf32>
    %477 = vector.broadcast %476 : vector<64x1xf32> to vector<64x40xf32>
    %478 = arith.mulf %473, %477 : vector<64x40xf32>
    %479 = vector.shape_cast %458 : vector<40xf32> to vector<1x40xf32>
    %480 = vector.broadcast %479 : vector<1x40xf32> to vector<64x40xf32>
    %481 = arith.mulf %478, %480 : vector<64x40xf32>
    %482 = vector.shape_cast %460 : vector<40xf32> to vector<1x40xf32>
    %483 = vector.broadcast %482 : vector<1x40xf32> to vector<64x40xf32>
    %484 = arith.addf %481, %483 : vector<64x40xf32>
    %485 = arith.truncf %484 : vector<64x40xf32> to vector<64x40xbf16>
    %c560 = arith.constant 560 : index
    %c0_97 = arith.constant 0 : index
    %486 = vector.load %arg2[%c560, %c0_97] : memref<680x128xbf16, #tpu.memory_space<vmem>>, vector<40x40xbf16>
    %cst_98 = arith.constant dense<0.000000e+00> : vector<64x40xf32>
    %487 = tpu.matmul %485, %486, %cst_98 {dimension_numbers = #tpu.dot_dimension_numbers<[1], [0], [0], [1], [0, 0, 1, 1], [], []>} : vector<64x40xbf16>, vector<40x40xbf16>, vector<64x40xf32> -> vector<64x40xf32>
    %488 = vector.extract_strided_slice %0 {offsets = [26, 0], sizes = [1, 40], strides = [1, 1]} : vector<32x128xf32> to vector<1x40xf32>
    %489 = vector.shape_cast %488 : vector<1x40xf32> to vector<40xf32>
    %490 = vector.shape_cast %489 : vector<40xf32> to vector<1x40xf32>
    %491 = vector.broadcast %490 : vector<1x40xf32> to vector<64x40xf32>
    %492 = arith.addf %487, %491 : vector<64x40xf32>
    %cst_99 = arith.constant 0.000000e+00 : f32
    %493 = vector.broadcast %cst_99 : f32 to vector<64x40xf32>
    %494 = arith.maximumf %492, %493 : vector<64x40xf32>
    %495 = arith.truncf %494 : vector<64x40xf32> to vector<64x40xbf16>
    %c600 = arith.constant 600 : index
    %c0_100 = arith.constant 0 : index
    %496 = vector.load %arg2[%c600, %c0_100] : memref<680x128xbf16, #tpu.memory_space<vmem>>, vector<40x40xbf16>
    %cst_101 = arith.constant dense<0.000000e+00> : vector<64x40xf32>
    %497 = tpu.matmul %495, %496, %cst_101 {dimension_numbers = #tpu.dot_dimension_numbers<[1], [0], [0], [1], [0, 0, 1, 1], [], []>} : vector<64x40xbf16>, vector<40x40xbf16>, vector<64x40xf32> -> vector<64x40xf32>
    %498 = vector.extract_strided_slice %0 {offsets = [27, 0], sizes = [1, 40], strides = [1, 1]} : vector<32x128xf32> to vector<1x40xf32>
    %499 = vector.shape_cast %498 : vector<1x40xf32> to vector<40xf32>
    %500 = vector.shape_cast %499 : vector<40xf32> to vector<1x40xf32>
    %501 = vector.broadcast %500 : vector<1x40xf32> to vector<64x40xf32>
    %502 = arith.addf %497, %501 : vector<64x40xf32>
    %503 = arith.addf %484, %502 : vector<64x40xf32>
    %504 = vector.extract_strided_slice %0 {offsets = [28, 0], sizes = [1, 40], strides = [1, 1]} : vector<32x128xf32> to vector<1x40xf32>
    %505 = vector.shape_cast %504 : vector<1x40xf32> to vector<40xf32>
    %506 = vector.extract_strided_slice %0 {offsets = [29, 0], sizes = [1, 40], strides = [1, 1]} : vector<32x128xf32> to vector<1x40xf32>
    %507 = vector.shape_cast %506 : vector<1x40xf32> to vector<40xf32>
    %cst_102 = arith.constant dense<0.000000e+00> : vector<64xf32>
    %508 = vector.multi_reduction <add>, %503, %cst_102 [1] : vector<64x40xf32> to vector<64xf32>
    %509 = vector.shape_cast %508 : vector<64xf32> to vector<64x1xf32>
    %cst_103 = arith.constant 4.000000e+01 : f32
    %510 = vector.broadcast %cst_103 : f32 to vector<64x1xf32>
    %511 = arith.divf %509, %510 : vector<64x1xf32>
    %512 = vector.broadcast %511 : vector<64x1xf32> to vector<64x40xf32>
    %513 = arith.subf %503, %512 : vector<64x40xf32>
    %514 = arith.mulf %513, %513 : vector<64x40xf32>
    %cst_104 = arith.constant dense<0.000000e+00> : vector<64xf32>
    %515 = vector.multi_reduction <add>, %514, %cst_104 [1] : vector<64x40xf32> to vector<64xf32>
    %516 = vector.shape_cast %515 : vector<64xf32> to vector<64x1xf32>
    %cst_105 = arith.constant 4.000000e+01 : f32
    %517 = vector.broadcast %cst_105 : f32 to vector<64x1xf32>
    %518 = arith.divf %516, %517 : vector<64x1xf32>
    %519 = vector.broadcast %511 : vector<64x1xf32> to vector<64x40xf32>
    %520 = arith.subf %503, %519 : vector<64x40xf32>
    %cst_106 = arith.constant 9.99999974E-6 : f32
    %521 = vector.broadcast %cst_106 : f32 to vector<64x1xf32>
    %522 = arith.addf %518, %521 : vector<64x1xf32>
    %523 = math.rsqrt %522 : vector<64x1xf32>
    %524 = vector.broadcast %523 : vector<64x1xf32> to vector<64x40xf32>
    %525 = arith.mulf %520, %524 : vector<64x40xf32>
    %526 = vector.shape_cast %505 : vector<40xf32> to vector<1x40xf32>
    %527 = vector.broadcast %526 : vector<1x40xf32> to vector<64x40xf32>
    %528 = arith.mulf %525, %527 : vector<64x40xf32>
    %529 = vector.shape_cast %507 : vector<40xf32> to vector<1x40xf32>
    %530 = vector.broadcast %529 : vector<1x40xf32> to vector<64x40xf32>
    %531 = arith.addf %528, %530 : vector<64x40xf32>
    %532 = arith.truncf %531 : vector<64x40xf32> to vector<64x40xbf16>
    %c640 = arith.constant 640 : index
    %c0_107 = arith.constant 0 : index
    %533 = vector.load %arg2[%c640, %c0_107] : memref<680x128xbf16, #tpu.memory_space<vmem>>, vector<40x128xbf16>
    %cst_108 = arith.constant dense<0.000000e+00> : vector<64x128xf32>
    %534 = tpu.matmul %532, %533, %cst_108 {dimension_numbers = #tpu.dot_dimension_numbers<[1], [0], [0], [1], [0, 0, 1, 1], [], []>} : vector<64x40xbf16>, vector<40x128xbf16>, vector<64x128xf32> -> vector<64x128xf32>
    %535 = vector.extract_strided_slice %0 {offsets = [30, 0], sizes = [1, 128], strides = [1, 1]} : vector<32x128xf32> to vector<1x128xf32>
    %536 = vector.shape_cast %535 : vector<1x128xf32> to vector<128xf32>
    %537 = vector.shape_cast %536 : vector<128xf32> to vector<1x128xf32>
    %538 = vector.broadcast %537 : vector<1x128xf32> to vector<64x128xf32>
    %539 = arith.addf %534, %538 : vector<64x128xf32>
    %540 = vector.shape_cast %539 : vector<64x128xf32> to vector<2x32x128xf32>
    %c0_109 = arith.constant 0 : index
    %c0_110 = arith.constant 0 : index
    %c0_111 = arith.constant 0 : index
    %541 = vector.load %arg5[%c0_109, %c0_110, %c0_111] : memref<2x32x128xf32, #tpu.memory_space<vmem>>, vector<2x32x128xf32>
    tpu.vector_store %arg5[%c0_109, %c0_110, %c0_111], %540 {strides = array<i32>} : memref<2x32x128xf32, #tpu.memory_space<vmem>>, vector<2x32x128xf32>,
    return
  }
  func.func @transform_0(%arg0: i32) -> (i32, i32, i32) {
    %c0_i32 = arith.constant 0 : i32
    %c0_i32_0 = arith.constant 0 : i32
    %c0_i32_1 = arith.constant 0 : i32
    return %arg0, %c0_i32, %c0_i32_0 : i32, i32, i32
  }
  func.func @transform_1(%arg0: i32) -> (i32, i32) {
    %c0_i32 = arith.constant 0 : i32
    %c0_i32_0 = arith.constant 0 : i32
    %c0_i32_1 = arith.constant 0 : i32
    return %c0_i32, %c0_i32_0 : i32, i32
  }
  func.func @transform_2(%arg0: i32) -> (i32, i32) {
    %c0_i32 = arith.constant 0 : i32
    %c0_i32_0 = arith.constant 0 : i32
    %c0_i32_1 = arith.constant 0 : i32
    return %c0_i32, %c0_i32_0 : i32, i32
  }
  func.func @transform_3(%arg0: i32) -> (i32, i32) {
    %c0_i32 = arith.constant 0 : i32
    %c0_i32_0 = arith.constant 0 : i32
    %c0_i32_1 = arith.constant 0 : i32
    return %c0_i32, %c0_i32_0 : i32, i32
  }
  func.func @transform_4(%arg0: i32) -> (i32, i32, i32) {
    %c0_i32 = arith.constant 0 : i32
    %c0_i32_0 = arith.constant 0 : i32
    %c0_i32_1 = arith.constant 0 : i32
    return %arg0, %c0_i32, %c0_i32_0 : i32, i32, i32
  }
}

</mosaic_0001>

<llo_original>
// kernel: encoder_forward.1
$region0: #{encoder_forward.1}
  #allocation0 [shape = 'u32[]', space=smem, size = 0x4, offset = 0x4, fixed_abs, tag = 'smem constant byte address 0x4 - core index']
  #allocation1 [shape = 'u32[144,128]{1,0:T(1,128)}', space=vmem, size = 0x12000, scoped, tag = 'internal scratch']
  %s0 = inlined_call_operand.vmem [shape: f32[2,32,40], index: 0, kind: input, shape index: {}]
  %s1 = inlined_call_operand.vmem [shape: bf16[680,128], index: 1, kind: input, shape index: {}]
  %s2 = inlined_call_operand.vmem [shape: f32[32,128], index: 2, kind: input, shape index: {}]
  %s3 = inlined_call_operand.vmem [shape: f32[256,256], index: 3, kind: input, shape index: {}]
  %s4 = inlined_call_operand.vmem [shape: f32[2,32,128], index: 4, kind: output, shape index: {}]
  %s5 = sld [smem:[#allocation0]]
  $region26: #{encoder_forward.1} parent=0
    _
  %s7 = ssub.s32 1, %s5
  %s8 = scalar_select 0, %s7, %s5
  // Predicated region
  $region2: #{encoder_forward.1} parent=0 // pred_check
    _
  $region3: #{encoder_forward.1} parent=0 // pred_check_branch
    %10 = sbr.rel (0) target = $region5
  $region4: #{encoder_forward.1} parent=0 // pred_region
    _
  $region5: #{encoder_forward.1} parent=0 // pred_fallthru
    _
  // Predicated region
  $region6: #{encoder_forward.1} parent=0 // pred_check
    _
  $region7: #{encoder_forward.1} parent=0 // pred_check_branch
    %12 = sbr.rel (0) target = $region9
  $region8: #{encoder_forward.1} parent=0 // pred_region
    _
  $region9: #{encoder_forward.1} parent=0 // pred_fallthru
    _
  // Predicated region
  $region10: #{encoder_forward.1} parent=0 // pred_check
    _
  $region11: #{encoder_forward.1} parent=0 // pred_check_branch
    %14 = sbr.rel (0) target = $region13
  $region12: #{encoder_forward.1} parent=0 // pred_region
    _
  $region13: #{encoder_forward.1} parent=0 // pred_fallthru
    _
  // Predicated region
  $region14: #{encoder_forward.1} parent=0 // pred_check
    _
  $region15: #{encoder_forward.1} parent=0 // pred_check_branch
    %16 = sbr.rel (0) target = $region17
  $region16: #{encoder_forward.1} parent=0 // pred_region
    _
  $region17: #{encoder_forward.1} parent=0 // pred_fallthru
    _
  %v18 = vld [vmem:[%s2] sm:$0xff]
  %v19 = vld [vmem:[%s2 + $0x8] sm:$0xff]
  %v20 = vld [vmem:[%s2 + $0x10] sm:$0xff]
  %v21 = vld [vmem:[%s2 + $0x18] sm:$0xff]
  %v22 = vld [vmem:[%s3] sm:$0xff]
  %v23 = vld [vmem:[%s3 + $0x8] sm:$0xff]
  %v24 = vld [vmem:[%s3 + $0x10] sm:$0xff]
  %v25 = vld [vmem:[%s3 + $0x18] sm:$0xff]
  %v26 = vld [vmem:[%s3 + $0x20] sm:$0xff]
  %v27 = vld [vmem:[%s3 + $0x28] sm:$0xff]
  %v28 = vld [vmem:[%s3 + $0x30] sm:$0xff]
  %v29 = vld [vmem:[%s3 + $0x38] sm:$0xff]
  %v30 = vld [vmem:[%s3 + $0x40] sm:$0xff]
  %v31 = vld [vmem:[%s3 + $0x48] sm:$0xff]
  %v32 = vld [vmem:[%s3 + $0x50] sm:$0xff]
  %v33 = vld [vmem:[%s3 + $0x58] sm:$0xff]
  %v34 = vld [vmem:[%s3 + $0x60] sm:$0xff]
  %v35 = vld [vmem:[%s3 + $0x68] sm:$0xff]
  %v36 = vld [vmem:[%s3 + $0x70] sm:$0xff]
  %v37 = vld [vmem:[%s3 + $0x78] sm:$0xff]
  %v38 = vld [vmem:[%s3 + $0x80] sm:$0xff]
  %v39 = vld [vmem:[%s3 + $0x88] sm:$0xff]
  %v40 = vld [vmem:[%s3 + $0x90] sm:$0xff]
  %v41 = vld [vmem:[%s3 + $0x98] sm:$0xff]
  %v42 = vld [vmem:[%s3 + $0xa0] sm:$0xff]
  %v43 = vld [vmem:[%s3 + $0xa8] sm:$0xff]
  %v44 = vld [vmem:[%s3 + $0xb0] sm:$0xff]
  %v45 = vld [vmem:[%s3 + $0xb8] sm:$0xff]
  %v46 = vld [vmem:[%s3 + $0xc0] sm:$0xff]
  %v47 = vld [vmem:[%s3 + $0xc8] sm:$0xff]
  %v48 = vld [vmem:[%s3 + $0xd0] sm:$0xff]
  %v49 = vld [vmem:[%s3 + $0xd8] sm:$0xff]
  %v50 = vld [vmem:[%s3 + $0xe0] sm:$0xff]
  %v51 = vld [vmem:[%s3 + $0xe8] sm:$0xff]
  %v52 = vld [vmem:[%s3 + $0xf0] sm:$0xff]
  %v53 = vld [vmem:[%s3 + $0xf8] sm:$0xff]
  %v54 = vld [vmem:[%s3 + $0x100] sm:$0xff]
  %v55 = vld [vmem:[%s3 + $0x108] sm:$0xff]
  %v56 = vld [vmem:[%s3 + $0x110] sm:$0xff]
  %v57 = vld [vmem:[%s3 + $0x118] sm:$0xff]
  %v58 = vld [vmem:[%s3 + $0x120] sm:$0xff]
  %v59 = vld [vmem:[%s3 + $0x128] sm:$0xff]
  %v60 = vld [vmem:[%s3 + $0x130] sm:$0xff]
  %v61 = vld [vmem:[%s3 + $0x138] sm:$0xff]
  %v62 = vld [vmem:[%s3 + $0x140] sm:$0xff]
  %v63 = vld [vmem:[%s3 + $0x148] sm:$0xff]
  %v64 = vld [vmem:[%s3 + $0x150] sm:$0xff]
  %v65 = vld [vmem:[%s3 + $0x158] sm:$0xff]
  %v66 = vld [vmem:[%s3 + $0x160] sm:$0xff]
  %v67 = vld [vmem:[%s3 + $0x168] sm:$0xff]
  %v68 = vld [vmem:[%s3 + $0x170] sm:$0xff]
  %v69 = vld [vmem:[%s3 + $0x178] sm:$0xff]
  %v70 = vld [vmem:[%s3 + $0x180] sm:$0xff]
  %v71 = vld [vmem:[%s3 + $0x188] sm:$0xff]
  %v72 = vld [vmem:[%s3 + $0x190] sm:$0xff]
  %v73 = vld [vmem:[%s3 + $0x198] sm:$0xff]
  %v74 = vld [vmem:[%s3 + $0x1a0] sm:$0xff]
  %v75 = vld [vmem:[%s3 + $0x1a8] sm:$0xff]
  %v76 = vld [vmem:[%s3 + $0x1b0] sm:$0xff]
  %v77 = vld [vmem:[%s3 + $0x1b8] sm:$0xff]
  %v78 = vld [vmem:[%s3 + $0x1c0] sm:$0xff]
  %v79 = vld [vmem:[%s3 + $0x1c8] sm:$0xff]
  %v80 = vld [vmem:[%s3 + $0x1d0] sm:$0xff]
  %v81 = vld [vmem:[%s3 + $0x1d8] sm:$0xff]
  %v82 = vld [vmem:[%s3 + $0x1e0] sm:$0xff]
  %v83 = vld [vmem:[%s3 + $0x1e8] sm:$0xff]
  %v84 = vld [vmem:[%s3 + $0x1f0] sm:$0xff]
  %v85 = vld [vmem:[%s3 + $0x1f8] sm:$0xff]
  %v86 = vld [vmem:[%s0] sm:$0xff]
  %v87 = vld [vmem:[%s0 + $0x8] sm:$0xff]
  %v88 = vld [vmem:[%s0 + $0x10] sm:$0xff]
  %v89 = vld [vmem:[%s0 + $0x18] sm:$0xff]
  %v90 = vld [vmem:[%s0 + $0x20] sm:$0xff]
  %v91 = vld [vmem:[%s0 + $0x28] sm:$0xff]
  %v92 = vld [vmem:[%s0 + $0x30] sm:$0xff]
  %v93 = vld [vmem:[%s0 + $0x38] sm:$0xff]
  %vm94 = vcmask 326656
  %v95 = vsel %vm94, %v86, 0.0
  %96 = vadd.xlane.f32.xlu0 %v95
  %v97 = vpop.xlane.xlu0 %96
  %v98 = vsel %vm94, %v87, 0.0
  %99 = vadd.xlane.f32.xlu0 %v98
  %v100 = vpop.xlane.xlu0 %99
  %v101 = vsel %vm94, %v88, 0.0
  %102 = vadd.xlane.f32.xlu0 %v101
  %v103 = vpop.xlane.xlu0 %102
  %v104 = vsel %vm94, %v89, 0.0
  %105 = vadd.xlane.f32.xlu0 %v104
  %v106 = vpop.xlane.xlu0 %105
  %v107 = vsel %vm94, %v90, 0.0
  %108 = vadd.xlane.f32.xlu0 %v107
  %v109 = vpop.xlane.xlu0 %108
  %v110 = vsel %vm94, %v91, 0.0
  %111 = vadd.xlane.f32.xlu0 %v110
  %v112 = vpop.xlane.xlu0 %111
  %v113 = vsel %vm94, %v92, 0.0
  %114 = vadd.xlane.f32.xlu0 %v113
  %v115 = vpop.xlane.xlu0 %114
  %v116 = vsel %vm94, %v93, 0.0
  %117 = vadd.xlane.f32.xlu0 %v116
  %v118 = vpop.xlane.xlu0 %117
  %v119 = vrcp.pop 40.0
  %v120 = vmul.f32 %v97, %v119
  %v121 = vmul.f32 %v100, %v119
  %v122 = vmul.f32 %v103, %v119
  %v123 = vmul.f32 %v106, %v119
  %v124 = vmul.f32 %v109, %v119
  %v125 = vmul.f32 %v112, %v119
  %v126 = vmul.f32 %v115, %v119
  %v127 = vmul.f32 %v118, %v119
  %v128 = vsub.f32 %v86, %v120
  %v129 = vsub.f32 %v87, %v121
  %v130 = vsub.f32 %v88, %v122
  %v131 = vsub.f32 %v89, %v123
  %v132 = vsub.f32 %v90, %v124
  %v133 = vsub.f32 %v91, %v125
  %v134 = vsub.f32 %v92, %v126
  %v135 = vsub.f32 %v93, %v127
  %v136 = vmul.f32 %v128, %v128
  %v137 = vmul.f32 %v129, %v129
  %v138 = vmul.f32 %v130, %v130
  %v139 = vmul.f32 %v131, %v131
  %v140 = vmul.f32 %v132, %v132
  %v141 = vmul.f32 %v133, %v133
  %v142 = vmul.f32 %v134, %v134
  %v143 = vmul.f32 %v135, %v135
  %v144 = vsel %vm94, %v136, 0.0
  %145 = vadd.xlane.f32.xlu0 %v144
  %v146 = vpop.xlane.xlu0 %145
  %v147 = vsel %vm94, %v137, 0.0
  %148 = vadd.xlane.f32.xlu0 %v147
  %v149 = vpop.xlane.xlu0 %148
  %v150 = vsel %vm94, %v138, 0.0
  %151 = vadd.xlane.f32.xlu0 %v150
  %v152 = vpop.xlane.xlu0 %151
  %v153 = vsel %vm94, %v139, 0.0
  %154 = vadd.xlane.f32.xlu0 %v153
  %v155 = vpop.xlane.xlu0 %154
  %v156 = vsel %vm94, %v140, 0.0
  %157 = vadd.xlane.f32.xlu0 %v156
  %v158 = vpop.xlane.xlu0 %157
  %v159 = vsel %vm94, %v141, 0.0
  %160 = vadd.xlane.f32.xlu0 %v159
  %v161 = vpop.xlane.xlu0 %160
  %v162 = vsel %vm94, %v142, 0.0
  %163 = vadd.xlane.f32.xlu0 %v162
  %v164 = vpop.xlane.xlu0 %163
  %v165 = vsel %vm94, %v143, 0.0
  %166 = vadd.xlane.f32.xlu0 %v165
  %v167 = vpop.xlane.xlu0 %166
  %v168 = vmul.f32 %v146, %v119
  %v169 = vmul.f32 %v149, %v119
  %v170 = vmul.f32 %v152, %v119
  %v171 = vmul.f32 %v155, %v119
  %v172 = vmul.f32 %v158, %v119
  %v173 = vmul.f32 %v161, %v119
  %v174 = vmul.f32 %v164, %v119
  %v175 = vmul.f32 %v167, %v119
  %v176 = vadd.f32 %v168, 1e-05
  %v177 = vadd.f32 %v169, 1e-05
  %v178 = vadd.f32 %v170, 1e-05
  %v179 = vadd.f32 %v171, 1e-05
  %v180 = vadd.f32 %v172, 1e-05
  %v181 = vadd.f32 %v173, 1e-05
  %v182 = vadd.f32 %v174, 1e-05
  %v183 = vadd.f32 %v175, 1e-05
  %v184 = vrsqrt.pop %v176
  %v185 = vrsqrt.pop %v177
  %v186 = vrsqrt.pop %v178
  %v187 = vrsqrt.pop %v179
  %v188 = vrsqrt.pop %v180
  %v189 = vrsqrt.pop %v181
  %v190 = vrsqrt.pop %v182
  %v191 = vrsqrt.pop %v183
  %v192 = vmul.f32 %v128, %v184
  %v193 = vmul.f32 %v129, %v185
  %v194 = vmul.f32 %v130, %v186
  %v195 = vmul.f32 %v131, %v187
  %v196 = vmul.f32 %v132, %v188
  %v197 = vmul.f32 %v133, %v189
  %v198 = vmul.f32 %v134, %v190
  %v199 = vmul.f32 %v135, %v191
  %v200 = vlaneseq
  %v201 = vshrl.u32 %v200, 7
  %v202 = vsub.s32 0, %v201
  %v203 = vrot.slane %v18, %v202
  %v204 = vmul.f32 %v192, %v203
  %v205 = vmul.f32 %v193, %v203
  %v206 = vmul.f32 %v194, %v203
  %v207 = vmul.f32 %v195, %v203
  %v208 = vmul.f32 %v196, %v203
  %v209 = vmul.f32 %v197, %v203
  %v210 = vmul.f32 %v198, %v203
  %v211 = vmul.f32 %v199, %v203
  %v212 = vlaneseq
  %v213 = vshrl.u32 %v212, 7
  %v214 = vsub.s32 1, %v213
  %v215 = vrot.slane %v18, %v214
  %v216 = vadd.f32 %v204, %v215
  %v217 = vadd.f32 %v205, %v215
  %v218 = vadd.f32 %v206, %v215
  %v219 = vadd.f32 %v207, %v215
  %v220 = vadd.f32 %v208, %v215
  %v221 = vadd.f32 %v209, %v215
  %v222 = vadd.f32 %v210, %v215
  %v223 = vadd.f32 %v211, %v215
  %v224 = vpack.c.bf16 %v217, %v216
  %v225 = vpack.c.bf16 %v219, %v218
  %v226 = vpack.c.bf16 %v221, %v220
  %v227 = vpack.c.bf16 %v223, %v222
  %v228 = vld [vmem:[%s1] sm:$0xf]
  %v229 = vld [vmem:[%s1 + $0x4] sm:$0xf]
  %v230 = vld [vmem:[%s1 + $0x8] sm:$0xf]
  %v231 = vld [vmem:[%s1 + $0xc] sm:$0xf]
  %v232 = vld [vmem:[%s1 + $0x10] sm:$0xf]
  %v238 = vunpack.c.l.b16 %v228
  %v239 = vunpack.c.l.b16 %v229
  %v240 = vunpack.c.l.b16 %v230
  %v241 = vunpack.c.l.b16 %v231
  %v242 = vunpack.c.l.b16 %v232
  %v243 = vpack.c.b16 %v239, %v238
  %v244 = vpack.c.b16 %v241, %v240
  %v245 = vpack.c.b16 %v242, %v242
  %v249 = vsel %vm94, %v224, 0
  %v252 = vsel %vm94, %v225, 0
  %v255 = vsel %vm94, %v226, 0
  %v258 = vsel %vm94, %v227, 0
  %vm260 = vcmask 1043456
  %v262 = vsel %vm260, %v245, 0
  %264 = vmatprep.subr.bf16.mxu0 0
  %265 = vmatpush1.bf16.msra.mxu0 0
  %266 = vmatprep.subr.bf16.mxu0 0
  %267 = vmatpush1.bf16.msra.mxu0 0
  %268 = vmatprep.subr.bf16.mxu0 0
  %269 = vmatpush1.bf16.msra.mxu0 0
  %270 = vmatprep.subr.bf16.mxu0 0
  %271 = vmatpush1.bf16.msra.mxu0 0
  %272 = vmatprep.subr.bf16.mxu0 0
  %273 = vmatpush1.bf16.msra.mxu0 0
  %274 = vmatprep.subr.bf16.mxu0 0
  %275 = vmatpush1.bf16.msra.mxu0 %v262
  %276 = vmatprep.subr.bf16.mxu0 0
  %277 = vmatpush1.bf16.msra.mxu0 %v244
  %278 = vmatprep.subr.bf16.mxu0 0
  %279 = vmatpush1.bf16.msra.mxu0 %v243
  %280 = vmatprep.subr.bf16.mxu0 0
  %281 = vmatpush2.bf16.msra.mxu0 0
  %282 = vmatprep.subr.bf16.mxu0 0
  %283 = vmatpush2.bf16.msra.mxu0 0
  %284 = vmatprep.subr.bf16.mxu0 0
  %285 = vmatpush2.bf16.msra.mxu0 0
  %286 = vmatprep.subr.bf16.mxu0 0
  %287 = vmatpush2.bf16.msra.mxu0 0
  %288 = vmatprep.subr.bf16.mxu0 0
  %289 = vmatpush2.bf16.msra.mxu0 0
  %290 = vmatprep.subr.bf16.mxu0 0
  %291 = vmatpush2.bf16.msra.mxu0 0
  %292 = vmatprep.subr.bf16.mxu0 0
  %293 = vmatpush2.bf16.msra.mxu0 0
  %294 = vmatprep.subr.bf16.mxu0 0
  %295 = vmatpush2.bf16.msra.mxu0 0
  %296 = vmatprep.mubr.bf16.mxu0 0
  %297 = vmatmul.mubr.bf16.gmra.mxu0 %v249
  %v298 = vpop.f32.mrf.mxu0
  %v299 = vadd.f32 0.0, %v298
  %v300 = vpop.f32.mrf.mxu0
  %v301 = vpop.f32.mrf.mxu0
  %v302 = vadd.f32 0.0, %v301
  %v303 = vpop.f32.mrf.mxu0
  %304 = vmatprep.mubr.bf16.mxu0 0
  %305 = vmatmul.mubr.bf16.gmra.mxu0 %v252
  %v306 = vpop.f32.mrf.mxu0
  %v307 = vadd.f32 0.0, %v306
  %v308 = vpop.f32.mrf.mxu0
  %v309 = vpop.f32.mrf.mxu0
  %v310 = vadd.f32 0.0, %v309
  %v311 = vpop.f32.mrf.mxu0
  %312 = vmatprep.mubr.bf16.mxu0 0
  %313 = vmatmul.mubr.bf16.gmra.mxu0 %v255
  %v314 = vpop.f32.mrf.mxu0
  %v315 = vadd.f32 0.0, %v314
  %v316 = vpop.f32.mrf.mxu0
  %v317 = vpop.f32.mrf.mxu0
  %v318 = vadd.f32 0.0, %v317
  %v319 = vpop.f32.mrf.mxu0
  %320 = vmatprep.mubr.bf16.mxu0 0
  %321 = vmatmul.mubr.bf16.gmra.mxu0 %v258
  %v322 = vpop.f32.mrf.mxu0
  %v323 = vadd.f32 0.0, %v322
  %v324 = vpop.f32.mrf.mxu0
  %v325 = vpop.f32.mrf.mxu0
  %v326 = vadd.f32 0.0, %v325
  %v327 = vpop.f32.mrf.mxu0
  %328 = vdwg.mxu0
  %337 = vrot.lane.b32.xlu0 %v299, 118
  %v338 = vpop.permute.xlu0 %337
  %339 = vrot.lane.b32.xlu0 %v302, 118
  %v340 = vpop.permute.xlu0 %339
  %341 = vrot.lane.b32.xlu0 %v307, 118
  %v342 = vpop.permute.xlu0 %341
  %343 = vrot.lane.b32.xlu0 %v310, 118
  %v344 = vpop.permute.xlu0 %343
  %345 = vrot.lane.b32.xlu0 %v315, 118
  %v346 = vpop.permute.xlu0 %345
  %347 = vrot.lane.b32.xlu0 %v318, 118
  %v348 = vpop.permute.xlu0 %347
  %349 = vrot.lane.b32.xlu0 %v323, 118
  %v350 = vpop.permute.xlu0 %349
  %351 = vrot.lane.b32.xlu0 %v326, 118
  %v352 = vpop.permute.xlu0 %351
  %361 = vrot.lane.b32.xlu0 %v299, 108
  %v362 = vpop.permute.xlu0 %361
  %363 = vrot.lane.b32.xlu0 %v302, 108
  %v364 = vpop.permute.xlu0 %363
  %365 = vrot.lane.b32.xlu0 %v307, 108
  %v366 = vpop.permute.xlu0 %365
  %367 = vrot.lane.b32.xlu0 %v310, 108
  %v368 = vpop.permute.xlu0 %367
  %369 = vrot.lane.b32.xlu0 %v315, 108
  %v370 = vpop.permute.xlu0 %369
  %371 = vrot.lane.b32.xlu0 %v318, 108
  %v372 = vpop.permute.xlu0 %371
  %373 = vrot.lane.b32.xlu0 %v323, 108
  %v374 = vpop.permute.xlu0 %373
  %375 = vrot.lane.b32.xlu0 %v326, 108
  %v376 = vpop.permute.xlu0 %375
  %385 = vrot.lane.b32.xlu0 %v299, 98
  %v386 = vpop.permute.xlu0 %385
  %387 = vrot.lane.b32.xlu0 %v302, 98
  %v388 = vpop.permute.xlu0 %387
  %389 = vrot.lane.b32.xlu0 %v307, 98
  %v390 = vpop.permute.xlu0 %389
  %391 = vrot.lane.b32.xlu0 %v310, 98
  %v392 = vpop.permute.xlu0 %391
  %393 = vrot.lane.b32.xlu0 %v315, 98
  %v394 = vpop.permute.xlu0 %393
  %395 = vrot.lane.b32.xlu0 %v318, 98
  %v396 = vpop.permute.xlu0 %395
  %397 = vrot.lane.b32.xlu0 %v323, 98
  %v398 = vpop.permute.xlu0 %397
  %399 = vrot.lane.b32.xlu0 %v326, 98
  %v400 = vpop.permute.xlu0 %399
  %v409 = vpack.c.bf16 %v302, %v299
  %v410 = vpack.c.bf16 %v310, %v307
  %v411 = vpack.c.bf16 %v318, %v315
  %v412 = vpack.c.bf16 %v326, %v323
  %v413 = vpack.c.bf16 %v340, %v338
  %v414 = vpack.c.bf16 %v344, %v342
  %v415 = vpack.c.bf16 %v348, %v346
  %v416 = vpack.c.bf16 %v352, %v350
  %v417 = vpack.c.bf16 %v364, %v362
  %v418 = vpack.c.bf16 %v368, %v366
  %v419 = vpack.c.bf16 %v372, %v370
  %v420 = vpack.c.bf16 %v376, %v374
  %v421 = vpack.c.bf16 %v388, %v386
  %v422 = vpack.c.bf16 %v392, %v390
  %v423 = vpack.c.bf16 %v396, %v394
  %v424 = vpack.c.bf16 %v400, %v398
  %441 = vrot.lane.b32.xlu0 %v409, 88
  %v442 = vpop.permute.xlu0 %441
  %443 = vrot.lane.b32.xlu0 %v410, 88
  %v444 = vpop.permute.xlu0 %443
  %445 = vrot.lane.b32.xlu0 %v411, 88
  %v446 = vpop.permute.xlu0 %445
  %447 = vrot.lane.b32.xlu0 %v412, 88
  %v448 = vpop.permute.xlu0 %447
  %449 = vrot.lane.b32.xlu0 %v413, 88
  %v450 = vpop.permute.xlu0 %449
  %451 = vrot.lane.b32.xlu0 %v414, 88
  %v452 = vpop.permute.xlu0 %451
  %453 = vrot.lane.b32.xlu0 %v415, 88
  %v454 = vpop.permute.xlu0 %453
  %455 = vrot.lane.b32.xlu0 %v416, 88
  %v456 = vpop.permute.xlu0 %455
  %457 = vrot.lane.b32.xlu0 %v417, 88
  %v458 = vpop.permute.xlu0 %457
  %459 = vrot.lane.b32.xlu0 %v418, 88
  %v460 = vpop.permute.xlu0 %459
  %461 = vrot.lane.b32.xlu0 %v419, 88
  %v462 = vpop.permute.xlu0 %461
  %463 = vrot.lane.b32.xlu0 %v420, 88
  %v464 = vpop.permute.xlu0 %463
  %465 = vrot.lane.b32.xlu0 %v421, 88
  %v466 = vpop.permute.xlu0 %465
  %467 = vrot.lane.b32.xlu0 %v422, 88
  %v468 = vpop.permute.xlu0 %467
  %469 = vrot.lane.b32.xlu0 %v423, 88
  %v470 = vpop.permute.xlu0 %469
  %471 = vrot.lane.b32.xlu0 %v424, 88
  %v472 = vpop.permute.xlu0 %471
  %vm473 = vcmask 80896
  %v475 = vsel %vm473, %v442, 0
  %v478 = vsel %vm473, %v444, 0
  %v481 = vsel %vm473, %v446, 0
  %v484 = vsel %vm473, %v448, 0
  %v487 = vsel %vm473, %v450, 0
  %v490 = vsel %vm473, %v452, 0
  %v493 = vsel %vm473, %v454, 0
  %v496 = vsel %vm473, %v456, 0
  %v499 = vsel %vm473, %v458, 0
  %v502 = vsel %vm473, %v460, 0
  %v505 = vsel %vm473, %v462, 0
  %v508 = vsel %vm473, %v464, 0
  %v511 = vsel %vm473, %v466, 0
  %v514 = vsel %vm473, %v468, 0
  %v517 = vsel %vm473, %v470, 0
  %v520 = vsel %vm473, %v472, 0
  %v523 = vsel %vm473, %v409, 0
  %v526 = vsel %vm473, %v410, 0
  %v529 = vsel %vm473, %v411, 0
  %v532 = vsel %vm473, %v412, 0
  %v535 = vsel %vm473, %v413, 0
  %v538 = vsel %vm473, %v414, 0
  %v541 = vsel %vm473, %v415, 0
  %v544 = vsel %vm473, %v416, 0
  %v547 = vsel %vm473, %v417, 0
  %v550 = vsel %vm473, %v418, 0
  %v553 = vsel %vm473, %v419, 0
  %v556 = vsel %vm473, %v420, 0
  %v559 = vsel %vm473, %v421, 0
  %v562 = vsel %vm473, %v422, 0
  %v565 = vsel %vm473, %v423, 0
  %v568 = vsel %vm473, %v424, 0
  %570 = vmatprep.subr.bf16.mxu0 0
  %571 = vmatpush1.bf16.xpose.msra.mxu0 %v544
  %572 = vmatprep.subr.bf16.mxu0 0
  %573 = vmatpush1.bf16.xpose.msra.mxu0 %v541
  %574 = vmatprep.subr.bf16.mxu0 0
  %575 = vmatpush1.bf16.xpose.msra.mxu0 %v538
  %576 = vmatprep.subr.bf16.mxu0 0
  %577 = vmatpush1.bf16.xpose.msra.mxu0 %v535
  %578 = vmatprep.subr.bf16.mxu0 0
  %579 = vmatpush1.bf16.xpose.msra.mxu0 %v532
  %580 = vmatprep.subr.bf16.mxu0 0
  %581 = vmatpush1.bf16.xpose.msra.mxu0 %v529
  %582 = vmatprep.subr.bf16.mxu0 0
  %583 = vmatpush1.bf16.xpose.msra.mxu0 %v526
  %584 = vmatprep.subr.bf16.mxu0 0
  %585 = vmatpush1.bf16.xpose.msra.mxu0 %v523
  %586 = vmatprep.subr.bf16.mxu0 0
  %587 = vmatpush2.bf16.xpose.msra.mxu0 %v568
  %588 = vmatprep.subr.bf16.mxu0 0
  %589 = vmatpush2.bf16.xpose.msra.mxu0 %v565
  %590 = vmatprep.subr.bf16.mxu0 0
  %591 = vmatpush2.bf16.xpose.msra.mxu0 %v562
  %592 = vmatprep.subr.bf16.mxu0 0
  %593 = vmatpush2.bf16.xpose.msra.mxu0 %v559
  %594 = vmatprep.subr.bf16.mxu0 0
  %595 = vmatpush2.bf16.xpose.msra.mxu0 %v556
  %596 = vmatprep.subr.bf16.mxu0 0
  %597 = vmatpush2.bf16.xpose.msra.mxu0 %v553
  %598 = vmatprep.subr.bf16.mxu0 0
  %599 = vmatpush2.bf16.xpose.msra.mxu0 %v550
  %600 = vmatprep.subr.bf16.mxu0 0
  %601 = vmatpush2.bf16.xpose.msra.mxu0 %v547
  %602 = vmatprep.mubr.bf16.mxu0 0
  %603 = vmatmul.mubr.bf16.gmra.mxu0 %v475
  %v604 = vpop.f32.mrf.mxu0
  %v605 = vadd.f32 %v22, %v604
  %v606 = vpop.f32.mrf.mxu0
  %v607 = vadd.f32 %v23, %v606
  %v608 = vpop.f32.mrf.mxu0
  %v609 = vadd.f32 %v24, %v608
  %v610 = vpop.f32.mrf.mxu0
  %v611 = vadd.f32 %v25, %v610
  %612 = vmatprep.mubr.bf16.mxu0 0
  %613 = vmatmul.mubr.bf16.gmra.mxu0 %v478
  %v614 = vpop.f32.mrf.mxu0
  %v615 = vadd.f32 %v26, %v614
  %v616 = vpop.f32.mrf.mxu0
  %v617 = vadd.f32 %v27, %v616
  %v618 = vpop.f32.mrf.mxu0
  %v619 = vadd.f32 %v28, %v618
  %v620 = vpop.f32.mrf.mxu0
  %v621 = vadd.f32 %v29, %v620
  %622 = vmatprep.mubr.bf16.mxu0 0
  %623 = vmatmul.mubr.bf16.gmra.mxu0 %v481
  %v624 = vpop.f32.mrf.mxu0
  %v625 = vadd.f32 %v30, %v624
  %v626 = vpop.f32.mrf.mxu0
  %v627 = vadd.f32 %v31, %v626
  %v628 = vpop.f32.mrf.mxu0
  %v629 = vadd.f32 %v32, %v628
  %v630 = vpop.f32.mrf.mxu0
  %v631 = vadd.f32 %v33, %v630
  %632 = vmatprep.mubr.bf16.mxu0 0
  %633 = vmatmul.mubr.bf16.gmra.mxu0 %v484
  %v634 = vpop.f32.mrf.mxu0
  %v635 = vadd.f32 %v34, %v634
  %v636 = vpop.f32.mrf.mxu0
  %v637 = vadd.f32 %v35, %v636
  %v638 = vpop.f32.mrf.mxu0
  %v639 = vadd.f32 %v36, %v638
  %v640 = vpop.f32.mrf.mxu0
  %v641 = vadd.f32 %v37, %v640
  %642 = vmatprep.mubr.bf16.mxu0 0
  %643 = vmatmul.mubr.bf16.gmra.mxu0 %v487
  %v644 = vpop.f32.mrf.mxu0
  %v645 = vadd.f32 %v38, %v644
  %v646 = vpop.f32.mrf.mxu0
  %v647 = vadd.f32 %v39, %v646
  %v648 = vpop.f32.mrf.mxu0
  %v649 = vadd.f32 %v40, %v648
  %v650 = vpop.f32.mrf.mxu0
  %v651 = vadd.f32 %v41, %v650
  %652 = vmatprep.mubr.bf16.mxu0 0
  %653 = vmatmul.mubr.bf16.gmra.mxu0 %v490
  %v654 = vpop.f32.mrf.mxu0
  %v655 = vadd.f32 %v42, %v654
  %v656 = vpop.f32.mrf.mxu0
  %v657 = vadd.f32 %v43, %v656
  %v658 = vpop.f32.mrf.mxu0
  %v659 = vadd.f32 %v44, %v658
  %v660 = vpop.f32.mrf.mxu0
  %v661 = vadd.f32 %v45, %v660
  %662 = vmatprep.mubr.bf16.mxu0 0
  %663 = vmatmul.mubr.bf16.gmra.mxu0 %v493
  %v664 = vpop.f32.mrf.mxu0
  %v665 = vadd.f32 %v46, %v664
  %v666 = vpop.f32.mrf.mxu0
  %v667 = vadd.f32 %v47, %v666
  %v668 = vpop.f32.mrf.mxu0
  %v669 = vadd.f32 %v48, %v668
  %v670 = vpop.f32.mrf.mxu0
  %v671 = vadd.f32 %v49, %v670
  %672 = vmatprep.mubr.bf16.mxu0 0
  %673 = vmatmul.mubr.bf16.gmra.mxu0 %v496
  %v674 = vpop.f32.mrf.mxu0
  %v675 = vadd.f32 %v50, %v674
  %v676 = vpop.f32.mrf.mxu0
  %v677 = vadd.f32 %v51, %v676
  %v678 = vpop.f32.mrf.mxu0
  %v679 = vadd.f32 %v52, %v678
  %v680 = vpop.f32.mrf.mxu0
  %v681 = vadd.f32 %v53, %v680
  %682 = vmatprep.mubr.bf16.mxu0 0
  %683 = vmatmul.mubr.bf16.gmra.mxu0 %v499
  %v684 = vpop.f32.mrf.mxu0
  %v685 = vadd.f32 %v54, %v684
  %v686 = vpop.f32.mrf.mxu0
  %v687 = vadd.f32 %v55, %v686
  %v688 = vpop.f32.mrf.mxu0
  %v689 = vadd.f32 %v56, %v688
  %v690 = vpop.f32.mrf.mxu0
  %v691 = vadd.f32 %v57, %v690
  %692 = vmatprep.mubr.bf16.mxu0 0
  %693 = vmatmul.mubr.bf16.gmra.mxu0 %v502
  %v694 = vpop.f32.mrf.mxu0
  %v695 = vadd.f32 %v58, %v694
  %v696 = vpop.f32.mrf.mxu0
  %v697 = vadd.f32 %v59, %v696
  %v698 = vpop.f32.mrf.mxu0
  %v699 = vadd.f32 %v60, %v698
  %v700 = vpop.f32.mrf.mxu0
  %v701 = vadd.f32 %v61, %v700
  %702 = vmatprep.mubr.bf16.mxu0 0
  %703 = vmatmul.mubr.bf16.gmra.mxu0 %v505
  %v704 = vpop.f32.mrf.mxu0
  %v705 = vadd.f32 %v62, %v704
  %v706 = vpop.f32.mrf.mxu0
  %v707 = vadd.f32 %v63, %v706
  %v708 = vpop.f32.mrf.mxu0
  %v709 = vadd.f32 %v64, %v708
  %v710 = vpop.f32.mrf.mxu0
  %v711 = vadd.f32 %v65, %v710
  %712 = vmatprep.mubr.bf16.mxu0 0
  %713 = vmatmul.mubr.bf16.gmra.mxu0 %v508
  %v714 = vpop.f32.mrf.mxu0
  %v715 = vadd.f32 %v66, %v714
  %v716 = vpop.f32.mrf.mxu0
  %v717 = vadd.f32 %v67, %v716
  %v718 = vpop.f32.mrf.mxu0
  %v719 = vadd.f32 %v68, %v718
  %v720 = vpop.f32.mrf.mxu0
  %v721 = vadd.f32 %v69, %v720
  %722 = vmatprep.mubr.bf16.mxu0 0
  %723 = vmatmul.mubr.bf16.gmra.mxu0 %v511
  %v724 = vpop.f32.mrf.mxu0
  %v725 = vadd.f32 %v70, %v724
  %v726 = vpop.f32.mrf.mxu0
  %v727 = vadd.f32 %v71, %v726
  %v728 = vpop.f32.mrf.mxu0
  %v729 = vadd.f32 %v72, %v728
  %v730 = vpop.f32.mrf.mxu0
  %v731 = vadd.f32 %v73, %v730
  %732 = vmatprep.mubr.bf16.mxu0 0
  %733 = vmatmul.mubr.bf16.gmra.mxu0 %v514
  %v734 = vpop.f32.mrf.mxu0
  %v735 = vadd.f32 %v74, %v734
  %v736 = vpop.f32.mrf.mxu0
  %v737 = vadd.f32 %v75, %v736
  %v738 = vpop.f32.mrf.mxu0
  %v739 = vadd.f32 %v76, %v738
  %v740 = vpop.f32.mrf.mxu0
  %v741 = vadd.f32 %v77, %v740
  %742 = vmatprep.mubr.bf16.mxu0 0
  %743 = vmatmul.mubr.bf16.gmra.mxu0 %v517
  %v744 = vpop.f32.mrf.mxu0
  %v745 = vadd.f32 %v78, %v744
  %v746 = vpop.f32.mrf.mxu0
  %v747 = vadd.f32 %v79, %v746
  %v748 = vpop.f32.mrf.mxu0
  %v749 = vadd.f32 %v80, %v748
  %v750 = vpop.f32.mrf.mxu0
  %v751 = vadd.f32 %v81, %v750
  %752 = vmatprep.mubr.bf16.mxu0 0
  %753 = vmatmul.mubr.bf16.gmra.mxu0 %v520
  %v754 = vpop.f32.mrf.mxu0
  %v755 = vadd.f32 %v82, %v754
  %v756 = vpop.f32.mrf.mxu0
  %v757 = vadd.f32 %v83, %v756
  %v758 = vpop.f32.mrf.mxu0
  %v759 = vadd.f32 %v84, %v758
  %v760 = vpop.f32.mrf.mxu0
  %v761 = vadd.f32 %v85, %v760
  %762 = vdwg.mxu0
  %v763 = vmax.f32 %v605, %v607
  %764 = vmax.xlane.f32.xlu0 %v763
  %v765 = vpop.xlane.xlu0 %764
  %v766 = vmax.f32 %v609, %v611
  %767 = vmax.xlane.f32.xlu0 %v766
  %v768 = vpop.xlane.xlu0 %767
  %v769 = vmax.f32 %v615, %v617
  %770 = vmax.xlane.f32.xlu0 %v769
  %v771 = vpop.xlane.xlu0 %770
  %v772 = vmax.f32 %v619, %v621
  %773 = vmax.xlane.f32.xlu0 %v772
  %v774 = vpop.xlane.xlu0 %773
  %v775 = vmax.f32 %v625, %v627
  %776 = vmax.xlane.f32.xlu0 %v775
  %v777 = vpop.xlane.xlu0 %776
  %v778 = vmax.f32 %v629, %v631
  %779 = vmax.xlane.f32.xlu0 %v778
  %v780 = vpop.xlane.xlu0 %779
  %v781 = vmax.f32 %v635, %v637
  %782 = vmax.xlane.f32.xlu0 %v781
  %v783 = vpop.xlane.xlu0 %782
  %v784 = vmax.f32 %v639, %v641
  %785 = vmax.xlane.f32.xlu0 %v784
  %v786 = vpop.xlane.xlu0 %785
  %v787 = vmax.f32 %v645, %v647
  %788 = vmax.xlane.f32.xlu0 %v787
  %v789 = vpop.xlane.xlu0 %788
  %v790 = vmax.f32 %v649, %v651
  %791 = vmax.xlane.f32.xlu0 %v790
  %v792 = vpop.xlane.xlu0 %791
  %v793 = vmax.f32 %v655, %v657
  %794 = vmax.xlane.f32.xlu0 %v793
  %v795 = vpop.xlane.xlu0 %794
  %v796 = vmax.f32 %v659, %v661
  %797 = vmax.xlane.f32.xlu0 %v796
  %v798 = vpop.xlane.xlu0 %797
  %v799 = vmax.f32 %v665, %v667
  %800 = vmax.xlane.f32.xlu0 %v799
  %v801 = vpop.xlane.xlu0 %800
  %v802 = vmax.f32 %v669, %v671
  %803 = vmax.xlane.f32.xlu0 %v802
  %v804 = vpop.xlane.xlu0 %803
  %v805 = vmax.f32 %v675, %v677
  %806 = vmax.xlane.f32.xlu0 %v805
  %v807 = vpop.xlane.xlu0 %806
  %v808 = vmax.f32 %v679, %v681
  %809 = vmax.xlane.f32.xlu0 %v808
  %v810 = vpop.xlane.xlu0 %809
  %v811 = vmax.f32 %v685, %v687
  %812 = vmax.xlane.f32.xlu0 %v811
  %v813 = vpop.xlane.xlu0 %812
  %v814 = vmax.f32 %v689, %v691
  %815 = vmax.xlane.f32.xlu0 %v814
  %v816 = vpop.xlane.xlu0 %815
  %v817 = vmax.f32 %v695, %v697
  %818 = vmax.xlane.f32.xlu0 %v817
  %v819 = vpop.xlane.xlu0 %818
  %v820 = vmax.f32 %v699, %v701
  %821 = vmax.xlane.f32.xlu0 %v820
  %v822 = vpop.xlane.xlu0 %821
  %v823 = vmax.f32 %v705, %v707
  %824 = vmax.xlane.f32.xlu0 %v823
  %v825 = vpop.xlane.xlu0 %824
  %v826 = vmax.f32 %v709, %v711
  %827 = vmax.xlane.f32.xlu0 %v826
  %v828 = vpop.xlane.xlu0 %827
  %v829 = vmax.f32 %v715, %v717
  %830 = vmax.xlane.f32.xlu0 %v829
  %v831 = vpop.xlane.xlu0 %830
  %v832 = vmax.f32 %v719, %v721
  %833 = vmax.xlane.f32.xlu0 %v832
  %v834 = vpop.xlane.xlu0 %833
  %v835 = vmax.f32 %v725, %v727
  %836 = vmax.xlane.f32.xlu0 %v835
  %v837 = vpop.xlane.xlu0 %836
  %v838 = vmax.f32 %v729, %v731
  %839 = vmax.xlane.f32.xlu0 %v838
  %v840 = vpop.xlane.xlu0 %839
  %v841 = vmax.f32 %v735, %v737
  %842 = vmax.xlane.f32.xlu0 %v841
  %v843 = vpop.xlane.xlu0 %842
  %v844 = vmax.f32 %v739, %v741
  %845 = vmax.xlane.f32.xlu0 %v844
  %v846 = vpop.xlane.xlu0 %845
  %v847 = vmax.f32 %v745, %v747
  %848 = vmax.xlane.f32.xlu0 %v847
  %v849 = vpop.xlane.xlu0 %848
  %v850 = vmax.f32 %v749, %v751
  %851 = vmax.xlane.f32.xlu0 %v850
  %v852 = vpop.xlane.xlu0 %851
  %v853 = vmax.f32 %v755, %v757
  %854 = vmax.xlane.f32.xlu0 %v853
  %v855 = vpop.xlane.xlu0 %854
  %v856 = vmax.f32 %v759, %v761
  %857 = vmax.xlane.f32.xlu0 %v856
  %v858 = vpop.xlane.xlu0 %857
  %v859 = vsub.f32 %v605, %v765
  %v860 = vsub.f32 %v607, %v765
  %v861 = vsub.f32 %v609, %v768
  %v862 = vsub.f32 %v611, %v768
  %v863 = vsub.f32 %v615, %v771
  %v864 = vsub.f32 %v617, %v771
  %v865 = vsub.f32 %v619, %v774
  %v866 = vsub.f32 %v621, %v774
  %v867 = vsub.f32 %v625, %v777
  %v868 = vsub.f32 %v627, %v777
  %v869 = vsub.f32 %v629, %v780
  %v870 = vsub.f32 %v631, %v780
  %v871 = vsub.f32 %v635, %v783
  %v872 = vsub.f32 %v637, %v783
  %v873 = vsub.f32 %v639, %v786
  %v874 = vsub.f32 %v641, %v786
  %v875 = vsub.f32 %v645, %v789
  %v876 = vsub.f32 %v647, %v789
  %v877 = vsub.f32 %v649, %v792
  %v878 = vsub.f32 %v651, %v792
  %v879 = vsub.f32 %v655, %v795
  %v880 = vsub.f32 %v657, %v795
  %v881 = vsub.f32 %v659, %v798
  %v882 = vsub.f32 %v661, %v798
  %v883 = vsub.f32 %v665, %v801
  %v884 = vsub.f32 %v667, %v801
  %v885 = vsub.f32 %v669, %v804
  %v886 = vsub.f32 %v671, %v804
  %v887 = vsub.f32 %v675, %v807
  %v888 = vsub.f32 %v677, %v807
  %v889 = vsub.f32 %v679, %v810
  %v890 = vsub.f32 %v681, %v810
  %v891 = vsub.f32 %v685, %v813
  %v892 = vsub.f32 %v687, %v813
  %v893 = vsub.f32 %v689, %v816
  %v894 = vsub.f32 %v691, %v816
  %v895 = vsub.f32 %v695, %v819
  %v896 = vsub.f32 %v697, %v819
  %v897 = vsub.f32 %v699, %v822
  %v898 = vsub.f32 %v701, %v822
  %v899 = vsub.f32 %v705, %v825
  %v900 = vsub.f32 %v707, %v825
  %v901 = vsub.f32 %v709, %v828
  %v902 = vsub.f32 %v711, %v828
  %v903 = vsub.f32 %v715, %v831
  %v904 = vsub.f32 %v717, %v831
  %v905 = vsub.f32 %v719, %v834
  %v906 = vsub.f32 %v721, %v834
  %v907 = vsub.f32 %v725, %v837
  %v908 = vsub.f32 %v727, %v837
  %v909 = vsub.f32 %v729, %v840
  %v910 = vsub.f32 %v731, %v840
  %v911 = vsub.f32 %v735, %v843
  %v912 = vsub.f32 %v737, %v843
  %v913 = vsub.f32 %v739, %v846
  %v914 = vsub.f32 %v741, %v846
  %v915 = vsub.f32 %v745, %v849
  %v916 = vsub.f32 %v747, %v849
  %v917 = vsub.f32 %v749, %v852
  %v918 = vsub.f32 %v751, %v852
  %v919 = vsub.f32 %v755, %v855
  %v920 = vsub.f32 %v757, %v855
  %v921 = vsub.f32 %v759, %v858
  %v922 = vsub.f32 %v761, %v858
  %v923 = vmul.f32 %v859, 1.442695
  %v924 = vpow.pop %v923
  %v925 = vmul.f32 %v860, 1.442695
  %v926 = vpow.pop %v925
  %v927 = vmul.f32 %v861, 1.442695
  %v928 = vpow.pop %v927
  %v929 = vmul.f32 %v862, 1.442695
  %v930 = vpow.pop %v929
  %v931 = vmul.f32 %v863, 1.442695
  %v932 = vpow.pop %v931
  %v933 = vmul.f32 %v864, 1.442695
  %v934 = vpow.pop %v933
  %v935 = vmul.f32 %v865, 1.442695
  %v936 = vpow.pop %v935
  %v937 = vmul.f32 %v866, 1.442695
  %v938 = vpow.pop %v937
  %v939 = vmul.f32 %v867, 1.442695
  %v940 = vpow.pop %v939
  %v941 = vmul.f32 %v868, 1.442695
  %v942 = vpow.pop %v941
  %v943 = vmul.f32 %v869, 1.442695
  %v944 = vpow.pop %v943
  %v945 = vmul.f32 %v870, 1.442695
  %v946 = vpow.pop %v945
  %v947 = vmul.f32 %v871, 1.442695
  %v948 = vpow.pop %v947
  %v949 = vmul.f32 %v872, 1.442695
  %v950 = vpow.pop %v949
  %v951 = vmul.f32 %v873, 1.442695
  %v952 = vpow.pop %v951
  %v953 = vmul.f32 %v874, 1.442695
  %v954 = vpow.pop %v953
  %v955 = vmul.f32 %v875, 1.442695
  %v956 = vpow.pop %v955
  %v957 = vmul.f32 %v876, 1.442695
  %v958 = vpow.pop %v957
  %v959 = vmul.f32 %v877, 1.442695
  %v960 = vpow.pop %v959
  %v961 = vmul.f32 %v878, 1.442695
  %v962 = vpow.pop %v961
  %v963 = vmul.f32 %v879, 1.442695
  %v964 = vpow.pop %v963
  %v965 = vmul.f32 %v880, 1.442695
  %v966 = vpow.pop %v965
  %v967 = vmul.f32 %v881, 1.442695
  %v968 = vpow.pop %v967
  %v969 = vmul.f32 %v882, 1.442695
  %v970 = vpow.pop %v969
  %v971 = vmul.f32 %v883, 1.442695
  %v972 = vpow.pop %v971
  %v973 = vmul.f32 %v884, 1.442695
  %v974 = vpow.pop %v973
  %v975 = vmul.f32 %v885, 1.442695
  %v976 = vpow.pop %v975
  %v977 = vmul.f32 %v886, 1.442695
  %v978 = vpow.pop %v977
  %v979 = vmul.f32 %v887, 1.442695
  %v980 = vpow.pop %v979
  %v981 = vmul.f32 %v888, 1.442695
  %v982 = vpow.pop %v981
  %v983 = vmul.f32 %v889, 1.442695
  %v984 = vpow.pop %v983
  %v985 = vmul.f32 %v890, 1.442695
  %v986 = vpow.pop %v985
  %v987 = vmul.f32 %v891, 1.442695
  %v988 = vpow.pop %v987
  %v989 = vmul.f32 %v892, 1.442695
  %v990 = vpow.pop %v989
  %v991 = vmul.f32 %v893, 1.442695
  %v992 = vpow.pop %v991
  %v993 = vmul.f32 %v894, 1.442695
  %v994 = vpow.pop %v993
  %v995 = vmul.f32 %v895, 1.442695
  %v996 = vpow.pop %v995
  %v997 = vmul.f32 %v896, 1.442695
  %v998 = vpow.pop %v997
  %v999 = vmul.f32 %v897, 1.442695
  %v1000 = vpow.pop %v999
  %v1001 = vmul.f32 %v898, 1.442695
  %v1002 = vpow.pop %v1001
  %v1003 = vmul.f32 %v899, 1.442695
  %v1004 = vpow.pop %v1003
  %v1005 = vmul.f32 %v900, 1.442695
  %v1006 = vpow.pop %v1005
  %v1007 = vmul.f32 %v901, 1.442695
  %v1008 = vpow.pop %v1007
  %v1009 = vmul.f32 %v902, 1.442695
  %v1010 = vpow.pop %v1009
  %v1011 = vmul.f32 %v903, 1.442695
  %v1012 = vpow.pop %v1011
  %v1013 = vmul.f32 %v904, 1.442695
  %v1014 = vpow.pop %v1013
  %v1015 = vmul.f32 %v905, 1.442695
  %v1016 = vpow.pop %v1015
  %v1017 = vmul.f32 %v906, 1.442695
  %v1018 = vpow.pop %v1017
  %v1019 = vmul.f32 %v907, 1.442695
  %v1020 = vpow.pop %v1019
  %v1021 = vmul.f32 %v908, 1.442695
  %v1022 = vpow.pop %v1021
  %v1023 = vmul.f32 %v909, 1.442695
  %v1024 = vpow.pop %v1023
  %v1025 = vmul.f32 %v910, 1.442695
  %v1026 = vpow.pop %v1025
  %v1027 = vmul.f32 %v911, 1.442695
  %v1028 = vpow.pop %v1027
  %v1029 = vmul.f32 %v912, 1.442695
  %v1030 = vpow.pop %v1029
  %v1031 = vmul.f32 %v913, 1.442695
  %v1032 = vpow.pop %v1031
  %v1033 = vmul.f32 %v914, 1.442695
  %v1034 = vpow.pop %v1033
  %v1035 = vmul.f32 %v915, 1.442695
  %v1036 = vpow.pop %v1035
  %v1037 = vmul.f32 %v916, 1.442695
  %v1038 = vpow.pop %v1037
  %v1039 = vmul.f32 %v917, 1.442695
  %v1040 = vpow.pop %v1039
  %v1041 = vmul.f32 %v918, 1.442695
  %v1042 = vpow.pop %v1041
  %v1043 = vmul.f32 %v919, 1.442695
  %v1044 = vpow.pop %v1043
  %v1045 = vmul.f32 %v920, 1.442695
  %v1046 = vpow.pop %v1045
  %v1047 = vmul.f32 %v921, 1.442695
  %v1048 = vpow.pop %v1047
  %v1049 = vmul.f32 %v922, 1.442695
  %v1050 = vpow.pop %v1049
  %v1051 = vadd.f32 %v924, %v926
  %1052 = vadd.xlane.f32.xlu0 %v1051
  %v1053 = vpop.xlane.xlu0 %1052
  %v1054 = vadd.f32 %v928, %v930
  %1055 = vadd.xlane.f32.xlu0 %v1054
  %v1056 = vpop.xlane.xlu0 %1055
  %v1057 = vadd.f32 %v932, %v934
  %1058 = vadd.xlane.f32.xlu0 %v1057
  %v1059 = vpop.xlane.xlu0 %1058
  %v1060 = vadd.f32 %v936, %v938
  %1061 = vadd.xlane.f32.xlu0 %v1060
  %v1062 = vpop.xlane.xlu0 %1061
  %v1063 = vadd.f32 %v940, %v942
  %1064 = vadd.xlane.f32.xlu0 %v1063
  %v1065 = vpop.xlane.xlu0 %1064
  %v1066 = vadd.f32 %v944, %v946
  %1067 = vadd.xlane.f32.xlu0 %v1066
  %v1068 = vpop.xlane.xlu0 %1067
  %v1069 = vadd.f32 %v948, %v950
  %1070 = vadd.xlane.f32.xlu0 %v1069
  %v1071 = vpop.xlane.xlu0 %1070
  %v1072 = vadd.f32 %v952, %v954
  %1073 = vadd.xlane.f32.xlu0 %v1072
  %v1074 = vpop.xlane.xlu0 %1073
  %v1075 = vadd.f32 %v956, %v958
  %1076 = vadd.xlane.f32.xlu0 %v1075
  %v1077 = vpop.xlane.xlu0 %1076
  %v1078 = vadd.f32 %v960, %v962
  %1079 = vadd.xlane.f32.xlu0 %v1078
  %v1080 = vpop.xlane.xlu0 %1079
  %v1081 = vadd.f32 %v964, %v966
  %1082 = vadd.xlane.f32.xlu0 %v1081
  %v1083 = vpop.xlane.xlu0 %1082
  %v1084 = vadd.f32 %v968, %v970
  %1085 = vadd.xlane.f32.xlu0 %v1084
  %v1086 = vpop.xlane.xlu0 %1085
  %v1087 = vadd.f32 %v972, %v974
  %1088 = vadd.xlane.f32.xlu0 %v1087
  %v1089 = vpop.xlane.xlu0 %1088
  %v1090 = vadd.f32 %v976, %v978
  %1091 = vadd.xlane.f32.xlu0 %v1090
  %v1092 = vpop.xlane.xlu0 %1091
  %v1093 = vadd.f32 %v980, %v982
  %1094 = vadd.xlane.f32.xlu0 %v1093
  %v1095 = vpop.xlane.xlu0 %1094
  %v1096 = vadd.f32 %v984, %v986
  %1097 = vadd.xlane.f32.xlu0 %v1096
  %v1098 = vpop.xlane.xlu0 %1097
  %v1099 = vadd.f32 %v988, %v990
  %1100 = vadd.xlane.f32.xlu0 %v1099
  %v1101 = vpop.xlane.xlu0 %1100
  %v1102 = vadd.f32 %v992, %v994
  %1103 = vadd.xlane.f32.xlu0 %v1102
  %v1104 = vpop.xlane.xlu0 %1103
  %v1105 = vadd.f32 %v996, %v998
  %1106 = vadd.xlane.f32.xlu0 %v1105
  %v1107 = vpop.xlane.xlu0 %1106
  %v1108 = vadd.f32 %v1000, %v1002
  %1109 = vadd.xlane.f32.xlu0 %v1108
  %v1110 = vpop.xlane.xlu0 %1109
  %v1111 = vadd.f32 %v1004, %v1006
  %1112 = vadd.xlane.f32.xlu0 %v1111
  %v1113 = vpop.xlane.xlu0 %1112
  %v1114 = vadd.f32 %v1008, %v1010
  %1115 = vadd.xlane.f32.xlu0 %v1114
  %v1116 = vpop.xlane.xlu0 %1115
  %v1117 = vadd.f32 %v1012, %v1014
  %1118 = vadd.xlane.f32.xlu0 %v1117
  %v1119 = vpop.xlane.xlu0 %1118
  %v1120 = vadd.f32 %v1016, %v1018
  %1121 = vadd.xlane.f32.xlu0 %v1120
  %v1122 = vpop.xlane.xlu0 %1121
  %v1123 = vadd.f32 %v1020, %v1022
  %1124 = vadd.xlane.f32.xlu0 %v1123
  %v1125 = vpop.xlane.xlu0 %1124
  %v1126 = vadd.f32 %v1024, %v1026
  %1127 = vadd.xlane.f32.xlu0 %v1126
  %v1128 = vpop.xlane.xlu0 %1127
  %v1129 = vadd.f32 %v1028, %v1030
  %1130 = vadd.xlane.f32.xlu0 %v1129
  %v1131 = vpop.xlane.xlu0 %1130
  %v1132 = vadd.f32 %v1032, %v1034
  %1133 = vadd.xlane.f32.xlu0 %v1132
  %v1134 = vpop.xlane.xlu0 %1133
  %v1135 = vadd.f32 %v1036, %v1038
  %1136 = vadd.xlane.f32.xlu0 %v1135
  %v1137 = vpop.xlane.xlu0 %1136
  %v1138 = vadd.f32 %v1040, %v1042
  %1139 = vadd.xlane.f32.xlu0 %v1138
  %v1140 = vpop.xlane.xlu0 %1139
  %v1141 = vadd.f32 %v1044, %v1046
  %1142 = vadd.xlane.f32.xlu0 %v1141
  %v1143 = vpop.xlane.xlu0 %1142
  %v1144 = vadd.f32 %v1048, %v1050
  %1145 = vadd.xlane.f32.xlu0 %v1144
  %v1146 = vpop.xlane.xlu0 %1145
  %v1147 = vrcp.pop %v1053
  %v1148 = vmul.f32 %v924, %v1147
  %v1149 = vmul.f32 %v926, %v1147
  %v1150 = vrcp.pop %v1056
  %v1151 = vmul.f32 %v928, %v1150
  %v1152 = vmul.f32 %v930, %v1150
  %v1153 = vrcp.pop %v1059
  %v1154 = vmul.f32 %v932, %v1153
  %v1155 = vmul.f32 %v934, %v1153
  %v1156 = vrcp.pop %v1062
  %v1157 = vmul.f32 %v936, %v1156
  %v1158 = vmul.f32 %v938, %v1156
  %v1159 = vrcp.pop %v1065
  %v1160 = vmul.f32 %v940, %v1159
  %v1161 = vmul.f32 %v942, %v1159
  %v1162 = vrcp.pop %v1068
  %v1163 = vmul.f32 %v944, %v1162
  %v1164 = vmul.f32 %v946, %v1162
  %v1165 = vrcp.pop %v1071
  %v1166 = vmul.f32 %v948, %v1165
  %v1167 = vmul.f32 %v950, %v1165
  %v1168 = vrcp.pop %v1074
  %v1169 = vmul.f32 %v952, %v1168
  %v1170 = vmul.f32 %v954, %v1168
  %v1171 = vrcp.pop %v1077
  %v1172 = vmul.f32 %v956, %v1171
  %v1173 = vmul.f32 %v958, %v1171
  %v1174 = vrcp.pop %v1080
  %v1175 = vmul.f32 %v960, %v1174
  %v1176 = vmul.f32 %v962, %v1174
  %v1177 = vrcp.pop %v1083
  %v1178 = vmul.f32 %v964, %v1177
  %v1179 = vmul.f32 %v966, %v1177
  %v1180 = vrcp.pop %v1086
  %v1181 = vmul.f32 %v968, %v1180
  %v1182 = vmul.f32 %v970, %v1180
  %v1183 = vrcp.pop %v1089
  %v1184 = vmul.f32 %v972, %v1183
  %v1185 = vmul.f32 %v974, %v1183
  %v1186 = vrcp.pop %v1092
  %v1187 = vmul.f32 %v976, %v1186
  %v1188 = vmul.f32 %v978, %v1186
  %v1189 = vrcp.pop %v1095
  %v1190 = vmul.f32 %v980, %v1189
  %v1191 = vmul.f32 %v982, %v1189
  %v1192 = vrcp.pop %v1098
  %v1193 = vmul.f32 %v984, %v1192
  %v1194 = vmul.f32 %v986, %v1192
  %v1195 = vrcp.pop %v1101
  %v1196 = vmul.f32 %v988, %v1195
  %v1197 = vmul.f32 %v990, %v1195
  %v1198 = vrcp.pop %v1104
  %v1199 = vmul.f32 %v992, %v1198
  %v1200 = vmul.f32 %v994, %v1198
  %v1201 = vrcp.pop %v1107
  %v1202 = vmul.f32 %v996, %v1201
  %v1203 = vmul.f32 %v998, %v1201
  %v1204 = vrcp.pop %v1110
  %v1205 = vmul.f32 %v1000, %v1204
  %v1206 = vmul.f32 %v1002, %v1204
  %v1207 = vrcp.pop %v1113
  %v1208 = vmul.f32 %v1004, %v1207
  %v1209 = vmul.f32 %v1006, %v1207
  %v1210 = vrcp.pop %v1116
  %v1211 = vmul.f32 %v1008, %v1210
  %v1212 = vmul.f32 %v1010, %v1210
  %v1213 = vrcp.pop %v1119
  %v1214 = vmul.f32 %v1012, %v1213
  %v1215 = vmul.f32 %v1014, %v1213
  %v1216 = vrcp.pop %v1122
  %v1217 = vmul.f32 %v1016, %v1216
  %v1218 = vmul.f32 %v1018, %v1216
  %v1219 = vrcp.pop %v1125
  %v1220 = vmul.f32 %v1020, %v1219
  %v1221 = vmul.f32 %v1022, %v1219
  %v1222 = vrcp.pop %v1128
  %v1223 = vmul.f32 %v1024, %v1222
  %v1224 = vmul.f32 %v1026, %v1222
  %v1225 = vrcp.pop %v1131
  %v1226 = vmul.f32 %v1028, %v1225
  %v1227 = vmul.f32 %v1030, %v1225
  %v1228 = vrcp.pop %v1134
  %v1229 = vmul.f32 %v1032, %v1228
  %v1230 = vmul.f32 %v1034, %v1228
  %v1231 = vrcp.pop %v1137
  %v1232 = vmul.f32 %v1036, %v1231
  %v1233 = vmul.f32 %v1038, %v1231
  %v1234 = vrcp.pop %v1140
  %v1235 = vmul.f32 %v1040, %v1234
  %v1236 = vmul.f32 %v1042, %v1234
  %v1237 = vrcp.pop %v1143
  %v1238 = vmul.f32 %v1044, %v1237
  %v1239 = vmul.f32 %v1046, %v1237
  %v1240 = vrcp.pop %v1146
  %v1241 = vmul.f32 %v1048, %v1240
  %v1242 = vmul.f32 %v1050, %v1240
  %v1243 = vpack.c.bf16 %v1151, %v1148
  %v1244 = vpack.c.bf16 %v1152, %v1149
  %v1245 = vpack.c.bf16 %v1157, %v1154
  %v1246 = vpack.c.bf16 %v1158, %v1155
  %v1247 = vpack.c.bf16 %v1163, %v1160
  %v1248 = vpack.c.bf16 %v1164, %v1161
  %v1249 = vpack.c.bf16 %v1169, %v1166
  %v1250 = vpack.c.bf16 %v1170, %v1167
  %v1251 = vpack.c.bf16 %v1175, %v1172
  %v1252 = vpack.c.bf16 %v1176, %v1173
  %v1253 = vpack.c.bf16 %v1181, %v1178
  %v1254 = vpack.c.bf16 %v1182, %v1179
  %v1255 = vpack.c.bf16 %v1187, %v1184
  %v1256 = vpack.c.bf16 %v1188, %v1185
  %v1257 = vpack.c.bf16 %v1193, %v1190
  %v1258 = vpack.c.bf16 %v1194, %v1191
  %v1259 = vpack.c.bf16 %v1199, %v1196
  %v1260 = vpack.c.bf16 %v1200, %v1197
  %v1261 = vpack.c.bf16 %v1205, %v1202
  %v1262 = vpack.c.bf16 %v1206, %v1203
  %v1263 = vpack.c.bf16 %v1211, %v1208
  %v1264 = vpack.c.bf16 %v1212, %v1209
  %v1265 = vpack.c.bf16 %v1217, %v1214
  %v1266 = vpack.c.bf16 %v1218, %v1215
  %v1267 = vpack.c.bf16 %v1223, %v1220
  %v1268 = vpack.c.bf16 %v1224, %v1221
  %v1269 = vpack.c.bf16 %v1229, %v1226
  %v1270 = vpack.c.bf16 %v1230, %v1227
  %v1271 = vpack.c.bf16 %v1235, %v1232
  %v1272 = vpack.c.bf16 %v1236, %v1233
  %v1273 = vpack.c.bf16 %v1241, %v1238
  %v1274 = vpack.c.bf16 %v1242, %v1239
  %1275 = vrot.lane.b32.xlu0 %v409, 48
  %v1276 = vpop.permute.xlu0 %1275
  %1277 = vrot.lane.b32.xlu0 %v410, 48
  %v1278 = vpop.permute.xlu0 %1277
  %1279 = vrot.lane.b32.xlu0 %v411, 48
  %v1280 = vpop.permute.xlu0 %1279
  %1281 = vrot.lane.b32.xlu0 %v412, 48
  %v1282 = vpop.permute.xlu0 %1281
  %1283 = vrot.lane.b32.xlu0 %v413, 48
  %v1284 = vpop.permute.xlu0 %1283
  %1285 = vrot.lane.b32.xlu0 %v414, 48
  %v1286 = vpop.permute.xlu0 %1285
  %1287 = vrot.lane.b32.xlu0 %v415, 48
  %v1288 = vpop.permute.xlu0 %1287
  %1289 = vrot.lane.b32.xlu0 %v416, 48
  %v1290 = vpop.permute.xlu0 %1289
  %1291 = vrot.lane.b32.xlu0 %v417, 48
  %v1292 = vpop.permute.xlu0 %1291
  %1293 = vrot.lane.b32.xlu0 %v418, 48
  %v1294 = vpop.permute.xlu0 %1293
  %1295 = vrot.lane.b32.xlu0 %v419, 48
  %v1296 = vpop.permute.xlu0 %1295
  %1297 = vrot.lane.b32.xlu0 %v420, 48
  %v1298 = vpop.permute.xlu0 %1297
  %1299 = vrot.lane.b32.xlu0 %v421, 48
  %v1300 = vpop.permute.xlu0 %1299
  %1301 = vrot.lane.b32.xlu0 %v422, 48
  %v1302 = vpop.permute.xlu0 %1301
  %1303 = vrot.lane.b32.xlu0 %v423, 48
  %v1304 = vpop.permute.xlu0 %1303
  %1305 = vrot.lane.b32.xlu0 %v424, 48
  %v1306 = vpop.permute.xlu0 %1305
  %1323 = vmatprep.subr.bf16.mxu0 0
  %1324 = vmatpush1.bf16.msra.mxu0 %v1290
  %1325 = vmatprep.subr.bf16.mxu0 0
  %1326 = vmatpush1.bf16.msra.mxu0 %v1288
  %1327 = vmatprep.subr.bf16.mxu0 0
  %1328 = vmatpush1.bf16.msra.mxu0 %v1286
  %1329 = vmatprep.subr.bf16.mxu0 0
  %1330 = vmatpush1.bf16.msra.mxu0 %v1284
  %1331 = vmatprep.subr.bf16.mxu0 0
  %1332 = vmatpush1.bf16.msra.mxu0 %v1282
  %1333 = vmatprep.subr.bf16.mxu0 0
  %1334 = vmatpush1.bf16.msra.mxu0 %v1280
  %1335 = vmatprep.subr.bf16.mxu0 0
  %1336 = vmatpush1.bf16.msra.mxu0 %v1278
  %1337 = vmatprep.subr.bf16.mxu0 0
  %1338 = vmatpush1.bf16.msra.mxu0 %v1276
  %1339 = vmatprep.subr.bf16.mxu0 0
  %1340 = vmatpush2.bf16.msra.mxu0 %v1306
  %1341 = vmatprep.subr.bf16.mxu0 0
  %1342 = vmatpush2.bf16.msra.mxu0 %v1304
  %1343 = vmatprep.subr.bf16.mxu0 0
  %1344 = vmatpush2.bf16.msra.mxu0 %v1302
  %1345 = vmatprep.subr.bf16.mxu0 0
  %1346 = vmatpush2.bf16.msra.mxu0 %v1300
  %1347 = vmatprep.subr.bf16.mxu0 0
  %1348 = vmatpush2.bf16.msra.mxu0 %v1298
  %1349 = vmatprep.subr.bf16.mxu0 0
  %1350 = vmatpush2.bf16.msra.mxu0 %v1296
  %1351 = vmatprep.subr.bf16.mxu0 0
  %1352 = vmatpush2.bf16.msra.mxu0 %v1294
  %1353 = vmatprep.subr.bf16.mxu0 0
  %1354 = vmatpush2.bf16.msra.mxu0 %v1292
  %1355 = vmatprep.mubr.bf16.mxu0 %v1244
  %1356 = vmatmul.mubr.bf16.gmra.mxu0 %v1243
  %v1357 = vpop.f32.mrf.mxu0
  %v1358 = vadd.f32 0.0, %v1357
  %v1359 = vpop.f32.mrf.mxu0
  %v1360 = vpop.f32.mrf.mxu0
  %v1361 = vadd.f32 0.0, %v1360
  %v1362 = vpop.f32.mrf.mxu0
  %1363 = vmatprep.mubr.bf16.mxu0 %v1246
  %1364 = vmatmul.mubr.bf16.gmra.mxu0 %v1245
  %v1365 = vpop.f32.mrf.mxu0
  %v1366 = vadd.f32 0.0, %v1365
  %v1367 = vpop.f32.mrf.mxu0
  %v1368 = vpop.f32.mrf.mxu0
  %v1369 = vadd.f32 0.0, %v1368
  %v1370 = vpop.f32.mrf.mxu0
  %1371 = vmatprep.mubr.bf16.mxu0 %v1248
  %1372 = vmatmul.mubr.bf16.gmra.mxu0 %v1247
  %v1373 = vpop.f32.mrf.mxu0
  %v1374 = vadd.f32 0.0, %v1373
  %v1375 = vpop.f32.mrf.mxu0
  %v1376 = vpop.f32.mrf.mxu0
  %v1377 = vadd.f32 0.0, %v1376
  %v1378 = vpop.f32.mrf.mxu0
  %1379 = vmatprep.mubr.bf16.mxu0 %v1250
  %1380 = vmatmul.mubr.bf16.gmra.mxu0 %v1249
  %v1381 = vpop.f32.mrf.mxu0
  %v1382 = vadd.f32 0.0, %v1381
  %v1383 = vpop.f32.mrf.mxu0
  %v1384 = vpop.f32.mrf.mxu0
  %v1385 = vadd.f32 0.0, %v1384
  %v1386 = vpop.f32.mrf.mxu0
  %1387 = vmatprep.mubr.bf16.mxu0 %v1252
  %1388 = vmatmul.mubr.bf16.gmra.mxu0 %v1251
  %v1389 = vpop.f32.mrf.mxu0
  %v1390 = vadd.f32 0.0, %v1389
  %v1391 = vpop.f32.mrf.mxu0
  %v1392 = vpop.f32.mrf.mxu0
  %v1393 = vadd.f32 0.0, %v1392
  %v1394 = vpop.f32.mrf.mxu0
  %1395 = vmatprep.mubr.bf16.mxu0 %v1254
  %1396 = vmatmul.mubr.bf16.gmra.mxu0 %v1253
  %v1397 = vpop.f32.mrf.mxu0
  %v1398 = vadd.f32 0.0, %v1397
  %v1399 = vpop.f32.mrf.mxu0
  %v1400 = vpop.f32.mrf.mxu0
  %v1401 = vadd.f32 0.0, %v1400
  %v1402 = vpop.f32.mrf.mxu0
  %1403 = vmatprep.mubr.bf16.mxu0 %v1256
  %1404 = vmatmul.mubr.bf16.gmra.mxu0 %v1255
  %v1405 = vpop.f32.mrf.mxu0
  %v1406 = vadd.f32 0.0, %v1405
  %v1407 = vpop.f32.mrf.mxu0
  %v1408 = vpop.f32.mrf.mxu0
  %v1409 = vadd.f32 0.0, %v1408
  %v1410 = vpop.f32.mrf.mxu0
  %1411 = vmatprep.mubr.bf16.mxu0 %v1258
  %1412 = vmatmul.mubr.bf16.gmra.mxu0 %v1257
  %v1413 = vpop.f32.mrf.mxu0
  %v1414 = vadd.f32 0.0, %v1413
  %v1415 = vpop.f32.mrf.mxu0
  %v1416 = vpop.f32.mrf.mxu0
  %v1417 = vadd.f32 0.0, %v1416
  %v1418 = vpop.f32.mrf.mxu0
  %1419 = vmatprep.mubr.bf16.mxu0 %v1260
  %1420 = vmatmul.mubr.bf16.gmra.mxu0 %v1259
  %v1421 = vpop.f32.mrf.mxu0
  %v1422 = vadd.f32 0.0, %v1421
  %v1423 = vpop.f32.mrf.mxu0
  %v1424 = vpop.f32.mrf.mxu0
  %v1425 = vadd.f32 0.0, %v1424
  %v1426 = vpop.f32.mrf.mxu0
  %1427 = vmatprep.mubr.bf16.mxu0 %v1262
  %1428 = vmatmul.mubr.bf16.gmra.mxu0 %v1261
  %v1429 = vpop.f32.mrf.mxu0
  %v1430 = vadd.f32 0.0, %v1429
  %v1431 = vpop.f32.mrf.mxu0
  %v1432 = vpop.f32.mrf.mxu0
  %v1433 = vadd.f32 0.0, %v1432
  %v1434 = vpop.f32.mrf.mxu0
  %1435 = vmatprep.mubr.bf16.mxu0 %v1264
  %1436 = vmatmul.mubr.bf16.gmra.mxu0 %v1263
  %v1437 = vpop.f32.mrf.mxu0
  %v1438 = vadd.f32 0.0, %v1437
  %v1439 = vpop.f32.mrf.mxu0
  %v1440 = vpop.f32.mrf.mxu0
  %v1441 = vadd.f32 0.0, %v1440
  %v1442 = vpop.f32.mrf.mxu0
  %1443 = vmatprep.mubr.bf16.mxu0 %v1266
  %1444 = vmatmul.mubr.bf16.gmra.mxu0 %v1265
  %v1445 = vpop.f32.mrf.mxu0
  %v1446 = vadd.f32 0.0, %v1445
  %v1447 = vpop.f32.mrf.mxu0
  %v1448 = vpop.f32.mrf.mxu0
  %v1449 = vadd.f32 0.0, %v1448
  %v1450 = vpop.f32.mrf.mxu0
  %1451 = vmatprep.mubr.bf16.mxu0 %v1268
  %1452 = vmatmul.mubr.bf16.gmra.mxu0 %v1267
  %v1453 = vpop.f32.mrf.mxu0
  %v1454 = vadd.f32 0.0, %v1453
  %v1455 = vpop.f32.mrf.mxu0
  %v1456 = vpop.f32.mrf.mxu0
  %v1457 = vadd.f32 0.0, %v1456
  %v1458 = vpop.f32.mrf.mxu0
  %1459 = vmatprep.mubr.bf16.mxu0 %v1270
  %1460 = vmatmul.mubr.bf16.gmra.mxu0 %v1269
  %v1461 = vpop.f32.mrf.mxu0
  %v1462 = vadd.f32 0.0, %v1461
  %v1463 = vpop.f32.mrf.mxu0
  %v1464 = vpop.f32.mrf.mxu0
  %v1465 = vadd.f32 0.0, %v1464
  %v1466 = vpop.f32.mrf.mxu0
  %1467 = vmatprep.mubr.bf16.mxu0 %v1272
  %1468 = vmatmul.mubr.bf16.gmra.mxu0 %v1271
  %v1469 = vpop.f32.mrf.mxu0
  %v1470 = vadd.f32 0.0, %v1469
  %v1471 = vpop.f32.mrf.mxu0
  %v1472 = vpop.f32.mrf.mxu0
  %v1473 = vadd.f32 0.0, %v1472
  %v1474 = vpop.f32.mrf.mxu0
  %1475 = vmatprep.mubr.bf16.mxu0 %v1274
  %1476 = vmatmul.mubr.bf16.gmra.mxu0 %v1273
  %v1477 = vpop.f32.mrf.mxu0
  %v1478 = vadd.f32 0.0, %v1477
  %v1479 = vpop.f32.mrf.mxu0
  %v1480 = vpop.f32.mrf.mxu0
  %v1481 = vadd.f32 0.0, %v1480
  %v1482 = vpop.f32.mrf.mxu0
  %1483 = vdwg.mxu0
  %1492 = vrot.lane.b32.xlu0 %v1390, 10
  %v1493 = vpop.permute.xlu0 %1492
  %1494 = vrot.lane.b32.xlu0 %v1393, 10
  %v1495 = vpop.permute.xlu0 %1494
  %1496 = vrot.lane.b32.xlu0 %v1398, 10
  %v1497 = vpop.permute.xlu0 %1496
  %1498 = vrot.lane.b32.xlu0 %v1401, 10
  %v1499 = vpop.permute.xlu0 %1498
  %1500 = vrot.lane.b32.xlu0 %v1406, 10
  %v1501 = vpop.permute.xlu0 %1500
  %1502 = vrot.lane.b32.xlu0 %v1409, 10
  %v1503 = vpop.permute.xlu0 %1502
  %1504 = vrot.lane.b32.xlu0 %v1414, 10
  %v1505 = vpop.permute.xlu0 %1504
  %1506 = vrot.lane.b32.xlu0 %v1417, 10
  %v1507 = vpop.permute.xlu0 %1506
  %1524 = vrot.lane.b32.xlu0 %v1422, 20
  %v1525 = vpop.permute.xlu0 %1524
  %1526 = vrot.lane.b32.xlu0 %v1425, 20
  %v1527 = vpop.permute.xlu0 %1526
  %1528 = vrot.lane.b32.xlu0 %v1430, 20
  %v1529 = vpop.permute.xlu0 %1528
  %1530 = vrot.lane.b32.xlu0 %v1433, 20
  %v1531 = vpop.permute.xlu0 %1530
  %1532 = vrot.lane.b32.xlu0 %v1438, 20
  %v1533 = vpop.permute.xlu0 %1532
  %1534 = vrot.lane.b32.xlu0 %v1441, 20
  %v1535 = vpop.permute.xlu0 %1534
  %1536 = vrot.lane.b32.xlu0 %v1446, 20
  %v1537 = vpop.permute.xlu0 %1536
  %1538 = vrot.lane.b32.xlu0 %v1449, 20
  %v1539 = vpop.permute.xlu0 %1538
  %1556 = vrot.lane.b32.xlu0 %v1454, 30
  %v1557 = vpop.permute.xlu0 %1556
  %1558 = vrot.lane.b32.xlu0 %v1457, 30
  %v1559 = vpop.permute.xlu0 %1558
  %1560 = vrot.lane.b32.xlu0 %v1462, 30
  %v1561 = vpop.permute.xlu0 %1560
  %1562 = vrot.lane.b32.xlu0 %v1465, 30
  %v1563 = vpop.permute.xlu0 %1562
  %1564 = vrot.lane.b32.xlu0 %v1470, 30
  %v1565 = vpop.permute.xlu0 %1564
  %1566 = vrot.lane.b32.xlu0 %v1473, 30
  %v1567 = vpop.permute.xlu0 %1566
  %1568 = vrot.lane.b32.xlu0 %v1478, 30
  %v1569 = vpop.permute.xlu0 %1568
  %1570 = vrot.lane.b32.xlu0 %v1481, 30
  %v1571 = vpop.permute.xlu0 %1570
  %v1580 = vsel %vm473, %v1358, %v1493
  %v1581 = vsel %vm473, %v1361, %v1495
  %v1582 = vsel %vm473, %v1366, %v1497
  %v1583 = vsel %vm473, %v1369, %v1499
  %v1584 = vsel %vm473, %v1374, %v1501
  %v1585 = vsel %vm473, %v1377, %v1503
  %v1586 = vsel %vm473, %v1382, %v1505
  %v1587 = vsel %vm473, %v1385, %v1507
  %vm1588 = vcmask 162816
  %v1589 = vsel %vm1588, %v1580, %v1525
  %v1590 = vsel %vm1588, %v1581, %v1527
  %v1591 = vsel %vm1588, %v1582, %v1529
  %v1592 = vsel %vm1588, %v1583, %v1531
  %v1593 = vsel %vm1588, %v1584, %v1533
  %v1594 = vsel %vm1588, %v1585, %v1535
  %v1595 = vsel %vm1588, %v1586, %v1537
  %v1596 = vsel %vm1588, %v1587, %v1539
  %vm1597 = vcmask 244736
  %v1598 = vsel %vm1597, %v1589, %v1557
  %v1599 = vsel %vm1597, %v1590, %v1559
  %v1600 = vsel %vm1597, %v1591, %v1561
  %v1601 = vsel %vm1597, %v1592, %v1563
  %v1602 = vsel %vm1597, %v1593, %v1565
  %v1603 = vsel %vm1597, %v1594, %v1567
  %v1604 = vsel %vm1597, %v1595, %v1569
  %v1605 = vsel %vm1597, %v1596, %v1571
  %v1606 = vpack.c.bf16 %v1599, %v1598
  %v1607 = vpack.c.bf16 %v1601, %v1600
  %v1608 = vpack.c.bf16 %v1603, %v1602
  %v1609 = vpack.c.bf16 %v1605, %v1604
  %v1610 = vld [vmem:[%s1 + $0x14] sm:$0xf]
  %v1611 = vld [vmem:[%s1 + $0x18] sm:$0xf]
  %v1612 = vld [vmem:[%s1 + $0x1c] sm:$0xf]
  %v1613 = vld [vmem:[%s1 + $0x20] sm:$0xf]
  %v1614 = vld [vmem:[%s1 + $0x24] sm:$0xf]
  %v1615 = vlaneseq
  %v1616 = vshrl.u32 %v1615, 7
  %v1617 = vsub.s32 4, %v1616
  %v1618 = vrot.slane %v18, %v1617
  %v1624 = vunpack.c.l.b16 %v1610
  %v1625 = vunpack.c.l.b16 %v1611
  %v1626 = vunpack.c.l.b16 %v1612
  %v1627 = vunpack.c.l.b16 %v1613
  %v1628 = vunpack.c.l.b16 %v1614
  %v1629 = vpack.c.b16 %v1625, %v1624
  %v1630 = vpack.c.b16 %v1627, %v1626
  %v1631 = vpack.c.b16 %v1628, %v1628
  %v1635 = vsel %vm94, %v1606, 0
  %v1638 = vsel %vm94, %v1607, 0
  %v1641 = vsel %vm94, %v1608, 0
  %v1644 = vsel %vm94, %v1609, 0
  %v1647 = vsel %vm260, %v1631, 0
  %1649 = vmatprep.subr.bf16.mxu0 0
  %1650 = vmatpush1.bf16.msra.mxu0 0
  %1651 = vmatprep.subr.bf16.mxu0 0
  %1652 = vmatpush1.bf16.msra.mxu0 0
  %1653 = vmatprep.subr.bf16.mxu0 0
  %1654 = vmatpush1.bf16.msra.mxu0 0
  %1655 = vmatprep.subr.bf16.mxu0 0
  %1656 = vmatpush1.bf16.msra.mxu0 0
  %1657 = vmatprep.subr.bf16.mxu0 0
  %1658 = vmatpush1.bf16.msra.mxu0 0
  %1659 = vmatprep.subr.bf16.mxu0 0
  %1660 = vmatpush1.bf16.msra.mxu0 %v1647
  %1661 = vmatprep.subr.bf16.mxu0 0
  %1662 = vmatpush1.bf16.msra.mxu0 %v1630
  %1663 = vmatprep.subr.bf16.mxu0 0
  %1664 = vmatpush1.bf16.msra.mxu0 %v1629
  %1665 = vmatprep.subr.bf16.mxu0 0
  %1666 = vmatpush2.bf16.msra.mxu0 0
  %1667 = vmatprep.subr.bf16.mxu0 0
  %1668 = vmatpush2.bf16.msra.mxu0 0
  %1669 = vmatprep.subr.bf16.mxu0 0
  %1670 = vmatpush2.bf16.msra.mxu0 0
  %1671 = vmatprep.subr.bf16.mxu0 0
  %1672 = vmatpush2.bf16.msra.mxu0 0
  %1673 = vmatprep.subr.bf16.mxu0 0
  %1674 = vmatpush2.bf16.msra.mxu0 0
  %1675 = vmatprep.subr.bf16.mxu0 0
  %1676 = vmatpush2.bf16.msra.mxu0 0
  %1677 = vmatprep.subr.bf16.mxu0 0
  %1678 = vmatpush2.bf16.msra.mxu0 0
  %1679 = vmatprep.subr.bf16.mxu0 0
  %1680 = vmatpush2.bf16.msra.mxu0 0
  %1681 = vmatprep.mubr.bf16.mxu0 0
  %1682 = vmatmul.mubr.bf16.gmra.mxu0 %v1635
  %v1683 = vpop.f32.mrf.mxu0
  %v1684 = vadd.f32 %v1618, %v1683
  %v1685 = vpop.f32.mrf.mxu0
  %v1686 = vpop.f32.mrf.mxu0
  %v1687 = vadd.f32 %v1618, %v1686
  %v1688 = vpop.f32.mrf.mxu0
  %1689 = vmatprep.mubr.bf16.mxu0 0
  %1690 = vmatmul.mubr.bf16.gmra.mxu0 %v1638
  %v1691 = vpop.f32.mrf.mxu0
  %v1692 = vadd.f32 %v1618, %v1691
  %v1693 = vpop.f32.mrf.mxu0
  %v1694 = vpop.f32.mrf.mxu0
  %v1695 = vadd.f32 %v1618, %v1694
  %v1696 = vpop.f32.mrf.mxu0
  %1697 = vmatprep.mubr.bf16.mxu0 0
  %1698 = vmatmul.mubr.bf16.gmra.mxu0 %v1641
  %v1699 = vpop.f32.mrf.mxu0
  %v1700 = vadd.f32 %v1618, %v1699
  %v1701 = vpop.f32.mrf.mxu0
  %v1702 = vpop.f32.mrf.mxu0
  %v1703 = vadd.f32 %v1618, %v1702
  %v1704 = vpop.f32.mrf.mxu0
  %1705 = vmatprep.mubr.bf16.mxu0 0
  %1706 = vmatmul.mubr.bf16.gmra.mxu0 %v1644
  %v1707 = vpop.f32.mrf.mxu0
  %v1708 = vadd.f32 %v1618, %v1707
  %v1709 = vpop.f32.mrf.mxu0
  %v1710 = vpop.f32.mrf.mxu0
  %v1711 = vadd.f32 %v1618, %v1710
  %v1712 = vpop.f32.mrf.mxu0
  %1713 = vdwg.mxu0
  %v1714 = vadd.f32 %v216, %v1684
  %v1715 = vadd.f32 %v217, %v1687
  %v1716 = vadd.f32 %v218, %v1692
  %v1717 = vadd.f32 %v219, %v1695
  %v1718 = vadd.f32 %v220, %v1700
  %v1719 = vadd.f32 %v221, %v1703
  %v1720 = vadd.f32 %v222, %v1708
  %v1721 = vadd.f32 %v223, %v1711
  %v1722 = vsel %vm94, %v1714, 0.0
  %1723 = vadd.xlane.f32.xlu0 %v1722
  %v1724 = vpop.xlane.xlu0 %1723
  %v1725 = vsel %vm94, %v1715, 0.0
  %1726 = vadd.xlane.f32.xlu0 %v1725
  %v1727 = vpop.xlane.xlu0 %1726
  %v1728 = vsel %vm94, %v1716, 0.0
  %1729 = vadd.xlane.f32.xlu0 %v1728
  %v1730 = vpop.xlane.xlu0 %1729
  %v1731 = vsel %vm94, %v1717, 0.0
  %1732 = vadd.xlane.f32.xlu0 %v1731
  %v1733 = vpop.xlane.xlu0 %1732
  %v1734 = vsel %vm94, %v1718, 0.0
  %1735 = vadd.xlane.f32.xlu0 %v1734
  %v1736 = vpop.xlane.xlu0 %1735
  %v1737 = vsel %vm94, %v1719, 0.0
  %1738 = vadd.xlane.f32.xlu0 %v1737
  %v1739 = vpop.xlane.xlu0 %1738
  %v1740 = vsel %vm94, %v1720, 0.0
  %1741 = vadd.xlane.f32.xlu0 %v1740
  %v1742 = vpop.xlane.xlu0 %1741
  %v1743 = vsel %vm94, %v1721, 0.0
  %1744 = vadd.xlane.f32.xlu0 %v1743
  %v1745 = vpop.xlane.xlu0 %1744
  %v1746 = vmul.f32 %v1724, %v119
  %v1747 = vmul.f32 %v1727, %v119
  %v1748 = vmul.f32 %v1730, %v119
  %v1749 = vmul.f32 %v1733, %v119
  %v1750 = vmul.f32 %v1736, %v119
  %v1751 = vmul.f32 %v1739, %v119
  %v1752 = vmul.f32 %v1742, %v119
  %v1753 = vmul.f32 %v1745, %v119
  %v1754 = vsub.f32 %v1714, %v1746
  %v1755 = vsub.f32 %v1715, %v1747
  %v1756 = vsub.f32 %v1716, %v1748
  %v1757 = vsub.f32 %v1717, %v1749
  %v1758 = vsub.f32 %v1718, %v1750
  %v1759 = vsub.f32 %v1719, %v1751
  %v1760 = vsub.f32 %v1720, %v1752
  %v1761 = vsub.f32 %v1721, %v1753
  %v1762 = vmul.f32 %v1754, %v1754
  %v1763 = vmul.f32 %v1755, %v1755
  %v1764 = vmul.f32 %v1756, %v1756
  %v1765 = vmul.f32 %v1757, %v1757
  %v1766 = vmul.f32 %v1758, %v1758
  %v1767 = vmul.f32 %v1759, %v1759
  %v1768 = vmul.f32 %v1760, %v1760
  %v1769 = vmul.f32 %v1761, %v1761
  %v1770 = vsel %vm94, %v1762, 0.0
  %1771 = vadd.xlane.f32.xlu0 %v1770
  %v1772 = vpop.xlane.xlu0 %1771
  %v1773 = vsel %vm94, %v1763, 0.0
  %1774 = vadd.xlane.f32.xlu0 %v1773
  %v1775 = vpop.xlane.xlu0 %1774
  %v1776 = vsel %vm94, %v1764, 0.0
  %1777 = vadd.xlane.f32.xlu0 %v1776
  %v1778 = vpop.xlane.xlu0 %1777
  %v1779 = vsel %vm94, %v1765, 0.0
  %1780 = vadd.xlane.f32.xlu0 %v1779
  %v1781 = vpop.xlane.xlu0 %1780
  %v1782 = vsel %vm94, %v1766, 0.0
  %1783 = vadd.xlane.f32.xlu0 %v1782
  %v1784 = vpop.xlane.xlu0 %1783
  %v1785 = vsel %vm94, %v1767, 0.0
  %1786 = vadd.xlane.f32.xlu0 %v1785
  %v1787 = vpop.xlane.xlu0 %1786
  %v1788 = vsel %vm94, %v1768, 0.0
  %1789 = vadd.xlane.f32.xlu0 %v1788
  %v1790 = vpop.xlane.xlu0 %1789
  %v1791 = vsel %vm94, %v1769, 0.0
  %1792 = vadd.xlane.f32.xlu0 %v1791
  %v1793 = vpop.xlane.xlu0 %1792
  %v1794 = vmul.f32 %v1772, %v119
  %v1795 = vmul.f32 %v1775, %v119
  %v1796 = vmul.f32 %v1778, %v119
  %v1797 = vmul.f32 %v1781, %v119
  %v1798 = vmul.f32 %v1784, %v119
  %v1799 = vmul.f32 %v1787, %v119
  %v1800 = vmul.f32 %v1790, %v119
  %v1801 = vmul.f32 %v1793, %v119
  %v1802 = vadd.f32 %v1794, 1e-05
  %v1803 = vadd.f32 %v1795, 1e-05
  %v1804 = vadd.f32 %v1796, 1e-05
  %v1805 = vadd.f32 %v1797, 1e-05
  %v1806 = vadd.f32 %v1798, 1e-05
  %v1807 = vadd.f32 %v1799, 1e-05
  %v1808 = vadd.f32 %v1800, 1e-05
  %v1809 = vadd.f32 %v1801, 1e-05
  %v1810 = vrsqrt.pop %v1802
  %v1811 = vrsqrt.pop %v1803
  %v1812 = vrsqrt.pop %v1804
  %v1813 = vrsqrt.pop %v1805
  %v1814 = vrsqrt.pop %v1806
  %v1815 = vrsqrt.pop %v1807
  %v1816 = vrsqrt.pop %v1808
  %v1817 = vrsqrt.pop %v1809
  %v1818 = vmul.f32 %v1754, %v1810
  %v1819 = vmul.f32 %v1755, %v1811
  %v1820 = vmul.f32 %v1756, %v1812
  %v1821 = vmul.f32 %v1757, %v1813
  %v1822 = vmul.f32 %v1758, %v1814
  %v1823 = vmul.f32 %v1759, %v1815
  %v1824 = vmul.f32 %v1760, %v1816
  %v1825 = vmul.f32 %v1761, %v1817
  %v1826 = vlaneseq
  %v1827 = vshrl.u32 %v1826, 7
  %v1828 = vsub.s32 2, %v1827
  %v1829 = vrot.slane %v18, %v1828
  %v1830 = vmul.f32 %v1818, %v1829
  %v1831 = vmul.f32 %v1819, %v1829
  %v1832 = vmul.f32 %v1820, %v1829
  %v1833 = vmul.f32 %v1821, %v1829
  %v1834 = vmul.f32 %v1822, %v1829
  %v1835 = vmul.f32 %v1823, %v1829
  %v1836 = vmul.f32 %v1824, %v1829
  %v1837 = vmul.f32 %v1825, %v1829
  %v1838 = vlaneseq
  %v1839 = vshrl.u32 %v1838, 7
  %v1840 = vsub.s32 3, %v1839
  %v1841 = vrot.slane %v18, %v1840
  %v1842 = vadd.f32 %v1830, %v1841
  %v1843 = vadd.f32 %v1831, %v1841
  %v1844 = vadd.f32 %v1832, %v1841
  %v1845 = vadd.f32 %v1833, %v1841
  %v1846 = vadd.f32 %v1834, %v1841
  %v1847 = vadd.f32 %v1835, %v1841
  %v1848 = vadd.f32 %v1836, %v1841
  %v1849 = vadd.f32 %v1837, %v1841
  %v1850 = vpack.c.bf16 %v1843, %v1842
  %v1851 = vpack.c.bf16 %v1845, %v1844
  %v1852 = vpack.c.bf16 %v1847, %v1846
  %v1853 = vpack.c.bf16 %v1849, %v1848
  %v1854 = vld [vmem:[%s1 + $0x28] sm:$0xf]
  %v1855 = vld [vmem:[%s1 + $0x2c] sm:$0xf]
  %v1856 = vld [vmem:[%s1 + $0x30] sm:$0xf]
  %v1857 = vld [vmem:[%s1 + $0x34] sm:$0xf]
  %v1858 = vld [vmem:[%s1 + $0x38] sm:$0xf]
  %v1859 = vlaneseq
  %v1860 = vshrl.u32 %v1859, 7
  %v1861 = vsub.s32 5, %v1860
  %v1862 = vrot.slane %v18, %v1861
  %v1868 = vunpack.c.l.b16 %v1854
  %v1869 = vunpack.c.l.b16 %v1855
  %v1870 = vunpack.c.l.b16 %v1856
  %v1871 = vunpack.c.l.b16 %v1857
  %v1872 = vunpack.c.l.b16 %v1858
  %v1873 = vpack.c.b16 %v1869, %v1868
  %v1874 = vpack.c.b16 %v1871, %v1870
  %v1875 = vpack.c.b16 %v1872, %v1872
  %v1879 = vsel %vm94, %v1850, 0
  %v1882 = vsel %vm94, %v1851, 0
  %v1885 = vsel %vm94, %v1852, 0
  %v1888 = vsel %vm94, %v1853, 0
  %v1891 = vsel %vm260, %v1875, 0
  %1893 = vmatprep.subr.bf16.mxu0 0
  %1894 = vmatpush1.bf16.msra.mxu0 0
  %1895 = vmatprep.subr.bf16.mxu0 0
  %1896 = vmatpush1.bf16.msra.mxu0 0
  %1897 = vmatprep.subr.bf16.mxu0 0
  %1898 = vmatpush1.bf16.msra.mxu0 0
  %1899 = vmatprep.subr.bf16.mxu0 0
  %1900 = vmatpush1.bf16.msra.mxu0 0
  %1901 = vmatprep.subr.bf16.mxu0 0
  %1902 = vmatpush1.bf16.msra.mxu0 0
  %1903 = vmatprep.subr.bf16.mxu0 0
  %1904 = vmatpush1.bf16.msra.mxu0 %v1891
  %1905 = vmatprep.subr.bf16.mxu0 0
  %1906 = vmatpush1.bf16.msra.mxu0 %v1874
  %1907 = vmatprep.subr.bf16.mxu0 0
  %1908 = vmatpush1.bf16.msra.mxu0 %v1873
  %1909 = vmatprep.subr.bf16.mxu0 0
  %1910 = vmatpush2.bf16.msra.mxu0 0
  %1911 = vmatprep.subr.bf16.mxu0 0
  %1912 = vmatpush2.bf16.msra.mxu0 0
  %1913 = vmatprep.subr.bf16.mxu0 0
  %1914 = vmatpush2.bf16.msra.mxu0 0
  %1915 = vmatprep.subr.bf16.mxu0 0
  %1916 = vmatpush2.bf16.msra.mxu0 0
  %1917 = vmatprep.subr.bf16.mxu0 0
  %1918 = vmatpush2.bf16.msra.mxu0 0
  %1919 = vmatprep.subr.bf16.mxu0 0
  %1920 = vmatpush2.bf16.msra.mxu0 0
  %1921 = vmatprep.subr.bf16.mxu0 0
  %1922 = vmatpush2.bf16.msra.mxu0 0
  %1923 = vmatprep.subr.bf16.mxu0 0
  %1924 = vmatpush2.bf16.msra.mxu0 0
  %1925 = vmatprep.mubr.bf16.mxu0 0
  %1926 = vmatmul.mubr.bf16.gmra.mxu0 %v1879
  %v1927 = vpop.f32.mrf.mxu0
  %v1928 = vadd.f32 %v1862, %v1927
  %v1929 = vpop.f32.mrf.mxu0
  %v1930 = vpop.f32.mrf.mxu0
  %v1931 = vadd.f32 %v1862, %v1930
  %v1932 = vpop.f32.mrf.mxu0
  %1933 = vmatprep.mubr.bf16.mxu0 0
  %1934 = vmatmul.mubr.bf16.gmra.mxu0 %v1882
  %v1935 = vpop.f32.mrf.mxu0
  %v1936 = vadd.f32 %v1862, %v1935
  %v1937 = vpop.f32.mrf.mxu0
  %v1938 = vpop.f32.mrf.mxu0
  %v1939 = vadd.f32 %v1862, %v1938
  %v1940 = vpop.f32.mrf.mxu0
  %1941 = vmatprep.mubr.bf16.mxu0 0
  %1942 = vmatmul.mubr.bf16.gmra.mxu0 %v1885
  %v1943 = vpop.f32.mrf.mxu0
  %v1944 = vadd.f32 %v1862, %v1943
  %v1945 = vpop.f32.mrf.mxu0
  %v1946 = vpop.f32.mrf.mxu0
  %v1947 = vadd.f32 %v1862, %v1946
  %v1948 = vpop.f32.mrf.mxu0
  %1949 = vmatprep.mubr.bf16.mxu0 0
  %1950 = vmatmul.mubr.bf16.gmra.mxu0 %v1888
  %v1951 = vpop.f32.mrf.mxu0
  %v1952 = vadd.f32 %v1862, %v1951
  %v1953 = vpop.f32.mrf.mxu0
  %v1954 = vpop.f32.mrf.mxu0
  %v1955 = vadd.f32 %v1862, %v1954
  %v1956 = vpop.f32.mrf.mxu0
  %1957 = vdwg.mxu0
  %v1958 = vmax.f32 %v1928, 0.0
  %v1959 = vmax.f32 %v1931, 0.0
  %v1960 = vmax.f32 %v1936, 0.0
  %v1961 = vmax.f32 %v1939, 0.0
  %v1962 = vmax.f32 %v1944, 0.0
  %v1963 = vmax.f32 %v1947, 0.0
  %v1964 = vmax.f32 %v1952, 0.0
  %v1965 = vmax.f32 %v1955, 0.0
  %v1966 = vpack.c.bf16 %v1959, %v1958
  %v1967 = vpack.c.bf16 %v1961, %v1960
  %v1968 = vpack.c.bf16 %v1963, %v1962
  %v1969 = vpack.c.bf16 %v1965, %v1964
  %v1970 = vld [vmem:[%s1 + $0x3c] sm:$0xf]
  %v1971 = vld [vmem:[%s1 + $0x40] sm:$0xf]
  %v1972 = vld [vmem:[%s1 + $0x44] sm:$0xf]
  %v1973 = vld [vmem:[%s1 + $0x48] sm:$0xf]
  %v1974 = vld [vmem:[%s1 + $0x4c] sm:$0xf]
  %v1975 = vlaneseq
  %v1976 = vshrl.u32 %v1975, 7
  %v1977 = vsub.s32 6, %v1976
  %v1978 = vrot.slane %v18, %v1977
  %v1984 = vunpack.c.l.b16 %v1970
  %v1985 = vunpack.c.l.b16 %v1971
  %v1986 = vunpack.c.l.b16 %v1972
  %v1987 = vunpack.c.l.b16 %v1973
  %v1988 = vunpack.c.l.b16 %v1974
  %v1989 = vpack.c.b16 %v1985, %v1984
  %v1990 = vpack.c.b16 %v1987, %v1986
  %v1991 = vpack.c.b16 %v1988, %v1988
  %v1995 = vsel %vm94, %v1966, 0
  %v1998 = vsel %vm94, %v1967, 0
  %v2001 = vsel %vm94, %v1968, 0
  %v2004 = vsel %vm94, %v1969, 0
  %v2007 = vsel %vm260, %v1991, 0
  %2009 = vmatprep.subr.bf16.mxu0 0
  %2010 = vmatpush1.bf16.msra.mxu0 0
  %2011 = vmatprep.subr.bf16.mxu0 0
  %2012 = vmatpush1.bf16.msra.mxu0 0
  %2013 = vmatprep.subr.bf16.mxu0 0
  %2014 = vmatpush1.bf16.msra.mxu0 0
  %2015 = vmatprep.subr.bf16.mxu0 0
  %2016 = vmatpush1.bf16.msra.mxu0 0
  %2017 = vmatprep.subr.bf16.mxu0 0
  %2018 = vmatpush1.bf16.msra.mxu0 0
  %2019 = vmatprep.subr.bf16.mxu0 0
  %2020 = vmatpush1.bf16.msra.mxu0 %v2007
  %2021 = vmatprep.subr.bf16.mxu0 0
  %2022 = vmatpush1.bf16.msra.mxu0 %v1990
  %2023 = vmatprep.subr.bf16.mxu0 0
  %2024 = vmatpush1.bf16.msra.mxu0 %v1989
  %2025 = vmatprep.subr.bf16.mxu0 0
  %2026 = vmatpush2.bf16.msra.mxu0 0
  %2027 = vmatprep.subr.bf16.mxu0 0
  %2028 = vmatpush2.bf16.msra.mxu0 0
  %2029 = vmatprep.subr.bf16.mxu0 0
  %2030 = vmatpush2.bf16.msra.mxu0 0
  %2031 = vmatprep.subr.bf16.mxu0 0
  %2032 = vmatpush2.bf16.msra.mxu0 0
  %2033 = vmatprep.subr.bf16.mxu0 0
  %2034 = vmatpush2.bf16.msra.mxu0 0
  %2035 = vmatprep.subr.bf16.mxu0 0
  %2036 = vmatpush2.bf16.msra.mxu0 0
  %2037 = vmatprep.subr.bf16.mxu0 0
  %2038 = vmatpush2.bf16.msra.mxu0 0
  %2039 = vmatprep.subr.bf16.mxu0 0
  %2040 = vmatpush2.bf16.msra.mxu0 0
  %2041 = vmatprep.mubr.bf16.mxu0 0
  %2042 = vmatmul.mubr.bf16.gmra.mxu0 %v1995
  %v2043 = vpop.f32.mrf.mxu0
  %v2044 = vadd.f32 %v1978, %v2043
  %v2045 = vpop.f32.mrf.mxu0
  %v2046 = vpop.f32.mrf.mxu0
  %v2047 = vadd.f32 %v1978, %v2046
  %v2048 = vpop.f32.mrf.mxu0
  %2049 = vmatprep.mubr.bf16.mxu0 0
  %2050 = vmatmul.mubr.bf16.gmra.mxu0 %v1998
  %v2051 = vpop.f32.mrf.mxu0
  %v2052 = vadd.f32 %v1978, %v2051
  %v2053 = vpop.f32.mrf.mxu0
  %v2054 = vpop.f32.mrf.mxu0
  %v2055 = vadd.f32 %v1978, %v2054
  %v2056 = vpop.f32.mrf.mxu0
  %2057 = vmatprep.mubr.bf16.mxu0 0
  %2058 = vmatmul.mubr.bf16.gmra.mxu0 %v2001
  %v2059 = vpop.f32.mrf.mxu0
  %v2060 = vadd.f32 %v1978, %v2059
  %v2061 = vpop.f32.mrf.mxu0
  %v2062 = vpop.f32.mrf.mxu0
  %v2063 = vadd.f32 %v1978, %v2062
  %v2064 = vpop.f32.mrf.mxu0
  %2065 = vmatprep.mubr.bf16.mxu0 0
  %2066 = vmatmul.mubr.bf16.gmra.mxu0 %v2004
  %v2067 = vpop.f32.mrf.mxu0
  %v2068 = vadd.f32 %v1978, %v2067
  %v2069 = vpop.f32.mrf.mxu0
  %v2070 = vpop.f32.mrf.mxu0
  %v2071 = vadd.f32 %v1978, %v2070
  %v2072 = vpop.f32.mrf.mxu0
  %2073 = vdwg.mxu0
  %v2074 = vadd.f32 %v1842, %v2044
  %v2075 = vadd.f32 %v1843, %v2047
  %v2076 = vadd.f32 %v1844, %v2052
  %v2077 = vadd.f32 %v1845, %v2055
  %v2078 = vadd.f32 %v1846, %v2060
  %v2079 = vadd.f32 %v1847, %v2063
  %v2080 = vadd.f32 %v1848, %v2068
  %v2081 = vadd.f32 %v1849, %v2071
  %v2082 = vsel %vm94, %v2074, 0.0
  %2083 = vadd.xlane.f32.xlu0 %v2082
  %v2084 = vpop.xlane.xlu0 %2083
  %v2085 = vsel %vm94, %v2075, 0.0
  %2086 = vadd.xlane.f32.xlu0 %v2085
  %v2087 = vpop.xlane.xlu0 %2086
  %v2088 = vsel %vm94, %v2076, 0.0
  %2089 = vadd.xlane.f32.xlu0 %v2088
  %v2090 = vpop.xlane.xlu0 %2089
  %v2091 = vsel %vm94, %v2077, 0.0
  %2092 = vadd.xlane.f32.xlu0 %v2091
  %v2093 = vpop.xlane.xlu0 %2092
  %v2094 = vsel %vm94, %v2078, 0.0
  %2095 = vadd.xlane.f32.xlu0 %v2094
  %v2096 = vpop.xlane.xlu0 %2095
  %v2097 = vsel %vm94, %v2079, 0.0
  %2098 = vadd.xlane.f32.xlu0 %v2097
  %v2099 = vpop.xlane.xlu0 %2098
  %v2100 = vsel %vm94, %v2080, 0.0
  %2101 = vadd.xlane.f32.xlu0 %v2100
  %v2102 = vpop.xlane.xlu0 %2101
  %v2103 = vsel %vm94, %v2081, 0.0
  %2104 = vadd.xlane.f32.xlu0 %v2103
  %v2105 = vpop.xlane.xlu0 %2104
  %v2106 = vmul.f32 %v2084, %v119
  %v2107 = vmul.f32 %v2087, %v119
  %v2108 = vmul.f32 %v2090, %v119
  %v2109 = vmul.f32 %v2093, %v119
  %v2110 = vmul.f32 %v2096, %v119
  %v2111 = vmul.f32 %v2099, %v119
  %v2112 = vmul.f32 %v2102, %v119
  %v2113 = vmul.f32 %v2105, %v119
  %v2114 = vsub.f32 %v2074, %v2106
  %v2115 = vsub.f32 %v2075, %v2107
  %v2116 = vsub.f32 %v2076, %v2108
  %v2117 = vsub.f32 %v2077, %v2109
  %v2118 = vsub.f32 %v2078, %v2110
  %v2119 = vsub.f32 %v2079, %v2111
  %v2120 = vsub.f32 %v2080, %v2112
  %v2121 = vsub.f32 %v2081, %v2113
  %v2122 = vmul.f32 %v2114, %v2114
  %v2123 = vmul.f32 %v2115, %v2115
  %v2124 = vmul.f32 %v2116, %v2116
  %v2125 = vmul.f32 %v2117, %v2117
  %v2126 = vmul.f32 %v2118, %v2118
  %v2127 = vmul.f32 %v2119, %v2119
  %v2128 = vmul.f32 %v2120, %v2120
  %v2129 = vmul.f32 %v2121, %v2121
  %v2130 = vsel %vm94, %v2122, 0.0
  %2131 = vadd.xlane.f32.xlu0 %v2130
  %v2132 = vpop.xlane.xlu0 %2131
  %v2133 = vsel %vm94, %v2123, 0.0
  %2134 = vadd.xlane.f32.xlu0 %v2133
  %v2135 = vpop.xlane.xlu0 %2134
  %v2136 = vsel %vm94, %v2124, 0.0
  %2137 = vadd.xlane.f32.xlu0 %v2136
  %v2138 = vpop.xlane.xlu0 %2137
  %v2139 = vsel %vm94, %v2125, 0.0
  %2140 = vadd.xlane.f32.xlu0 %v2139
  %v2141 = vpop.xlane.xlu0 %2140
  %v2142 = vsel %vm94, %v2126, 0.0
  %2143 = vadd.xlane.f32.xlu0 %v2142
  %v2144 = vpop.xlane.xlu0 %2143
  %v2145 = vsel %vm94, %v2127, 0.0
  %2146 = vadd.xlane.f32.xlu0 %v2145
  %v2147 = vpop.xlane.xlu0 %2146
  %v2148 = vsel %vm94, %v2128, 0.0
  %2149 = vadd.xlane.f32.xlu0 %v2148
  %v2150 = vpop.xlane.xlu0 %2149
  %v2151 = vsel %vm94, %v2129, 0.0
  %2152 = vadd.xlane.f32.xlu0 %v2151
  %v2153 = vpop.xlane.xlu0 %2152
  %v2154 = vmul.f32 %v2132, %v119
  %v2155 = vmul.f32 %v2135, %v119
  %v2156 = vmul.f32 %v2138, %v119
  %v2157 = vmul.f32 %v2141, %v119
  %v2158 = vmul.f32 %v2144, %v119
  %v2159 = vmul.f32 %v2147, %v119
  %v2160 = vmul.f32 %v2150, %v119
  %v2161 = vmul.f32 %v2153, %v119
  %v2162 = vadd.f32 %v2154, 1e-05
  %v2163 = vadd.f32 %v2155, 1e-05
  %v2164 = vadd.f32 %v2156, 1e-05
  %v2165 = vadd.f32 %v2157, 1e-05
  %v2166 = vadd.f32 %v2158, 1e-05
  %v2167 = vadd.f32 %v2159, 1e-05
  %v2168 = vadd.f32 %v2160, 1e-05
  %v2169 = vadd.f32 %v2161, 1e-05
  %v2170 = vrsqrt.pop %v2162
  %v2171 = vrsqrt.pop %v2163
  %v2172 = vrsqrt.pop %v2164
  %v2173 = vrsqrt.pop %v2165
  %v2174 = vrsqrt.pop %v2166
  %v2175 = vrsqrt.pop %v2167
  %v2176 = vrsqrt.pop %v2168
  %v2177 = vrsqrt.pop %v2169
  %v2178 = vmul.f32 %v2114, %v2170
  %v2179 = vmul.f32 %v2115, %v2171
  %v2180 = vmul.f32 %v2116, %v2172
  %v2181 = vmul.f32 %v2117, %v2173
  %v2182 = vmul.f32 %v2118, %v2174
  %v2183 = vmul.f32 %v2119, %v2175
  %v2184 = vmul.f32 %v2120, %v2176
  %v2185 = vmul.f32 %v2121, %v2177
  %v2186 = vlaneseq
  %v2187 = vshrl.u32 %v2186, 7
  %v2188 = vsub.s32 7, %v2187
  %v2189 = vrot.slane %v18, %v2188
  %v2190 = vmul.f32 %v2178, %v2189
  %v2191 = vmul.f32 %v2179, %v2189
  %v2192 = vmul.f32 %v2180, %v2189
  %v2193 = vmul.f32 %v2181, %v2189
  %v2194 = vmul.f32 %v2182, %v2189
  %v2195 = vmul.f32 %v2183, %v2189
  %v2196 = vmul.f32 %v2184, %v2189
  %v2197 = vmul.f32 %v2185, %v2189
  %v2198 = vlaneseq
  %v2199 = vshrl.u32 %v2198, 7
  %v2200 = vsub.s32 0, %v2199
  %v2201 = vrot.slane %v19, %v2200
  %v2202 = vadd.f32 %v2190, %v2201
  %v2203 = vadd.f32 %v2191, %v2201
  %v2204 = vadd.f32 %v2192, %v2201
  %v2205 = vadd.f32 %v2193, %v2201
  %v2206 = vadd.f32 %v2194, %v2201
  %v2207 = vadd.f32 %v2195, %v2201
  %v2208 = vadd.f32 %v2196, %v2201
  %v2209 = vadd.f32 %v2197, %v2201
  %v2210 = vpack.c.bf16 %v2203, %v2202
  %v2211 = vpack.c.bf16 %v2205, %v2204
  %v2212 = vpack.c.bf16 %v2207, %v2206
  %v2213 = vpack.c.bf16 %v2209, %v2208
  %v2214 = vld [vmem:[%s1 + $0x50] sm:$0xf]
  %v2215 = vld [vmem:[%s1 + $0x54] sm:$0xf]
  %v2216 = vld [vmem:[%s1 + $0x58] sm:$0xf]
  %v2217 = vld [vmem:[%s1 + $0x5c] sm:$0xf]
  %v2218 = vld [vmem:[%s1 + $0x60] sm:$0xf]
  %v2224 = vunpack.c.l.b16 %v2214
  %v2225 = vunpack.c.l.b16 %v2215
  %v2226 = vunpack.c.l.b16 %v2216
  %v2227 = vunpack.c.l.b16 %v2217
  %v2228 = vunpack.c.l.b16 %v2218
  %v2229 = vpack.c.b16 %v2225, %v2224
  %v2230 = vpack.c.b16 %v2227, %v2226
  %v2231 = vpack.c.b16 %v2228, %v2228
  %v2235 = vsel %vm94, %v2210, 0
  %v2238 = vsel %vm94, %v2211, 0
  %v2241 = vsel %vm94, %v2212, 0
  %v2244 = vsel %vm94, %v2213, 0
  %v2247 = vsel %vm260, %v2231, 0
  %2249 = vmatprep.subr.bf16.mxu0 0
  %2250 = vmatpush1.bf16.msra.mxu0 0
  %2251 = vmatprep.subr.bf16.mxu0 0
  %2252 = vmatpush1.bf16.msra.mxu0 0
  %2253 = vmatprep.subr.bf16.mxu0 0
  %2254 = vmatpush1.bf16.msra.mxu0 0
  %2255 = vmatprep.subr.bf16.mxu0 0
  %2256 = vmatpush1.bf16.msra.mxu0 0
  %2257 = vmatprep.subr.bf16.mxu0 0
  %2258 = vmatpush1.bf16.msra.mxu0 0
  %2259 = vmatprep.subr.bf16.mxu0 0
  %2260 = vmatpush1.bf16.msra.mxu0 %v2247
  %2261 = vmatprep.subr.bf16.mxu0 0
  %2262 = vmatpush1.bf16.msra.mxu0 %v2230
  %2263 = vmatprep.subr.bf16.mxu0 0
  %2264 = vmatpush1.bf16.msra.mxu0 %v2229
  %2265 = vmatprep.subr.bf16.mxu0 0
  %2266 = vmatpush2.bf16.msra.mxu0 0
  %2267 = vmatprep.subr.bf16.mxu0 0
  %2268 = vmatpush2.bf16.msra.mxu0 0
  %2269 = vmatprep.subr.bf16.mxu0 0
  %2270 = vmatpush2.bf16.msra.mxu0 0
  %2271 = vmatprep.subr.bf16.mxu0 0
  %2272 = vmatpush2.bf16.msra.mxu0 0
  %2273 = vmatprep.subr.bf16.mxu0 0
  %2274 = vmatpush2.bf16.msra.mxu0 0
  %2275 = vmatprep.subr.bf16.mxu0 0
  %2276 = vmatpush2.bf16.msra.mxu0 0
  %2277 = vmatprep.subr.bf16.mxu0 0
  %2278 = vmatpush2.bf16.msra.mxu0 0
  %2279 = vmatprep.subr.bf16.mxu0 0
  %2280 = vmatpush2.bf16.msra.mxu0 0
  %2281 = vmatprep.mubr.bf16.mxu0 0
  %2282 = vmatmul.mubr.bf16.gmra.mxu0 %v2235
  %v2283 = vpop.f32.mrf.mxu0
  %v2284 = vadd.f32 0.0, %v2283
  %v2285 = vpop.f32.mrf.mxu0
  %v2286 = vpop.f32.mrf.mxu0
  %v2287 = vadd.f32 0.0, %v2286
  %v2288 = vpop.f32.mrf.mxu0
  %2289 = vmatprep.mubr.bf16.mxu0 0
  %2290 = vmatmul.mubr.bf16.gmra.mxu0 %v2238
  %v2291 = vpop.f32.mrf.mxu0
  %v2292 = vadd.f32 0.0, %v2291
  %v2293 = vpop.f32.mrf.mxu0
  %v2294 = vpop.f32.mrf.mxu0
  %v2295 = vadd.f32 0.0, %v2294
  %v2296 = vpop.f32.mrf.mxu0
  %2297 = vmatprep.mubr.bf16.mxu0 0
  %2298 = vmatmul.mubr.bf16.gmra.mxu0 %v2241
  %v2299 = vpop.f32.mrf.mxu0
  %v2300 = vadd.f32 0.0, %v2299
  %v2301 = vpop.f32.mrf.mxu0
  %v2302 = vpop.f32.mrf.mxu0
  %v2303 = vadd.f32 0.0, %v2302
  %v2304 = vpop.f32.mrf.mxu0
  %2305 = vmatprep.mubr.bf16.mxu0 0
  %2306 = vmatmul.mubr.bf16.gmra.mxu0 %v2244
  %v2307 = vpop.f32.mrf.mxu0
  %v2308 = vadd.f32 0.0, %v2307
  %v2309 = vpop.f32.mrf.mxu0
  %v2310 = vpop.f32.mrf.mxu0
  %v2311 = vadd.f32 0.0, %v2310
  %v2312 = vpop.f32.mrf.mxu0
  %2313 = vdwg.mxu0
  %2322 = vrot.lane.b32.xlu0 %v2284, 118
  %v2323 = vpop.permute.xlu0 %2322
  %2324 = vrot.lane.b32.xlu0 %v2287, 118
  %v2325 = vpop.permute.xlu0 %2324
  %2326 = vrot.lane.b32.xlu0 %v2292, 118
  %v2327 = vpop.permute.xlu0 %2326
  %2328 = vrot.lane.b32.xlu0 %v2295, 118
  %v2329 = vpop.permute.xlu0 %2328
  %2330 = vrot.lane.b32.xlu0 %v2300, 118
  %v2331 = vpop.permute.xlu0 %2330
  %2332 = vrot.lane.b32.xlu0 %v2303, 118
  %v2333 = vpop.permute.xlu0 %2332
  %2334 = vrot.lane.b32.xlu0 %v2308, 118
  %v2335 = vpop.permute.xlu0 %2334
  %2336 = vrot.lane.b32.xlu0 %v2311, 118
  %v2337 = vpop.permute.xlu0 %2336
  %2346 = vrot.lane.b32.xlu0 %v2284, 108
  %v2347 = vpop.permute.xlu0 %2346
  %2348 = vrot.lane.b32.xlu0 %v2287, 108
  %v2349 = vpop.permute.xlu0 %2348
  %2350 = vrot.lane.b32.xlu0 %v2292, 108
  %v2351 = vpop.permute.xlu0 %2350
  %2352 = vrot.lane.b32.xlu0 %v2295, 108
  %v2353 = vpop.permute.xlu0 %2352
  %2354 = vrot.lane.b32.xlu0 %v2300, 108
  %v2355 = vpop.permute.xlu0 %2354
  %2356 = vrot.lane.b32.xlu0 %v2303, 108
  %v2357 = vpop.permute.xlu0 %2356
  %2358 = vrot.lane.b32.xlu0 %v2308, 108
  %v2359 = vpop.permute.xlu0 %2358
  %2360 = vrot.lane.b32.xlu0 %v2311, 108
  %v2361 = vpop.permute.xlu0 %2360
  %2370 = vrot.lane.b32.xlu0 %v2284, 98
  %v2371 = vpop.permute.xlu0 %2370
  %2372 = vrot.lane.b32.xlu0 %v2287, 98
  %v2373 = vpop.permute.xlu0 %2372
  %2374 = vrot.lane.b32.xlu0 %v2292, 98
  %v2375 = vpop.permute.xlu0 %2374
  %2376 = vrot.lane.b32.xlu0 %v2295, 98
  %v2377 = vpop.permute.xlu0 %2376
  %2378 = vrot.lane.b32.xlu0 %v2300, 98
  %v2379 = vpop.permute.xlu0 %2378
  %2380 = vrot.lane.b32.xlu0 %v2303, 98
  %v2381 = vpop.permute.xlu0 %2380
  %2382 = vrot.lane.b32.xlu0 %v2308, 98
  %v2383 = vpop.permute.xlu0 %2382
  %2384 = vrot.lane.b32.xlu0 %v2311, 98
  %v2385 = vpop.permute.xlu0 %2384
  %v2394 = vpack.c.bf16 %v2287, %v2284
  %v2395 = vpack.c.bf16 %v2295, %v2292
  %v2396 = vpack.c.bf16 %v2303, %v2300
  %v2397 = vpack.c.bf16 %v2311, %v2308
  %v2398 = vpack.c.bf16 %v2325, %v2323
  %v2399 = vpack.c.bf16 %v2329, %v2327
  %v2400 = vpack.c.bf16 %v2333, %v2331
  %v2401 = vpack.c.bf16 %v2337, %v2335
  %v2402 = vpack.c.bf16 %v2349, %v2347
  %v2403 = vpack.c.bf16 %v2353, %v2351
  %v2404 = vpack.c.bf16 %v2357, %v2355
  %v2405 = vpack.c.bf16 %v2361, %v2359
  %v2406 = vpack.c.bf16 %v2373, %v2371
  %v2407 = vpack.c.bf16 %v2377, %v2375
  %v2408 = vpack.c.bf16 %v2381, %v2379
  %v2409 = vpack.c.bf16 %v2385, %v2383
  %2426 = vrot.lane.b32.xlu0 %v2394, 88
  %v2427 = vpop.permute.xlu0 %2426
  %2428 = vrot.lane.b32.xlu0 %v2395, 88
  %v2429 = vpop.permute.xlu0 %2428
  %2430 = vrot.lane.b32.xlu0 %v2396, 88
  %v2431 = vpop.permute.xlu0 %2430
  %2432 = vrot.lane.b32.xlu0 %v2397, 88
  %v2433 = vpop.permute.xlu0 %2432
  %2434 = vrot.lane.b32.xlu0 %v2398, 88
  %v2435 = vpop.permute.xlu0 %2434
  %2436 = vrot.lane.b32.xlu0 %v2399, 88
  %v2437 = vpop.permute.xlu0 %2436
  %2438 = vrot.lane.b32.xlu0 %v2400, 88
  %v2439 = vpop.permute.xlu0 %2438
  %2440 = vrot.lane.b32.xlu0 %v2401, 88
  %v2441 = vpop.permute.xlu0 %2440
  %2442 = vrot.lane.b32.xlu0 %v2402, 88
  %v2443 = vpop.permute.xlu0 %2442
  %2444 = vrot.lane.b32.xlu0 %v2403, 88
  %v2445 = vpop.permute.xlu0 %2444
  %2446 = vrot.lane.b32.xlu0 %v2404, 88
  %v2447 = vpop.permute.xlu0 %2446
  %2448 = vrot.lane.b32.xlu0 %v2405, 88
  %v2449 = vpop.permute.xlu0 %2448
  %2450 = vrot.lane.b32.xlu0 %v2406, 88
  %v2451 = vpop.permute.xlu0 %2450
  %2452 = vrot.lane.b32.xlu0 %v2407, 88
  %v2453 = vpop.permute.xlu0 %2452
  %2454 = vrot.lane.b32.xlu0 %v2408, 88
  %v2455 = vpop.permute.xlu0 %2454
  %2456 = vrot.lane.b32.xlu0 %v2409, 88
  %v2457 = vpop.permute.xlu0 %2456
  %v2459 = vsel %vm473, %v2427, 0
  %v2462 = vsel %vm473, %v2429, 0
  %v2465 = vsel %vm473, %v2431, 0
  %v2468 = vsel %vm473, %v2433, 0
  %v2471 = vsel %vm473, %v2435, 0
  %v2474 = vsel %vm473, %v2437, 0
  %v2477 = vsel %vm473, %v2439, 0
  %v2480 = vsel %vm473, %v2441, 0
  %v2483 = vsel %vm473, %v2443, 0
  %v2486 = vsel %vm473, %v2445, 0
  %v2489 = vsel %vm473, %v2447, 0
  %v2492 = vsel %vm473, %v2449, 0
  %v2495 = vsel %vm473, %v2451, 0
  %v2498 = vsel %vm473, %v2453, 0
  %v2501 = vsel %vm473, %v2455, 0
  %v2504 = vsel %vm473, %v2457, 0
  %v2507 = vsel %vm473, %v2394, 0
  %v2510 = vsel %vm473, %v2395, 0
  %v2513 = vsel %vm473, %v2396, 0
  %v2516 = vsel %vm473, %v2397, 0
  %v2519 = vsel %vm473, %v2398, 0
  %v2522 = vsel %vm473, %v2399, 0
  %v2525 = vsel %vm473, %v2400, 0
  %v2528 = vsel %vm473, %v2401, 0
  %v2531 = vsel %vm473, %v2402, 0
  %v2534 = vsel %vm473, %v2403, 0
  %v2537 = vsel %vm473, %v2404, 0
  %v2540 = vsel %vm473, %v2405, 0
  %v2543 = vsel %vm473, %v2406, 0
  %v2546 = vsel %vm473, %v2407, 0
  %v2549 = vsel %vm473, %v2408, 0
  %v2552 = vsel %vm473, %v2409, 0
  %2554 = vmatprep.subr.bf16.mxu0 0
  %2555 = vmatpush1.bf16.xpose.msra.mxu0 %v2528
  %2556 = vmatprep.subr.bf16.mxu0 0
  %2557 = vmatpush1.bf16.xpose.msra.mxu0 %v2525
  %2558 = vmatprep.subr.bf16.mxu0 0
  %2559 = vmatpush1.bf16.xpose.msra.mxu0 %v2522
  %2560 = vmatprep.subr.bf16.mxu0 0
  %2561 = vmatpush1.bf16.xpose.msra.mxu0 %v2519
  %2562 = vmatprep.subr.bf16.mxu0 0
  %2563 = vmatpush1.bf16.xpose.msra.mxu0 %v2516
  %2564 = vmatprep.subr.bf16.mxu0 0
  %2565 = vmatpush1.bf16.xpose.msra.mxu0 %v2513
  %2566 = vmatprep.subr.bf16.mxu0 0
  %2567 = vmatpush1.bf16.xpose.msra.mxu0 %v2510
  %2568 = vmatprep.subr.bf16.mxu0 0
  %2569 = vmatpush1.bf16.xpose.msra.mxu0 %v2507
  %2570 = vmatprep.subr.bf16.mxu0 0
  %2571 = vmatpush2.bf16.xpose.msra.mxu0 %v2552
  %2572 = vmatprep.subr.bf16.mxu0 0
  %2573 = vmatpush2.bf16.xpose.msra.mxu0 %v2549
  %2574 = vmatprep.subr.bf16.mxu0 0
  %2575 = vmatpush2.bf16.xpose.msra.mxu0 %v2546
  %2576 = vmatprep.subr.bf16.mxu0 0
  %2577 = vmatpush2.bf16.xpose.msra.mxu0 %v2543
  %2578 = vmatprep.subr.bf16.mxu0 0
  %2579 = vmatpush2.bf16.xpose.msra.mxu0 %v2540
  %2580 = vmatprep.subr.bf16.mxu0 0
  %2581 = vmatpush2.bf16.xpose.msra.mxu0 %v2537
  %2582 = vmatprep.subr.bf16.mxu0 0
  %2583 = vmatpush2.bf16.xpose.msra.mxu0 %v2534
  %2584 = vmatprep.subr.bf16.mxu0 0
  %2585 = vmatpush2.bf16.xpose.msra.mxu0 %v2531
  %2586 = vmatprep.mubr.bf16.mxu0 0
  %2587 = vmatmul.mubr.bf16.gmra.mxu0 %v2459
  %v2588 = vpop.f32.mrf.mxu0
  %v2589 = vadd.f32 %v22, %v2588
  %v2590 = vpop.f32.mrf.mxu0
  %v2591 = vadd.f32 %v23, %v2590
  %v2592 = vpop.f32.mrf.mxu0
  %v2593 = vadd.f32 %v24, %v2592
  %v2594 = vpop.f32.mrf.mxu0
  %v2595 = vadd.f32 %v25, %v2594
  %2596 = vmatprep.mubr.bf16.mxu0 0
  %2597 = vmatmul.mubr.bf16.gmra.mxu0 %v2462
  %v2598 = vpop.f32.mrf.mxu0
  %v2599 = vadd.f32 %v26, %v2598
  %v2600 = vpop.f32.mrf.mxu0
  %v2601 = vadd.f32 %v27, %v2600
  %v2602 = vpop.f32.mrf.mxu0
  %v2603 = vadd.f32 %v28, %v2602
  %v2604 = vpop.f32.mrf.mxu0
  %v2605 = vadd.f32 %v29, %v2604
  %2606 = vmatprep.mubr.bf16.mxu0 0
  %2607 = vmatmul.mubr.bf16.gmra.mxu0 %v2465
  %v2608 = vpop.f32.mrf.mxu0
  %v2609 = vadd.f32 %v30, %v2608
  %v2610 = vpop.f32.mrf.mxu0
  %v2611 = vadd.f32 %v31, %v2610
  %v2612 = vpop.f32.mrf.mxu0
  %v2613 = vadd.f32 %v32, %v2612
  %v2614 = vpop.f32.mrf.mxu0
  %v2615 = vadd.f32 %v33, %v2614
  %2616 = vmatprep.mubr.bf16.mxu0 0
  %2617 = vmatmul.mubr.bf16.gmra.mxu0 %v2468
  %v2618 = vpop.f32.mrf.mxu0
  %v2619 = vadd.f32 %v34, %v2618
  %v2620 = vpop.f32.mrf.mxu0
  %v2621 = vadd.f32 %v35, %v2620
  %v2622 = vpop.f32.mrf.mxu0
  %v2623 = vadd.f32 %v36, %v2622
  %v2624 = vpop.f32.mrf.mxu0
  %v2625 = vadd.f32 %v37, %v2624
  %2626 = vmatprep.mubr.bf16.mxu0 0
  %2627 = vmatmul.mubr.bf16.gmra.mxu0 %v2471
  %v2628 = vpop.f32.mrf.mxu0
  %v2629 = vadd.f32 %v38, %v2628
  %v2630 = vpop.f32.mrf.mxu0
  %v2631 = vadd.f32 %v39, %v2630
  %v2632 = vpop.f32.mrf.mxu0
  %v2633 = vadd.f32 %v40, %v2632
  %v2634 = vpop.f32.mrf.mxu0
  %v2635 = vadd.f32 %v41, %v2634
  %2636 = vmatprep.mubr.bf16.mxu0 0
  %2637 = vmatmul.mubr.bf16.gmra.mxu0 %v2474
  %v2638 = vpop.f32.mrf.mxu0
  %v2639 = vadd.f32 %v42, %v2638
  %v2640 = vpop.f32.mrf.mxu0
  %v2641 = vadd.f32 %v43, %v2640
  %v2642 = vpop.f32.mrf.mxu0
  %v2643 = vadd.f32 %v44, %v2642
  %v2644 = vpop.f32.mrf.mxu0
  %v2645 = vadd.f32 %v45, %v2644
  %2646 = vmatprep.mubr.bf16.mxu0 0
  %2647 = vmatmul.mubr.bf16.gmra.mxu0 %v2477
  %v2648 = vpop.f32.mrf.mxu0
  %v2649 = vadd.f32 %v46, %v2648
  %v2650 = vpop.f32.mrf.mxu0
  %v2651 = vadd.f32 %v47, %v2650
  %v2652 = vpop.f32.mrf.mxu0
  %v2653 = vadd.f32 %v48, %v2652
  %v2654 = vpop.f32.mrf.mxu0
  %v2655 = vadd.f32 %v49, %v2654
  %2656 = vmatprep.mubr.bf16.mxu0 0
  %2657 = vmatmul.mubr.bf16.gmra.mxu0 %v2480
  %v2658 = vpop.f32.mrf.mxu0
  %v2659 = vadd.f32 %v50, %v2658
  %v2660 = vpop.f32.mrf.mxu0
  %v2661 = vadd.f32 %v51, %v2660
  %v2662 = vpop.f32.mrf.mxu0
  %v2663 = vadd.f32 %v52, %v2662
  %v2664 = vpop.f32.mrf.mxu0
  %v2665 = vadd.f32 %v53, %v2664
  %2666 = vmatprep.mubr.bf16.mxu0 0
  %2667 = vmatmul.mubr.bf16.gmra.mxu0 %v2483
  %v2668 = vpop.f32.mrf.mxu0
  %v2669 = vadd.f32 %v54, %v2668
  %v2670 = vpop.f32.mrf.mxu0
  %v2671 = vadd.f32 %v55, %v2670
  %v2672 = vpop.f32.mrf.mxu0
  %v2673 = vadd.f32 %v56, %v2672
  %v2674 = vpop.f32.mrf.mxu0
  %v2675 = vadd.f32 %v57, %v2674
  %2676 = vmatprep.mubr.bf16.mxu0 0
  %2677 = vmatmul.mubr.bf16.gmra.mxu0 %v2486
  %v2678 = vpop.f32.mrf.mxu0
  %v2679 = vadd.f32 %v58, %v2678
  %v2680 = vpop.f32.mrf.mxu0
  %v2681 = vadd.f32 %v59, %v2680
  %v2682 = vpop.f32.mrf.mxu0
  %v2683 = vadd.f32 %v60, %v2682
  %v2684 = vpop.f32.mrf.mxu0
  %v2685 = vadd.f32 %v61, %v2684
  %2686 = vmatprep.mubr.bf16.mxu0 0
  %2687 = vmatmul.mubr.bf16.gmra.mxu0 %v2489
  %v2688 = vpop.f32.mrf.mxu0
  %v2689 = vadd.f32 %v62, %v2688
  %v2690 = vpop.f32.mrf.mxu0
  %v2691 = vadd.f32 %v63, %v2690
  %v2692 = vpop.f32.mrf.mxu0
  %v2693 = vadd.f32 %v64, %v2692
  %v2694 = vpop.f32.mrf.mxu0
  %v2695 = vadd.f32 %v65, %v2694
  %2696 = vmatprep.mubr.bf16.mxu0 0
  %2697 = vmatmul.mubr.bf16.gmra.mxu0 %v2492
  %v2698 = vpop.f32.mrf.mxu0
  %v2699 = vadd.f32 %v66, %v2698
  %v2700 = vpop.f32.mrf.mxu0
  %v2701 = vadd.f32 %v67, %v2700
  %v2702 = vpop.f32.mrf.mxu0
  %v2703 = vadd.f32 %v68, %v2702
  %v2704 = vpop.f32.mrf.mxu0
  %v2705 = vadd.f32 %v69, %v2704
  %2706 = vmatprep.mubr.bf16.mxu0 0
  %2707 = vmatmul.mubr.bf16.gmra.mxu0 %v2495
  %v2708 = vpop.f32.mrf.mxu0
  %v2709 = vadd.f32 %v70, %v2708
  %v2710 = vpop.f32.mrf.mxu0
  %v2711 = vadd.f32 %v71, %v2710
  %v2712 = vpop.f32.mrf.mxu0
  %v2713 = vadd.f32 %v72, %v2712
  %v2714 = vpop.f32.mrf.mxu0
  %v2715 = vadd.f32 %v73, %v2714
  %2716 = vmatprep.mubr.bf16.mxu0 0
  %2717 = vmatmul.mubr.bf16.gmra.mxu0 %v2498
  %v2718 = vpop.f32.mrf.mxu0
  %v2719 = vadd.f32 %v74, %v2718
  %v2720 = vpop.f32.mrf.mxu0
  %v2721 = vadd.f32 %v75, %v2720
  %v2722 = vpop.f32.mrf.mxu0
  %v2723 = vadd.f32 %v76, %v2722
  %v2724 = vpop.f32.mrf.mxu0
  %v2725 = vadd.f32 %v77, %v2724
  %2726 = vmatprep.mubr.bf16.mxu0 0
  %2727 = vmatmul.mubr.bf16.gmra.mxu0 %v2501
  %v2728 = vpop.f32.mrf.mxu0
  %v2729 = vadd.f32 %v78, %v2728
  %v2730 = vpop.f32.mrf.mxu0
  %v2731 = vadd.f32 %v79, %v2730
  %v2732 = vpop.f32.mrf.mxu0
  %v2733 = vadd.f32 %v80, %v2732
  %v2734 = vpop.f32.mrf.mxu0
  %v2735 = vadd.f32 %v81, %v2734
  %2736 = vmatprep.mubr.bf16.mxu0 0
  %2737 = vmatmul.mubr.bf16.gmra.mxu0 %v2504
  %v2738 = vpop.f32.mrf.mxu0
  %v2739 = vadd.f32 %v82, %v2738
  %v2740 = vpop.f32.mrf.mxu0
  %v2741 = vadd.f32 %v83, %v2740
  %v2742 = vpop.f32.mrf.mxu0
  %v2743 = vadd.f32 %v84, %v2742
  %v2744 = vpop.f32.mrf.mxu0
  %v2745 = vadd.f32 %v85, %v2744
  %2746 = vdwg.mxu0
  %v2747 = vmax.f32 %v2589, %v2591
  %2748 = vmax.xlane.f32.xlu0 %v2747
  %v2749 = vpop.xlane.xlu0 %2748
  %v2750 = vmax.f32 %v2593, %v2595
  %2751 = vmax.xlane.f32.xlu0 %v2750
  %v2752 = vpop.xlane.xlu0 %2751
  %v2753 = vmax.f32 %v2599, %v2601
  %2754 = vmax.xlane.f32.xlu0 %v2753
  %v2755 = vpop.xlane.xlu0 %2754
  %v2756 = vmax.f32 %v2603, %v2605
  %2757 = vmax.xlane.f32.xlu0 %v2756
  %v2758 = vpop.xlane.xlu0 %2757
  %v2759 = vmax.f32 %v2609, %v2611
  %2760 = vmax.xlane.f32.xlu0 %v2759
  %v2761 = vpop.xlane.xlu0 %2760
  %v2762 = vmax.f32 %v2613, %v2615
  %2763 = vmax.xlane.f32.xlu0 %v2762
  %v2764 = vpop.xlane.xlu0 %2763
  %v2765 = vmax.f32 %v2619, %v2621
  %2766 = vmax.xlane.f32.xlu0 %v2765
  %v2767 = vpop.xlane.xlu0 %2766
  %v2768 = vmax.f32 %v2623, %v2625
  %2769 = vmax.xlane.f32.xlu0 %v2768
  %v2770 = vpop.xlane.xlu0 %2769
  %v2771 = vmax.f32 %v2629, %v2631
  %2772 = vmax.xlane.f32.xlu0 %v2771
  %v2773 = vpop.xlane.xlu0 %2772
  %v2774 = vmax.f32 %v2633, %v2635
  %2775 = vmax.xlane.f32.xlu0 %v2774
  %v2776 = vpop.xlane.xlu0 %2775
  %v2777 = vmax.f32 %v2639, %v2641
  %2778 = vmax.xlane.f32.xlu0 %v2777
  %v2779 = vpop.xlane.xlu0 %2778
  %v2780 = vmax.f32 %v2643, %v2645
  %2781 = vmax.xlane.f32.xlu0 %v2780
  %v2782 = vpop.xlane.xlu0 %2781
  %v2783 = vmax.f32 %v2649, %v2651
  %2784 = vmax.xlane.f32.xlu0 %v2783
  %v2785 = vpop.xlane.xlu0 %2784
  %v2786 = vmax.f32 %v2653, %v2655
  %2787 = vmax.xlane.f32.xlu0 %v2786
  %v2788 = vpop.xlane.xlu0 %2787
  %v2789 = vmax.f32 %v2659, %v2661
  %2790 = vmax.xlane.f32.xlu0 %v2789
  %v2791 = vpop.xlane.xlu0 %2790
  %v2792 = vmax.f32 %v2663, %v2665
  %2793 = vmax.xlane.f32.xlu0 %v2792
  %v2794 = vpop.xlane.xlu0 %2793
  %v2795 = vmax.f32 %v2669, %v2671
  %2796 = vmax.xlane.f32.xlu0 %v2795
  %v2797 = vpop.xlane.xlu0 %2796
  %v2798 = vmax.f32 %v2673, %v2675
  %2799 = vmax.xlane.f32.xlu0 %v2798
  %v2800 = vpop.xlane.xlu0 %2799
  %v2801 = vmax.f32 %v2679, %v2681
  %2802 = vmax.xlane.f32.xlu0 %v2801
  %v2803 = vpop.xlane.xlu0 %2802
  %v2804 = vmax.f32 %v2683, %v2685
  %2805 = vmax.xlane.f32.xlu0 %v2804
  %v2806 = vpop.xlane.xlu0 %2805
  %v2807 = vmax.f32 %v2689, %v2691
  %2808 = vmax.xlane.f32.xlu0 %v2807
  %v2809 = vpop.xlane.xlu0 %2808
  %v2810 = vmax.f32 %v2693, %v2695
  %2811 = vmax.xlane.f32.xlu0 %v2810
  %v2812 = vpop.xlane.xlu0 %2811
  %v2813 = vmax.f32 %v2699, %v2701
  %2814 = vmax.xlane.f32.xlu0 %v2813
  %v2815 = vpop.xlane.xlu0 %2814
  %v2816 = vmax.f32 %v2703, %v2705
  %2817 = vmax.xlane.f32.xlu0 %v2816
  %v2818 = vpop.xlane.xlu0 %2817
  %v2819 = vmax.f32 %v2709, %v2711
  %2820 = vmax.xlane.f32.xlu0 %v2819
  %v2821 = vpop.xlane.xlu0 %2820
  %v2822 = vmax.f32 %v2713, %v2715
  %2823 = vmax.xlane.f32.xlu0 %v2822
  %v2824 = vpop.xlane.xlu0 %2823
  %v2825 = vmax.f32 %v2719, %v2721
  %2826 = vmax.xlane.f32.xlu0 %v2825
  %v2827 = vpop.xlane.xlu0 %2826
  %v2828 = vmax.f32 %v2723, %v2725
  %2829 = vmax.xlane.f32.xlu0 %v2828
  %v2830 = vpop.xlane.xlu0 %2829
  %v2831 = vmax.f32 %v2729, %v2731
  %2832 = vmax.xlane.f32.xlu0 %v2831
  %v2833 = vpop.xlane.xlu0 %2832
  %v2834 = vmax.f32 %v2733, %v2735
  %2835 = vmax.xlane.f32.xlu0 %v2834
  %v2836 = vpop.xlane.xlu0 %2835
  %v2837 = vmax.f32 %v2739, %v2741
  %2838 = vmax.xlane.f32.xlu0 %v2837
  %v2839 = vpop.xlane.xlu0 %2838
  %v2840 = vmax.f32 %v2743, %v2745
  %2841 = vmax.xlane.f32.xlu0 %v2840
  %v2842 = vpop.xlane.xlu0 %2841
  %v2843 = vsub.f32 %v2589, %v2749
  %v2844 = vsub.f32 %v2591, %v2749
  %v2845 = vsub.f32 %v2593, %v2752
  %v2846 = vsub.f32 %v2595, %v2752
  %v2847 = vsub.f32 %v2599, %v2755
  %v2848 = vsub.f32 %v2601, %v2755
  %v2849 = vsub.f32 %v2603, %v2758
  %v2850 = vsub.f32 %v2605, %v2758
  %v2851 = vsub.f32 %v2609, %v2761
  %v2852 = vsub.f32 %v2611, %v2761
  %v2853 = vsub.f32 %v2613, %v2764
  %v2854 = vsub.f32 %v2615, %v2764
  %v2855 = vsub.f32 %v2619, %v2767
  %v2856 = vsub.f32 %v2621, %v2767
  %v2857 = vsub.f32 %v2623, %v2770
  %v2858 = vsub.f32 %v2625, %v2770
  %v2859 = vsub.f32 %v2629, %v2773
  %v2860 = vsub.f32 %v2631, %v2773
  %v2861 = vsub.f32 %v2633, %v2776
  %v2862 = vsub.f32 %v2635, %v2776
  %v2863 = vsub.f32 %v2639, %v2779
  %v2864 = vsub.f32 %v2641, %v2779
  %v2865 = vsub.f32 %v2643, %v2782
  %v2866 = vsub.f32 %v2645, %v2782
  %v2867 = vsub.f32 %v2649, %v2785
  %v2868 = vsub.f32 %v2651, %v2785
  %v2869 = vsub.f32 %v2653, %v2788
  %v2870 = vsub.f32 %v2655, %v2788
  %v2871 = vsub.f32 %v2659, %v2791
  %v2872 = vsub.f32 %v2661, %v2791
  %v2873 = vsub.f32 %v2663, %v2794
  %v2874 = vsub.f32 %v2665, %v2794
  %v2875 = vsub.f32 %v2669, %v2797
  %v2876 = vsub.f32 %v2671, %v2797
  %v2877 = vsub.f32 %v2673, %v2800
  %v2878 = vsub.f32 %v2675, %v2800
  %v2879 = vsub.f32 %v2679, %v2803
  %v2880 = vsub.f32 %v2681, %v2803
  %v2881 = vsub.f32 %v2683, %v2806
  %v2882 = vsub.f32 %v2685, %v2806
  %v2883 = vsub.f32 %v2689, %v2809
  %v2884 = vsub.f32 %v2691, %v2809
  %v2885 = vsub.f32 %v2693, %v2812
  %v2886 = vsub.f32 %v2695, %v2812
  %v2887 = vsub.f32 %v2699, %v2815
  %v2888 = vsub.f32 %v2701, %v2815
  %v2889 = vsub.f32 %v2703, %v2818
  %v2890 = vsub.f32 %v2705, %v2818
  %v2891 = vsub.f32 %v2709, %v2821
  %v2892 = vsub.f32 %v2711, %v2821
  %v2893 = vsub.f32 %v2713, %v2824
  %v2894 = vsub.f32 %v2715, %v2824
  %v2895 = vsub.f32 %v2719, %v2827
  %v2896 = vsub.f32 %v2721, %v2827
  %v2897 = vsub.f32 %v2723, %v2830
  %v2898 = vsub.f32 %v2725, %v2830
  %v2899 = vsub.f32 %v2729, %v2833
  %v2900 = vsub.f32 %v2731, %v2833
  %v2901 = vsub.f32 %v2733, %v2836
  %v2902 = vsub.f32 %v2735, %v2836
  %v2903 = vsub.f32 %v2739, %v2839
  %v2904 = vsub.f32 %v2741, %v2839
  %v2905 = vsub.f32 %v2743, %v2842
  %v2906 = vsub.f32 %v2745, %v2842
  %v2907 = vmul.f32 %v2843, 1.442695
  %v2908 = vpow.pop %v2907
  %v2909 = vmul.f32 %v2844, 1.442695
  %v2910 = vpow.pop %v2909
  %v2911 = vmul.f32 %v2845, 1.442695
  %v2912 = vpow.pop %v2911
  %v2913 = vmul.f32 %v2846, 1.442695
  %v2914 = vpow.pop %v2913
  %v2915 = vmul.f32 %v2847, 1.442695
  %v2916 = vpow.pop %v2915
  %v2917 = vmul.f32 %v2848, 1.442695
  %v2918 = vpow.pop %v2917
  %v2919 = vmul.f32 %v2849, 1.442695
  %v2920 = vpow.pop %v2919
  %v2921 = vmul.f32 %v2850, 1.442695
  %v2922 = vpow.pop %v2921
  %v2923 = vmul.f32 %v2851, 1.442695
  %v2924 = vpow.pop %v2923
  %v2925 = vmul.f32 %v2852, 1.442695
  %v2926 = vpow.pop %v2925
  %v2927 = vmul.f32 %v2853, 1.442695
  %v2928 = vpow.pop %v2927
  %v2929 = vmul.f32 %v2854, 1.442695
  %v2930 = vpow.pop %v2929
  %v2931 = vmul.f32 %v2855, 1.442695
  %v2932 = vpow.pop %v2931
  %v2933 = vmul.f32 %v2856, 1.442695
  %v2934 = vpow.pop %v2933
  %v2935 = vmul.f32 %v2857, 1.442695
  %v2936 = vpow.pop %v2935
  %v2937 = vmul.f32 %v2858, 1.442695
  %v2938 = vpow.pop %v2937
  %v2939 = vmul.f32 %v2859, 1.442695
  %v2940 = vpow.pop %v2939
  %v2941 = vmul.f32 %v2860, 1.442695
  %v2942 = vpow.pop %v2941
  %v2943 = vmul.f32 %v2861, 1.442695
  %v2944 = vpow.pop %v2943
  %v2945 = vmul.f32 %v2862, 1.442695
  %v2946 = vpow.pop %v2945
  %v2947 = vmul.f32 %v2863, 1.442695
  %v2948 = vpow.pop %v2947
  %v2949 = vmul.f32 %v2864, 1.442695
  %v2950 = vpow.pop %v2949
  %v2951 = vmul.f32 %v2865, 1.442695
  %v2952 = vpow.pop %v2951
  %v2953 = vmul.f32 %v2866, 1.442695
  %v2954 = vpow.pop %v2953
  %v2955 = vmul.f32 %v2867, 1.442695
  %v2956 = vpow.pop %v2955
  %v2957 = vmul.f32 %v2868, 1.442695
  %v2958 = vpow.pop %v2957
  %v2959 = vmul.f32 %v2869, 1.442695
  %v2960 = vpow.pop %v2959
  %v2961 = vmul.f32 %v2870, 1.442695
  %v2962 = vpow.pop %v2961
  %v2963 = vmul.f32 %v2871, 1.442695
  %v2964 = vpow.pop %v2963
  %v2965 = vmul.f32 %v2872, 1.442695
  %v2966 = vpow.pop %v2965
  %v2967 = vmul.f32 %v2873, 1.442695
  %v2968 = vpow.pop %v2967
  %v2969 = vmul.f32 %v2874, 1.442695
  %v2970 = vpow.pop %v2969
  %v2971 = vmul.f32 %v2875, 1.442695
  %v2972 = vpow.pop %v2971
  %v2973 = vmul.f32 %v2876, 1.442695
  %v2974 = vpow.pop %v2973
  %v2975 = vmul.f32 %v2877, 1.442695
  %v2976 = vpow.pop %v2975
  %v2977 = vmul.f32 %v2878, 1.442695
  %v2978 = vpow.pop %v2977
  %v2979 = vmul.f32 %v2879, 1.442695
  %v2980 = vpow.pop %v2979
  %v2981 = vmul.f32 %v2880, 1.442695
  %v2982 = vpow.pop %v2981
  %v2983 = vmul.f32 %v2881, 1.442695
  %v2984 = vpow.pop %v2983
  %v2985 = vmul.f32 %v2882, 1.442695
  %v2986 = vpow.pop %v2985
  %v2987 = vmul.f32 %v2883, 1.442695
  %v2988 = vpow.pop %v2987
  %v2989 = vmul.f32 %v2884, 1.442695
  %v2990 = vpow.pop %v2989
  %v2991 = vmul.f32 %v2885, 1.442695
  %v2992 = vpow.pop %v2991
  %v2993 = vmul.f32 %v2886, 1.442695
  %v2994 = vpow.pop %v2993
  %v2995 = vmul.f32 %v2887, 1.442695
  %v2996 = vpow.pop %v2995
  %v2997 = vmul.f32 %v2888, 1.442695
  %v2998 = vpow.pop %v2997
  %v2999 = vmul.f32 %v2889, 1.442695
  %v3000 = vpow.pop %v2999
  %v3001 = vmul.f32 %v2890, 1.442695
  %v3002 = vpow.pop %v3001
  %v3003 = vmul.f32 %v2891, 1.442695
  %v3004 = vpow.pop %v3003
  %v3005 = vmul.f32 %v2892, 1.442695
  %v3006 = vpow.pop %v3005
  %v3007 = vmul.f32 %v2893, 1.442695
  %v3008 = vpow.pop %v3007
  %v3009 = vmul.f32 %v2894, 1.442695
  %v3010 = vpow.pop %v3009
  %v3011 = vmul.f32 %v2895, 1.442695
  %v3012 = vpow.pop %v3011
  %v3013 = vmul.f32 %v2896, 1.442695
  %v3014 = vpow.pop %v3013
  %v3015 = vmul.f32 %v2897, 1.442695
  %v3016 = vpow.pop %v3015
  %v3017 = vmul.f32 %v2898, 1.442695
  %v3018 = vpow.pop %v3017
  %v3019 = vmul.f32 %v2899, 1.442695
  %v3020 = vpow.pop %v3019
  %v3021 = vmul.f32 %v2900, 1.442695
  %v3022 = vpow.pop %v3021
  %v3023 = vmul.f32 %v2901, 1.442695
  %v3024 = vpow.pop %v3023
  %v3025 = vmul.f32 %v2902, 1.442695
  %v3026 = vpow.pop %v3025
  %v3027 = vmul.f32 %v2903, 1.442695
  %v3028 = vpow.pop %v3027
  %v3029 = vmul.f32 %v2904, 1.442695
  %v3030 = vpow.pop %v3029
  %v3031 = vmul.f32 %v2905, 1.442695
  %v3032 = vpow.pop %v3031
  %v3033 = vmul.f32 %v2906, 1.442695
  %v3034 = vpow.pop %v3033
  %v3035 = vadd.f32 %v2908, %v2910
  %3036 = vadd.xlane.f32.xlu0 %v3035
  %v3037 = vpop.xlane.xlu0 %3036
  %v3038 = vadd.f32 %v2912, %v2914
  %3039 = vadd.xlane.f32.xlu0 %v3038
  %v3040 = vpop.xlane.xlu0 %3039
  %v3041 = vadd.f32 %v2916, %v2918
  %3042 = vadd.xlane.f32.xlu0 %v3041
  %v3043 = vpop.xlane.xlu0 %3042
  %v3044 = vadd.f32 %v2920, %v2922
  %3045 = vadd.xlane.f32.xlu0 %v3044
  %v3046 = vpop.xlane.xlu0 %3045
  %v3047 = vadd.f32 %v2924, %v2926
  %3048 = vadd.xlane.f32.xlu0 %v3047
  %v3049 = vpop.xlane.xlu0 %3048
  %v3050 = vadd.f32 %v2928, %v2930
  %3051 = vadd.xlane.f32.xlu0 %v3050
  %v3052 = vpop.xlane.xlu0 %3051
  %v3053 = vadd.f32 %v2932, %v2934
  %3054 = vadd.xlane.f32.xlu0 %v3053
  %v3055 = vpop.xlane.xlu0 %3054
  %v3056 = vadd.f32 %v2936, %v2938
  %3057 = vadd.xlane.f32.xlu0 %v3056
  %v3058 = vpop.xlane.xlu0 %3057
  %v3059 = vadd.f32 %v2940, %v2942
  %3060 = vadd.xlane.f32.xlu0 %v3059
  %v3061 = vpop.xlane.xlu0 %3060
  %v3062 = vadd.f32 %v2944, %v2946
  %3063 = vadd.xlane.f32.xlu0 %v3062
  %v3064 = vpop.xlane.xlu0 %3063
  %v3065 = vadd.f32 %v2948, %v2950
  %3066 = vadd.xlane.f32.xlu0 %v3065
  %v3067 = vpop.xlane.xlu0 %3066
  %v3068 = vadd.f32 %v2952, %v2954
  %3069 = vadd.xlane.f32.xlu0 %v3068
  %v3070 = vpop.xlane.xlu0 %3069
  %v3071 = vadd.f32 %v2956, %v2958
  %3072 = vadd.xlane.f32.xlu0 %v3071
  %v3073 = vpop.xlane.xlu0 %3072
  %v3074 = vadd.f32 %v2960, %v2962
  %3075 = vadd.xlane.f32.xlu0 %v3074
  %v3076 = vpop.xlane.xlu0 %3075
  %v3077 = vadd.f32 %v2964, %v2966
  %3078 = vadd.xlane.f32.xlu0 %v3077
  %v3079 = vpop.xlane.xlu0 %3078
  %v3080 = vadd.f32 %v2968, %v2970
  %3081 = vadd.xlane.f32.xlu0 %v3080
  %v3082 = vpop.xlane.xlu0 %3081
  %v3083 = vadd.f32 %v2972, %v2974
  %3084 = vadd.xlane.f32.xlu0 %v3083
  %v3085 = vpop.xlane.xlu0 %3084
  %v3086 = vadd.f32 %v2976, %v2978
  %3087 = vadd.xlane.f32.xlu0 %v3086
  %v3088 = vpop.xlane.xlu0 %3087
  %v3089 = vadd.f32 %v2980, %v2982
  %3090 = vadd.xlane.f32.xlu0 %v3089
  %v3091 = vpop.xlane.xlu0 %3090
  %v3092 = vadd.f32 %v2984, %v2986
  %3093 = vadd.xlane.f32.xlu0 %v3092
  %v3094 = vpop.xlane.xlu0 %3093
  %v3095 = vadd.f32 %v2988, %v2990
  %3096 = vadd.xlane.f32.xlu0 %v3095
  %v3097 = vpop.xlane.xlu0 %3096
  %v3098 = vadd.f32 %v2992, %v2994
  %3099 = vadd.xlane.f32.xlu0 %v3098
  %v3100 = vpop.xlane.xlu0 %3099
  %v3101 = vadd.f32 %v2996, %v2998
  %3102 = vadd.xlane.f32.xlu0 %v3101
  %v3103 = vpop.xlane.xlu0 %3102
  %v3104 = vadd.f32 %v3000, %v3002
  %3105 = vadd.xlane.f32.xlu0 %v3104
  %v3106 = vpop.xlane.xlu0 %3105
  %v3107 = vadd.f32 %v3004, %v3006
  %3108 = vadd.xlane.f32.xlu0 %v3107
  %v3109 = vpop.xlane.xlu0 %3108
  %v3110 = vadd.f32 %v3008, %v3010
  %3111 = vadd.xlane.f32.xlu0 %v3110
  %v3112 = vpop.xlane.xlu0 %3111
  %v3113 = vadd.f32 %v3012, %v3014
  %3114 = vadd.xlane.f32.xlu0 %v3113
  %v3115 = vpop.xlane.xlu0 %3114
  %v3116 = vadd.f32 %v3016, %v3018
  %3117 = vadd.xlane.f32.xlu0 %v3116
  %v3118 = vpop.xlane.xlu0 %3117
  %v3119 = vadd.f32 %v3020, %v3022
  %3120 = vadd.xlane.f32.xlu0 %v3119
  %v3121 = vpop.xlane.xlu0 %3120
  %v3122 = vadd.f32 %v3024, %v3026
  %3123 = vadd.xlane.f32.xlu0 %v3122
  %v3124 = vpop.xlane.xlu0 %3123
  %v3125 = vadd.f32 %v3028, %v3030
  %3126 = vadd.xlane.f32.xlu0 %v3125
  %v3127 = vpop.xlane.xlu0 %3126
  %v3128 = vadd.f32 %v3032, %v3034
  %3129 = vadd.xlane.f32.xlu0 %v3128
  %v3130 = vpop.xlane.xlu0 %3129
  %v3131 = vrcp.pop %v3037
  %v3132 = vmul.f32 %v2908, %v3131
  %v3133 = vmul.f32 %v2910, %v3131
  %v3134 = vrcp.pop %v3040
  %v3135 = vmul.f32 %v2912, %v3134
  %v3136 = vmul.f32 %v2914, %v3134
  %v3137 = vrcp.pop %v3043
  %v3138 = vmul.f32 %v2916, %v3137
  %v3139 = vmul.f32 %v2918, %v3137
  %v3140 = vrcp.pop %v3046
  %v3141 = vmul.f32 %v2920, %v3140
  %v3142 = vmul.f32 %v2922, %v3140
  %v3143 = vrcp.pop %v3049
  %v3144 = vmul.f32 %v2924, %v3143
  %v3145 = vmul.f32 %v2926, %v3143
  %v3146 = vrcp.pop %v3052
  %v3147 = vmul.f32 %v2928, %v3146
  %v3148 = vmul.f32 %v2930, %v3146
  %v3149 = vrcp.pop %v3055
  %v3150 = vmul.f32 %v2932, %v3149
  %v3151 = vmul.f32 %v2934, %v3149
  %v3152 = vrcp.pop %v3058
  %v3153 = vmul.f32 %v2936, %v3152
  %v3154 = vmul.f32 %v2938, %v3152
  %v3155 = vrcp.pop %v3061
  %v3156 = vmul.f32 %v2940, %v3155
  %v3157 = vmul.f32 %v2942, %v3155
  %v3158 = vrcp.pop %v3064
  %v3159 = vmul.f32 %v2944, %v3158
  %v3160 = vmul.f32 %v2946, %v3158
  %v3161 = vrcp.pop %v3067
  %v3162 = vmul.f32 %v2948, %v3161
  %v3163 = vmul.f32 %v2950, %v3161
  %v3164 = vrcp.pop %v3070
  %v3165 = vmul.f32 %v2952, %v3164
  %v3166 = vmul.f32 %v2954, %v3164
  %v3167 = vrcp.pop %v3073
  %v3168 = vmul.f32 %v2956, %v3167
  %v3169 = vmul.f32 %v2958, %v3167
  %v3170 = vrcp.pop %v3076
  %v3171 = vmul.f32 %v2960, %v3170
  %v3172 = vmul.f32 %v2962, %v3170
  %v3173 = vrcp.pop %v3079
  %v3174 = vmul.f32 %v2964, %v3173
  %v3175 = vmul.f32 %v2966, %v3173
  %v3176 = vrcp.pop %v3082
  %v3177 = vmul.f32 %v2968, %v3176
  %v3178 = vmul.f32 %v2970, %v3176
  %v3179 = vrcp.pop %v3085
  %v3180 = vmul.f32 %v2972, %v3179
  %v3181 = vmul.f32 %v2974, %v3179
  %v3182 = vrcp.pop %v3088
  %v3183 = vmul.f32 %v2976, %v3182
  %v3184 = vmul.f32 %v2978, %v3182
  %v3185 = vrcp.pop %v3091
  %v3186 = vmul.f32 %v2980, %v3185
  %v3187 = vmul.f32 %v2982, %v3185
  %v3188 = vrcp.pop %v3094
  %v3189 = vmul.f32 %v2984, %v3188
  %v3190 = vmul.f32 %v2986, %v3188
  %v3191 = vrcp.pop %v3097
  %v3192 = vmul.f32 %v2988, %v3191
  %v3193 = vmul.f32 %v2990, %v3191
  %v3194 = vrcp.pop %v3100
  %v3195 = vmul.f32 %v2992, %v3194
  %v3196 = vmul.f32 %v2994, %v3194
  %v3197 = vrcp.pop %v3103
  %v3198 = vmul.f32 %v2996, %v3197
  %v3199 = vmul.f32 %v2998, %v3197
  %v3200 = vrcp.pop %v3106
  %v3201 = vmul.f32 %v3000, %v3200
  %v3202 = vmul.f32 %v3002, %v3200
  %v3203 = vrcp.pop %v3109
  %v3204 = vmul.f32 %v3004, %v3203
  %v3205 = vmul.f32 %v3006, %v3203
  %v3206 = vrcp.pop %v3112
  %v3207 = vmul.f32 %v3008, %v3206
  %v3208 = vmul.f32 %v3010, %v3206
  %v3209 = vrcp.pop %v3115
  %v3210 = vmul.f32 %v3012, %v3209
  %v3211 = vmul.f32 %v3014, %v3209
  %v3212 = vrcp.pop %v3118
  %v3213 = vmul.f32 %v3016, %v3212
  %v3214 = vmul.f32 %v3018, %v3212
  %v3215 = vrcp.pop %v3121
  %v3216 = vmul.f32 %v3020, %v3215
  %v3217 = vmul.f32 %v3022, %v3215
  %v3218 = vrcp.pop %v3124
  %v3219 = vmul.f32 %v3024, %v3218
  %v3220 = vmul.f32 %v3026, %v3218
  %v3221 = vrcp.pop %v3127
  %v3222 = vmul.f32 %v3028, %v3221
  %v3223 = vmul.f32 %v3030, %v3221
  %v3224 = vrcp.pop %v3130
  %v3225 = vmul.f32 %v3032, %v3224
  %v3226 = vmul.f32 %v3034, %v3224
  %v3227 = vpack.c.bf16 %v3135, %v3132
  %v3228 = vpack.c.bf16 %v3136, %v3133
  %v3229 = vpack.c.bf16 %v3141, %v3138
  %v3230 = vpack.c.bf16 %v3142, %v3139
  %v3231 = vpack.c.bf16 %v3147, %v3144
  %v3232 = vpack.c.bf16 %v3148, %v3145
  %v3233 = vpack.c.bf16 %v3153, %v3150
  %v3234 = vpack.c.bf16 %v3154, %v3151
  %v3235 = vpack.c.bf16 %v3159, %v3156
  %v3236 = vpack.c.bf16 %v3160, %v3157
  %v3237 = vpack.c.bf16 %v3165, %v3162
  %v3238 = vpack.c.bf16 %v3166, %v3163
  %v3239 = vpack.c.bf16 %v3171, %v3168
  %v3240 = vpack.c.bf16 %v3172, %v3169
  %v3241 = vpack.c.bf16 %v3177, %v3174
  %v3242 = vpack.c.bf16 %v3178, %v3175
  %v3243 = vpack.c.bf16 %v3183, %v3180
  %v3244 = vpack.c.bf16 %v3184, %v3181
  %v3245 = vpack.c.bf16 %v3189, %v3186
  %v3246 = vpack.c.bf16 %v3190, %v3187
  %v3247 = vpack.c.bf16 %v3195, %v3192
  %v3248 = vpack.c.bf16 %v3196, %v3193
  %v3249 = vpack.c.bf16 %v3201, %v3198
  %v3250 = vpack.c.bf16 %v3202, %v3199
  %v3251 = vpack.c.bf16 %v3207, %v3204
  %v3252 = vpack.c.bf16 %v3208, %v3205
  %v3253 = vpack.c.bf16 %v3213, %v3210
  %v3254 = vpack.c.bf16 %v3214, %v3211
  %v3255 = vpack.c.bf16 %v3219, %v3216
  %v3256 = vpack.c.bf16 %v3220, %v3217
  %v3257 = vpack.c.bf16 %v3225, %v3222
  %v3258 = vpack.c.bf16 %v3226, %v3223
  %3259 = vrot.lane.b32.xlu0 %v2394, 48
  %v3260 = vpop.permute.xlu0 %3259
  %3261 = vrot.lane.b32.xlu0 %v2395, 48
  %v3262 = vpop.permute.xlu0 %3261
  %3263 = vrot.lane.b32.xlu0 %v2396, 48
  %v3264 = vpop.permute.xlu0 %3263
  %3265 = vrot.lane.b32.xlu0 %v2397, 48
  %v3266 = vpop.permute.xlu0 %3265
  %3267 = vrot.lane.b32.xlu0 %v2398, 48
  %v3268 = vpop.permute.xlu0 %3267
  %3269 = vrot.lane.b32.xlu0 %v2399, 48
  %v3270 = vpop.permute.xlu0 %3269
  %3271 = vrot.lane.b32.xlu0 %v2400, 48
  %v3272 = vpop.permute.xlu0 %3271
  %3273 = vrot.lane.b32.xlu0 %v2401, 48
  %v3274 = vpop.permute.xlu0 %3273
  %3275 = vrot.lane.b32.xlu0 %v2402, 48
  %v3276 = vpop.permute.xlu0 %3275
  %3277 = vrot.lane.b32.xlu0 %v2403, 48
  %v3278 = vpop.permute.xlu0 %3277
  %3279 = vrot.lane.b32.xlu0 %v2404, 48
  %v3280 = vpop.permute.xlu0 %3279
  %3281 = vrot.lane.b32.xlu0 %v2405, 48
  %v3282 = vpop.permute.xlu0 %3281
  %3283 = vrot.lane.b32.xlu0 %v2406, 48
  %v3284 = vpop.permute.xlu0 %3283
  %3285 = vrot.lane.b32.xlu0 %v2407, 48
  %v3286 = vpop.permute.xlu0 %3285
  %3287 = vrot.lane.b32.xlu0 %v2408, 48
  %v3288 = vpop.permute.xlu0 %3287
  %3289 = vrot.lane.b32.xlu0 %v2409, 48
  %v3290 = vpop.permute.xlu0 %3289
  %3307 = vmatprep.subr.bf16.mxu0 0
  %3308 = vmatpush1.bf16.msra.mxu0 %v3274
  %3309 = vmatprep.subr.bf16.mxu0 0
  %3310 = vmatpush1.bf16.msra.mxu0 %v3272
  %3311 = vmatprep.subr.bf16.mxu0 0
  %3312 = vmatpush1.bf16.msra.mxu0 %v3270
  %3313 = vmatprep.subr.bf16.mxu0 0
  %3314 = vmatpush1.bf16.msra.mxu0 %v3268
  %3315 = vmatprep.subr.bf16.mxu0 0
  %3316 = vmatpush1.bf16.msra.mxu0 %v3266
  %3317 = vmatprep.subr.bf16.mxu0 0
  %3318 = vmatpush1.bf16.msra.mxu0 %v3264
  %3319 = vmatprep.subr.bf16.mxu0 0
  %3320 = vmatpush1.bf16.msra.mxu0 %v3262
  %3321 = vmatprep.subr.bf16.mxu0 0
  %3322 = vmatpush1.bf16.msra.mxu0 %v3260
  %3323 = vmatprep.subr.bf16.mxu0 0
  %3324 = vmatpush2.bf16.msra.mxu0 %v3290
  %3325 = vmatprep.subr.bf16.mxu0 0
  %3326 = vmatpush2.bf16.msra.mxu0 %v3288
  %3327 = vmatprep.subr.bf16.mxu0 0
  %3328 = vmatpush2.bf16.msra.mxu0 %v3286
  %3329 = vmatprep.subr.bf16.mxu0 0
  %3330 = vmatpush2.bf16.msra.mxu0 %v3284
  %3331 = vmatprep.subr.bf16.mxu0 0
  %3332 = vmatpush2.bf16.msra.mxu0 %v3282
  %3333 = vmatprep.subr.bf16.mxu0 0
  %3334 = vmatpush2.bf16.msra.mxu0 %v3280
  %3335 = vmatprep.subr.bf16.mxu0 0
  %3336 = vmatpush2.bf16.msra.mxu0 %v3278
  %3337 = vmatprep.subr.bf16.mxu0 0
  %3338 = vmatpush2.bf16.msra.mxu0 %v3276
  %3339 = vmatprep.mubr.bf16.mxu0 %v3228
  %3340 = vmatmul.mubr.bf16.gmra.mxu0 %v3227
  %v3341 = vpop.f32.mrf.mxu0
  %v3342 = vadd.f32 0.0, %v3341
  %v3343 = vpop.f32.mrf.mxu0
  %v3344 = vpop.f32.mrf.mxu0
  %v3345 = vadd.f32 0.0, %v3344
  %v3346 = vpop.f32.mrf.mxu0
  %3347 = vmatprep.mubr.bf16.mxu0 %v3230
  %3348 = vmatmul.mubr.bf16.gmra.mxu0 %v3229
  %v3349 = vpop.f32.mrf.mxu0
  %v3350 = vadd.f32 0.0, %v3349
  %v3351 = vpop.f32.mrf.mxu0
  %v3352 = vpop.f32.mrf.mxu0
  %v3353 = vadd.f32 0.0, %v3352
  %v3354 = vpop.f32.mrf.mxu0
  %3355 = vmatprep.mubr.bf16.mxu0 %v3232
  %3356 = vmatmul.mubr.bf16.gmra.mxu0 %v3231
  %v3357 = vpop.f32.mrf.mxu0
  %v3358 = vadd.f32 0.0, %v3357
  %v3359 = vpop.f32.mrf.mxu0
  %v3360 = vpop.f32.mrf.mxu0
  %v3361 = vadd.f32 0.0, %v3360
  %v3362 = vpop.f32.mrf.mxu0
  %3363 = vmatprep.mubr.bf16.mxu0 %v3234
  %3364 = vmatmul.mubr.bf16.gmra.mxu0 %v3233
  %v3365 = vpop.f32.mrf.mxu0
  %v3366 = vadd.f32 0.0, %v3365
  %v3367 = vpop.f32.mrf.mxu0
  %v3368 = vpop.f32.mrf.mxu0
  %v3369 = vadd.f32 0.0, %v3368
  %v3370 = vpop.f32.mrf.mxu0
  %3371 = vmatprep.mubr.bf16.mxu0 %v3236
  %3372 = vmatmul.mubr.bf16.gmra.mxu0 %v3235
  %v3373 = vpop.f32.mrf.mxu0
  %v3374 = vadd.f32 0.0, %v3373
  %v3375 = vpop.f32.mrf.mxu0
  %v3376 = vpop.f32.mrf.mxu0
  %v3377 = vadd.f32 0.0, %v3376
  %v3378 = vpop.f32.mrf.mxu0
  %3379 = vmatprep.mubr.bf16.mxu0 %v3238
  %3380 = vmatmul.mubr.bf16.gmra.mxu0 %v3237
  %v3381 = vpop.f32.mrf.mxu0
  %v3382 = vadd.f32 0.0, %v3381
  %v3383 = vpop.f32.mrf.mxu0
  %v3384 = vpop.f32.mrf.mxu0
  %v3385 = vadd.f32 0.0, %v3384
  %v3386 = vpop.f32.mrf.mxu0
  %3387 = vmatprep.mubr.bf16.mxu0 %v3240
  %3388 = vmatmul.mubr.bf16.gmra.mxu0 %v3239
  %v3389 = vpop.f32.mrf.mxu0
  %v3390 = vadd.f32 0.0, %v3389
  %v3391 = vpop.f32.mrf.mxu0
  %v3392 = vpop.f32.mrf.mxu0
  %v3393 = vadd.f32 0.0, %v3392
  %v3394 = vpop.f32.mrf.mxu0
  %3395 = vmatprep.mubr.bf16.mxu0 %v3242
  %3396 = vmatmul.mubr.bf16.gmra.mxu0 %v3241
  %v3397 = vpop.f32.mrf.mxu0
  %v3398 = vadd.f32 0.0, %v3397
  %v3399 = vpop.f32.mrf.mxu0
  %v3400 = vpop.f32.mrf.mxu0
  %v3401 = vadd.f32 0.0, %v3400
  %v3402 = vpop.f32.mrf.mxu0
  %3403 = vmatprep.mubr.bf16.mxu0 %v3244
  %3404 = vmatmul.mubr.bf16.gmra.mxu0 %v3243
  %v3405 = vpop.f32.mrf.mxu0
  %v3406 = vadd.f32 0.0, %v3405
  %v3407 = vpop.f32.mrf.mxu0
  %v3408 = vpop.f32.mrf.mxu0
  %v3409 = vadd.f32 0.0, %v3408
  %v3410 = vpop.f32.mrf.mxu0
  %3411 = vmatprep.mubr.bf16.mxu0 %v3246
  %3412 = vmatmul.mubr.bf16.gmra.mxu0 %v3245
  %v3413 = vpop.f32.mrf.mxu0
  %v3414 = vadd.f32 0.0, %v3413
  %v3415 = vpop.f32.mrf.mxu0
  %v3416 = vpop.f32.mrf.mxu0
  %v3417 = vadd.f32 0.0, %v3416
  %v3418 = vpop.f32.mrf.mxu0
  %3419 = vmatprep.mubr.bf16.mxu0 %v3248
  %3420 = vmatmul.mubr.bf16.gmra.mxu0 %v3247
  %v3421 = vpop.f32.mrf.mxu0
  %v3422 = vadd.f32 0.0, %v3421
  %v3423 = vpop.f32.mrf.mxu0
  %v3424 = vpop.f32.mrf.mxu0
  %v3425 = vadd.f32 0.0, %v3424
  %v3426 = vpop.f32.mrf.mxu0
  %3427 = vmatprep.mubr.bf16.mxu0 %v3250
  %3428 = vmatmul.mubr.bf16.gmra.mxu0 %v3249
  %v3429 = vpop.f32.mrf.mxu0
  %v3430 = vadd.f32 0.0, %v3429
  %v3431 = vpop.f32.mrf.mxu0
  %v3432 = vpop.f32.mrf.mxu0
  %v3433 = vadd.f32 0.0, %v3432
  %v3434 = vpop.f32.mrf.mxu0
  %3435 = vmatprep.mubr.bf16.mxu0 %v3252
  %3436 = vmatmul.mubr.bf16.gmra.mxu0 %v3251
  %v3437 = vpop.f32.mrf.mxu0
  %v3438 = vadd.f32 0.0, %v3437
  %v3439 = vpop.f32.mrf.mxu0
  %v3440 = vpop.f32.mrf.mxu0
  %v3441 = vadd.f32 0.0, %v3440
  %v3442 = vpop.f32.mrf.mxu0
  %3443 = vmatprep.mubr.bf16.mxu0 %v3254
  %3444 = vmatmul.mubr.bf16.gmra.mxu0 %v3253
  %v3445 = vpop.f32.mrf.mxu0
  %v3446 = vadd.f32 0.0, %v3445
  %v3447 = vpop.f32.mrf.mxu0
  %v3448 = vpop.f32.mrf.mxu0
  %v3449 = vadd.f32 0.0, %v3448
  %v3450 = vpop.f32.mrf.mxu0
  %3451 = vmatprep.mubr.bf16.mxu0 %v3256
  %3452 = vmatmul.mubr.bf16.gmra.mxu0 %v3255
  %v3453 = vpop.f32.mrf.mxu0
  %v3454 = vadd.f32 0.0, %v3453
  %v3455 = vpop.f32.mrf.mxu0
  %v3456 = vpop.f32.mrf.mxu0
  %v3457 = vadd.f32 0.0, %v3456
  %v3458 = vpop.f32.mrf.mxu0
  %3459 = vmatprep.mubr.bf16.mxu0 %v3258
  %3460 = vmatmul.mubr.bf16.gmra.mxu0 %v3257
  %v3461 = vpop.f32.mrf.mxu0
  %v3462 = vadd.f32 0.0, %v3461
  %v3463 = vpop.f32.mrf.mxu0
  %v3464 = vpop.f32.mrf.mxu0
  %v3465 = vadd.f32 0.0, %v3464
  %v3466 = vpop.f32.mrf.mxu0
  %3467 = vdwg.mxu0
  %3476 = vrot.lane.b32.xlu0 %v3374, 10
  %v3477 = vpop.permute.xlu0 %3476
  %3478 = vrot.lane.b32.xlu0 %v3377, 10
  %v3479 = vpop.permute.xlu0 %3478
  %3480 = vrot.lane.b32.xlu0 %v3382, 10
  %v3481 = vpop.permute.xlu0 %3480
  %3482 = vrot.lane.b32.xlu0 %v3385, 10
  %v3483 = vpop.permute.xlu0 %3482
  %3484 = vrot.lane.b32.xlu0 %v3390, 10
  %v3485 = vpop.permute.xlu0 %3484
  %3486 = vrot.lane.b32.xlu0 %v3393, 10
  %v3487 = vpop.permute.xlu0 %3486
  %3488 = vrot.lane.b32.xlu0 %v3398, 10
  %v3489 = vpop.permute.xlu0 %3488
  %3490 = vrot.lane.b32.xlu0 %v3401, 10
  %v3491 = vpop.permute.xlu0 %3490
  %3508 = vrot.lane.b32.xlu0 %v3406, 20
  %v3509 = vpop.permute.xlu0 %3508
  %3510 = vrot.lane.b32.xlu0 %v3409, 20
  %v3511 = vpop.permute.xlu0 %3510
  %3512 = vrot.lane.b32.xlu0 %v3414, 20
  %v3513 = vpop.permute.xlu0 %3512
  %3514 = vrot.lane.b32.xlu0 %v3417, 20
  %v3515 = vpop.permute.xlu0 %3514
  %3516 = vrot.lane.b32.xlu0 %v3422, 20
  %v3517 = vpop.permute.xlu0 %3516
  %3518 = vrot.lane.b32.xlu0 %v3425, 20
  %v3519 = vpop.permute.xlu0 %3518
  %3520 = vrot.lane.b32.xlu0 %v3430, 20
  %v3521 = vpop.permute.xlu0 %3520
  %3522 = vrot.lane.b32.xlu0 %v3433, 20
  %v3523 = vpop.permute.xlu0 %3522
  %3540 = vrot.lane.b32.xlu0 %v3438, 30
  %v3541 = vpop.permute.xlu0 %3540
  %3542 = vrot.lane.b32.xlu0 %v3441, 30
  %v3543 = vpop.permute.xlu0 %3542
  %3544 = vrot.lane.b32.xlu0 %v3446, 30
  %v3545 = vpop.permute.xlu0 %3544
  %3546 = vrot.lane.b32.xlu0 %v3449, 30
  %v3547 = vpop.permute.xlu0 %3546
  %3548 = vrot.lane.b32.xlu0 %v3454, 30
  %v3549 = vpop.permute.xlu0 %3548
  %3550 = vrot.lane.b32.xlu0 %v3457, 30
  %v3551 = vpop.permute.xlu0 %3550
  %3552 = vrot.lane.b32.xlu0 %v3462, 30
  %v3553 = vpop.permute.xlu0 %3552
  %3554 = vrot.lane.b32.xlu0 %v3465, 30
  %v3555 = vpop.permute.xlu0 %3554
  %v3564 = vsel %vm473, %v3342, %v3477
  %v3565 = vsel %vm473, %v3345, %v3479
  %v3566 = vsel %vm473, %v3350, %v3481
  %v3567 = vsel %vm473, %v3353, %v3483
  %v3568 = vsel %vm473, %v3358, %v3485
  %v3569 = vsel %vm473, %v3361, %v3487
  %v3570 = vsel %vm473, %v3366, %v3489
  %v3571 = vsel %vm473, %v3369, %v3491
  %v3572 = vsel %vm1588, %v3564, %v3509
  %v3573 = vsel %vm1588, %v3565, %v3511
  %v3574 = vsel %vm1588, %v3566, %v3513
  %v3575 = vsel %vm1588, %v3567, %v3515
  %v3576 = vsel %vm1588, %v3568, %v3517
  %v3577 = vsel %vm1588, %v3569, %v3519
  %v3578 = vsel %vm1588, %v3570, %v3521
  %v3579 = vsel %vm1588, %v3571, %v3523
  %v3580 = vsel %vm1597, %v3572, %v3541
  %v3581 = vsel %vm1597, %v3573, %v3543
  %v3582 = vsel %vm1597, %v3574, %v3545
  %v3583 = vsel %vm1597, %v3575, %v3547
  %v3584 = vsel %vm1597, %v3576, %v3549
  %v3585 = vsel %vm1597, %v3577, %v3551
  %v3586 = vsel %vm1597, %v3578, %v3553
  %v3587 = vsel %vm1597, %v3579, %v3555
  %v3588 = vpack.c.bf16 %v3581, %v3580
  %v3589 = vpack.c.bf16 %v3583, %v3582
  %v3590 = vpack.c.bf16 %v3585, %v3584
  %v3591 = vpack.c.bf16 %v3587, %v3586
  %v3592 = vld [vmem:[%s1 + $0x64] sm:$0xf]
  %v3593 = vld [vmem:[%s1 + $0x68] sm:$0xf]
  %v3594 = vld [vmem:[%s1 + $0x6c] sm:$0xf]
  %v3595 = vld [vmem:[%s1 + $0x70] sm:$0xf]
  %v3596 = vld [vmem:[%s1 + $0x74] sm:$0xf]
  %v3597 = vlaneseq
  %v3598 = vshrl.u32 %v3597, 7
  %v3599 = vsub.s32 3, %v3598
  %v3600 = vrot.slane %v19, %v3599
  %v3606 = vunpack.c.l.b16 %v3592
  %v3607 = vunpack.c.l.b16 %v3593
  %v3608 = vunpack.c.l.b16 %v3594
  %v3609 = vunpack.c.l.b16 %v3595
  %v3610 = vunpack.c.l.b16 %v3596
  %v3611 = vpack.c.b16 %v3607, %v3606
  %v3612 = vpack.c.b16 %v3609, %v3608
  %v3613 = vpack.c.b16 %v3610, %v3610
  %v3617 = vsel %vm94, %v3588, 0
  %v3620 = vsel %vm94, %v3589, 0
  %v3623 = vsel %vm94, %v3590, 0
  %v3626 = vsel %vm94, %v3591, 0
  %v3629 = vsel %vm260, %v3613, 0
  %3631 = vmatprep.subr.bf16.mxu0 0
  %3632 = vmatpush1.bf16.msra.mxu0 0
  %3633 = vmatprep.subr.bf16.mxu0 0
  %3634 = vmatpush1.bf16.msra.mxu0 0
  %3635 = vmatprep.subr.bf16.mxu0 0
  %3636 = vmatpush1.bf16.msra.mxu0 0
  %3637 = vmatprep.subr.bf16.mxu0 0
  %3638 = vmatpush1.bf16.msra.mxu0 0
  %3639 = vmatprep.subr.bf16.mxu0 0
  %3640 = vmatpush1.bf16.msra.mxu0 0
  %3641 = vmatprep.subr.bf16.mxu0 0
  %3642 = vmatpush1.bf16.msra.mxu0 %v3629
  %3643 = vmatprep.subr.bf16.mxu0 0
  %3644 = vmatpush1.bf16.msra.mxu0 %v3612
  %3645 = vmatprep.subr.bf16.mxu0 0
  %3646 = vmatpush1.bf16.msra.mxu0 %v3611
  %3647 = vmatprep.subr.bf16.mxu0 0
  %3648 = vmatpush2.bf16.msra.mxu0 0
  %3649 = vmatprep.subr.bf16.mxu0 0
  %3650 = vmatpush2.bf16.msra.mxu0 0
  %3651 = vmatprep.subr.bf16.mxu0 0
  %3652 = vmatpush2.bf16.msra.mxu0 0
  %3653 = vmatprep.subr.bf16.mxu0 0
  %3654 = vmatpush2.bf16.msra.mxu0 0
  %3655 = vmatprep.subr.bf16.mxu0 0
  %3656 = vmatpush2.bf16.msra.mxu0 0
  %3657 = vmatprep.subr.bf16.mxu0 0
  %3658 = vmatpush2.bf16.msra.mxu0 0
  %3659 = vmatprep.subr.bf16.mxu0 0
  %3660 = vmatpush2.bf16.msra.mxu0 0
  %3661 = vmatprep.subr.bf16.mxu0 0
  %3662 = vmatpush2.bf16.msra.mxu0 0
  %3663 = vmatprep.mubr.bf16.mxu0 0
  %3664 = vmatmul.mubr.bf16.gmra.mxu0 %v3617
  %v3665 = vpop.f32.mrf.mxu0
  %v3666 = vadd.f32 %v3600, %v3665
  %v3667 = vpop.f32.mrf.mxu0
  %v3668 = vpop.f32.mrf.mxu0
  %v3669 = vadd.f32 %v3600, %v3668
  %v3670 = vpop.f32.mrf.mxu0
  %3671 = vmatprep.mubr.bf16.mxu0 0
  %3672 = vmatmul.mubr.bf16.gmra.mxu0 %v3620
  %v3673 = vpop.f32.mrf.mxu0
  %v3674 = vadd.f32 %v3600, %v3673
  %v3675 = vpop.f32.mrf.mxu0
  %v3676 = vpop.f32.mrf.mxu0
  %v3677 = vadd.f32 %v3600, %v3676
  %v3678 = vpop.f32.mrf.mxu0
  %3679 = vmatprep.mubr.bf16.mxu0 0
  %3680 = vmatmul.mubr.bf16.gmra.mxu0 %v3623
  %v3681 = vpop.f32.mrf.mxu0
  %v3682 = vadd.f32 %v3600, %v3681
  %v3683 = vpop.f32.mrf.mxu0
  %v3684 = vpop.f32.mrf.mxu0
  %v3685 = vadd.f32 %v3600, %v3684
  %v3686 = vpop.f32.mrf.mxu0
  %3687 = vmatprep.mubr.bf16.mxu0 0
  %3688 = vmatmul.mubr.bf16.gmra.mxu0 %v3626
  %v3689 = vpop.f32.mrf.mxu0
  %v3690 = vadd.f32 %v3600, %v3689
  %v3691 = vpop.f32.mrf.mxu0
  %v3692 = vpop.f32.mrf.mxu0
  %v3693 = vadd.f32 %v3600, %v3692
  %v3694 = vpop.f32.mrf.mxu0
  %3695 = vdwg.mxu0
  %v3696 = vadd.f32 %v2202, %v3666
  %v3697 = vadd.f32 %v2203, %v3669
  %v3698 = vadd.f32 %v2204, %v3674
  %v3699 = vadd.f32 %v2205, %v3677
  %v3700 = vadd.f32 %v2206, %v3682
  %v3701 = vadd.f32 %v2207, %v3685
  %v3702 = vadd.f32 %v2208, %v3690
  %v3703 = vadd.f32 %v2209, %v3693
  %v3704 = vsel %vm94, %v3696, 0.0
  %3705 = vadd.xlane.f32.xlu0 %v3704
  %v3706 = vpop.xlane.xlu0 %3705
  %v3707 = vsel %vm94, %v3697, 0.0
  %3708 = vadd.xlane.f32.xlu0 %v3707
  %v3709 = vpop.xlane.xlu0 %3708
  %v3710 = vsel %vm94, %v3698, 0.0
  %3711 = vadd.xlane.f32.xlu0 %v3710
  %v3712 = vpop.xlane.xlu0 %3711
  %v3713 = vsel %vm94, %v3699, 0.0
  %3714 = vadd.xlane.f32.xlu0 %v3713
  %v3715 = vpop.xlane.xlu0 %3714
  %v3716 = vsel %vm94, %v3700, 0.0
  %3717 = vadd.xlane.f32.xlu0 %v3716
  %v3718 = vpop.xlane.xlu0 %3717
  %v3719 = vsel %vm94, %v3701, 0.0
  %3720 = vadd.xlane.f32.xlu0 %v3719
  %v3721 = vpop.xlane.xlu0 %3720
  %v3722 = vsel %vm94, %v3702, 0.0
  %3723 = vadd.xlane.f32.xlu0 %v3722
  %v3724 = vpop.xlane.xlu0 %3723
  %v3725 = vsel %vm94, %v3703, 0.0
  %3726 = vadd.xlane.f32.xlu0 %v3725
  %v3727 = vpop.xlane.xlu0 %3726
  %v3728 = vmul.f32 %v3706, %v119
  %v3729 = vmul.f32 %v3709, %v119
  %v3730 = vmul.f32 %v3712, %v119
  %v3731 = vmul.f32 %v3715, %v119
  %v3732 = vmul.f32 %v3718, %v119
  %v3733 = vmul.f32 %v3721, %v119
  %v3734 = vmul.f32 %v3724, %v119
  %v3735 = vmul.f32 %v3727, %v119
  %v3736 = vsub.f32 %v3696, %v3728
  %v3737 = vsub.f32 %v3697, %v3729
  %v3738 = vsub.f32 %v3698, %v3730
  %v3739 = vsub.f32 %v3699, %v3731
  %v3740 = vsub.f32 %v3700, %v3732
  %v3741 = vsub.f32 %v3701, %v3733
  %v3742 = vsub.f32 %v3702, %v3734
  %v3743 = vsub.f32 %v3703, %v3735
  %v3744 = vmul.f32 %v3736, %v3736
  %v3745 = vmul.f32 %v3737, %v3737
  %v3746 = vmul.f32 %v3738, %v3738
  %v3747 = vmul.f32 %v3739, %v3739
  %v3748 = vmul.f32 %v3740, %v3740
  %v3749 = vmul.f32 %v3741, %v3741
  %v3750 = vmul.f32 %v3742, %v3742
  %v3751 = vmul.f32 %v3743, %v3743
  %v3752 = vsel %vm94, %v3744, 0.0
  %3753 = vadd.xlane.f32.xlu0 %v3752
  %v3754 = vpop.xlane.xlu0 %3753
  %v3755 = vsel %vm94, %v3745, 0.0
  %3756 = vadd.xlane.f32.xlu0 %v3755
  %v3757 = vpop.xlane.xlu0 %3756
  %v3758 = vsel %vm94, %v3746, 0.0
  %3759 = vadd.xlane.f32.xlu0 %v3758
  %v3760 = vpop.xlane.xlu0 %3759
  %v3761 = vsel %vm94, %v3747, 0.0
  %3762 = vadd.xlane.f32.xlu0 %v3761
  %v3763 = vpop.xlane.xlu0 %3762
  %v3764 = vsel %vm94, %v3748, 0.0
  %3765 = vadd.xlane.f32.xlu0 %v3764
  %v3766 = vpop.xlane.xlu0 %3765
  %v3767 = vsel %vm94, %v3749, 0.0
  %3768 = vadd.xlane.f32.xlu0 %v3767
  %v3769 = vpop.xlane.xlu0 %3768
  %v3770 = vsel %vm94, %v3750, 0.0
  %3771 = vadd.xlane.f32.xlu0 %v3770
  %v3772 = vpop.xlane.xlu0 %3771
  %v3773 = vsel %vm94, %v3751, 0.0
  %3774 = vadd.xlane.f32.xlu0 %v3773
  %v3775 = vpop.xlane.xlu0 %3774
  %v3776 = vmul.f32 %v3754, %v119
  %v3777 = vmul.f32 %v3757, %v119
  %v3778 = vmul.f32 %v3760, %v119
  %v3779 = vmul.f32 %v3763, %v119
  %v3780 = vmul.f32 %v3766, %v119
  %v3781 = vmul.f32 %v3769, %v119
  %v3782 = vmul.f32 %v3772, %v119
  %v3783 = vmul.f32 %v3775, %v119
  %v3784 = vadd.f32 %v3776, 1e-05
  %v3785 = vadd.f32 %v3777, 1e-05
  %v3786 = vadd.f32 %v3778, 1e-05
  %v3787 = vadd.f32 %v3779, 1e-05
  %v3788 = vadd.f32 %v3780, 1e-05
  %v3789 = vadd.f32 %v3781, 1e-05
  %v3790 = vadd.f32 %v3782, 1e-05
  %v3791 = vadd.f32 %v3783, 1e-05
  %v3792 = vrsqrt.pop %v3784
  %v3793 = vrsqrt.pop %v3785
  %v3794 = vrsqrt.pop %v3786
  %v3795 = vrsqrt.pop %v3787
  %v3796 = vrsqrt.pop %v3788
  %v3797 = vrsqrt.pop %v3789
  %v3798 = vrsqrt.pop %v3790
  %v3799 = vrsqrt.pop %v3791
  %v3800 = vmul.f32 %v3736, %v3792
  %v3801 = vmul.f32 %v3737, %v3793
  %v3802 = vmul.f32 %v3738, %v3794
  %v3803 = vmul.f32 %v3739, %v3795
  %v3804 = vmul.f32 %v3740, %v3796
  %v3805 = vmul.f32 %v3741, %v3797
  %v3806 = vmul.f32 %v3742, %v3798
  %v3807 = vmul.f32 %v3743, %v3799
  %v3808 = vlaneseq
  %v3809 = vshrl.u32 %v3808, 7
  %v3810 = vsub.s32 1, %v3809
  %v3811 = vrot.slane %v19, %v3810
  %v3812 = vmul.f32 %v3800, %v3811
  %v3813 = vmul.f32 %v3801, %v3811
  %v3814 = vmul.f32 %v3802, %v3811
  %v3815 = vmul.f32 %v3803, %v3811
  %v3816 = vmul.f32 %v3804, %v3811
  %v3817 = vmul.f32 %v3805, %v3811
  %v3818 = vmul.f32 %v3806, %v3811
  %v3819 = vmul.f32 %v3807, %v3811
  %v3820 = vlaneseq
  %v3821 = vshrl.u32 %v3820, 7
  %v3822 = vsub.s32 2, %v3821
  %v3823 = vrot.slane %v19, %v3822
  %v3824 = vadd.f32 %v3812, %v3823
  %v3825 = vadd.f32 %v3813, %v3823
  %v3826 = vadd.f32 %v3814, %v3823
  %v3827 = vadd.f32 %v3815, %v3823
  %v3828 = vadd.f32 %v3816, %v3823
  %v3829 = vadd.f32 %v3817, %v3823
  %v3830 = vadd.f32 %v3818, %v3823
  %v3831 = vadd.f32 %v3819, %v3823
  %v3832 = vpack.c.bf16 %v3825, %v3824
  %v3833 = vpack.c.bf16 %v3827, %v3826
  %v3834 = vpack.c.bf16 %v3829, %v3828
  %v3835 = vpack.c.bf16 %v3831, %v3830
  %v3836 = vld [vmem:[%s1 + $0x78] sm:$0xf]
  %v3837 = vld [vmem:[%s1 + $0x7c] sm:$0xf]
  %v3838 = vld [vmem:[%s1 + $0x80] sm:$0xf]
  %v3839 = vld [vmem:[%s1 + $0x84] sm:$0xf]
  %v3840 = vld [vmem:[%s1 + $0x88] sm:$0xf]
  %v3841 = vlaneseq
  %v3842 = vshrl.u32 %v3841, 7
  %v3843 = vsub.s32 4, %v3842
  %v3844 = vrot.slane %v19, %v3843
  %v3850 = vunpack.c.l.b16 %v3836
  %v3851 = vunpack.c.l.b16 %v3837
  %v3852 = vunpack.c.l.b16 %v3838
  %v3853 = vunpack.c.l.b16 %v3839
  %v3854 = vunpack.c.l.b16 %v3840
  %v3855 = vpack.c.b16 %v3851, %v3850
  %v3856 = vpack.c.b16 %v3853, %v3852
  %v3857 = vpack.c.b16 %v3854, %v3854
  %v3861 = vsel %vm94, %v3832, 0
  %v3864 = vsel %vm94, %v3833, 0
  %v3867 = vsel %vm94, %v3834, 0
  %v3870 = vsel %vm94, %v3835, 0
  %v3873 = vsel %vm260, %v3857, 0
  %3875 = vmatprep.subr.bf16.mxu0 0
  %3876 = vmatpush1.bf16.msra.mxu0 0
  %3877 = vmatprep.subr.bf16.mxu0 0
  %3878 = vmatpush1.bf16.msra.mxu0 0
  %3879 = vmatprep.subr.bf16.mxu0 0
  %3880 = vmatpush1.bf16.msra.mxu0 0
  %3881 = vmatprep.subr.bf16.mxu0 0
  %3882 = vmatpush1.bf16.msra.mxu0 0
  %3883 = vmatprep.subr.bf16.mxu0 0
  %3884 = vmatpush1.bf16.msra.mxu0 0
  %3885 = vmatprep.subr.bf16.mxu0 0
  %3886 = vmatpush1.bf16.msra.mxu0 %v3873
  %3887 = vmatprep.subr.bf16.mxu0 0
  %3888 = vmatpush1.bf16.msra.mxu0 %v3856
  %3889 = vmatprep.subr.bf16.mxu0 0
  %3890 = vmatpush1.bf16.msra.mxu0 %v3855
  %3891 = vmatprep.subr.bf16.mxu0 0
  %3892 = vmatpush2.bf16.msra.mxu0 0
  %3893 = vmatprep.subr.bf16.mxu0 0
  %3894 = vmatpush2.bf16.msra.mxu0 0
  %3895 = vmatprep.subr.bf16.mxu0 0
  %3896 = vmatpush2.bf16.msra.mxu0 0
  %3897 = vmatprep.subr.bf16.mxu0 0
  %3898 = vmatpush2.bf16.msra.mxu0 0
  %3899 = vmatprep.subr.bf16.mxu0 0
  %3900 = vmatpush2.bf16.msra.mxu0 0
  %3901 = vmatprep.subr.bf16.mxu0 0
  %3902 = vmatpush2.bf16.msra.mxu0 0
  %3903 = vmatprep.subr.bf16.mxu0 0
  %3904 = vmatpush2.bf16.msra.mxu0 0
  %3905 = vmatprep.subr.bf16.mxu0 0
  %3906 = vmatpush2.bf16.msra.mxu0 0
  %3907 = vmatprep.mubr.bf16.mxu0 0
  %3908 = vmatmul.mubr.bf16.gmra.mxu0 %v3861
  %v3909 = vpop.f32.mrf.mxu0
  %v3910 = vadd.f32 %v3844, %v3909
  %v3911 = vpop.f32.mrf.mxu0
  %v3912 = vpop.f32.mrf.mxu0
  %v3913 = vadd.f32 %v3844, %v3912
  %v3914 = vpop.f32.mrf.mxu0
  %3915 = vmatprep.mubr.bf16.mxu0 0
  %3916 = vmatmul.mubr.bf16.gmra.mxu0 %v3864
  %v3917 = vpop.f32.mrf.mxu0
  %v3918 = vadd.f32 %v3844, %v3917
  %v3919 = vpop.f32.mrf.mxu0
  %v3920 = vpop.f32.mrf.mxu0
  %v3921 = vadd.f32 %v3844, %v3920
  %v3922 = vpop.f32.mrf.mxu0
  %3923 = vmatprep.mubr.bf16.mxu0 0
  %3924 = vmatmul.mubr.bf16.gmra.mxu0 %v3867
  %v3925 = vpop.f32.mrf.mxu0
  %v3926 = vadd.f32 %v3844, %v3925
  %v3927 = vpop.f32.mrf.mxu0
  %v3928 = vpop.f32.mrf.mxu0
  %v3929 = vadd.f32 %v3844, %v3928
  %v3930 = vpop.f32.mrf.mxu0
  %3931 = vmatprep.mubr.bf16.mxu0 0
  %3932 = vmatmul.mubr.bf16.gmra.mxu0 %v3870
  %v3933 = vpop.f32.mrf.mxu0
  %v3934 = vadd.f32 %v3844, %v3933
  %v3935 = vpop.f32.mrf.mxu0
  %v3936 = vpop.f32.mrf.mxu0
  %v3937 = vadd.f32 %v3844, %v3936
  %v3938 = vpop.f32.mrf.mxu0
  %3939 = vdwg.mxu0
  %v3940 = vmax.f32 %v3910, 0.0
  %v3941 = vmax.f32 %v3913, 0.0
  %v3942 = vmax.f32 %v3918, 0.0
  %v3943 = vmax.f32 %v3921, 0.0
  %v3944 = vmax.f32 %v3926, 0.0
  %v3945 = vmax.f32 %v3929, 0.0
  %v3946 = vmax.f32 %v3934, 0.0
  %v3947 = vmax.f32 %v3937, 0.0
  %v3948 = vpack.c.bf16 %v3941, %v3940
  %v3949 = vpack.c.bf16 %v3943, %v3942
  %v3950 = vpack.c.bf16 %v3945, %v3944
  %v3951 = vpack.c.bf16 %v3947, %v3946
  %v3952 = vld [vmem:[%s1 + $0x8c] sm:$0xf]
  %v3953 = vld [vmem:[%s1 + $0x90] sm:$0xf]
  %v3954 = vld [vmem:[%s1 + $0x94] sm:$0xf]
  %v3955 = vld [vmem:[%s1 + $0x98] sm:$0xf]
  %v3956 = vld [vmem:[%s1 + $0x9c] sm:$0xf]
  %v3957 = vlaneseq
  %v3958 = vshrl.u32 %v3957, 7
  %v3959 = vsub.s32 5, %v3958
  %v3960 = vrot.slane %v19, %v3959
  %v3966 = vunpack.c.l.b16 %v3952
  %v3967 = vunpack.c.l.b16 %v3953
  %v3968 = vunpack.c.l.b16 %v3954
  %v3969 = vunpack.c.l.b16 %v3955
  %v3970 = vunpack.c.l.b16 %v3956
  %v3971 = vpack.c.b16 %v3967, %v3966
  %v3972 = vpack.c.b16 %v3969, %v3968
  %v3973 = vpack.c.b16 %v3970, %v3970
  %v3977 = vsel %vm94, %v3948, 0
  %v3980 = vsel %vm94, %v3949, 0
  %v3983 = vsel %vm94, %v3950, 0
  %v3986 = vsel %vm94, %v3951, 0
  %v3989 = vsel %vm260, %v3973, 0
  %3991 = vmatprep.subr.bf16.mxu0 0
  %3992 = vmatpush1.bf16.msra.mxu0 0
  %3993 = vmatprep.subr.bf16.mxu0 0
  %3994 = vmatpush1.bf16.msra.mxu0 0
  %3995 = vmatprep.subr.bf16.mxu0 0
  %3996 = vmatpush1.bf16.msra.mxu0 0
  %3997 = vmatprep.subr.bf16.mxu0 0
  %3998 = vmatpush1.bf16.msra.mxu0 0
  %3999 = vmatprep.subr.bf16.mxu0 0
  %4000 = vmatpush1.bf16.msra.mxu0 0
  %4001 = vmatprep.subr.bf16.mxu0 0
  %4002 = vmatpush1.bf16.msra.mxu0 %v3989
  %4003 = vmatprep.subr.bf16.mxu0 0
  %4004 = vmatpush1.bf16.msra.mxu0 %v3972
  %4005 = vmatprep.subr.bf16.mxu0 0
  %4006 = vmatpush1.bf16.msra.mxu0 %v3971
  %4007 = vmatprep.subr.bf16.mxu0 0
  %4008 = vmatpush2.bf16.msra.mxu0 0
  %4009 = vmatprep.subr.bf16.mxu0 0
  %4010 = vmatpush2.bf16.msra.mxu0 0
  %4011 = vmatprep.subr.bf16.mxu0 0
  %4012 = vmatpush2.bf16.msra.mxu0 0
  %4013 = vmatprep.subr.bf16.mxu0 0
  %4014 = vmatpush2.bf16.msra.mxu0 0
  %4015 = vmatprep.subr.bf16.mxu0 0
  %4016 = vmatpush2.bf16.msra.mxu0 0
  %4017 = vmatprep.subr.bf16.mxu0 0
  %4018 = vmatpush2.bf16.msra.mxu0 0
  %4019 = vmatprep.subr.bf16.mxu0 0
  %4020 = vmatpush2.bf16.msra.mxu0 0
  %4021 = vmatprep.subr.bf16.mxu0 0
  %4022 = vmatpush2.bf16.msra.mxu0 0
  %4023 = vmatprep.mubr.bf16.mxu0 0
  %4024 = vmatmul.mubr.bf16.gmra.mxu0 %v3977
  %v4025 = vpop.f32.mrf.mxu0
  %v4026 = vadd.f32 %v3960, %v4025
  %v4027 = vpop.f32.mrf.mxu0
  %v4028 = vpop.f32.mrf.mxu0
  %v4029 = vadd.f32 %v3960, %v4028
  %v4030 = vpop.f32.mrf.mxu0
  %4031 = vmatprep.mubr.bf16.mxu0 0
  %4032 = vmatmul.mubr.bf16.gmra.mxu0 %v3980
  %v4033 = vpop.f32.mrf.mxu0
  %v4034 = vadd.f32 %v3960, %v4033
  %v4035 = vpop.f32.mrf.mxu0
  %v4036 = vpop.f32.mrf.mxu0
  %v4037 = vadd.f32 %v3960, %v4036
  %v4038 = vpop.f32.mrf.mxu0
  %4039 = vmatprep.mubr.bf16.mxu0 0
  %4040 = vmatmul.mubr.bf16.gmra.mxu0 %v3983
  %v4041 = vpop.f32.mrf.mxu0
  %v4042 = vadd.f32 %v3960, %v4041
  %v4043 = vpop.f32.mrf.mxu0
  %v4044 = vpop.f32.mrf.mxu0
  %v4045 = vadd.f32 %v3960, %v4044
  %v4046 = vpop.f32.mrf.mxu0
  %4047 = vmatprep.mubr.bf16.mxu0 0
  %4048 = vmatmul.mubr.bf16.gmra.mxu0 %v3986
  %v4049 = vpop.f32.mrf.mxu0
  %v4050 = vadd.f32 %v3960, %v4049
  %v4051 = vpop.f32.mrf.mxu0
  %v4052 = vpop.f32.mrf.mxu0
  %v4053 = vadd.f32 %v3960, %v4052
  %v4054 = vpop.f32.mrf.mxu0
  %4055 = vdwg.mxu0
  %v4056 = vadd.f32 %v3824, %v4026
  %v4057 = vadd.f32 %v3825, %v4029
  %v4058 = vadd.f32 %v3826, %v4034
  %v4059 = vadd.f32 %v3827, %v4037
  %v4060 = vadd.f32 %v3828, %v4042
  %v4061 = vadd.f32 %v3829, %v4045
  %v4062 = vadd.f32 %v3830, %v4050
  %v4063 = vadd.f32 %v3831, %v4053
  %v4064 = vsel %vm94, %v4056, 0.0
  %4065 = vadd.xlane.f32.xlu0 %v4064
  %v4066 = vpop.xlane.xlu0 %4065
  %v4067 = vsel %vm94, %v4057, 0.0
  %4068 = vadd.xlane.f32.xlu0 %v4067
  %v4069 = vpop.xlane.xlu0 %4068
  %v4070 = vsel %vm94, %v4058, 0.0
  %4071 = vadd.xlane.f32.xlu0 %v4070
  %v4072 = vpop.xlane.xlu0 %4071
  %v4073 = vsel %vm94, %v4059, 0.0
  %4074 = vadd.xlane.f32.xlu0 %v4073
  %v4075 = vpop.xlane.xlu0 %4074
  %v4076 = vsel %vm94, %v4060, 0.0
  %4077 = vadd.xlane.f32.xlu0 %v4076
  %v4078 = vpop.xlane.xlu0 %4077
  %v4079 = vsel %vm94, %v4061, 0.0
  %4080 = vadd.xlane.f32.xlu0 %v4079
  %v4081 = vpop.xlane.xlu0 %4080
  %v4082 = vsel %vm94, %v4062, 0.0
  %4083 = vadd.xlane.f32.xlu0 %v4082
  %v4084 = vpop.xlane.xlu0 %4083
  %v4085 = vsel %vm94, %v4063, 0.0
  %4086 = vadd.xlane.f32.xlu0 %v4085
  %v4087 = vpop.xlane.xlu0 %4086
  %v4088 = vmul.f32 %v4066, %v119
  %v4089 = vmul.f32 %v4069, %v119
  %v4090 = vmul.f32 %v4072, %v119
  %v4091 = vmul.f32 %v4075, %v119
  %v4092 = vmul.f32 %v4078, %v119
  %v4093 = vmul.f32 %v4081, %v119
  %v4094 = vmul.f32 %v4084, %v119
  %v4095 = vmul.f32 %v4087, %v119
  %v4096 = vsub.f32 %v4056, %v4088
  %v4097 = vsub.f32 %v4057, %v4089
  %v4098 = vsub.f32 %v4058, %v4090
  %v4099 = vsub.f32 %v4059, %v4091
  %v4100 = vsub.f32 %v4060, %v4092
  %v4101 = vsub.f32 %v4061, %v4093
  %v4102 = vsub.f32 %v4062, %v4094
  %v4103 = vsub.f32 %v4063, %v4095
  %v4104 = vmul.f32 %v4096, %v4096
  %v4105 = vmul.f32 %v4097, %v4097
  %v4106 = vmul.f32 %v4098, %v4098
  %v4107 = vmul.f32 %v4099, %v4099
  %v4108 = vmul.f32 %v4100, %v4100
  %v4109 = vmul.f32 %v4101, %v4101
  %v4110 = vmul.f32 %v4102, %v4102
  %v4111 = vmul.f32 %v4103, %v4103
  %v4112 = vsel %vm94, %v4104, 0.0
  %4113 = vadd.xlane.f32.xlu0 %v4112
  %v4114 = vpop.xlane.xlu0 %4113
  %v4115 = vsel %vm94, %v4105, 0.0
  %4116 = vadd.xlane.f32.xlu0 %v4115
  %v4117 = vpop.xlane.xlu0 %4116
  %v4118 = vsel %vm94, %v4106, 0.0
  %4119 = vadd.xlane.f32.xlu0 %v4118
  %v4120 = vpop.xlane.xlu0 %4119
  %v4121 = vsel %vm94, %v4107, 0.0
  %4122 = vadd.xlane.f32.xlu0 %v4121
  %v4123 = vpop.xlane.xlu0 %4122
  %v4124 = vsel %vm94, %v4108, 0.0
  %4125 = vadd.xlane.f32.xlu0 %v4124
  %v4126 = vpop.xlane.xlu0 %4125
  %v4127 = vsel %vm94, %v4109, 0.0
  %4128 = vadd.xlane.f32.xlu0 %v4127
  %v4129 = vpop.xlane.xlu0 %4128
  %v4130 = vsel %vm94, %v4110, 0.0
  %4131 = vadd.xlane.f32.xlu0 %v4130
  %v4132 = vpop.xlane.xlu0 %4131
  %v4133 = vsel %vm94, %v4111, 0.0
  %4134 = vadd.xlane.f32.xlu0 %v4133
  %v4135 = vpop.xlane.xlu0 %4134
  %v4136 = vmul.f32 %v4114, %v119
  %v4137 = vmul.f32 %v4117, %v119
  %v4138 = vmul.f32 %v4120, %v119
  %v4139 = vmul.f32 %v4123, %v119
  %v4140 = vmul.f32 %v4126, %v119
  %v4141 = vmul.f32 %v4129, %v119
  %v4142 = vmul.f32 %v4132, %v119
  %v4143 = vmul.f32 %v4135, %v119
  %v4144 = vadd.f32 %v4136, 1e-05
  %v4145 = vadd.f32 %v4137, 1e-05
  %v4146 = vadd.f32 %v4138, 1e-05
  %v4147 = vadd.f32 %v4139, 1e-05
  %v4148 = vadd.f32 %v4140, 1e-05
  %v4149 = vadd.f32 %v4141, 1e-05
  %v4150 = vadd.f32 %v4142, 1e-05
  %v4151 = vadd.f32 %v4143, 1e-05
  %v4152 = vrsqrt.pop %v4144
  %v4153 = vrsqrt.pop %v4145
  %v4154 = vrsqrt.pop %v4146
  %v4155 = vrsqrt.pop %v4147
  %v4156 = vrsqrt.pop %v4148
  %v4157 = vrsqrt.pop %v4149
  %v4158 = vrsqrt.pop %v4150
  %v4159 = vrsqrt.pop %v4151
  %v4160 = vmul.f32 %v4096, %v4152
  %v4161 = vmul.f32 %v4097, %v4153
  %v4162 = vmul.f32 %v4098, %v4154
  %v4163 = vmul.f32 %v4099, %v4155
  %v4164 = vmul.f32 %v4100, %v4156
  %v4165 = vmul.f32 %v4101, %v4157
  %v4166 = vmul.f32 %v4102, %v4158
  %v4167 = vmul.f32 %v4103, %v4159
  %v4168 = vlaneseq
  %v4169 = vshrl.u32 %v4168, 7
  %v4170 = vsub.s32 6, %v4169
  %v4171 = vrot.slane %v19, %v4170
  %v4172 = vmul.f32 %v4160, %v4171
  %v4173 = vmul.f32 %v4161, %v4171
  %v4174 = vmul.f32 %v4162, %v4171
  %v4175 = vmul.f32 %v4163, %v4171
  %v4176 = vmul.f32 %v4164, %v4171
  %v4177 = vmul.f32 %v4165, %v4171
  %v4178 = vmul.f32 %v4166, %v4171
  %v4179 = vmul.f32 %v4167, %v4171
  %v4180 = vlaneseq
  %v4181 = vshrl.u32 %v4180, 7
  %v4182 = vsub.s32 7, %v4181
  %v4183 = vrot.slane %v19, %v4182
  %v4184 = vadd.f32 %v4172, %v4183
  %v4185 = vadd.f32 %v4173, %v4183
  %v4186 = vadd.f32 %v4174, %v4183
  %v4187 = vadd.f32 %v4175, %v4183
  %v4188 = vadd.f32 %v4176, %v4183
  %v4189 = vadd.f32 %v4177, %v4183
  %v4190 = vadd.f32 %v4178, %v4183
  %v4191 = vadd.f32 %v4179, %v4183
  %v4192 = vpack.c.bf16 %v4185, %v4184
  %v4193 = vpack.c.bf16 %v4187, %v4186
  %v4194 = vpack.c.bf16 %v4189, %v4188
  %v4195 = vpack.c.bf16 %v4191, %v4190
  %v4196 = vld [vmem:[%s1 + $0xa0] sm:$0xf]
  %v4197 = vld [vmem:[%s1 + $0xa4] sm:$0xf]
  %v4198 = vld [vmem:[%s1 + $0xa8] sm:$0xf]
  %v4199 = vld [vmem:[%s1 + $0xac] sm:$0xf]
  %v4200 = vld [vmem:[%s1 + $0xb0] sm:$0xf]
  %v4206 = vunpack.c.l.b16 %v4196
  %v4207 = vunpack.c.l.b16 %v4197
  %v4208 = vunpack.c.l.b16 %v4198
  %v4209 = vunpack.c.l.b16 %v4199
  %v4210 = vunpack.c.l.b16 %v4200
  %v4211 = vpack.c.b16 %v4207, %v4206
  %v4212 = vpack.c.b16 %v4209, %v4208
  %v4213 = vpack.c.b16 %v4210, %v4210
  %v4217 = vsel %vm94, %v4192, 0
  %v4220 = vsel %vm94, %v4193, 0
  %v4223 = vsel %vm94, %v4194, 0
  %v4226 = vsel %vm94, %v4195, 0
  %v4229 = vsel %vm260, %v4213, 0
  %4231 = vmatprep.subr.bf16.mxu0 0
  %4232 = vmatpush1.bf16.msra.mxu0 0
  %4233 = vmatprep.subr.bf16.mxu0 0
  %4234 = vmatpush1.bf16.msra.mxu0 0
  %4235 = vmatprep.subr.bf16.mxu0 0
  %4236 = vmatpush1.bf16.msra.mxu0 0
  %4237 = vmatprep.subr.bf16.mxu0 0
  %4238 = vmatpush1.bf16.msra.mxu0 0
  %4239 = vmatprep.subr.bf16.mxu0 0
  %4240 = vmatpush1.bf16.msra.mxu0 0
  %4241 = vmatprep.subr.bf16.mxu0 0
  %4242 = vmatpush1.bf16.msra.mxu0 %v4229
  %4243 = vmatprep.subr.bf16.mxu0 0
  %4244 = vmatpush1.bf16.msra.mxu0 %v4212
  %4245 = vmatprep.subr.bf16.mxu0 0
  %4246 = vmatpush1.bf16.msra.mxu0 %v4211
  %4247 = vmatprep.subr.bf16.mxu0 0
  %4248 = vmatpush2.bf16.msra.mxu0 0
  %4249 = vmatprep.subr.bf16.mxu0 0
  %4250 = vmatpush2.bf16.msra.mxu0 0
  %4251 = vmatprep.subr.bf16.mxu0 0
  %4252 = vmatpush2.bf16.msra.mxu0 0
  %4253 = vmatprep.subr.bf16.mxu0 0
  %4254 = vmatpush2.bf16.msra.mxu0 0
  %4255 = vmatprep.subr.bf16.mxu0 0
  %4256 = vmatpush2.bf16.msra.mxu0 0
  %4257 = vmatprep.subr.bf16.mxu0 0
  %4258 = vmatpush2.bf16.msra.mxu0 0
  %4259 = vmatprep.subr.bf16.mxu0 0
  %4260 = vmatpush2.bf16.msra.mxu0 0
  %4261 = vmatprep.subr.bf16.mxu0 0
  %4262 = vmatpush2.bf16.msra.mxu0 0
  %4263 = vmatprep.mubr.bf16.mxu0 0
  %4264 = vmatmul.mubr.bf16.gmra.mxu0 %v4217
  %v4265 = vpop.f32.mrf.mxu0
  %v4266 = vadd.f32 0.0, %v4265
  %v4267 = vpop.f32.mrf.mxu0
  %v4268 = vpop.f32.mrf.mxu0
  %v4269 = vadd.f32 0.0, %v4268
  %v4270 = vpop.f32.mrf.mxu0
  %4271 = vmatprep.mubr.bf16.mxu0 0
  %4272 = vmatmul.mubr.bf16.gmra.mxu0 %v4220
  %v4273 = vpop.f32.mrf.mxu0
  %v4274 = vadd.f32 0.0, %v4273
  %v4275 = vpop.f32.mrf.mxu0
  %v4276 = vpop.f32.mrf.mxu0
  %v4277 = vadd.f32 0.0, %v4276
  %v4278 = vpop.f32.mrf.mxu0
  %4279 = vmatprep.mubr.bf16.mxu0 0
  %4280 = vmatmul.mubr.bf16.gmra.mxu0 %v4223
  %v4281 = vpop.f32.mrf.mxu0
  %v4282 = vadd.f32 0.0, %v4281
  %v4283 = vpop.f32.mrf.mxu0
  %v4284 = vpop.f32.mrf.mxu0
  %v4285 = vadd.f32 0.0, %v4284
  %v4286 = vpop.f32.mrf.mxu0
  %4287 = vmatprep.mubr.bf16.mxu0 0
  %4288 = vmatmul.mubr.bf16.gmra.mxu0 %v4226
  %v4289 = vpop.f32.mrf.mxu0
  %v4290 = vadd.f32 0.0, %v4289
  %v4291 = vpop.f32.mrf.mxu0
  %v4292 = vpop.f32.mrf.mxu0
  %v4293 = vadd.f32 0.0, %v4292
  %v4294 = vpop.f32.mrf.mxu0
  %4295 = vdwg.mxu0
  %4304 = vrot.lane.b32.xlu0 %v4266, 118
  %v4305 = vpop.permute.xlu0 %4304
  %4306 = vrot.lane.b32.xlu0 %v4269, 118
  %v4307 = vpop.permute.xlu0 %4306
  %4308 = vrot.lane.b32.xlu0 %v4274, 118
  %v4309 = vpop.permute.xlu0 %4308
  %4310 = vrot.lane.b32.xlu0 %v4277, 118
  %v4311 = vpop.permute.xlu0 %4310
  %4312 = vrot.lane.b32.xlu0 %v4282, 118
  %v4313 = vpop.permute.xlu0 %4312
  %4314 = vrot.lane.b32.xlu0 %v4285, 118
  %v4315 = vpop.permute.xlu0 %4314
  %4316 = vrot.lane.b32.xlu0 %v4290, 118
  %v4317 = vpop.permute.xlu0 %4316
  %4318 = vrot.lane.b32.xlu0 %v4293, 118
  %v4319 = vpop.permute.xlu0 %4318
  %4328 = vrot.lane.b32.xlu0 %v4266, 108
  %v4329 = vpop.permute.xlu0 %4328
  %4330 = vrot.lane.b32.xlu0 %v4269, 108
  %v4331 = vpop.permute.xlu0 %4330
  %4332 = vrot.lane.b32.xlu0 %v4274, 108
  %v4333 = vpop.permute.xlu0 %4332
  %4334 = vrot.lane.b32.xlu0 %v4277, 108
  %v4335 = vpop.permute.xlu0 %4334
  %4336 = vrot.lane.b32.xlu0 %v4282, 108
  %v4337 = vpop.permute.xlu0 %4336
  %4338 = vrot.lane.b32.xlu0 %v4285, 108
  %v4339 = vpop.permute.xlu0 %4338
  %4340 = vrot.lane.b32.xlu0 %v4290, 108
  %v4341 = vpop.permute.xlu0 %4340
  %4342 = vrot.lane.b32.xlu0 %v4293, 108
  %v4343 = vpop.permute.xlu0 %4342
  %4352 = vrot.lane.b32.xlu0 %v4266, 98
  %v4353 = vpop.permute.xlu0 %4352
  %4354 = vrot.lane.b32.xlu0 %v4269, 98
  %v4355 = vpop.permute.xlu0 %4354
  %4356 = vrot.lane.b32.xlu0 %v4274, 98
  %v4357 = vpop.permute.xlu0 %4356
  %4358 = vrot.lane.b32.xlu0 %v4277, 98
  %v4359 = vpop.permute.xlu0 %4358
  %4360 = vrot.lane.b32.xlu0 %v4282, 98
  %v4361 = vpop.permute.xlu0 %4360
  %4362 = vrot.lane.b32.xlu0 %v4285, 98
  %v4363 = vpop.permute.xlu0 %4362
  %4364 = vrot.lane.b32.xlu0 %v4290, 98
  %v4365 = vpop.permute.xlu0 %4364
  %4366 = vrot.lane.b32.xlu0 %v4293, 98
  %v4367 = vpop.permute.xlu0 %4366
  %v4376 = vpack.c.bf16 %v4269, %v4266
  %v4377 = vpack.c.bf16 %v4277, %v4274
  %v4378 = vpack.c.bf16 %v4285, %v4282
  %v4379 = vpack.c.bf16 %v4293, %v4290
  %v4380 = vpack.c.bf16 %v4307, %v4305
  %v4381 = vpack.c.bf16 %v4311, %v4309
  %v4382 = vpack.c.bf16 %v4315, %v4313
  %v4383 = vpack.c.bf16 %v4319, %v4317
  %v4384 = vpack.c.bf16 %v4331, %v4329
  %v4385 = vpack.c.bf16 %v4335, %v4333
  %v4386 = vpack.c.bf16 %v4339, %v4337
  %v4387 = vpack.c.bf16 %v4343, %v4341
  %v4388 = vpack.c.bf16 %v4355, %v4353
  %v4389 = vpack.c.bf16 %v4359, %v4357
  %v4390 = vpack.c.bf16 %v4363, %v4361
  %v4391 = vpack.c.bf16 %v4367, %v4365
  %4408 = vrot.lane.b32.xlu0 %v4376, 88
  %v4409 = vpop.permute.xlu0 %4408
  %4410 = vrot.lane.b32.xlu0 %v4377, 88
  %v4411 = vpop.permute.xlu0 %4410
  %4412 = vrot.lane.b32.xlu0 %v4378, 88
  %v4413 = vpop.permute.xlu0 %4412
  %4414 = vrot.lane.b32.xlu0 %v4379, 88
  %v4415 = vpop.permute.xlu0 %4414
  %4416 = vrot.lane.b32.xlu0 %v4380, 88
  %v4417 = vpop.permute.xlu0 %4416
  %4418 = vrot.lane.b32.xlu0 %v4381, 88
  %v4419 = vpop.permute.xlu0 %4418
  %4420 = vrot.lane.b32.xlu0 %v4382, 88
  %v4421 = vpop.permute.xlu0 %4420
  %4422 = vrot.lane.b32.xlu0 %v4383, 88
  %v4423 = vpop.permute.xlu0 %4422
  %4424 = vrot.lane.b32.xlu0 %v4384, 88
  %v4425 = vpop.permute.xlu0 %4424
  %4426 = vrot.lane.b32.xlu0 %v4385, 88
  %v4427 = vpop.permute.xlu0 %4426
  %4428 = vrot.lane.b32.xlu0 %v4386, 88
  %v4429 = vpop.permute.xlu0 %4428
  %4430 = vrot.lane.b32.xlu0 %v4387, 88
  %v4431 = vpop.permute.xlu0 %4430
  %4432 = vrot.lane.b32.xlu0 %v4388, 88
  %v4433 = vpop.permute.xlu0 %4432
  %4434 = vrot.lane.b32.xlu0 %v4389, 88
  %v4435 = vpop.permute.xlu0 %4434
  %4436 = vrot.lane.b32.xlu0 %v4390, 88
  %v4437 = vpop.permute.xlu0 %4436
  %4438 = vrot.lane.b32.xlu0 %v4391, 88
  %v4439 = vpop.permute.xlu0 %4438
  %v4441 = vsel %vm473, %v4409, 0
  %v4444 = vsel %vm473, %v4411, 0
  %v4447 = vsel %vm473, %v4413, 0
  %v4450 = vsel %vm473, %v4415, 0
  %v4453 = vsel %vm473, %v4417, 0
  %v4456 = vsel %vm473, %v4419, 0
  %v4459 = vsel %vm473, %v4421, 0
  %v4462 = vsel %vm473, %v4423, 0
  %v4465 = vsel %vm473, %v4425, 0
  %v4468 = vsel %vm473, %v4427, 0
  %v4471 = vsel %vm473, %v4429, 0
  %v4474 = vsel %vm473, %v4431, 0
  %v4477 = vsel %vm473, %v4433, 0
  %v4480 = vsel %vm473, %v4435, 0
  %v4483 = vsel %vm473, %v4437, 0
  %v4486 = vsel %vm473, %v4439, 0
  %v4489 = vsel %vm473, %v4376, 0
  %v4492 = vsel %vm473, %v4377, 0
  %v4495 = vsel %vm473, %v4378, 0
  %v4498 = vsel %vm473, %v4379, 0
  %v4501 = vsel %vm473, %v4380, 0
  %v4504 = vsel %vm473, %v4381, 0
  %v4507 = vsel %vm473, %v4382, 0
  %v4510 = vsel %vm473, %v4383, 0
  %v4513 = vsel %vm473, %v4384, 0
  %v4516 = vsel %vm473, %v4385, 0
  %v4519 = vsel %vm473, %v4386, 0
  %v4522 = vsel %vm473, %v4387, 0
  %v4525 = vsel %vm473, %v4388, 0
  %v4528 = vsel %vm473, %v4389, 0
  %v4531 = vsel %vm473, %v4390, 0
  %v4534 = vsel %vm473, %v4391, 0
  %4536 = vmatprep.subr.bf16.mxu0 0
  %4537 = vmatpush1.bf16.xpose.msra.mxu0 %v4510
  %4538 = vmatprep.subr.bf16.mxu0 0
  %4539 = vmatpush1.bf16.xpose.msra.mxu0 %v4507
  %4540 = vmatprep.subr.bf16.mxu0 0
  %4541 = vmatpush1.bf16.xpose.msra.mxu0 %v4504
  %4542 = vmatprep.subr.bf16.mxu0 0
  %4543 = vmatpush1.bf16.xpose.msra.mxu0 %v4501
  %4544 = vmatprep.subr.bf16.mxu0 0
  %4545 = vmatpush1.bf16.xpose.msra.mxu0 %v4498
  %4546 = vmatprep.subr.bf16.mxu0 0
  %4547 = vmatpush1.bf16.xpose.msra.mxu0 %v4495
  %4548 = vmatprep.subr.bf16.mxu0 0
  %4549 = vmatpush1.bf16.xpose.msra.mxu0 %v4492
  %4550 = vmatprep.subr.bf16.mxu0 0
  %4551 = vmatpush1.bf16.xpose.msra.mxu0 %v4489
  %4552 = vmatprep.subr.bf16.mxu0 0
  %4553 = vmatpush2.bf16.xpose.msra.mxu0 %v4534
  %4554 = vmatprep.subr.bf16.mxu0 0
  %4555 = vmatpush2.bf16.xpose.msra.mxu0 %v4531
  %4556 = vmatprep.subr.bf16.mxu0 0
  %4557 = vmatpush2.bf16.xpose.msra.mxu0 %v4528
  %4558 = vmatprep.subr.bf16.mxu0 0
  %4559 = vmatpush2.bf16.xpose.msra.mxu0 %v4525
  %4560 = vmatprep.subr.bf16.mxu0 0
  %4561 = vmatpush2.bf16.xpose.msra.mxu0 %v4522
  %4562 = vmatprep.subr.bf16.mxu0 0
  %4563 = vmatpush2.bf16.xpose.msra.mxu0 %v4519
  %4564 = vmatprep.subr.bf16.mxu0 0
  %4565 = vmatpush2.bf16.xpose.msra.mxu0 %v4516
  %4566 = vmatprep.subr.bf16.mxu0 0
  %4567 = vmatpush2.bf16.xpose.msra.mxu0 %v4513
  %4568 = vmatprep.mubr.bf16.mxu0 0
  %4569 = vmatmul.mubr.bf16.gmra.mxu0 %v4441
  %v4570 = vpop.f32.mrf.mxu0
  %v4571 = vadd.f32 %v22, %v4570
  %v4572 = vpop.f32.mrf.mxu0
  %v4573 = vadd.f32 %v23, %v4572
  %v4574 = vpop.f32.mrf.mxu0
  %v4575 = vadd.f32 %v24, %v4574
  %v4576 = vpop.f32.mrf.mxu0
  %v4577 = vadd.f32 %v25, %v4576
  %4578 = vmatprep.mubr.bf16.mxu0 0
  %4579 = vmatmul.mubr.bf16.gmra.mxu0 %v4444
  %v4580 = vpop.f32.mrf.mxu0
  %v4581 = vadd.f32 %v26, %v4580
  %v4582 = vpop.f32.mrf.mxu0
  %v4583 = vadd.f32 %v27, %v4582
  %v4584 = vpop.f32.mrf.mxu0
  %v4585 = vadd.f32 %v28, %v4584
  %v4586 = vpop.f32.mrf.mxu0
  %v4587 = vadd.f32 %v29, %v4586
  %4588 = vmatprep.mubr.bf16.mxu0 0
  %4589 = vmatmul.mubr.bf16.gmra.mxu0 %v4447
  %v4590 = vpop.f32.mrf.mxu0
  %v4591 = vadd.f32 %v30, %v4590
  %v4592 = vpop.f32.mrf.mxu0
  %v4593 = vadd.f32 %v31, %v4592
  %v4594 = vpop.f32.mrf.mxu0
  %v4595 = vadd.f32 %v32, %v4594
  %v4596 = vpop.f32.mrf.mxu0
  %v4597 = vadd.f32 %v33, %v4596
  %4598 = vmatprep.mubr.bf16.mxu0 0
  %4599 = vmatmul.mubr.bf16.gmra.mxu0 %v4450
  %v4600 = vpop.f32.mrf.mxu0
  %v4601 = vadd.f32 %v34, %v4600
  %v4602 = vpop.f32.mrf.mxu0
  %v4603 = vadd.f32 %v35, %v4602
  %v4604 = vpop.f32.mrf.mxu0
  %v4605 = vadd.f32 %v36, %v4604
  %v4606 = vpop.f32.mrf.mxu0
  %v4607 = vadd.f32 %v37, %v4606
  %4608 = vmatprep.mubr.bf16.mxu0 0
  %4609 = vmatmul.mubr.bf16.gmra.mxu0 %v4453
  %v4610 = vpop.f32.mrf.mxu0
  %v4611 = vadd.f32 %v38, %v4610
  %v4612 = vpop.f32.mrf.mxu0
  %v4613 = vadd.f32 %v39, %v4612
  %v4614 = vpop.f32.mrf.mxu0
  %v4615 = vadd.f32 %v40, %v4614
  %v4616 = vpop.f32.mrf.mxu0
  %v4617 = vadd.f32 %v41, %v4616
  %4618 = vmatprep.mubr.bf16.mxu0 0
  %4619 = vmatmul.mubr.bf16.gmra.mxu0 %v4456
  %v4620 = vpop.f32.mrf.mxu0
  %v4621 = vadd.f32 %v42, %v4620
  %v4622 = vpop.f32.mrf.mxu0
  %v4623 = vadd.f32 %v43, %v4622
  %v4624 = vpop.f32.mrf.mxu0
  %v4625 = vadd.f32 %v44, %v4624
  %v4626 = vpop.f32.mrf.mxu0
  %v4627 = vadd.f32 %v45, %v4626
  %4628 = vmatprep.mubr.bf16.mxu0 0
  %4629 = vmatmul.mubr.bf16.gmra.mxu0 %v4459
  %v4630 = vpop.f32.mrf.mxu0
  %v4631 = vadd.f32 %v46, %v4630
  %v4632 = vpop.f32.mrf.mxu0
  %v4633 = vadd.f32 %v47, %v4632
  %v4634 = vpop.f32.mrf.mxu0
  %v4635 = vadd.f32 %v48, %v4634
  %v4636 = vpop.f32.mrf.mxu0
  %v4637 = vadd.f32 %v49, %v4636
  %4638 = vmatprep.mubr.bf16.mxu0 0
  %4639 = vmatmul.mubr.bf16.gmra.mxu0 %v4462
  %v4640 = vpop.f32.mrf.mxu0
  %v4641 = vadd.f32 %v50, %v4640
  %v4642 = vpop.f32.mrf.mxu0
  %v4643 = vadd.f32 %v51, %v4642
  %v4644 = vpop.f32.mrf.mxu0
  %v4645 = vadd.f32 %v52, %v4644
  %v4646 = vpop.f32.mrf.mxu0
  %v4647 = vadd.f32 %v53, %v4646
  %4648 = vmatprep.mubr.bf16.mxu0 0
  %4649 = vmatmul.mubr.bf16.gmra.mxu0 %v4465
  %v4650 = vpop.f32.mrf.mxu0
  %v4651 = vadd.f32 %v54, %v4650
  %v4652 = vpop.f32.mrf.mxu0
  %v4653 = vadd.f32 %v55, %v4652
  %v4654 = vpop.f32.mrf.mxu0
  %v4655 = vadd.f32 %v56, %v4654
  %v4656 = vpop.f32.mrf.mxu0
  %v4657 = vadd.f32 %v57, %v4656
  %4658 = vmatprep.mubr.bf16.mxu0 0
  %4659 = vmatmul.mubr.bf16.gmra.mxu0 %v4468
  %v4660 = vpop.f32.mrf.mxu0
  %v4661 = vadd.f32 %v58, %v4660
  %v4662 = vpop.f32.mrf.mxu0
  %v4663 = vadd.f32 %v59, %v4662
  %v4664 = vpop.f32.mrf.mxu0
  %v4665 = vadd.f32 %v60, %v4664
  %v4666 = vpop.f32.mrf.mxu0
  %v4667 = vadd.f32 %v61, %v4666
  %4668 = vmatprep.mubr.bf16.mxu0 0
  %4669 = vmatmul.mubr.bf16.gmra.mxu0 %v4471
  %v4670 = vpop.f32.mrf.mxu0
  %v4671 = vadd.f32 %v62, %v4670
  %v4672 = vpop.f32.mrf.mxu0
  %v4673 = vadd.f32 %v63, %v4672
  %v4674 = vpop.f32.mrf.mxu0
  %v4675 = vadd.f32 %v64, %v4674
  %v4676 = vpop.f32.mrf.mxu0
  %v4677 = vadd.f32 %v65, %v4676
  %4678 = vmatprep.mubr.bf16.mxu0 0
  %4679 = vmatmul.mubr.bf16.gmra.mxu0 %v4474
  %v4680 = vpop.f32.mrf.mxu0
  %v4681 = vadd.f32 %v66, %v4680
  %v4682 = vpop.f32.mrf.mxu0
  %v4683 = vadd.f32 %v67, %v4682
  %v4684 = vpop.f32.mrf.mxu0
  %v4685 = vadd.f32 %v68, %v4684
  %v4686 = vpop.f32.mrf.mxu0
  %v4687 = vadd.f32 %v69, %v4686
  %4688 = vmatprep.mubr.bf16.mxu0 0
  %4689 = vmatmul.mubr.bf16.gmra.mxu0 %v4477
  %v4690 = vpop.f32.mrf.mxu0
  %v4691 = vadd.f32 %v70, %v4690
  %v4692 = vpop.f32.mrf.mxu0
  %v4693 = vadd.f32 %v71, %v4692
  %v4694 = vpop.f32.mrf.mxu0
  %v4695 = vadd.f32 %v72, %v4694
  %v4696 = vpop.f32.mrf.mxu0
  %v4697 = vadd.f32 %v73, %v4696
  %4698 = vmatprep.mubr.bf16.mxu0 0
  %4699 = vmatmul.mubr.bf16.gmra.mxu0 %v4480
  %v4700 = vpop.f32.mrf.mxu0
  %v4701 = vadd.f32 %v74, %v4700
  %v4702 = vpop.f32.mrf.mxu0
  %v4703 = vadd.f32 %v75, %v4702
  %v4704 = vpop.f32.mrf.mxu0
  %v4705 = vadd.f32 %v76, %v4704
  %v4706 = vpop.f32.mrf.mxu0
  %v4707 = vadd.f32 %v77, %v4706
  %4708 = vmatprep.mubr.bf16.mxu0 0
  %4709 = vmatmul.mubr.bf16.gmra.mxu0 %v4483
  %v4710 = vpop.f32.mrf.mxu0
  %v4711 = vadd.f32 %v78, %v4710
  %v4712 = vpop.f32.mrf.mxu0
  %v4713 = vadd.f32 %v79, %v4712
  %v4714 = vpop.f32.mrf.mxu0
  %v4715 = vadd.f32 %v80, %v4714
  %v4716 = vpop.f32.mrf.mxu0
  %v4717 = vadd.f32 %v81, %v4716
  %4718 = vmatprep.mubr.bf16.mxu0 0
  %4719 = vmatmul.mubr.bf16.gmra.mxu0 %v4486
  %v4720 = vpop.f32.mrf.mxu0
  %v4721 = vadd.f32 %v82, %v4720
  %v4722 = vpop.f32.mrf.mxu0
  %v4723 = vadd.f32 %v83, %v4722
  %v4724 = vpop.f32.mrf.mxu0
  %v4725 = vadd.f32 %v84, %v4724
  %v4726 = vpop.f32.mrf.mxu0
  %v4727 = vadd.f32 %v85, %v4726
  %4728 = vdwg.mxu0
  %v4729 = vmax.f32 %v4571, %v4573
  %4730 = vmax.xlane.f32.xlu0 %v4729
  %v4731 = vpop.xlane.xlu0 %4730
  %v4732 = vmax.f32 %v4575, %v4577
  %4733 = vmax.xlane.f32.xlu0 %v4732
  %v4734 = vpop.xlane.xlu0 %4733
  %v4735 = vmax.f32 %v4581, %v4583
  %4736 = vmax.xlane.f32.xlu0 %v4735
  %v4737 = vpop.xlane.xlu0 %4736
  %v4738 = vmax.f32 %v4585, %v4587
  %4739 = vmax.xlane.f32.xlu0 %v4738
  %v4740 = vpop.xlane.xlu0 %4739
  %v4741 = vmax.f32 %v4591, %v4593
  %4742 = vmax.xlane.f32.xlu0 %v4741
  %v4743 = vpop.xlane.xlu0 %4742
  %v4744 = vmax.f32 %v4595, %v4597
  %4745 = vmax.xlane.f32.xlu0 %v4744
  %v4746 = vpop.xlane.xlu0 %4745
  %v4747 = vmax.f32 %v4601, %v4603
  %4748 = vmax.xlane.f32.xlu0 %v4747
  %v4749 = vpop.xlane.xlu0 %4748
  %v4750 = vmax.f32 %v4605, %v4607
  %4751 = vmax.xlane.f32.xlu0 %v4750
  %v4752 = vpop.xlane.xlu0 %4751
  %v4753 = vmax.f32 %v4611, %v4613
  %4754 = vmax.xlane.f32.xlu0 %v4753
  %v4755 = vpop.xlane.xlu0 %4754
  %v4756 = vmax.f32 %v4615, %v4617
  %4757 = vmax.xlane.f32.xlu0 %v4756
  %v4758 = vpop.xlane.xlu0 %4757
  %v4759 = vmax.f32 %v4621, %v4623
  %4760 = vmax.xlane.f32.xlu0 %v4759
  %v4761 = vpop.xlane.xlu0 %4760
  %v4762 = vmax.f32 %v4625, %v4627
  %4763 = vmax.xlane.f32.xlu0 %v4762
  %v4764 = vpop.xlane.xlu0 %4763
  %v4765 = vmax.f32 %v4631, %v4633
  %4766 = vmax.xlane.f32.xlu0 %v4765
  %v4767 = vpop.xlane.xlu0 %4766
  %v4768 = vmax.f32 %v4635, %v4637
  %4769 = vmax.xlane.f32.xlu0 %v4768
  %v4770 = vpop.xlane.xlu0 %4769
  %v4771 = vmax.f32 %v4641, %v4643
  %4772 = vmax.xlane.f32.xlu0 %v4771
  %v4773 = vpop.xlane.xlu0 %4772
  %v4774 = vmax.f32 %v4645, %v4647
  %4775 = vmax.xlane.f32.xlu0 %v4774
  %v4776 = vpop.xlane.xlu0 %4775
  %v4777 = vmax.f32 %v4651, %v4653
  %4778 = vmax.xlane.f32.xlu0 %v4777
  %v4779 = vpop.xlane.xlu0 %4778
  %v4780 = vmax.f32 %v4655, %v4657
  %4781 = vmax.xlane.f32.xlu0 %v4780
  %v4782 = vpop.xlane.xlu0 %4781
  %v4783 = vmax.f32 %v4661, %v4663
  %4784 = vmax.xlane.f32.xlu0 %v4783
  %v4785 = vpop.xlane.xlu0 %4784
  %v4786 = vmax.f32 %v4665, %v4667
  %4787 = vmax.xlane.f32.xlu0 %v4786
  %v4788 = vpop.xlane.xlu0 %4787
  %v4789 = vmax.f32 %v4671, %v4673
  %4790 = vmax.xlane.f32.xlu0 %v4789
  %v4791 = vpop.xlane.xlu0 %4790
  %v4792 = vmax.f32 %v4675, %v4677
  %4793 = vmax.xlane.f32.xlu0 %v4792
  %v4794 = vpop.xlane.xlu0 %4793
  %v4795 = vmax.f32 %v4681, %v4683
  %4796 = vmax.xlane.f32.xlu0 %v4795
  %v4797 = vpop.xlane.xlu0 %4796
  %v4798 = vmax.f32 %v4685, %v4687
  %4799 = vmax.xlane.f32.xlu0 %v4798
  %v4800 = vpop.xlane.xlu0 %4799
  %v4801 = vmax.f32 %v4691, %v4693
  %4802 = vmax.xlane.f32.xlu0 %v4801
  %v4803 = vpop.xlane.xlu0 %4802
  %v4804 = vmax.f32 %v4695, %v4697
  %4805 = vmax.xlane.f32.xlu0 %v4804
  %v4806 = vpop.xlane.xlu0 %4805
  %v4807 = vmax.f32 %v4701, %v4703
  %4808 = vmax.xlane.f32.xlu0 %v4807
  %v4809 = vpop.xlane.xlu0 %4808
  %v4810 = vmax.f32 %v4705, %v4707
  %4811 = vmax.xlane.f32.xlu0 %v4810
  %v4812 = vpop.xlane.xlu0 %4811
  %v4813 = vmax.f32 %v4711, %v4713
  %4814 = vmax.xlane.f32.xlu0 %v4813
  %v4815 = vpop.xlane.xlu0 %4814
  %v4816 = vmax.f32 %v4715, %v4717
  %4817 = vmax.xlane.f32.xlu0 %v4816
  %v4818 = vpop.xlane.xlu0 %4817
  %v4819 = vmax.f32 %v4721, %v4723
  %4820 = vmax.xlane.f32.xlu0 %v4819
  %v4821 = vpop.xlane.xlu0 %4820
  %v4822 = vmax.f32 %v4725, %v4727
  %4823 = vmax.xlane.f32.xlu0 %v4822
  %v4824 = vpop.xlane.xlu0 %4823
  %v4825 = vsub.f32 %v4571, %v4731
  %v4826 = vsub.f32 %v4573, %v4731
  %v4827 = vsub.f32 %v4575, %v4734
  %v4828 = vsub.f32 %v4577, %v4734
  %v4829 = vsub.f32 %v4581, %v4737
  %v4830 = vsub.f32 %v4583, %v4737
  %v4831 = vsub.f32 %v4585, %v4740
  %v4832 = vsub.f32 %v4587, %v4740
  %v4833 = vsub.f32 %v4591, %v4743
  %v4834 = vsub.f32 %v4593, %v4743
  %v4835 = vsub.f32 %v4595, %v4746
  %v4836 = vsub.f32 %v4597, %v4746
  %v4837 = vsub.f32 %v4601, %v4749
  %v4838 = vsub.f32 %v4603, %v4749
  %v4839 = vsub.f32 %v4605, %v4752
  %v4840 = vsub.f32 %v4607, %v4752
  %v4841 = vsub.f32 %v4611, %v4755
  %v4842 = vsub.f32 %v4613, %v4755
  %v4843 = vsub.f32 %v4615, %v4758
  %v4844 = vsub.f32 %v4617, %v4758
  %v4845 = vsub.f32 %v4621, %v4761
  %v4846 = vsub.f32 %v4623, %v4761
  %v4847 = vsub.f32 %v4625, %v4764
  %v4848 = vsub.f32 %v4627, %v4764
  %v4849 = vsub.f32 %v4631, %v4767
  %v4850 = vsub.f32 %v4633, %v4767
  %v4851 = vsub.f32 %v4635, %v4770
  %v4852 = vsub.f32 %v4637, %v4770
  %v4853 = vsub.f32 %v4641, %v4773
  %v4854 = vsub.f32 %v4643, %v4773
  %v4855 = vsub.f32 %v4645, %v4776
  %v4856 = vsub.f32 %v4647, %v4776
  %v4857 = vsub.f32 %v4651, %v4779
  %v4858 = vsub.f32 %v4653, %v4779
  %v4859 = vsub.f32 %v4655, %v4782
  %v4860 = vsub.f32 %v4657, %v4782
  %v4861 = vsub.f32 %v4661, %v4785
  %v4862 = vsub.f32 %v4663, %v4785
  %v4863 = vsub.f32 %v4665, %v4788
  %v4864 = vsub.f32 %v4667, %v4788
  %v4865 = vsub.f32 %v4671, %v4791
  %v4866 = vsub.f32 %v4673, %v4791
  %v4867 = vsub.f32 %v4675, %v4794
  %v4868 = vsub.f32 %v4677, %v4794
  %v4869 = vsub.f32 %v4681, %v4797
  %v4870 = vsub.f32 %v4683, %v4797
  %v4871 = vsub.f32 %v4685, %v4800
  %v4872 = vsub.f32 %v4687, %v4800
  %v4873 = vsub.f32 %v4691, %v4803
  %v4874 = vsub.f32 %v4693, %v4803
  %v4875 = vsub.f32 %v4695, %v4806
  %v4876 = vsub.f32 %v4697, %v4806
  %v4877 = vsub.f32 %v4701, %v4809
  %v4878 = vsub.f32 %v4703, %v4809
  %v4879 = vsub.f32 %v4705, %v4812
  %v4880 = vsub.f32 %v4707, %v4812
  %v4881 = vsub.f32 %v4711, %v4815
  %v4882 = vsub.f32 %v4713, %v4815
  %v4883 = vsub.f32 %v4715, %v4818
  %v4884 = vsub.f32 %v4717, %v4818
  %v4885 = vsub.f32 %v4721, %v4821
  %v4886 = vsub.f32 %v4723, %v4821
  %v4887 = vsub.f32 %v4725, %v4824
  %v4888 = vsub.f32 %v4727, %v4824
  %v4889 = vmul.f32 %v4825, 1.442695
  %v4890 = vpow.pop %v4889
  %v4891 = vmul.f32 %v4826, 1.442695
  %v4892 = vpow.pop %v4891
  %v4893 = vmul.f32 %v4827, 1.442695
  %v4894 = vpow.pop %v4893
  %v4895 = vmul.f32 %v4828, 1.442695
  %v4896 = vpow.pop %v4895
  %v4897 = vmul.f32 %v4829, 1.442695
  %v4898 = vpow.pop %v4897
  %v4899 = vmul.f32 %v4830, 1.442695
  %v4900 = vpow.pop %v4899
  %v4901 = vmul.f32 %v4831, 1.442695
  %v4902 = vpow.pop %v4901
  %v4903 = vmul.f32 %v4832, 1.442695
  %v4904 = vpow.pop %v4903
  %v4905 = vmul.f32 %v4833, 1.442695
  %v4906 = vpow.pop %v4905
  %v4907 = vmul.f32 %v4834, 1.442695
  %v4908 = vpow.pop %v4907
  %v4909 = vmul.f32 %v4835, 1.442695
  %v4910 = vpow.pop %v4909
  %v4911 = vmul.f32 %v4836, 1.442695
  %v4912 = vpow.pop %v4911
  %v4913 = vmul.f32 %v4837, 1.442695
  %v4914 = vpow.pop %v4913
  %v4915 = vmul.f32 %v4838, 1.442695
  %v4916 = vpow.pop %v4915
  %v4917 = vmul.f32 %v4839, 1.442695
  %v4918 = vpow.pop %v4917
  %v4919 = vmul.f32 %v4840, 1.442695
  %v4920 = vpow.pop %v4919
  %v4921 = vmul.f32 %v4841, 1.442695
  %v4922 = vpow.pop %v4921
  %v4923 = vmul.f32 %v4842, 1.442695
  %v4924 = vpow.pop %v4923
  %v4925 = vmul.f32 %v4843, 1.442695
  %v4926 = vpow.pop %v4925
  %v4927 = vmul.f32 %v4844, 1.442695
  %v4928 = vpow.pop %v4927
  %v4929 = vmul.f32 %v4845, 1.442695
  %v4930 = vpow.pop %v4929
  %v4931 = vmul.f32 %v4846, 1.442695
  %v4932 = vpow.pop %v4931
  %v4933 = vmul.f32 %v4847, 1.442695
  %v4934 = vpow.pop %v4933
  %v4935 = vmul.f32 %v4848, 1.442695
  %v4936 = vpow.pop %v4935
  %v4937 = vmul.f32 %v4849, 1.442695
  %v4938 = vpow.pop %v4937
  %v4939 = vmul.f32 %v4850, 1.442695
  %v4940 = vpow.pop %v4939
  %v4941 = vmul.f32 %v4851, 1.442695
  %v4942 = vpow.pop %v4941
  %v4943 = vmul.f32 %v4852, 1.442695
  %v4944 = vpow.pop %v4943
  %v4945 = vmul.f32 %v4853, 1.442695
  %v4946 = vpow.pop %v4945
  %v4947 = vmul.f32 %v4854, 1.442695
  %v4948 = vpow.pop %v4947
  %v4949 = vmul.f32 %v4855, 1.442695
  %v4950 = vpow.pop %v4949
  %v4951 = vmul.f32 %v4856, 1.442695
  %v4952 = vpow.pop %v4951
  %v4953 = vmul.f32 %v4857, 1.442695
  %v4954 = vpow.pop %v4953
  %v4955 = vmul.f32 %v4858, 1.442695
  %v4956 = vpow.pop %v4955
  %v4957 = vmul.f32 %v4859, 1.442695
  %v4958 = vpow.pop %v4957
  %v4959 = vmul.f32 %v4860, 1.442695
  %v4960 = vpow.pop %v4959
  %v4961 = vmul.f32 %v4861, 1.442695
  %v4962 = vpow.pop %v4961
  %v4963 = vmul.f32 %v4862, 1.442695
  %v4964 = vpow.pop %v4963
  %v4965 = vmul.f32 %v4863, 1.442695
  %v4966 = vpow.pop %v4965
  %v4967 = vmul.f32 %v4864, 1.442695
  %v4968 = vpow.pop %v4967
  %v4969 = vmul.f32 %v4865, 1.442695
  %v4970 = vpow.pop %v4969
  %v4971 = vmul.f32 %v4866, 1.442695
  %v4972 = vpow.pop %v4971
  %v4973 = vmul.f32 %v4867, 1.442695
  %v4974 = vpow.pop %v4973
  %v4975 = vmul.f32 %v4868, 1.442695
  %v4976 = vpow.pop %v4975
  %v4977 = vmul.f32 %v4869, 1.442695
  %v4978 = vpow.pop %v4977
  %v4979 = vmul.f32 %v4870, 1.442695
  %v4980 = vpow.pop %v4979
  %v4981 = vmul.f32 %v4871, 1.442695
  %v4982 = vpow.pop %v4981
  %v4983 = vmul.f32 %v4872, 1.442695
  %v4984 = vpow.pop %v4983
  %v4985 = vmul.f32 %v4873, 1.442695
  %v4986 = vpow.pop %v4985
  %v4987 = vmul.f32 %v4874, 1.442695
  %v4988 = vpow.pop %v4987
  %v4989 = vmul.f32 %v4875, 1.442695
  %v4990 = vpow.pop %v4989
  %v4991 = vmul.f32 %v4876, 1.442695
  %v4992 = vpow.pop %v4991
  %v4993 = vmul.f32 %v4877, 1.442695
  %v4994 = vpow.pop %v4993
  %v4995 = vmul.f32 %v4878, 1.442695
  %v4996 = vpow.pop %v4995
  %v4997 = vmul.f32 %v4879, 1.442695
  %v4998 = vpow.pop %v4997
  %v4999 = vmul.f32 %v4880, 1.442695
  %v5000 = vpow.pop %v4999
  %v5001 = vmul.f32 %v4881, 1.442695
  %v5002 = vpow.pop %v5001
  %v5003 = vmul.f32 %v4882, 1.442695
  %v5004 = vpow.pop %v5003
  %v5005 = vmul.f32 %v4883, 1.442695
  %v5006 = vpow.pop %v5005
  %v5007 = vmul.f32 %v4884, 1.442695
  %v5008 = vpow.pop %v5007
  %v5009 = vmul.f32 %v4885, 1.442695
  %v5010 = vpow.pop %v5009
  %v5011 = vmul.f32 %v4886, 1.442695
  %v5012 = vpow.pop %v5011
  %v5013 = vmul.f32 %v4887, 1.442695
  %v5014 = vpow.pop %v5013
  %v5015 = vmul.f32 %v4888, 1.442695
  %v5016 = vpow.pop %v5015
  %v5017 = vadd.f32 %v4890, %v4892
  %5018 = vadd.xlane.f32.xlu0 %v5017
  %v5019 = vpop.xlane.xlu0 %5018
  %v5020 = vadd.f32 %v4894, %v4896
  %5021 = vadd.xlane.f32.xlu0 %v5020
  %v5022 = vpop.xlane.xlu0 %5021
  %v5023 = vadd.f32 %v4898, %v4900
  %5024 = vadd.xlane.f32.xlu0 %v5023
  %v5025 = vpop.xlane.xlu0 %5024
  %v5026 = vadd.f32 %v4902, %v4904
  %5027 = vadd.xlane.f32.xlu0 %v5026
  %v5028 = vpop.xlane.xlu0 %5027
  %v5029 = vadd.f32 %v4906, %v4908
  %5030 = vadd.xlane.f32.xlu0 %v5029
  %v5031 = vpop.xlane.xlu0 %5030
  %v5032 = vadd.f32 %v4910, %v4912
  %5033 = vadd.xlane.f32.xlu0 %v5032
  %v5034 = vpop.xlane.xlu0 %5033
  %v5035 = vadd.f32 %v4914, %v4916
  %5036 = vadd.xlane.f32.xlu0 %v5035
  %v5037 = vpop.xlane.xlu0 %5036
  %v5038 = vadd.f32 %v4918, %v4920
  %5039 = vadd.xlane.f32.xlu0 %v5038
  %v5040 = vpop.xlane.xlu0 %5039
  %v5041 = vadd.f32 %v4922, %v4924
  %5042 = vadd.xlane.f32.xlu0 %v5041
  %v5043 = vpop.xlane.xlu0 %5042
  %v5044 = vadd.f32 %v4926, %v4928
  %5045 = vadd.xlane.f32.xlu0 %v5044
  %v5046 = vpop.xlane.xlu0 %5045
  %v5047 = vadd.f32 %v4930, %v4932
  %5048 = vadd.xlane.f32.xlu0 %v5047
  %v5049 = vpop.xlane.xlu0 %5048
  %v5050 = vadd.f32 %v4934, %v4936
  %5051 = vadd.xlane.f32.xlu0 %v5050
  %v5052 = vpop.xlane.xlu0 %5051
  %v5053 = vadd.f32 %v4938, %v4940
  %5054 = vadd.xlane.f32.xlu0 %v5053
  %v5055 = vpop.xlane.xlu0 %5054
  %v5056 = vadd.f32 %v4942, %v4944
  %5057 = vadd.xlane.f32.xlu0 %v5056
  %v5058 = vpop.xlane.xlu0 %5057
  %v5059 = vadd.f32 %v4946, %v4948
  %5060 = vadd.xlane.f32.xlu0 %v5059
  %v5061 = vpop.xlane.xlu0 %5060
  %v5062 = vadd.f32 %v4950, %v4952
  %5063 = vadd.xlane.f32.xlu0 %v5062
  %v5064 = vpop.xlane.xlu0 %5063
  %v5065 = vadd.f32 %v4954, %v4956
  %5066 = vadd.xlane.f32.xlu0 %v5065
  %v5067 = vpop.xlane.xlu0 %5066
  %v5068 = vadd.f32 %v4958, %v4960
  %5069 = vadd.xlane.f32.xlu0 %v5068
  %v5070 = vpop.xlane.xlu0 %5069
  %v5071 = vadd.f32 %v4962, %v4964
  %5072 = vadd.xlane.f32.xlu0 %v5071
  %v5073 = vpop.xlane.xlu0 %5072
  %v5074 = vadd.f32 %v4966, %v4968
  %5075 = vadd.xlane.f32.xlu0 %v5074
  %v5076 = vpop.xlane.xlu0 %5075
  %v5077 = vadd.f32 %v4970, %v4972
  %5078 = vadd.xlane.f32.xlu0 %v5077
  %v5079 = vpop.xlane.xlu0 %5078
  %v5080 = vadd.f32 %v4974, %v4976
  %5081 = vadd.xlane.f32.xlu0 %v5080
  %v5082 = vpop.xlane.xlu0 %5081
  %v5083 = vadd.f32 %v4978, %v4980
  %5084 = vadd.xlane.f32.xlu0 %v5083
  %v5085 = vpop.xlane.xlu0 %5084
  %v5086 = vadd.f32 %v4982, %v4984
  %5087 = vadd.xlane.f32.xlu0 %v5086
  %v5088 = vpop.xlane.xlu0 %5087
  %v5089 = vadd.f32 %v4986, %v4988
  %5090 = vadd.xlane.f32.xlu0 %v5089
  %v5091 = vpop.xlane.xlu0 %5090
  %v5092 = vadd.f32 %v4990, %v4992
  %5093 = vadd.xlane.f32.xlu0 %v5092
  %v5094 = vpop.xlane.xlu0 %5093
  %v5095 = vadd.f32 %v4994, %v4996
  %5096 = vadd.xlane.f32.xlu0 %v5095
  %v5097 = vpop.xlane.xlu0 %5096
  %v5098 = vadd.f32 %v4998, %v5000
  %5099 = vadd.xlane.f32.xlu0 %v5098
  %v5100 = vpop.xlane.xlu0 %5099
  %v5101 = vadd.f32 %v5002, %v5004
  %5102 = vadd.xlane.f32.xlu0 %v5101
  %v5103 = vpop.xlane.xlu0 %5102
  %v5104 = vadd.f32 %v5006, %v5008
  %5105 = vadd.xlane.f32.xlu0 %v5104
  %v5106 = vpop.xlane.xlu0 %5105
  %v5107 = vadd.f32 %v5010, %v5012
  %5108 = vadd.xlane.f32.xlu0 %v5107
  %v5109 = vpop.xlane.xlu0 %5108
  %v5110 = vadd.f32 %v5014, %v5016
  %5111 = vadd.xlane.f32.xlu0 %v5110
  %v5112 = vpop.xlane.xlu0 %5111
  %v5113 = vrcp.pop %v5019
  %v5114 = vmul.f32 %v4890, %v5113
  %v5115 = vmul.f32 %v4892, %v5113
  %v5116 = vrcp.pop %v5022
  %v5117 = vmul.f32 %v4894, %v5116
  %v5118 = vmul.f32 %v4896, %v5116
  %v5119 = vrcp.pop %v5025
  %v5120 = vmul.f32 %v4898, %v5119
  %v5121 = vmul.f32 %v4900, %v5119
  %v5122 = vrcp.pop %v5028
  %v5123 = vmul.f32 %v4902, %v5122
  %v5124 = vmul.f32 %v4904, %v5122
  %v5125 = vrcp.pop %v5031
  %v5126 = vmul.f32 %v4906, %v5125
  %v5127 = vmul.f32 %v4908, %v5125
  %v5128 = vrcp.pop %v5034
  %v5129 = vmul.f32 %v4910, %v5128
  %v5130 = vmul.f32 %v4912, %v5128
  %v5131 = vrcp.pop %v5037
  %v5132 = vmul.f32 %v4914, %v5131
  %v5133 = vmul.f32 %v4916, %v5131
  %v5134 = vrcp.pop %v5040
  %v5135 = vmul.f32 %v4918, %v5134
  %v5136 = vmul.f32 %v4920, %v5134
  %v5137 = vrcp.pop %v5043
  %v5138 = vmul.f32 %v4922, %v5137
  %v5139 = vmul.f32 %v4924, %v5137
  %v5140 = vrcp.pop %v5046
  %v5141 = vmul.f32 %v4926, %v5140
  %v5142 = vmul.f32 %v4928, %v5140
  %v5143 = vrcp.pop %v5049
  %v5144 = vmul.f32 %v4930, %v5143
  %v5145 = vmul.f32 %v4932, %v5143
  %v5146 = vrcp.pop %v5052
  %v5147 = vmul.f32 %v4934, %v5146
  %v5148 = vmul.f32 %v4936, %v5146
  %v5149 = vrcp.pop %v5055
  %v5150 = vmul.f32 %v4938, %v5149
  %v5151 = vmul.f32 %v4940, %v5149
  %v5152 = vrcp.pop %v5058
  %v5153 = vmul.f32 %v4942, %v5152
  %v5154 = vmul.f32 %v4944, %v5152
  %v5155 = vrcp.pop %v5061
  %v5156 = vmul.f32 %v4946, %v5155
  %v5157 = vmul.f32 %v4948, %v5155
  %v5158 = vrcp.pop %v5064
  %v5159 = vmul.f32 %v4950, %v5158
  %v5160 = vmul.f32 %v4952, %v5158
  %v5161 = vrcp.pop %v5067
  %v5162 = vmul.f32 %v4954, %v5161
  %v5163 = vmul.f32 %v4956, %v5161
  %v5164 = vrcp.pop %v5070
  %v5165 = vmul.f32 %v4958, %v5164
  %v5166 = vmul.f32 %v4960, %v5164
  %v5167 = vrcp.pop %v5073
  %v5168 = vmul.f32 %v4962, %v5167
  %v5169 = vmul.f32 %v4964, %v5167
  %v5170 = vrcp.pop %v5076
  %v5171 = vmul.f32 %v4966, %v5170
  %v5172 = vmul.f32 %v4968, %v5170
  %v5173 = vrcp.pop %v5079
  %v5174 = vmul.f32 %v4970, %v5173
  %v5175 = vmul.f32 %v4972, %v5173
  %v5176 = vrcp.pop %v5082
  %v5177 = vmul.f32 %v4974, %v5176
  %v5178 = vmul.f32 %v4976, %v5176
  %v5179 = vrcp.pop %v5085
  %v5180 = vmul.f32 %v4978, %v5179
  %v5181 = vmul.f32 %v4980, %v5179
  %v5182 = vrcp.pop %v5088
  %v5183 = vmul.f32 %v4982, %v5182
  %v5184 = vmul.f32 %v4984, %v5182
  %v5185 = vrcp.pop %v5091
  %v5186 = vmul.f32 %v4986, %v5185
  %v5187 = vmul.f32 %v4988, %v5185
  %v5188 = vrcp.pop %v5094
  %v5189 = vmul.f32 %v4990, %v5188
  %v5190 = vmul.f32 %v4992, %v5188
  %v5191 = vrcp.pop %v5097
  %v5192 = vmul.f32 %v4994, %v5191
  %v5193 = vmul.f32 %v4996, %v5191
  %v5194 = vrcp.pop %v5100
  %v5195 = vmul.f32 %v4998, %v5194
  %v5196 = vmul.f32 %v5000, %v5194
  %v5197 = vrcp.pop %v5103
  %v5198 = vmul.f32 %v5002, %v5197
  %v5199 = vmul.f32 %v5004, %v5197
  %v5200 = vrcp.pop %v5106
  %v5201 = vmul.f32 %v5006, %v5200
  %v5202 = vmul.f32 %v5008, %v5200
  %v5203 = vrcp.pop %v5109
  %v5204 = vmul.f32 %v5010, %v5203
  %v5205 = vmul.f32 %v5012, %v5203
  %v5206 = vrcp.pop %v5112
  %v5207 = vmul.f32 %v5014, %v5206
  %v5208 = vmul.f32 %v5016, %v5206
  %v5209 = vpack.c.bf16 %v5117, %v5114
  %v5210 = vpack.c.bf16 %v5118, %v5115
  %v5211 = vpack.c.bf16 %v5123, %v5120
  %v5212 = vpack.c.bf16 %v5124, %v5121
  %v5213 = vpack.c.bf16 %v5129, %v5126
  %v5214 = vpack.c.bf16 %v5130, %v5127
  %v5215 = vpack.c.bf16 %v5135, %v5132
  %v5216 = vpack.c.bf16 %v5136, %v5133
  %v5217 = vpack.c.bf16 %v5141, %v5138
  %v5218 = vpack.c.bf16 %v5142, %v5139
  %v5219 = vpack.c.bf16 %v5147, %v5144
  %v5220 = vpack.c.bf16 %v5148, %v5145
  %v5221 = vpack.c.bf16 %v5153, %v5150
  %v5222 = vpack.c.bf16 %v5154, %v5151
  %v5223 = vpack.c.bf16 %v5159, %v5156
  %v5224 = vpack.c.bf16 %v5160, %v5157
  %v5225 = vpack.c.bf16 %v5165, %v5162
  %v5226 = vpack.c.bf16 %v5166, %v5163
  %v5227 = vpack.c.bf16 %v5171, %v5168
  %v5228 = vpack.c.bf16 %v5172, %v5169
  %v5229 = vpack.c.bf16 %v5177, %v5174
  %v5230 = vpack.c.bf16 %v5178, %v5175
  %v5231 = vpack.c.bf16 %v5183, %v5180
  %v5232 = vpack.c.bf16 %v5184, %v5181
  %v5233 = vpack.c.bf16 %v5189, %v5186
  %v5234 = vpack.c.bf16 %v5190, %v5187
  %v5235 = vpack.c.bf16 %v5195, %v5192
  %v5236 = vpack.c.bf16 %v5196, %v5193
  %v5237 = vpack.c.bf16 %v5201, %v5198
  %v5238 = vpack.c.bf16 %v5202, %v5199
  %v5239 = vpack.c.bf16 %v5207, %v5204
  %v5240 = vpack.c.bf16 %v5208, %v5205
  %5241 = vrot.lane.b32.xlu0 %v4376, 48
  %v5242 = vpop.permute.xlu0 %5241
  %5243 = vrot.lane.b32.xlu0 %v4377, 48
  %v5244 = vpop.permute.xlu0 %5243
  %5245 = vrot.lane.b32.xlu0 %v4378, 48
  %v5246 = vpop.permute.xlu0 %5245
  %5247 = vrot.lane.b32.xlu0 %v4379, 48
  %v5248 = vpop.permute.xlu0 %5247
  %5249 = vrot.lane.b32.xlu0 %v4380, 48
  %v5250 = vpop.permute.xlu0 %5249
  %5251 = vrot.lane.b32.xlu0 %v4381, 48
  %v5252 = vpop.permute.xlu0 %5251
  %5253 = vrot.lane.b32.xlu0 %v4382, 48
  %v5254 = vpop.permute.xlu0 %5253
  %5255 = vrot.lane.b32.xlu0 %v4383, 48
  %v5256 = vpop.permute.xlu0 %5255
  %5257 = vrot.lane.b32.xlu0 %v4384, 48
  %v5258 = vpop.permute.xlu0 %5257
  %5259 = vrot.lane.b32.xlu0 %v4385, 48
  %v5260 = vpop.permute.xlu0 %5259
  %5261 = vrot.lane.b32.xlu0 %v4386, 48
  %v5262 = vpop.permute.xlu0 %5261
  %5263 = vrot.lane.b32.xlu0 %v4387, 48
  %v5264 = vpop.permute.xlu0 %5263
  %5265 = vrot.lane.b32.xlu0 %v4388, 48
  %v5266 = vpop.permute.xlu0 %5265
  %5267 = vrot.lane.b32.xlu0 %v4389, 48
  %v5268 = vpop.permute.xlu0 %5267
  %5269 = vrot.lane.b32.xlu0 %v4390, 48
  %v5270 = vpop.permute.xlu0 %5269
  %5271 = vrot.lane.b32.xlu0 %v4391, 48
  %v5272 = vpop.permute.xlu0 %5271
  %5289 = vmatprep.subr.bf16.mxu0 0
  %5290 = vmatpush1.bf16.msra.mxu0 %v5256
  %5291 = vmatprep.subr.bf16.mxu0 0
  %5292 = vmatpush1.bf16.msra.mxu0 %v5254
  %5293 = vmatprep.subr.bf16.mxu0 0
  %5294 = vmatpush1.bf16.msra.mxu0 %v5252
  %5295 = vmatprep.subr.bf16.mxu0 0
  %5296 = vmatpush1.bf16.msra.mxu0 %v5250
  %5297 = vmatprep.subr.bf16.mxu0 0
  %5298 = vmatpush1.bf16.msra.mxu0 %v5248
  %5299 = vmatprep.subr.bf16.mxu0 0
  %5300 = vmatpush1.bf16.msra.mxu0 %v5246
  %5301 = vmatprep.subr.bf16.mxu0 0
  %5302 = vmatpush1.bf16.msra.mxu0 %v5244
  %5303 = vmatprep.subr.bf16.mxu0 0
  %5304 = vmatpush1.bf16.msra.mxu0 %v5242
  %5305 = vmatprep.subr.bf16.mxu0 0
  %5306 = vmatpush2.bf16.msra.mxu0 %v5272
  %5307 = vmatprep.subr.bf16.mxu0 0
  %5308 = vmatpush2.bf16.msra.mxu0 %v5270
  %5309 = vmatprep.subr.bf16.mxu0 0
  %5310 = vmatpush2.bf16.msra.mxu0 %v5268
  %5311 = vmatprep.subr.bf16.mxu0 0
  %5312 = vmatpush2.bf16.msra.mxu0 %v5266
  %5313 = vmatprep.subr.bf16.mxu0 0
  %5314 = vmatpush2.bf16.msra.mxu0 %v5264
  %5315 = vmatprep.subr.bf16.mxu0 0
  %5316 = vmatpush2.bf16.msra.mxu0 %v5262
  %5317 = vmatprep.subr.bf16.mxu0 0
  %5318 = vmatpush2.bf16.msra.mxu0 %v5260
  %5319 = vmatprep.subr.bf16.mxu0 0
  %5320 = vmatpush2.bf16.msra.mxu0 %v5258
  %5321 = vmatprep.mubr.bf16.mxu0 %v5210
  %5322 = vmatmul.mubr.bf16.gmra.mxu0 %v5209
  %v5323 = vpop.f32.mrf.mxu0
  %v5324 = vadd.f32 0.0, %v5323
  %v5325 = vpop.f32.mrf.mxu0
  %v5326 = vpop.f32.mrf.mxu0
  %v5327 = vadd.f32 0.0, %v5326
  %v5328 = vpop.f32.mrf.mxu0
  %5329 = vmatprep.mubr.bf16.mxu0 %v5212
  %5330 = vmatmul.mubr.bf16.gmra.mxu0 %v5211
  %v5331 = vpop.f32.mrf.mxu0
  %v5332 = vadd.f32 0.0, %v5331
  %v5333 = vpop.f32.mrf.mxu0
  %v5334 = vpop.f32.mrf.mxu0
  %v5335 = vadd.f32 0.0, %v5334
  %v5336 = vpop.f32.mrf.mxu0
  %5337 = vmatprep.mubr.bf16.mxu0 %v5214
  %5338 = vmatmul.mubr.bf16.gmra.mxu0 %v5213
  %v5339 = vpop.f32.mrf.mxu0
  %v5340 = vadd.f32 0.0, %v5339
  %v5341 = vpop.f32.mrf.mxu0
  %v5342 = vpop.f32.mrf.mxu0
  %v5343 = vadd.f32 0.0, %v5342
  %v5344 = vpop.f32.mrf.mxu0
  %5345 = vmatprep.mubr.bf16.mxu0 %v5216
  %5346 = vmatmul.mubr.bf16.gmra.mxu0 %v5215
  %v5347 = vpop.f32.mrf.mxu0
  %v5348 = vadd.f32 0.0, %v5347
  %v5349 = vpop.f32.mrf.mxu0
  %v5350 = vpop.f32.mrf.mxu0
  %v5351 = vadd.f32 0.0, %v5350
  %v5352 = vpop.f32.mrf.mxu0
  %5353 = vmatprep.mubr.bf16.mxu0 %v5218
  %5354 = vmatmul.mubr.bf16.gmra.mxu0 %v5217
  %v5355 = vpop.f32.mrf.mxu0
  %v5356 = vadd.f32 0.0, %v5355
  %v5357 = vpop.f32.mrf.mxu0
  %v5358 = vpop.f32.mrf.mxu0
  %v5359 = vadd.f32 0.0, %v5358
  %v5360 = vpop.f32.mrf.mxu0
  %5361 = vmatprep.mubr.bf16.mxu0 %v5220
  %5362 = vmatmul.mubr.bf16.gmra.mxu0 %v5219
  %v5363 = vpop.f32.mrf.mxu0
  %v5364 = vadd.f32 0.0, %v5363
  %v5365 = vpop.f32.mrf.mxu0
  %v5366 = vpop.f32.mrf.mxu0
  %v5367 = vadd.f32 0.0, %v5366
  %v5368 = vpop.f32.mrf.mxu0
  %5369 = vmatprep.mubr.bf16.mxu0 %v5222
  %5370 = vmatmul.mubr.bf16.gmra.mxu0 %v5221
  %v5371 = vpop.f32.mrf.mxu0
  %v5372 = vadd.f32 0.0, %v5371
  %v5373 = vpop.f32.mrf.mxu0
  %v5374 = vpop.f32.mrf.mxu0
  %v5375 = vadd.f32 0.0, %v5374
  %v5376 = vpop.f32.mrf.mxu0
  %5377 = vmatprep.mubr.bf16.mxu0 %v5224
  %5378 = vmatmul.mubr.bf16.gmra.mxu0 %v5223
  %v5379 = vpop.f32.mrf.mxu0
  %v5380 = vadd.f32 0.0, %v5379
  %v5381 = vpop.f32.mrf.mxu0
  %v5382 = vpop.f32.mrf.mxu0
  %v5383 = vadd.f32 0.0, %v5382
  %v5384 = vpop.f32.mrf.mxu0
  %5385 = vmatprep.mubr.bf16.mxu0 %v5226
  %5386 = vmatmul.mubr.bf16.gmra.mxu0 %v5225
  %v5387 = vpop.f32.mrf.mxu0
  %v5388 = vadd.f32 0.0, %v5387
  %v5389 = vpop.f32.mrf.mxu0
  %v5390 = vpop.f32.mrf.mxu0
  %v5391 = vadd.f32 0.0, %v5390
  %v5392 = vpop.f32.mrf.mxu0
  %5393 = vmatprep.mubr.bf16.mxu0 %v5228
  %5394 = vmatmul.mubr.bf16.gmra.mxu0 %v5227
  %v5395 = vpop.f32.mrf.mxu0
  %v5396 = vadd.f32 0.0, %v5395
  %v5397 = vpop.f32.mrf.mxu0
  %v5398 = vpop.f32.mrf.mxu0
  %v5399 = vadd.f32 0.0, %v5398
  %v5400 = vpop.f32.mrf.mxu0
  %5401 = vmatprep.mubr.bf16.mxu0 %v5230
  %5402 = vmatmul.mubr.bf16.gmra.mxu0 %v5229
  %v5403 = vpop.f32.mrf.mxu0
  %v5404 = vadd.f32 0.0, %v5403
  %v5405 = vpop.f32.mrf.mxu0
  %v5406 = vpop.f32.mrf.mxu0
  %v5407 = vadd.f32 0.0, %v5406
  %v5408 = vpop.f32.mrf.mxu0
  %5409 = vmatprep.mubr.bf16.mxu0 %v5232
  %5410 = vmatmul.mubr.bf16.gmra.mxu0 %v5231
  %v5411 = vpop.f32.mrf.mxu0
  %v5412 = vadd.f32 0.0, %v5411
  %v5413 = vpop.f32.mrf.mxu0
  %v5414 = vpop.f32.mrf.mxu0
  %v5415 = vadd.f32 0.0, %v5414
  %v5416 = vpop.f32.mrf.mxu0
  %5417 = vmatprep.mubr.bf16.mxu0 %v5234
  %5418 = vmatmul.mubr.bf16.gmra.mxu0 %v5233
  %v5419 = vpop.f32.mrf.mxu0
  %v5420 = vadd.f32 0.0, %v5419
  %v5421 = vpop.f32.mrf.mxu0
  %v5422 = vpop.f32.mrf.mxu0
  %v5423 = vadd.f32 0.0, %v5422
  %v5424 = vpop.f32.mrf.mxu0
  %5425 = vmatprep.mubr.bf16.mxu0 %v5236
  %5426 = vmatmul.mubr.bf16.gmra.mxu0 %v5235
  %v5427 = vpop.f32.mrf.mxu0
  %v5428 = vadd.f32 0.0, %v5427
  %v5429 = vpop.f32.mrf.mxu0
  %v5430 = vpop.f32.mrf.mxu0
  %v5431 = vadd.f32 0.0, %v5430
  %v5432 = vpop.f32.mrf.mxu0
  %5433 = vmatprep.mubr.bf16.mxu0 %v5238
  %5434 = vmatmul.mubr.bf16.gmra.mxu0 %v5237
  %v5435 = vpop.f32.mrf.mxu0
  %v5436 = vadd.f32 0.0, %v5435
  %v5437 = vpop.f32.mrf.mxu0
  %v5438 = vpop.f32.mrf.mxu0
  %v5439 = vadd.f32 0.0, %v5438
  %v5440 = vpop.f32.mrf.mxu0
  %5441 = vmatprep.mubr.bf16.mxu0 %v5240
  %5442 = vmatmul.mubr.bf16.gmra.mxu0 %v5239
  %v5443 = vpop.f32.mrf.mxu0
  %v5444 = vadd.f32 0.0, %v5443
  %v5445 = vpop.f32.mrf.mxu0
  %v5446 = vpop.f32.mrf.mxu0
  %v5447 = vadd.f32 0.0, %v5446
  %v5448 = vpop.f32.mrf.mxu0
  %5449 = vdwg.mxu0
  %5458 = vrot.lane.b32.xlu0 %v5356, 10
  %v5459 = vpop.permute.xlu0 %5458
  %5460 = vrot.lane.b32.xlu0 %v5359, 10
  %v5461 = vpop.permute.xlu0 %5460
  %5462 = vrot.lane.b32.xlu0 %v5364, 10
  %v5463 = vpop.permute.xlu0 %5462
  %5464 = vrot.lane.b32.xlu0 %v5367, 10
  %v5465 = vpop.permute.xlu0 %5464
  %5466 = vrot.lane.b32.xlu0 %v5372, 10
  %v5467 = vpop.permute.xlu0 %5466
  %5468 = vrot.lane.b32.xlu0 %v5375, 10
  %v5469 = vpop.permute.xlu0 %5468
  %5470 = vrot.lane.b32.xlu0 %v5380, 10
  %v5471 = vpop.permute.xlu0 %5470
  %5472 = vrot.lane.b32.xlu0 %v5383, 10
  %v5473 = vpop.permute.xlu0 %5472
  %5490 = vrot.lane.b32.xlu0 %v5388, 20
  %v5491 = vpop.permute.xlu0 %5490
  %5492 = vrot.lane.b32.xlu0 %v5391, 20
  %v5493 = vpop.permute.xlu0 %5492
  %5494 = vrot.lane.b32.xlu0 %v5396, 20
  %v5495 = vpop.permute.xlu0 %5494
  %5496 = vrot.lane.b32.xlu0 %v5399, 20
  %v5497 = vpop.permute.xlu0 %5496
  %5498 = vrot.lane.b32.xlu0 %v5404, 20
  %v5499 = vpop.permute.xlu0 %5498
  %5500 = vrot.lane.b32.xlu0 %v5407, 20
  %v5501 = vpop.permute.xlu0 %5500
  %5502 = vrot.lane.b32.xlu0 %v5412, 20
  %v5503 = vpop.permute.xlu0 %5502
  %5504 = vrot.lane.b32.xlu0 %v5415, 20
  %v5505 = vpop.permute.xlu0 %5504
  %5522 = vrot.lane.b32.xlu0 %v5420, 30
  %v5523 = vpop.permute.xlu0 %5522
  %5524 = vrot.lane.b32.xlu0 %v5423, 30
  %v5525 = vpop.permute.xlu0 %5524
  %5526 = vrot.lane.b32.xlu0 %v5428, 30
  %v5527 = vpop.permute.xlu0 %5526
  %5528 = vrot.lane.b32.xlu0 %v5431, 30
  %v5529 = vpop.permute.xlu0 %5528
  %5530 = vrot.lane.b32.xlu0 %v5436, 30
  %v5531 = vpop.permute.xlu0 %5530
  %5532 = vrot.lane.b32.xlu0 %v5439, 30
  %v5533 = vpop.permute.xlu0 %5532
  %5534 = vrot.lane.b32.xlu0 %v5444, 30
  %v5535 = vpop.permute.xlu0 %5534
  %5536 = vrot.lane.b32.xlu0 %v5447, 30
  %v5537 = vpop.permute.xlu0 %5536
  %v5546 = vsel %vm473, %v5324, %v5459
  %v5547 = vsel %vm473, %v5327, %v5461
  %v5548 = vsel %vm473, %v5332, %v5463
  %v5549 = vsel %vm473, %v5335, %v5465
  %v5550 = vsel %vm473, %v5340, %v5467
  %v5551 = vsel %vm473, %v5343, %v5469
  %v5552 = vsel %vm473, %v5348, %v5471
  %v5553 = vsel %vm473, %v5351, %v5473
  %v5554 = vsel %vm1588, %v5546, %v5491
  %v5555 = vsel %vm1588, %v5547, %v5493
  %v5556 = vsel %vm1588, %v5548, %v5495
  %v5557 = vsel %vm1588, %v5549, %v5497
  %v5558 = vsel %vm1588, %v5550, %v5499
  %v5559 = vsel %vm1588, %v5551, %v5501
  %v5560 = vsel %vm1588, %v5552, %v5503
  %v5561 = vsel %vm1588, %v5553, %v5505
  %v5562 = vsel %vm1597, %v5554, %v5523
  %v5563 = vsel %vm1597, %v5555, %v5525
  %v5564 = vsel %vm1597, %v5556, %v5527
  %v5565 = vsel %vm1597, %v5557, %v5529
  %v5566 = vsel %vm1597, %v5558, %v5531
  %v5567 = vsel %vm1597, %v5559, %v5533
  %v5568 = vsel %vm1597, %v5560, %v5535
  %v5569 = vsel %vm1597, %v5561, %v5537
  %v5570 = vpack.c.bf16 %v5563, %v5562
  %v5571 = vpack.c.bf16 %v5565, %v5564
  %v5572 = vpack.c.bf16 %v5567, %v5566
  %v5573 = vpack.c.bf16 %v5569, %v5568
  %v5574 = vld [vmem:[%s1 + $0xb4] sm:$0xf]
  %v5575 = vld [vmem:[%s1 + $0xb8] sm:$0xf]
  %v5576 = vld [vmem:[%s1 + $0xbc] sm:$0xf]
  %v5577 = vld [vmem:[%s1 + $0xc0] sm:$0xf]
  %v5578 = vld [vmem:[%s1 + $0xc4] sm:$0xf]
  %v5579 = vlaneseq
  %v5580 = vshrl.u32 %v5579, 7
  %v5581 = vsub.s32 2, %v5580
  %v5582 = vrot.slane %v20, %v5581
  %v5588 = vunpack.c.l.b16 %v5574
  %v5589 = vunpack.c.l.b16 %v5575
  %v5590 = vunpack.c.l.b16 %v5576
  %v5591 = vunpack.c.l.b16 %v5577
  %v5592 = vunpack.c.l.b16 %v5578
  %v5593 = vpack.c.b16 %v5589, %v5588
  %v5594 = vpack.c.b16 %v5591, %v5590
  %v5595 = vpack.c.b16 %v5592, %v5592
  %v5599 = vsel %vm94, %v5570, 0
  %v5602 = vsel %vm94, %v5571, 0
  %v5605 = vsel %vm94, %v5572, 0
  %v5608 = vsel %vm94, %v5573, 0
  %v5611 = vsel %vm260, %v5595, 0
  %5613 = vmatprep.subr.bf16.mxu0 0
  %5614 = vmatpush1.bf16.msra.mxu0 0
  %5615 = vmatprep.subr.bf16.mxu0 0
  %5616 = vmatpush1.bf16.msra.mxu0 0
  %5617 = vmatprep.subr.bf16.mxu0 0
  %5618 = vmatpush1.bf16.msra.mxu0 0
  %5619 = vmatprep.subr.bf16.mxu0 0
  %5620 = vmatpush1.bf16.msra.mxu0 0
  %5621 = vmatprep.subr.bf16.mxu0 0
  %5622 = vmatpush1.bf16.msra.mxu0 0
  %5623 = vmatprep.subr.bf16.mxu0 0
  %5624 = vmatpush1.bf16.msra.mxu0 %v5611
  %5625 = vmatprep.subr.bf16.mxu0 0
  %5626 = vmatpush1.bf16.msra.mxu0 %v5594
  %5627 = vmatprep.subr.bf16.mxu0 0
  %5628 = vmatpush1.bf16.msra.mxu0 %v5593
  %5629 = vmatprep.subr.bf16.mxu0 0
  %5630 = vmatpush2.bf16.msra.mxu0 0
  %5631 = vmatprep.subr.bf16.mxu0 0
  %5632 = vmatpush2.bf16.msra.mxu0 0
  %5633 = vmatprep.subr.bf16.mxu0 0
  %5634 = vmatpush2.bf16.msra.mxu0 0
  %5635 = vmatprep.subr.bf16.mxu0 0
  %5636 = vmatpush2.bf16.msra.mxu0 0
  %5637 = vmatprep.subr.bf16.mxu0 0
  %5638 = vmatpush2.bf16.msra.mxu0 0
  %5639 = vmatprep.subr.bf16.mxu0 0
  %5640 = vmatpush2.bf16.msra.mxu0 0
  %5641 = vmatprep.subr.bf16.mxu0 0
  %5642 = vmatpush2.bf16.msra.mxu0 0
  %5643 = vmatprep.subr.bf16.mxu0 0
  %5644 = vmatpush2.bf16.msra.mxu0 0
  %5645 = vmatprep.mubr.bf16.mxu0 0
  %5646 = vmatmul.mubr.bf16.gmra.mxu0 %v5599
  %v5647 = vpop.f32.mrf.mxu0
  %v5648 = vadd.f32 %v5582, %v5647
  %v5649 = vpop.f32.mrf.mxu0
  %v5650 = vpop.f32.mrf.mxu0
  %v5651 = vadd.f32 %v5582, %v5650
  %v5652 = vpop.f32.mrf.mxu0
  %5653 = vmatprep.mubr.bf16.mxu0 0
  %5654 = vmatmul.mubr.bf16.gmra.mxu0 %v5602
  %v5655 = vpop.f32.mrf.mxu0
  %v5656 = vadd.f32 %v5582, %v5655
  %v5657 = vpop.f32.mrf.mxu0
  %v5658 = vpop.f32.mrf.mxu0
  %v5659 = vadd.f32 %v5582, %v5658
  %v5660 = vpop.f32.mrf.mxu0
  %5661 = vmatprep.mubr.bf16.mxu0 0
  %5662 = vmatmul.mubr.bf16.gmra.mxu0 %v5605
  %v5663 = vpop.f32.mrf.mxu0
  %v5664 = vadd.f32 %v5582, %v5663
  %v5665 = vpop.f32.mrf.mxu0
  %v5666 = vpop.f32.mrf.mxu0
  %v5667 = vadd.f32 %v5582, %v5666
  %v5668 = vpop.f32.mrf.mxu0
  %5669 = vmatprep.mubr.bf16.mxu0 0
  %5670 = vmatmul.mubr.bf16.gmra.mxu0 %v5608
  %v5671 = vpop.f32.mrf.mxu0
  %v5672 = vadd.f32 %v5582, %v5671
  %v5673 = vpop.f32.mrf.mxu0
  %v5674 = vpop.f32.mrf.mxu0
  %v5675 = vadd.f32 %v5582, %v5674
  %v5676 = vpop.f32.mrf.mxu0
  %5677 = vdwg.mxu0
  %v5678 = vadd.f32 %v4184, %v5648
  %v5679 = vadd.f32 %v4185, %v5651
  %v5680 = vadd.f32 %v4186, %v5656
  %v5681 = vadd.f32 %v4187, %v5659
  %v5682 = vadd.f32 %v4188, %v5664
  %v5683 = vadd.f32 %v4189, %v5667
  %v5684 = vadd.f32 %v4190, %v5672
  %v5685 = vadd.f32 %v4191, %v5675
  %v5686 = vsel %vm94, %v5678, 0.0
  %5687 = vadd.xlane.f32.xlu0 %v5686
  %v5688 = vpop.xlane.xlu0 %5687
  %v5689 = vsel %vm94, %v5679, 0.0
  %5690 = vadd.xlane.f32.xlu0 %v5689
  %v5691 = vpop.xlane.xlu0 %5690
  %v5692 = vsel %vm94, %v5680, 0.0
  %5693 = vadd.xlane.f32.xlu0 %v5692
  %v5694 = vpop.xlane.xlu0 %5693
  %v5695 = vsel %vm94, %v5681, 0.0
  %5696 = vadd.xlane.f32.xlu0 %v5695
  %v5697 = vpop.xlane.xlu0 %5696
  %v5698 = vsel %vm94, %v5682, 0.0
  %5699 = vadd.xlane.f32.xlu0 %v5698
  %v5700 = vpop.xlane.xlu0 %5699
  %v5701 = vsel %vm94, %v5683, 0.0
  %5702 = vadd.xlane.f32.xlu0 %v5701
  %v5703 = vpop.xlane.xlu0 %5702
  %v5704 = vsel %vm94, %v5684, 0.0
  %5705 = vadd.xlane.f32.xlu0 %v5704
  %v5706 = vpop.xlane.xlu0 %5705
  %v5707 = vsel %vm94, %v5685, 0.0
  %5708 = vadd.xlane.f32.xlu0 %v5707
  %v5709 = vpop.xlane.xlu0 %5708
  %v5710 = vmul.f32 %v5688, %v119
  %v5711 = vmul.f32 %v5691, %v119
  %v5712 = vmul.f32 %v5694, %v119
  %v5713 = vmul.f32 %v5697, %v119
  %v5714 = vmul.f32 %v5700, %v119
  %v5715 = vmul.f32 %v5703, %v119
  %v5716 = vmul.f32 %v5706, %v119
  %v5717 = vmul.f32 %v5709, %v119
  %v5718 = vsub.f32 %v5678, %v5710
  %v5719 = vsub.f32 %v5679, %v5711
  %v5720 = vsub.f32 %v5680, %v5712
  %v5721 = vsub.f32 %v5681, %v5713
  %v5722 = vsub.f32 %v5682, %v5714
  %v5723 = vsub.f32 %v5683, %v5715
  %v5724 = vsub.f32 %v5684, %v5716
  %v5725 = vsub.f32 %v5685, %v5717
  %v5726 = vmul.f32 %v5718, %v5718
  %v5727 = vmul.f32 %v5719, %v5719
  %v5728 = vmul.f32 %v5720, %v5720
  %v5729 = vmul.f32 %v5721, %v5721
  %v5730 = vmul.f32 %v5722, %v5722
  %v5731 = vmul.f32 %v5723, %v5723
  %v5732 = vmul.f32 %v5724, %v5724
  %v5733 = vmul.f32 %v5725, %v5725
  %v5734 = vsel %vm94, %v5726, 0.0
  %5735 = vadd.xlane.f32.xlu0 %v5734
  %v5736 = vpop.xlane.xlu0 %5735
  %v5737 = vsel %vm94, %v5727, 0.0
  %5738 = vadd.xlane.f32.xlu0 %v5737
  %v5739 = vpop.xlane.xlu0 %5738
  %v5740 = vsel %vm94, %v5728, 0.0
  %5741 = vadd.xlane.f32.xlu0 %v5740
  %v5742 = vpop.xlane.xlu0 %5741
  %v5743 = vsel %vm94, %v5729, 0.0
  %5744 = vadd.xlane.f32.xlu0 %v5743
  %v5745 = vpop.xlane.xlu0 %5744
  %v5746 = vsel %vm94, %v5730, 0.0
  %5747 = vadd.xlane.f32.xlu0 %v5746
  %v5748 = vpop.xlane.xlu0 %5747
  %v5749 = vsel %vm94, %v5731, 0.0
  %5750 = vadd.xlane.f32.xlu0 %v5749
  %v5751 = vpop.xlane.xlu0 %5750
  %v5752 = vsel %vm94, %v5732, 0.0
  %5753 = vadd.xlane.f32.xlu0 %v5752
  %v5754 = vpop.xlane.xlu0 %5753
  %v5755 = vsel %vm94, %v5733, 0.0
  %5756 = vadd.xlane.f32.xlu0 %v5755
  %v5757 = vpop.xlane.xlu0 %5756
  %v5758 = vmul.f32 %v5736, %v119
  %v5759 = vmul.f32 %v5739, %v119
  %v5760 = vmul.f32 %v5742, %v119
  %v5761 = vmul.f32 %v5745, %v119
  %v5762 = vmul.f32 %v5748, %v119
  %v5763 = vmul.f32 %v5751, %v119
  %v5764 = vmul.f32 %v5754, %v119
  %v5765 = vmul.f32 %v5757, %v119
  %v5766 = vadd.f32 %v5758, 1e-05
  %v5767 = vadd.f32 %v5759, 1e-05
  %v5768 = vadd.f32 %v5760, 1e-05
  %v5769 = vadd.f32 %v5761, 1e-05
  %v5770 = vadd.f32 %v5762, 1e-05
  %v5771 = vadd.f32 %v5763, 1e-05
  %v5772 = vadd.f32 %v5764, 1e-05
  %v5773 = vadd.f32 %v5765, 1e-05
  %v5774 = vrsqrt.pop %v5766
  %v5775 = vrsqrt.pop %v5767
  %v5776 = vrsqrt.pop %v5768
  %v5777 = vrsqrt.pop %v5769
  %v5778 = vrsqrt.pop %v5770
  %v5779 = vrsqrt.pop %v5771
  %v5780 = vrsqrt.pop %v5772
  %v5781 = vrsqrt.pop %v5773
  %v5782 = vmul.f32 %v5718, %v5774
  %v5783 = vmul.f32 %v5719, %v5775
  %v5784 = vmul.f32 %v5720, %v5776
  %v5785 = vmul.f32 %v5721, %v5777
  %v5786 = vmul.f32 %v5722, %v5778
  %v5787 = vmul.f32 %v5723, %v5779
  %v5788 = vmul.f32 %v5724, %v5780
  %v5789 = vmul.f32 %v5725, %v5781
  %v5790 = vlaneseq
  %v5791 = vshrl.u32 %v5790, 7
  %v5792 = vsub.s32 0, %v5791
  %v5793 = vrot.slane %v20, %v5792
  %v5794 = vmul.f32 %v5782, %v5793
  %v5795 = vmul.f32 %v5783, %v5793
  %v5796 = vmul.f32 %v5784, %v5793
  %v5797 = vmul.f32 %v5785, %v5793
  %v5798 = vmul.f32 %v5786, %v5793
  %v5799 = vmul.f32 %v5787, %v5793
  %v5800 = vmul.f32 %v5788, %v5793
  %v5801 = vmul.f32 %v5789, %v5793
  %v5802 = vlaneseq
  %v5803 = vshrl.u32 %v5802, 7
  %v5804 = vsub.s32 1, %v5803
  %v5805 = vrot.slane %v20, %v5804
  %v5806 = vadd.f32 %v5794, %v5805
  %v5807 = vadd.f32 %v5795, %v5805
  %v5808 = vadd.f32 %v5796, %v5805
  %v5809 = vadd.f32 %v5797, %v5805
  %v5810 = vadd.f32 %v5798, %v5805
  %v5811 = vadd.f32 %v5799, %v5805
  %v5812 = vadd.f32 %v5800, %v5805
  %v5813 = vadd.f32 %v5801, %v5805
  %v5814 = vpack.c.bf16 %v5807, %v5806
  %v5815 = vpack.c.bf16 %v5809, %v5808
  %v5816 = vpack.c.bf16 %v5811, %v5810
  %v5817 = vpack.c.bf16 %v5813, %v5812
  %v5818 = vld [vmem:[%s1 + $0xc8] sm:$0xf]
  %v5819 = vld [vmem:[%s1 + $0xcc] sm:$0xf]
  %v5820 = vld [vmem:[%s1 + $0xd0] sm:$0xf]
  %v5821 = vld [vmem:[%s1 + $0xd4] sm:$0xf]
  %v5822 = vld [vmem:[%s1 + $0xd8] sm:$0xf]
  %v5823 = vlaneseq
  %v5824 = vshrl.u32 %v5823, 7
  %v5825 = vsub.s32 3, %v5824
  %v5826 = vrot.slane %v20, %v5825
  %v5832 = vunpack.c.l.b16 %v5818
  %v5833 = vunpack.c.l.b16 %v5819
  %v5834 = vunpack.c.l.b16 %v5820
  %v5835 = vunpack.c.l.b16 %v5821
  %v5836 = vunpack.c.l.b16 %v5822
  %v5837 = vpack.c.b16 %v5833, %v5832
  %v5838 = vpack.c.b16 %v5835, %v5834
  %v5839 = vpack.c.b16 %v5836, %v5836
  %v5843 = vsel %vm94, %v5814, 0
  %v5846 = vsel %vm94, %v5815, 0
  %v5849 = vsel %vm94, %v5816, 0
  %v5852 = vsel %vm94, %v5817, 0
  %v5855 = vsel %vm260, %v5839, 0
  %5857 = vmatprep.subr.bf16.mxu0 0
  %5858 = vmatpush1.bf16.msra.mxu0 0
  %5859 = vmatprep.subr.bf16.mxu0 0
  %5860 = vmatpush1.bf16.msra.mxu0 0
  %5861 = vmatprep.subr.bf16.mxu0 0
  %5862 = vmatpush1.bf16.msra.mxu0 0
  %5863 = vmatprep.subr.bf16.mxu0 0
  %5864 = vmatpush1.bf16.msra.mxu0 0
  %5865 = vmatprep.subr.bf16.mxu0 0
  %5866 = vmatpush1.bf16.msra.mxu0 0
  %5867 = vmatprep.subr.bf16.mxu0 0
  %5868 = vmatpush1.bf16.msra.mxu0 %v5855
  %5869 = vmatprep.subr.bf16.mxu0 0
  %5870 = vmatpush1.bf16.msra.mxu0 %v5838
  %5871 = vmatprep.subr.bf16.mxu0 0
  %5872 = vmatpush1.bf16.msra.mxu0 %v5837
  %5873 = vmatprep.subr.bf16.mxu0 0
  %5874 = vmatpush2.bf16.msra.mxu0 0
  %5875 = vmatprep.subr.bf16.mxu0 0
  %5876 = vmatpush2.bf16.msra.mxu0 0
  %5877 = vmatprep.subr.bf16.mxu0 0
  %5878 = vmatpush2.bf16.msra.mxu0 0
  %5879 = vmatprep.subr.bf16.mxu0 0
  %5880 = vmatpush2.bf16.msra.mxu0 0
  %5881 = vmatprep.subr.bf16.mxu0 0
  %5882 = vmatpush2.bf16.msra.mxu0 0
  %5883 = vmatprep.subr.bf16.mxu0 0
  %5884 = vmatpush2.bf16.msra.mxu0 0
  %5885 = vmatprep.subr.bf16.mxu0 0
  %5886 = vmatpush2.bf16.msra.mxu0 0
  %5887 = vmatprep.subr.bf16.mxu0 0
  %5888 = vmatpush2.bf16.msra.mxu0 0
  %5889 = vmatprep.mubr.bf16.mxu0 0
  %5890 = vmatmul.mubr.bf16.gmra.mxu0 %v5843
  %v5891 = vpop.f32.mrf.mxu0
  %v5892 = vadd.f32 %v5826, %v5891
  %v5893 = vpop.f32.mrf.mxu0
  %v5894 = vpop.f32.mrf.mxu0
  %v5895 = vadd.f32 %v5826, %v5894
  %v5896 = vpop.f32.mrf.mxu0
  %5897 = vmatprep.mubr.bf16.mxu0 0
  %5898 = vmatmul.mubr.bf16.gmra.mxu0 %v5846
  %v5899 = vpop.f32.mrf.mxu0
  %v5900 = vadd.f32 %v5826, %v5899
  %v5901 = vpop.f32.mrf.mxu0
  %v5902 = vpop.f32.mrf.mxu0
  %v5903 = vadd.f32 %v5826, %v5902
  %v5904 = vpop.f32.mrf.mxu0
  %5905 = vmatprep.mubr.bf16.mxu0 0
  %5906 = vmatmul.mubr.bf16.gmra.mxu0 %v5849
  %v5907 = vpop.f32.mrf.mxu0
  %v5908 = vadd.f32 %v5826, %v5907
  %v5909 = vpop.f32.mrf.mxu0
  %v5910 = vpop.f32.mrf.mxu0
  %v5911 = vadd.f32 %v5826, %v5910
  %v5912 = vpop.f32.mrf.mxu0
  %5913 = vmatprep.mubr.bf16.mxu0 0
  %5914 = vmatmul.mubr.bf16.gmra.mxu0 %v5852
  %v5915 = vpop.f32.mrf.mxu0
  %v5916 = vadd.f32 %v5826, %v5915
  %v5917 = vpop.f32.mrf.mxu0
  %v5918 = vpop.f32.mrf.mxu0
  %v5919 = vadd.f32 %v5826, %v5918
  %v5920 = vpop.f32.mrf.mxu0
  %5921 = vdwg.mxu0
  %v5922 = vmax.f32 %v5892, 0.0
  %v5923 = vmax.f32 %v5895, 0.0
  %v5924 = vmax.f32 %v5900, 0.0
  %v5925 = vmax.f32 %v5903, 0.0
  %v5926 = vmax.f32 %v5908, 0.0
  %v5927 = vmax.f32 %v5911, 0.0
  %v5928 = vmax.f32 %v5916, 0.0
  %v5929 = vmax.f32 %v5919, 0.0
  %v5930 = vpack.c.bf16 %v5923, %v5922
  %v5931 = vpack.c.bf16 %v5925, %v5924
  %v5932 = vpack.c.bf16 %v5927, %v5926
  %v5933 = vpack.c.bf16 %v5929, %v5928
  %v5934 = vld [vmem:[%s1 + $0xdc] sm:$0xf]
  %v5935 = vld [vmem:[%s1 + $0xe0] sm:$0xf]
  %v5936 = vld [vmem:[%s1 + $0xe4] sm:$0xf]
  %v5937 = vld [vmem:[%s1 + $0xe8] sm:$0xf]
  %v5938 = vld [vmem:[%s1 + $0xec] sm:$0xf]
  %v5939 = vlaneseq
  %v5940 = vshrl.u32 %v5939, 7
  %v5941 = vsub.s32 4, %v5940
  %v5942 = vrot.slane %v20, %v5941
  %v5948 = vunpack.c.l.b16 %v5934
  %v5949 = vunpack.c.l.b16 %v5935
  %v5950 = vunpack.c.l.b16 %v5936
  %v5951 = vunpack.c.l.b16 %v5937
  %v5952 = vunpack.c.l.b16 %v5938
  %v5953 = vpack.c.b16 %v5949, %v5948
  %v5954 = vpack.c.b16 %v5951, %v5950
  %v5955 = vpack.c.b16 %v5952, %v5952
  %v5959 = vsel %vm94, %v5930, 0
  %v5962 = vsel %vm94, %v5931, 0
  %v5965 = vsel %vm94, %v5932, 0
  %v5968 = vsel %vm94, %v5933, 0
  %v5971 = vsel %vm260, %v5955, 0
  %5973 = vmatprep.subr.bf16.mxu0 0
  %5974 = vmatpush1.bf16.msra.mxu0 0
  %5975 = vmatprep.subr.bf16.mxu0 0
  %5976 = vmatpush1.bf16.msra.mxu0 0
  %5977 = vmatprep.subr.bf16.mxu0 0
  %5978 = vmatpush1.bf16.msra.mxu0 0
  %5979 = vmatprep.subr.bf16.mxu0 0
  %5980 = vmatpush1.bf16.msra.mxu0 0
  %5981 = vmatprep.subr.bf16.mxu0 0
  %5982 = vmatpush1.bf16.msra.mxu0 0
  %5983 = vmatprep.subr.bf16.mxu0 0
  %5984 = vmatpush1.bf16.msra.mxu0 %v5971
  %5985 = vmatprep.subr.bf16.mxu0 0
  %5986 = vmatpush1.bf16.msra.mxu0 %v5954
  %5987 = vmatprep.subr.bf16.mxu0 0
  %5988 = vmatpush1.bf16.msra.mxu0 %v5953
  %5989 = vmatprep.subr.bf16.mxu0 0
  %5990 = vmatpush2.bf16.msra.mxu0 0
  %5991 = vmatprep.subr.bf16.mxu0 0
  %5992 = vmatpush2.bf16.msra.mxu0 0
  %5993 = vmatprep.subr.bf16.mxu0 0
  %5994 = vmatpush2.bf16.msra.mxu0 0
  %5995 = vmatprep.subr.bf16.mxu0 0
  %5996 = vmatpush2.bf16.msra.mxu0 0
  %5997 = vmatprep.subr.bf16.mxu0 0
  %5998 = vmatpush2.bf16.msra.mxu0 0
  %5999 = vmatprep.subr.bf16.mxu0 0
  %6000 = vmatpush2.bf16.msra.mxu0 0
  %6001 = vmatprep.subr.bf16.mxu0 0
  %6002 = vmatpush2.bf16.msra.mxu0 0
  %6003 = vmatprep.subr.bf16.mxu0 0
  %6004 = vmatpush2.bf16.msra.mxu0 0
  %6005 = vmatprep.mubr.bf16.mxu0 0
  %6006 = vmatmul.mubr.bf16.gmra.mxu0 %v5959
  %v6007 = vpop.f32.mrf.mxu0
  %v6008 = vadd.f32 %v5942, %v6007
  %v6009 = vpop.f32.mrf.mxu0
  %v6010 = vpop.f32.mrf.mxu0
  %v6011 = vadd.f32 %v5942, %v6010
  %v6012 = vpop.f32.mrf.mxu0
  %6013 = vmatprep.mubr.bf16.mxu0 0
  %6014 = vmatmul.mubr.bf16.gmra.mxu0 %v5962
  %v6015 = vpop.f32.mrf.mxu0
  %v6016 = vadd.f32 %v5942, %v6015
  %v6017 = vpop.f32.mrf.mxu0
  %v6018 = vpop.f32.mrf.mxu0
  %v6019 = vadd.f32 %v5942, %v6018
  %v6020 = vpop.f32.mrf.mxu0
  %6021 = vmatprep.mubr.bf16.mxu0 0
  %6022 = vmatmul.mubr.bf16.gmra.mxu0 %v5965
  %v6023 = vpop.f32.mrf.mxu0
  %v6024 = vadd.f32 %v5942, %v6023
  %v6025 = vpop.f32.mrf.mxu0
  %v6026 = vpop.f32.mrf.mxu0
  %v6027 = vadd.f32 %v5942, %v6026
  %v6028 = vpop.f32.mrf.mxu0
  %6029 = vmatprep.mubr.bf16.mxu0 0
  %6030 = vmatmul.mubr.bf16.gmra.mxu0 %v5968
  %v6031 = vpop.f32.mrf.mxu0
  %v6032 = vadd.f32 %v5942, %v6031
  %v6033 = vpop.f32.mrf.mxu0
  %v6034 = vpop.f32.mrf.mxu0
  %v6035 = vadd.f32 %v5942, %v6034
  %v6036 = vpop.f32.mrf.mxu0
  %6037 = vdwg.mxu0
  %v6038 = vadd.f32 %v5806, %v6008
  %v6039 = vadd.f32 %v5807, %v6011
  %v6040 = vadd.f32 %v5808, %v6016
  %v6041 = vadd.f32 %v5809, %v6019
  %v6042 = vadd.f32 %v5810, %v6024
  %v6043 = vadd.f32 %v5811, %v6027
  %v6044 = vadd.f32 %v5812, %v6032
  %v6045 = vadd.f32 %v5813, %v6035
  %v6046 = vsel %vm94, %v6038, 0.0
  %6047 = vadd.xlane.f32.xlu0 %v6046
  %v6048 = vpop.xlane.xlu0 %6047
  %v6049 = vsel %vm94, %v6039, 0.0
  %6050 = vadd.xlane.f32.xlu0 %v6049
  %v6051 = vpop.xlane.xlu0 %6050
  %v6052 = vsel %vm94, %v6040, 0.0
  %6053 = vadd.xlane.f32.xlu0 %v6052
  %v6054 = vpop.xlane.xlu0 %6053
  %v6055 = vsel %vm94, %v6041, 0.0
  %6056 = vadd.xlane.f32.xlu0 %v6055
  %v6057 = vpop.xlane.xlu0 %6056
  %v6058 = vsel %vm94, %v6042, 0.0
  %6059 = vadd.xlane.f32.xlu0 %v6058
  %v6060 = vpop.xlane.xlu0 %6059
  %v6061 = vsel %vm94, %v6043, 0.0
  %6062 = vadd.xlane.f32.xlu0 %v6061
  %v6063 = vpop.xlane.xlu0 %6062
  %v6064 = vsel %vm94, %v6044, 0.0
  %6065 = vadd.xlane.f32.xlu0 %v6064
  %v6066 = vpop.xlane.xlu0 %6065
  %v6067 = vsel %vm94, %v6045, 0.0
  %6068 = vadd.xlane.f32.xlu0 %v6067
  %v6069 = vpop.xlane.xlu0 %6068
  %v6070 = vmul.f32 %v6048, %v119
  %v6071 = vmul.f32 %v6051, %v119
  %v6072 = vmul.f32 %v6054, %v119
  %v6073 = vmul.f32 %v6057, %v119
  %v6074 = vmul.f32 %v6060, %v119
  %v6075 = vmul.f32 %v6063, %v119
  %v6076 = vmul.f32 %v6066, %v119
  %v6077 = vmul.f32 %v6069, %v119
  %v6078 = vsub.f32 %v6038, %v6070
  %v6079 = vsub.f32 %v6039, %v6071
  %v6080 = vsub.f32 %v6040, %v6072
  %v6081 = vsub.f32 %v6041, %v6073
  %v6082 = vsub.f32 %v6042, %v6074
  %v6083 = vsub.f32 %v6043, %v6075
  %v6084 = vsub.f32 %v6044, %v6076
  %v6085 = vsub.f32 %v6045, %v6077
  %v6086 = vmul.f32 %v6078, %v6078
  %v6087 = vmul.f32 %v6079, %v6079
  %v6088 = vmul.f32 %v6080, %v6080
  %v6089 = vmul.f32 %v6081, %v6081
  %v6090 = vmul.f32 %v6082, %v6082
  %v6091 = vmul.f32 %v6083, %v6083
  %v6092 = vmul.f32 %v6084, %v6084
  %v6093 = vmul.f32 %v6085, %v6085
  %v6094 = vsel %vm94, %v6086, 0.0
  %6095 = vadd.xlane.f32.xlu0 %v6094
  %v6096 = vpop.xlane.xlu0 %6095
  %v6097 = vsel %vm94, %v6087, 0.0
  %6098 = vadd.xlane.f32.xlu0 %v6097
  %v6099 = vpop.xlane.xlu0 %6098
  %v6100 = vsel %vm94, %v6088, 0.0
  %6101 = vadd.xlane.f32.xlu0 %v6100
  %v6102 = vpop.xlane.xlu0 %6101
  %v6103 = vsel %vm94, %v6089, 0.0
  %6104 = vadd.xlane.f32.xlu0 %v6103
  %v6105 = vpop.xlane.xlu0 %6104
  %v6106 = vsel %vm94, %v6090, 0.0
  %6107 = vadd.xlane.f32.xlu0 %v6106
  %v6108 = vpop.xlane.xlu0 %6107
  %v6109 = vsel %vm94, %v6091, 0.0
  %6110 = vadd.xlane.f32.xlu0 %v6109
  %v6111 = vpop.xlane.xlu0 %6110
  %v6112 = vsel %vm94, %v6092, 0.0
  %6113 = vadd.xlane.f32.xlu0 %v6112
  %v6114 = vpop.xlane.xlu0 %6113
  %v6115 = vsel %vm94, %v6093, 0.0
  %6116 = vadd.xlane.f32.xlu0 %v6115
  %v6117 = vpop.xlane.xlu0 %6116
  %v6118 = vmul.f32 %v6096, %v119
  %v6119 = vmul.f32 %v6099, %v119
  %v6120 = vmul.f32 %v6102, %v119
  %v6121 = vmul.f32 %v6105, %v119
  %v6122 = vmul.f32 %v6108, %v119
  %v6123 = vmul.f32 %v6111, %v119
  %v6124 = vmul.f32 %v6114, %v119
  %v6125 = vmul.f32 %v6117, %v119
  %v6126 = vadd.f32 %v6118, 1e-05
  %v6127 = vadd.f32 %v6119, 1e-05
  %v6128 = vadd.f32 %v6120, 1e-05
  %v6129 = vadd.f32 %v6121, 1e-05
  %v6130 = vadd.f32 %v6122, 1e-05
  %v6131 = vadd.f32 %v6123, 1e-05
  %v6132 = vadd.f32 %v6124, 1e-05
  %v6133 = vadd.f32 %v6125, 1e-05
  %v6134 = vrsqrt.pop %v6126
  %v6135 = vrsqrt.pop %v6127
  %v6136 = vrsqrt.pop %v6128
  %v6137 = vrsqrt.pop %v6129
  %v6138 = vrsqrt.pop %v6130
  %v6139 = vrsqrt.pop %v6131
  %v6140 = vrsqrt.pop %v6132
  %v6141 = vrsqrt.pop %v6133
  %v6142 = vmul.f32 %v6078, %v6134
  %v6143 = vmul.f32 %v6079, %v6135
  %v6144 = vmul.f32 %v6080, %v6136
  %v6145 = vmul.f32 %v6081, %v6137
  %v6146 = vmul.f32 %v6082, %v6138
  %v6147 = vmul.f32 %v6083, %v6139
  %v6148 = vmul.f32 %v6084, %v6140
  %v6149 = vmul.f32 %v6085, %v6141
  %v6150 = vlaneseq
  %v6151 = vshrl.u32 %v6150, 7
  %v6152 = vsub.s32 5, %v6151
  %v6153 = vrot.slane %v20, %v6152
  %v6154 = vmul.f32 %v6142, %v6153
  %v6155 = vmul.f32 %v6143, %v6153
  %v6156 = vmul.f32 %v6144, %v6153
  %v6157 = vmul.f32 %v6145, %v6153
  %v6158 = vmul.f32 %v6146, %v6153
  %v6159 = vmul.f32 %v6147, %v6153
  %v6160 = vmul.f32 %v6148, %v6153
  %v6161 = vmul.f32 %v6149, %v6153
  %v6162 = vlaneseq
  %v6163 = vshrl.u32 %v6162, 7
  %v6164 = vsub.s32 6, %v6163
  %v6165 = vrot.slane %v20, %v6164
  %v6166 = vadd.f32 %v6154, %v6165
  %v6167 = vadd.f32 %v6155, %v6165
  %v6168 = vadd.f32 %v6156, %v6165
  %v6169 = vadd.f32 %v6157, %v6165
  %v6170 = vadd.f32 %v6158, %v6165
  %v6171 = vadd.f32 %v6159, %v6165
  %v6172 = vadd.f32 %v6160, %v6165
  %v6173 = vadd.f32 %v6161, %v6165
  %v6174 = vpack.c.bf16 %v6167, %v6166
  %v6175 = vpack.c.bf16 %v6169, %v6168
  %v6176 = vpack.c.bf16 %v6171, %v6170
  %v6177 = vpack.c.bf16 %v6173, %v6172
  %v6178 = vld [vmem:[%s1 + $0xf0] sm:$0xf]
  %v6179 = vld [vmem:[%s1 + $0xf4] sm:$0xf]
  %v6180 = vld [vmem:[%s1 + $0xf8] sm:$0xf]
  %v6181 = vld [vmem:[%s1 + $0xfc] sm:$0xf]
  %v6182 = vld [vmem:[%s1 + $0x100] sm:$0xf]
  %v6188 = vunpack.c.l.b16 %v6178
  %v6189 = vunpack.c.l.b16 %v6179
  %v6190 = vunpack.c.l.b16 %v6180
  %v6191 = vunpack.c.l.b16 %v6181
  %v6192 = vunpack.c.l.b16 %v6182
  %v6193 = vpack.c.b16 %v6189, %v6188
  %v6194 = vpack.c.b16 %v6191, %v6190
  %v6195 = vpack.c.b16 %v6192, %v6192
  %v6199 = vsel %vm94, %v6174, 0
  %v6202 = vsel %vm94, %v6175, 0
  %v6205 = vsel %vm94, %v6176, 0
  %v6208 = vsel %vm94, %v6177, 0
  %v6211 = vsel %vm260, %v6195, 0
  %6213 = vmatprep.subr.bf16.mxu0 0
  %6214 = vmatpush1.bf16.msra.mxu0 0
  %6215 = vmatprep.subr.bf16.mxu0 0
  %6216 = vmatpush1.bf16.msra.mxu0 0
  %6217 = vmatprep.subr.bf16.mxu0 0
  %6218 = vmatpush1.bf16.msra.mxu0 0
  %6219 = vmatprep.subr.bf16.mxu0 0
  %6220 = vmatpush1.bf16.msra.mxu0 0
  %6221 = vmatprep.subr.bf16.mxu0 0
  %6222 = vmatpush1.bf16.msra.mxu0 0
  %6223 = vmatprep.subr.bf16.mxu0 0
  %6224 = vmatpush1.bf16.msra.mxu0 %v6211
  %6225 = vmatprep.subr.bf16.mxu0 0
  %6226 = vmatpush1.bf16.msra.mxu0 %v6194
  %6227 = vmatprep.subr.bf16.mxu0 0
  %6228 = vmatpush1.bf16.msra.mxu0 %v6193
  %6229 = vmatprep.subr.bf16.mxu0 0
  %6230 = vmatpush2.bf16.msra.mxu0 0
  %6231 = vmatprep.subr.bf16.mxu0 0
  %6232 = vmatpush2.bf16.msra.mxu0 0
  %6233 = vmatprep.subr.bf16.mxu0 0
  %6234 = vmatpush2.bf16.msra.mxu0 0
  %6235 = vmatprep.subr.bf16.mxu0 0
  %6236 = vmatpush2.bf16.msra.mxu0 0
  %6237 = vmatprep.subr.bf16.mxu0 0
  %6238 = vmatpush2.bf16.msra.mxu0 0
  %6239 = vmatprep.subr.bf16.mxu0 0
  %6240 = vmatpush2.bf16.msra.mxu0 0
  %6241 = vmatprep.subr.bf16.mxu0 0
  %6242 = vmatpush2.bf16.msra.mxu0 0
  %6243 = vmatprep.subr.bf16.mxu0 0
  %6244 = vmatpush2.bf16.msra.mxu0 0
  %6245 = vmatprep.mubr.bf16.mxu0 0
  %6246 = vmatmul.mubr.bf16.gmra.mxu0 %v6199
  %v6247 = vpop.f32.mrf.mxu0
  %v6248 = vadd.f32 0.0, %v6247
  %v6249 = vpop.f32.mrf.mxu0
  %v6250 = vpop.f32.mrf.mxu0
  %v6251 = vadd.f32 0.0, %v6250
  %v6252 = vpop.f32.mrf.mxu0
  %6253 = vmatprep.mubr.bf16.mxu0 0
  %6254 = vmatmul.mubr.bf16.gmra.mxu0 %v6202
  %v6255 = vpop.f32.mrf.mxu0
  %v6256 = vadd.f32 0.0, %v6255
  %v6257 = vpop.f32.mrf.mxu0
  %v6258 = vpop.f32.mrf.mxu0
  %v6259 = vadd.f32 0.0, %v6258
  %v6260 = vpop.f32.mrf.mxu0
  %6261 = vmatprep.mubr.bf16.mxu0 0
  %6262 = vmatmul.mubr.bf16.gmra.mxu0 %v6205
  %v6263 = vpop.f32.mrf.mxu0
  %v6264 = vadd.f32 0.0, %v6263
  %v6265 = vpop.f32.mrf.mxu0
  %v6266 = vpop.f32.mrf.mxu0
  %v6267 = vadd.f32 0.0, %v6266
  %v6268 = vpop.f32.mrf.mxu0
  %6269 = vmatprep.mubr.bf16.mxu0 0
  %6270 = vmatmul.mubr.bf16.gmra.mxu0 %v6208
  %v6271 = vpop.f32.mrf.mxu0
  %v6272 = vadd.f32 0.0, %v6271
  %v6273 = vpop.f32.mrf.mxu0
  %v6274 = vpop.f32.mrf.mxu0
  %v6275 = vadd.f32 0.0, %v6274
  %v6276 = vpop.f32.mrf.mxu0
  %6277 = vdwg.mxu0
  %6286 = vrot.lane.b32.xlu0 %v6248, 118
  %v6287 = vpop.permute.xlu0 %6286
  %6288 = vrot.lane.b32.xlu0 %v6251, 118
  %v6289 = vpop.permute.xlu0 %6288
  %6290 = vrot.lane.b32.xlu0 %v6256, 118
  %v6291 = vpop.permute.xlu0 %6290
  %6292 = vrot.lane.b32.xlu0 %v6259, 118
  %v6293 = vpop.permute.xlu0 %6292
  %6294 = vrot.lane.b32.xlu0 %v6264, 118
  %v6295 = vpop.permute.xlu0 %6294
  %6296 = vrot.lane.b32.xlu0 %v6267, 118
  %v6297 = vpop.permute.xlu0 %6296
  %6298 = vrot.lane.b32.xlu0 %v6272, 118
  %v6299 = vpop.permute.xlu0 %6298
  %6300 = vrot.lane.b32.xlu0 %v6275, 118
  %v6301 = vpop.permute.xlu0 %6300
  %6310 = vrot.lane.b32.xlu0 %v6248, 108
  %v6311 = vpop.permute.xlu0 %6310
  %6312 = vrot.lane.b32.xlu0 %v6251, 108
  %v6313 = vpop.permute.xlu0 %6312
  %6314 = vrot.lane.b32.xlu0 %v6256, 108
  %v6315 = vpop.permute.xlu0 %6314
  %6316 = vrot.lane.b32.xlu0 %v6259, 108
  %v6317 = vpop.permute.xlu0 %6316
  %6318 = vrot.lane.b32.xlu0 %v6264, 108
  %v6319 = vpop.permute.xlu0 %6318
  %6320 = vrot.lane.b32.xlu0 %v6267, 108
  %v6321 = vpop.permute.xlu0 %6320
  %6322 = vrot.lane.b32.xlu0 %v6272, 108
  %v6323 = vpop.permute.xlu0 %6322
  %6324 = vrot.lane.b32.xlu0 %v6275, 108
  %v6325 = vpop.permute.xlu0 %6324
  %6334 = vrot.lane.b32.xlu0 %v6248, 98
  %v6335 = vpop.permute.xlu0 %6334
  %6336 = vrot.lane.b32.xlu0 %v6251, 98
  %v6337 = vpop.permute.xlu0 %6336
  %6338 = vrot.lane.b32.xlu0 %v6256, 98
  %v6339 = vpop.permute.xlu0 %6338
  %6340 = vrot.lane.b32.xlu0 %v6259, 98
  %v6341 = vpop.permute.xlu0 %6340
  %6342 = vrot.lane.b32.xlu0 %v6264, 98
  %v6343 = vpop.permute.xlu0 %6342
  %6344 = vrot.lane.b32.xlu0 %v6267, 98
  %v6345 = vpop.permute.xlu0 %6344
  %6346 = vrot.lane.b32.xlu0 %v6272, 98
  %v6347 = vpop.permute.xlu0 %6346
  %6348 = vrot.lane.b32.xlu0 %v6275, 98
  %v6349 = vpop.permute.xlu0 %6348
  %v6358 = vpack.c.bf16 %v6251, %v6248
  %v6359 = vpack.c.bf16 %v6259, %v6256
  %v6360 = vpack.c.bf16 %v6267, %v6264
  %v6361 = vpack.c.bf16 %v6275, %v6272
  %v6362 = vpack.c.bf16 %v6289, %v6287
  %v6363 = vpack.c.bf16 %v6293, %v6291
  %v6364 = vpack.c.bf16 %v6297, %v6295
  %v6365 = vpack.c.bf16 %v6301, %v6299
  %v6366 = vpack.c.bf16 %v6313, %v6311
  %v6367 = vpack.c.bf16 %v6317, %v6315
  %v6368 = vpack.c.bf16 %v6321, %v6319
  %v6369 = vpack.c.bf16 %v6325, %v6323
  %v6370 = vpack.c.bf16 %v6337, %v6335
  %v6371 = vpack.c.bf16 %v6341, %v6339
  %v6372 = vpack.c.bf16 %v6345, %v6343
  %v6373 = vpack.c.bf16 %v6349, %v6347
  %6390 = vrot.lane.b32.xlu0 %v6358, 88
  %v6391 = vpop.permute.xlu0 %6390
  %6392 = vrot.lane.b32.xlu0 %v6359, 88
  %v6393 = vpop.permute.xlu0 %6392
  %6394 = vrot.lane.b32.xlu0 %v6360, 88
  %v6395 = vpop.permute.xlu0 %6394
  %6396 = vrot.lane.b32.xlu0 %v6361, 88
  %v6397 = vpop.permute.xlu0 %6396
  %6398 = vrot.lane.b32.xlu0 %v6362, 88
  %v6399 = vpop.permute.xlu0 %6398
  %6400 = vrot.lane.b32.xlu0 %v6363, 88
  %v6401 = vpop.permute.xlu0 %6400
  %6402 = vrot.lane.b32.xlu0 %v6364, 88
  %v6403 = vpop.permute.xlu0 %6402
  %6404 = vrot.lane.b32.xlu0 %v6365, 88
  %v6405 = vpop.permute.xlu0 %6404
  %6406 = vrot.lane.b32.xlu0 %v6366, 88
  %v6407 = vpop.permute.xlu0 %6406
  %6408 = vrot.lane.b32.xlu0 %v6367, 88
  %v6409 = vpop.permute.xlu0 %6408
  %6410 = vrot.lane.b32.xlu0 %v6368, 88
  %v6411 = vpop.permute.xlu0 %6410
  %6412 = vrot.lane.b32.xlu0 %v6369, 88
  %v6413 = vpop.permute.xlu0 %6412
  %6414 = vrot.lane.b32.xlu0 %v6370, 88
  %v6415 = vpop.permute.xlu0 %6414
  %6416 = vrot.lane.b32.xlu0 %v6371, 88
  %v6417 = vpop.permute.xlu0 %6416
  %6418 = vrot.lane.b32.xlu0 %v6372, 88
  %v6419 = vpop.permute.xlu0 %6418
  %6420 = vrot.lane.b32.xlu0 %v6373, 88
  %v6421 = vpop.permute.xlu0 %6420
  %v6423 = vsel %vm473, %v6391, 0
  %v6426 = vsel %vm473, %v6393, 0
  %v6429 = vsel %vm473, %v6395, 0
  %v6432 = vsel %vm473, %v6397, 0
  %v6435 = vsel %vm473, %v6399, 0
  %v6438 = vsel %vm473, %v6401, 0
  %v6441 = vsel %vm473, %v6403, 0
  %v6444 = vsel %vm473, %v6405, 0
  %v6447 = vsel %vm473, %v6407, 0
  %v6450 = vsel %vm473, %v6409, 0
  %v6453 = vsel %vm473, %v6411, 0
  %v6456 = vsel %vm473, %v6413, 0
  %v6459 = vsel %vm473, %v6415, 0
  %v6462 = vsel %vm473, %v6417, 0
  %v6465 = vsel %vm473, %v6419, 0
  %v6468 = vsel %vm473, %v6421, 0
  %v6471 = vsel %vm473, %v6358, 0
  %v6474 = vsel %vm473, %v6359, 0
  %v6477 = vsel %vm473, %v6360, 0
  %v6480 = vsel %vm473, %v6361, 0
  %v6483 = vsel %vm473, %v6362, 0
  %v6486 = vsel %vm473, %v6363, 0
  %v6489 = vsel %vm473, %v6364, 0
  %v6492 = vsel %vm473, %v6365, 0
  %v6495 = vsel %vm473, %v6366, 0
  %v6498 = vsel %vm473, %v6367, 0
  %v6501 = vsel %vm473, %v6368, 0
  %v6504 = vsel %vm473, %v6369, 0
  %v6507 = vsel %vm473, %v6370, 0
  %v6510 = vsel %vm473, %v6371, 0
  %v6513 = vsel %vm473, %v6372, 0
  %v6516 = vsel %vm473, %v6373, 0
  %6518 = vmatprep.subr.bf16.mxu0 0
  %6519 = vmatpush1.bf16.xpose.msra.mxu0 %v6492
  %6520 = vmatprep.subr.bf16.mxu0 0
  %6521 = vmatpush1.bf16.xpose.msra.mxu0 %v6489
  %6522 = vmatprep.subr.bf16.mxu0 0
  %6523 = vmatpush1.bf16.xpose.msra.mxu0 %v6486
  %6524 = vmatprep.subr.bf16.mxu0 0
  %6525 = vmatpush1.bf16.xpose.msra.mxu0 %v6483
  %6526 = vmatprep.subr.bf16.mxu0 0
  %6527 = vmatpush1.bf16.xpose.msra.mxu0 %v6480
  %6528 = vmatprep.subr.bf16.mxu0 0
  %6529 = vmatpush1.bf16.xpose.msra.mxu0 %v6477
  %6530 = vmatprep.subr.bf16.mxu0 0
  %6531 = vmatpush1.bf16.xpose.msra.mxu0 %v6474
  %6532 = vmatprep.subr.bf16.mxu0 0
  %6533 = vmatpush1.bf16.xpose.msra.mxu0 %v6471
  %6534 = vmatprep.subr.bf16.mxu0 0
  %6535 = vmatpush2.bf16.xpose.msra.mxu0 %v6516
  %6536 = vmatprep.subr.bf16.mxu0 0
  %6537 = vmatpush2.bf16.xpose.msra.mxu0 %v6513
  %6538 = vmatprep.subr.bf16.mxu0 0
  %6539 = vmatpush2.bf16.xpose.msra.mxu0 %v6510
  %6540 = vmatprep.subr.bf16.mxu0 0
  %6541 = vmatpush2.bf16.xpose.msra.mxu0 %v6507
  %6542 = vmatprep.subr.bf16.mxu0 0
  %6543 = vmatpush2.bf16.xpose.msra.mxu0 %v6504
  %6544 = vmatprep.subr.bf16.mxu0 0
  %6545 = vmatpush2.bf16.xpose.msra.mxu0 %v6501
  %6546 = vmatprep.subr.bf16.mxu0 0
  %6547 = vmatpush2.bf16.xpose.msra.mxu0 %v6498
  %6548 = vmatprep.subr.bf16.mxu0 0
  %6549 = vmatpush2.bf16.xpose.msra.mxu0 %v6495
  %6550 = vmatprep.mubr.bf16.mxu0 0
  %6551 = vmatmul.mubr.bf16.gmra.mxu0 %v6423
  %v6552 = vpop.f32.mrf.mxu0
  %v6553 = vadd.f32 %v22, %v6552
  %v6554 = vpop.f32.mrf.mxu0
  %v6555 = vadd.f32 %v23, %v6554
  %v6556 = vpop.f32.mrf.mxu0
  %v6557 = vadd.f32 %v24, %v6556
  %v6558 = vpop.f32.mrf.mxu0
  %v6559 = vadd.f32 %v25, %v6558
  %6560 = vmatprep.mubr.bf16.mxu0 0
  %6561 = vmatmul.mubr.bf16.gmra.mxu0 %v6426
  %v6562 = vpop.f32.mrf.mxu0
  %v6563 = vadd.f32 %v26, %v6562
  %v6564 = vpop.f32.mrf.mxu0
  %v6565 = vadd.f32 %v27, %v6564
  %v6566 = vpop.f32.mrf.mxu0
  %v6567 = vadd.f32 %v28, %v6566
  %v6568 = vpop.f32.mrf.mxu0
  %v6569 = vadd.f32 %v29, %v6568
  %6570 = vmatprep.mubr.bf16.mxu0 0
  %6571 = vmatmul.mubr.bf16.gmra.mxu0 %v6429
  %v6572 = vpop.f32.mrf.mxu0
  %v6573 = vadd.f32 %v30, %v6572
  %v6574 = vpop.f32.mrf.mxu0
  %v6575 = vadd.f32 %v31, %v6574
  %v6576 = vpop.f32.mrf.mxu0
  %v6577 = vadd.f32 %v32, %v6576
  %v6578 = vpop.f32.mrf.mxu0
  %v6579 = vadd.f32 %v33, %v6578
  %6580 = vmatprep.mubr.bf16.mxu0 0
  %6581 = vmatmul.mubr.bf16.gmra.mxu0 %v6432
  %v6582 = vpop.f32.mrf.mxu0
  %v6583 = vadd.f32 %v34, %v6582
  %v6584 = vpop.f32.mrf.mxu0
  %v6585 = vadd.f32 %v35, %v6584
  %v6586 = vpop.f32.mrf.mxu0
  %v6587 = vadd.f32 %v36, %v6586
  %v6588 = vpop.f32.mrf.mxu0
  %v6589 = vadd.f32 %v37, %v6588
  %6590 = vmatprep.mubr.bf16.mxu0 0
  %6591 = vmatmul.mubr.bf16.gmra.mxu0 %v6435
  %v6592 = vpop.f32.mrf.mxu0
  %v6593 = vadd.f32 %v38, %v6592
  %v6594 = vpop.f32.mrf.mxu0
  %v6595 = vadd.f32 %v39, %v6594
  %v6596 = vpop.f32.mrf.mxu0
  %v6597 = vadd.f32 %v40, %v6596
  %v6598 = vpop.f32.mrf.mxu0
  %v6599 = vadd.f32 %v41, %v6598
  %6600 = vmatprep.mubr.bf16.mxu0 0
  %6601 = vmatmul.mubr.bf16.gmra.mxu0 %v6438
  %v6602 = vpop.f32.mrf.mxu0
  %v6603 = vadd.f32 %v42, %v6602
  %v6604 = vpop.f32.mrf.mxu0
  %v6605 = vadd.f32 %v43, %v6604
  %v6606 = vpop.f32.mrf.mxu0
  %v6607 = vadd.f32 %v44, %v6606
  %v6608 = vpop.f32.mrf.mxu0
  %v6609 = vadd.f32 %v45, %v6608
  %6610 = vmatprep.mubr.bf16.mxu0 0
  %6611 = vmatmul.mubr.bf16.gmra.mxu0 %v6441
  %v6612 = vpop.f32.mrf.mxu0
  %v6613 = vadd.f32 %v46, %v6612
  %v6614 = vpop.f32.mrf.mxu0
  %v6615 = vadd.f32 %v47, %v6614
  %v6616 = vpop.f32.mrf.mxu0
  %v6617 = vadd.f32 %v48, %v6616
  %v6618 = vpop.f32.mrf.mxu0
  %v6619 = vadd.f32 %v49, %v6618
  %6620 = vmatprep.mubr.bf16.mxu0 0
  %6621 = vmatmul.mubr.bf16.gmra.mxu0 %v6444
  %v6622 = vpop.f32.mrf.mxu0
  %v6623 = vadd.f32 %v50, %v6622
  %v6624 = vpop.f32.mrf.mxu0
  %v6625 = vadd.f32 %v51, %v6624
  %v6626 = vpop.f32.mrf.mxu0
  %v6627 = vadd.f32 %v52, %v6626
  %v6628 = vpop.f32.mrf.mxu0
  %v6629 = vadd.f32 %v53, %v6628
  %6630 = vmatprep.mubr.bf16.mxu0 0
  %6631 = vmatmul.mubr.bf16.gmra.mxu0 %v6447
  %v6632 = vpop.f32.mrf.mxu0
  %v6633 = vadd.f32 %v54, %v6632
  %v6634 = vpop.f32.mrf.mxu0
  %v6635 = vadd.f32 %v55, %v6634
  %v6636 = vpop.f32.mrf.mxu0
  %v6637 = vadd.f32 %v56, %v6636
  %v6638 = vpop.f32.mrf.mxu0
  %v6639 = vadd.f32 %v57, %v6638
  %6640 = vmatprep.mubr.bf16.mxu0 0
  %6641 = vmatmul.mubr.bf16.gmra.mxu0 %v6450
  %v6642 = vpop.f32.mrf.mxu0
  %v6643 = vadd.f32 %v58, %v6642
  %v6644 = vpop.f32.mrf.mxu0
  %v6645 = vadd.f32 %v59, %v6644
  %v6646 = vpop.f32.mrf.mxu0
  %v6647 = vadd.f32 %v60, %v6646
  %v6648 = vpop.f32.mrf.mxu0
  %v6649 = vadd.f32 %v61, %v6648
  %6650 = vmatprep.mubr.bf16.mxu0 0
  %6651 = vmatmul.mubr.bf16.gmra.mxu0 %v6453
  %v6652 = vpop.f32.mrf.mxu0
  %v6653 = vadd.f32 %v62, %v6652
  %v6654 = vpop.f32.mrf.mxu0
  %v6655 = vadd.f32 %v63, %v6654
  %v6656 = vpop.f32.mrf.mxu0
  %v6657 = vadd.f32 %v64, %v6656
  %v6658 = vpop.f32.mrf.mxu0
  %v6659 = vadd.f32 %v65, %v6658
  %6660 = vmatprep.mubr.bf16.mxu0 0
  %6661 = vmatmul.mubr.bf16.gmra.mxu0 %v6456
  %v6662 = vpop.f32.mrf.mxu0
  %v6663 = vadd.f32 %v66, %v6662
  %v6664 = vpop.f32.mrf.mxu0
  %v6665 = vadd.f32 %v67, %v6664
  %v6666 = vpop.f32.mrf.mxu0
  %v6667 = vadd.f32 %v68, %v6666
  %v6668 = vpop.f32.mrf.mxu0
  %v6669 = vadd.f32 %v69, %v6668
  %6670 = vmatprep.mubr.bf16.mxu0 0
  %6671 = vmatmul.mubr.bf16.gmra.mxu0 %v6459
  %v6672 = vpop.f32.mrf.mxu0
  %v6673 = vadd.f32 %v70, %v6672
  %v6674 = vpop.f32.mrf.mxu0
  %v6675 = vadd.f32 %v71, %v6674
  %v6676 = vpop.f32.mrf.mxu0
  %v6677 = vadd.f32 %v72, %v6676
  %v6678 = vpop.f32.mrf.mxu0
  %v6679 = vadd.f32 %v73, %v6678
  %6680 = vmatprep.mubr.bf16.mxu0 0
  %6681 = vmatmul.mubr.bf16.gmra.mxu0 %v6462
  %v6682 = vpop.f32.mrf.mxu0
  %v6683 = vadd.f32 %v74, %v6682
  %v6684 = vpop.f32.mrf.mxu0
  %v6685 = vadd.f32 %v75, %v6684
  %v6686 = vpop.f32.mrf.mxu0
  %v6687 = vadd.f32 %v76, %v6686
  %v6688 = vpop.f32.mrf.mxu0
  %v6689 = vadd.f32 %v77, %v6688
  %6690 = vmatprep.mubr.bf16.mxu0 0
  %6691 = vmatmul.mubr.bf16.gmra.mxu0 %v6465
  %v6692 = vpop.f32.mrf.mxu0
  %v6693 = vadd.f32 %v78, %v6692
  %v6694 = vpop.f32.mrf.mxu0
  %v6695 = vadd.f32 %v79, %v6694
  %v6696 = vpop.f32.mrf.mxu0
  %v6697 = vadd.f32 %v80, %v6696
  %v6698 = vpop.f32.mrf.mxu0
  %v6699 = vadd.f32 %v81, %v6698
  %6700 = vmatprep.mubr.bf16.mxu0 0
  %6701 = vmatmul.mubr.bf16.gmra.mxu0 %v6468
  %v6702 = vpop.f32.mrf.mxu0
  %v6703 = vadd.f32 %v82, %v6702
  %v6704 = vpop.f32.mrf.mxu0
  %v6705 = vadd.f32 %v83, %v6704
  %v6706 = vpop.f32.mrf.mxu0
  %v6707 = vadd.f32 %v84, %v6706
  %v6708 = vpop.f32.mrf.mxu0
  %v6709 = vadd.f32 %v85, %v6708
  %6710 = vdwg.mxu0
  %v6711 = vmax.f32 %v6553, %v6555
  %6712 = vmax.xlane.f32.xlu0 %v6711
  %v6713 = vpop.xlane.xlu0 %6712
  %v6714 = vmax.f32 %v6557, %v6559
  %6715 = vmax.xlane.f32.xlu0 %v6714
  %v6716 = vpop.xlane.xlu0 %6715
  %v6717 = vmax.f32 %v6563, %v6565
  %6718 = vmax.xlane.f32.xlu0 %v6717
  %v6719 = vpop.xlane.xlu0 %6718
  %v6720 = vmax.f32 %v6567, %v6569
  %6721 = vmax.xlane.f32.xlu0 %v6720
  %v6722 = vpop.xlane.xlu0 %6721
  %v6723 = vmax.f32 %v6573, %v6575
  %6724 = vmax.xlane.f32.xlu0 %v6723
  %v6725 = vpop.xlane.xlu0 %6724
  %v6726 = vmax.f32 %v6577, %v6579
  %6727 = vmax.xlane.f32.xlu0 %v6726
  %v6728 = vpop.xlane.xlu0 %6727
  %v6729 = vmax.f32 %v6583, %v6585
  %6730 = vmax.xlane.f32.xlu0 %v6729
  %v6731 = vpop.xlane.xlu0 %6730
  %v6732 = vmax.f32 %v6587, %v6589
  %6733 = vmax.xlane.f32.xlu0 %v6732
  %v6734 = vpop.xlane.xlu0 %6733
  %v6735 = vmax.f32 %v6593, %v6595
  %6736 = vmax.xlane.f32.xlu0 %v6735
  %v6737 = vpop.xlane.xlu0 %6736
  %v6738 = vmax.f32 %v6597, %v6599
  %6739 = vmax.xlane.f32.xlu0 %v6738
  %v6740 = vpop.xlane.xlu0 %6739
  %v6741 = vmax.f32 %v6603, %v6605
  %6742 = vmax.xlane.f32.xlu0 %v6741
  %v6743 = vpop.xlane.xlu0 %6742
  %v6744 = vmax.f32 %v6607, %v6609
  %6745 = vmax.xlane.f32.xlu0 %v6744
  %v6746 = vpop.xlane.xlu0 %6745
  %v6747 = vmax.f32 %v6613, %v6615
  %6748 = vmax.xlane.f32.xlu0 %v6747
  %v6749 = vpop.xlane.xlu0 %6748
  %v6750 = vmax.f32 %v6617, %v6619
  %6751 = vmax.xlane.f32.xlu0 %v6750
  %v6752 = vpop.xlane.xlu0 %6751
  %v6753 = vmax.f32 %v6623, %v6625
  %6754 = vmax.xlane.f32.xlu0 %v6753
  %v6755 = vpop.xlane.xlu0 %6754
  %v6756 = vmax.f32 %v6627, %v6629
  %6757 = vmax.xlane.f32.xlu0 %v6756
  %v6758 = vpop.xlane.xlu0 %6757
  %v6759 = vmax.f32 %v6633, %v6635
  %6760 = vmax.xlane.f32.xlu0 %v6759
  %v6761 = vpop.xlane.xlu0 %6760
  %v6762 = vmax.f32 %v6637, %v6639
  %6763 = vmax.xlane.f32.xlu0 %v6762
  %v6764 = vpop.xlane.xlu0 %6763
  %v6765 = vmax.f32 %v6643, %v6645
  %6766 = vmax.xlane.f32.xlu0 %v6765
  %v6767 = vpop.xlane.xlu0 %6766
  %v6768 = vmax.f32 %v6647, %v6649
  %6769 = vmax.xlane.f32.xlu0 %v6768
  %v6770 = vpop.xlane.xlu0 %6769
  %v6771 = vmax.f32 %v6653, %v6655
  %6772 = vmax.xlane.f32.xlu0 %v6771
  %v6773 = vpop.xlane.xlu0 %6772
  %v6774 = vmax.f32 %v6657, %v6659
  %6775 = vmax.xlane.f32.xlu0 %v6774
  %v6776 = vpop.xlane.xlu0 %6775
  %v6777 = vmax.f32 %v6663, %v6665
  %6778 = vmax.xlane.f32.xlu0 %v6777
  %v6779 = vpop.xlane.xlu0 %6778
  %v6780 = vmax.f32 %v6667, %v6669
  %6781 = vmax.xlane.f32.xlu0 %v6780
  %v6782 = vpop.xlane.xlu0 %6781
  %v6783 = vmax.f32 %v6673, %v6675
  %6784 = vmax.xlane.f32.xlu0 %v6783
  %v6785 = vpop.xlane.xlu0 %6784
  %v6786 = vmax.f32 %v6677, %v6679
  %6787 = vmax.xlane.f32.xlu0 %v6786
  %v6788 = vpop.xlane.xlu0 %6787
  %v6789 = vmax.f32 %v6683, %v6685
  %6790 = vmax.xlane.f32.xlu0 %v6789
  %v6791 = vpop.xlane.xlu0 %6790
  %v6792 = vmax.f32 %v6687, %v6689
  %6793 = vmax.xlane.f32.xlu0 %v6792
  %v6794 = vpop.xlane.xlu0 %6793
  %v6795 = vmax.f32 %v6693, %v6695
  %6796 = vmax.xlane.f32.xlu0 %v6795
  %v6797 = vpop.xlane.xlu0 %6796
  %v6798 = vmax.f32 %v6697, %v6699
  %6799 = vmax.xlane.f32.xlu0 %v6798
  %v6800 = vpop.xlane.xlu0 %6799
  %v6801 = vmax.f32 %v6703, %v6705
  %6802 = vmax.xlane.f32.xlu0 %v6801
  %v6803 = vpop.xlane.xlu0 %6802
  %v6804 = vmax.f32 %v6707, %v6709
  %6805 = vmax.xlane.f32.xlu0 %v6804
  %v6806 = vpop.xlane.xlu0 %6805
  %v6807 = vsub.f32 %v6553, %v6713
  %v6808 = vsub.f32 %v6555, %v6713
  %v6809 = vsub.f32 %v6557, %v6716
  %v6810 = vsub.f32 %v6559, %v6716
  %v6811 = vsub.f32 %v6563, %v6719
  %v6812 = vsub.f32 %v6565, %v6719
  %v6813 = vsub.f32 %v6567, %v6722
  %v6814 = vsub.f32 %v6569, %v6722
  %v6815 = vsub.f32 %v6573, %v6725
  %v6816 = vsub.f32 %v6575, %v6725
  %v6817 = vsub.f32 %v6577, %v6728
  %v6818 = vsub.f32 %v6579, %v6728
  %v6819 = vsub.f32 %v6583, %v6731
  %v6820 = vsub.f32 %v6585, %v6731
  %v6821 = vsub.f32 %v6587, %v6734
  %v6822 = vsub.f32 %v6589, %v6734
  %v6823 = vsub.f32 %v6593, %v6737
  %v6824 = vsub.f32 %v6595, %v6737
  %v6825 = vsub.f32 %v6597, %v6740
  %v6826 = vsub.f32 %v6599, %v6740
  %v6827 = vsub.f32 %v6603, %v6743
  %v6828 = vsub.f32 %v6605, %v6743
  %v6829 = vsub.f32 %v6607, %v6746
  %v6830 = vsub.f32 %v6609, %v6746
  %v6831 = vsub.f32 %v6613, %v6749
  %v6832 = vsub.f32 %v6615, %v6749
  %v6833 = vsub.f32 %v6617, %v6752
  %v6834 = vsub.f32 %v6619, %v6752
  %v6835 = vsub.f32 %v6623, %v6755
  %v6836 = vsub.f32 %v6625, %v6755
  %v6837 = vsub.f32 %v6627, %v6758
  %v6838 = vsub.f32 %v6629, %v6758
  %v6839 = vsub.f32 %v6633, %v6761
  %v6840 = vsub.f32 %v6635, %v6761
  %v6841 = vsub.f32 %v6637, %v6764
  %v6842 = vsub.f32 %v6639, %v6764
  %v6843 = vsub.f32 %v6643, %v6767
  %v6844 = vsub.f32 %v6645, %v6767
  %v6845 = vsub.f32 %v6647, %v6770
  %v6846 = vsub.f32 %v6649, %v6770
  %v6847 = vsub.f32 %v6653, %v6773
  %v6848 = vsub.f32 %v6655, %v6773
  %v6849 = vsub.f32 %v6657, %v6776
  %v6850 = vsub.f32 %v6659, %v6776
  %v6851 = vsub.f32 %v6663, %v6779
  %v6852 = vsub.f32 %v6665, %v6779
  %v6853 = vsub.f32 %v6667, %v6782
  %v6854 = vsub.f32 %v6669, %v6782
  %v6855 = vsub.f32 %v6673, %v6785
  %v6856 = vsub.f32 %v6675, %v6785
  %v6857 = vsub.f32 %v6677, %v6788
  %v6858 = vsub.f32 %v6679, %v6788
  %v6859 = vsub.f32 %v6683, %v6791
  %v6860 = vsub.f32 %v6685, %v6791
  %v6861 = vsub.f32 %v6687, %v6794
  %v6862 = vsub.f32 %v6689, %v6794
  %v6863 = vsub.f32 %v6693, %v6797
  %v6864 = vsub.f32 %v6695, %v6797
  %v6865 = vsub.f32 %v6697, %v6800
  %v6866 = vsub.f32 %v6699, %v6800
  %v6867 = vsub.f32 %v6703, %v6803
  %v6868 = vsub.f32 %v6705, %v6803
  %v6869 = vsub.f32 %v6707, %v6806
  %v6870 = vsub.f32 %v6709, %v6806
  %v6871 = vmul.f32 %v6807, 1.442695
  %v6872 = vpow.pop %v6871
  %v6873 = vmul.f32 %v6808, 1.442695
  %v6874 = vpow.pop %v6873
  %v6875 = vmul.f32 %v6809, 1.442695
  %v6876 = vpow.pop %v6875
  %v6877 = vmul.f32 %v6810, 1.442695
  %v6878 = vpow.pop %v6877
  %v6879 = vmul.f32 %v6811, 1.442695
  %v6880 = vpow.pop %v6879
  %v6881 = vmul.f32 %v6812, 1.442695
  %v6882 = vpow.pop %v6881
  %v6883 = vmul.f32 %v6813, 1.442695
  %v6884 = vpow.pop %v6883
  %v6885 = vmul.f32 %v6814, 1.442695
  %v6886 = vpow.pop %v6885
  %v6887 = vmul.f32 %v6815, 1.442695
  %v6888 = vpow.pop %v6887
  %v6889 = vmul.f32 %v6816, 1.442695
  %v6890 = vpow.pop %v6889
  %v6891 = vmul.f32 %v6817, 1.442695
  %v6892 = vpow.pop %v6891
  %v6893 = vmul.f32 %v6818, 1.442695
  %v6894 = vpow.pop %v6893
  %v6895 = vmul.f32 %v6819, 1.442695
  %v6896 = vpow.pop %v6895
  %v6897 = vmul.f32 %v6820, 1.442695
  %v6898 = vpow.pop %v6897
  %v6899 = vmul.f32 %v6821, 1.442695
  %v6900 = vpow.pop %v6899
  %v6901 = vmul.f32 %v6822, 1.442695
  %v6902 = vpow.pop %v6901
  %v6903 = vmul.f32 %v6823, 1.442695
  %v6904 = vpow.pop %v6903
  %v6905 = vmul.f32 %v6824, 1.442695
  %v6906 = vpow.pop %v6905
  %v6907 = vmul.f32 %v6825, 1.442695
  %v6908 = vpow.pop %v6907
  %v6909 = vmul.f32 %v6826, 1.442695
  %v6910 = vpow.pop %v6909
  %v6911 = vmul.f32 %v6827, 1.442695
  %v6912 = vpow.pop %v6911
  %v6913 = vmul.f32 %v6828, 1.442695
  %v6914 = vpow.pop %v6913
  %v6915 = vmul.f32 %v6829, 1.442695
  %v6916 = vpow.pop %v6915
  %v6917 = vmul.f32 %v6830, 1.442695
  %v6918 = vpow.pop %v6917
  %v6919 = vmul.f32 %v6831, 1.442695
  %v6920 = vpow.pop %v6919
  %v6921 = vmul.f32 %v6832, 1.442695
  %v6922 = vpow.pop %v6921
  %v6923 = vmul.f32 %v6833, 1.442695
  %v6924 = vpow.pop %v6923
  %v6925 = vmul.f32 %v6834, 1.442695
  %v6926 = vpow.pop %v6925
  %v6927 = vmul.f32 %v6835, 1.442695
  %v6928 = vpow.pop %v6927
  %v6929 = vmul.f32 %v6836, 1.442695
  %v6930 = vpow.pop %v6929
  %v6931 = vmul.f32 %v6837, 1.442695
  %v6932 = vpow.pop %v6931
  %v6933 = vmul.f32 %v6838, 1.442695
  %v6934 = vpow.pop %v6933
  %v6935 = vmul.f32 %v6839, 1.442695
  %v6936 = vpow.pop %v6935
  %v6937 = vmul.f32 %v6840, 1.442695
  %v6938 = vpow.pop %v6937
  %v6939 = vmul.f32 %v6841, 1.442695
  %v6940 = vpow.pop %v6939
  %v6941 = vmul.f32 %v6842, 1.442695
  %v6942 = vpow.pop %v6941
  %v6943 = vmul.f32 %v6843, 1.442695
  %v6944 = vpow.pop %v6943
  %v6945 = vmul.f32 %v6844, 1.442695
  %v6946 = vpow.pop %v6945
  %v6947 = vmul.f32 %v6845, 1.442695
  %v6948 = vpow.pop %v6947
  %v6949 = vmul.f32 %v6846, 1.442695
  %v6950 = vpow.pop %v6949
  %v6951 = vmul.f32 %v6847, 1.442695
  %v6952 = vpow.pop %v6951
  %v6953 = vmul.f32 %v6848, 1.442695
  %v6954 = vpow.pop %v6953
  %v6955 = vmul.f32 %v6849, 1.442695
  %v6956 = vpow.pop %v6955
  %v6957 = vmul.f32 %v6850, 1.442695
  %v6958 = vpow.pop %v6957
  %v6959 = vmul.f32 %v6851, 1.442695
  %v6960 = vpow.pop %v6959
  %v6961 = vmul.f32 %v6852, 1.442695
  %v6962 = vpow.pop %v6961
  %v6963 = vmul.f32 %v6853, 1.442695
  %v6964 = vpow.pop %v6963
  %v6965 = vmul.f32 %v6854, 1.442695
  %v6966 = vpow.pop %v6965
  %v6967 = vmul.f32 %v6855, 1.442695
  %v6968 = vpow.pop %v6967
  %v6969 = vmul.f32 %v6856, 1.442695
  %v6970 = vpow.pop %v6969
  %v6971 = vmul.f32 %v6857, 1.442695
  %v6972 = vpow.pop %v6971
  %v6973 = vmul.f32 %v6858, 1.442695
  %v6974 = vpow.pop %v6973
  %v6975 = vmul.f32 %v6859, 1.442695
  %v6976 = vpow.pop %v6975
  %v6977 = vmul.f32 %v6860, 1.442695
  %v6978 = vpow.pop %v6977
  %v6979 = vmul.f32 %v6861, 1.442695
  %v6980 = vpow.pop %v6979
  %v6981 = vmul.f32 %v6862, 1.442695
  %v6982 = vpow.pop %v6981
  %v6983 = vmul.f32 %v6863, 1.442695
  %v6984 = vpow.pop %v6983
  %v6985 = vmul.f32 %v6864, 1.442695
  %v6986 = vpow.pop %v6985
  %v6987 = vmul.f32 %v6865, 1.442695
  %v6988 = vpow.pop %v6987
  %v6989 = vmul.f32 %v6866, 1.442695
  %v6990 = vpow.pop %v6989
  %v6991 = vmul.f32 %v6867, 1.442695
  %v6992 = vpow.pop %v6991
  %v6993 = vmul.f32 %v6868, 1.442695
  %v6994 = vpow.pop %v6993
  %v6995 = vmul.f32 %v6869, 1.442695
  %v6996 = vpow.pop %v6995
  %v6997 = vmul.f32 %v6870, 1.442695
  %v6998 = vpow.pop %v6997
  %v6999 = vadd.f32 %v6872, %v6874
  %7000 = vadd.xlane.f32.xlu0 %v6999
  %v7001 = vpop.xlane.xlu0 %7000
  %v7002 = vadd.f32 %v6876, %v6878
  %7003 = vadd.xlane.f32.xlu0 %v7002
  %v7004 = vpop.xlane.xlu0 %7003
  %v7005 = vadd.f32 %v6880, %v6882
  %7006 = vadd.xlane.f32.xlu0 %v7005
  %v7007 = vpop.xlane.xlu0 %7006
  %v7008 = vadd.f32 %v6884, %v6886
  %7009 = vadd.xlane.f32.xlu0 %v7008
  %v7010 = vpop.xlane.xlu0 %7009
  %v7011 = vadd.f32 %v6888, %v6890
  %7012 = vadd.xlane.f32.xlu0 %v7011
  %v7013 = vpop.xlane.xlu0 %7012
  %v7014 = vadd.f32 %v6892, %v6894
  %7015 = vadd.xlane.f32.xlu0 %v7014
  %v7016 = vpop.xlane.xlu0 %7015
  %v7017 = vadd.f32 %v6896, %v6898
  %7018 = vadd.xlane.f32.xlu0 %v7017
  %v7019 = vpop.xlane.xlu0 %7018
  %v7020 = vadd.f32 %v6900, %v6902
  %7021 = vadd.xlane.f32.xlu0 %v7020
  %v7022 = vpop.xlane.xlu0 %7021
  %v7023 = vadd.f32 %v6904, %v6906
  %7024 = vadd.xlane.f32.xlu0 %v7023
  %v7025 = vpop.xlane.xlu0 %7024
  %v7026 = vadd.f32 %v6908, %v6910
  %7027 = vadd.xlane.f32.xlu0 %v7026
  %v7028 = vpop.xlane.xlu0 %7027
  %v7029 = vadd.f32 %v6912, %v6914
  %7030 = vadd.xlane.f32.xlu0 %v7029
  %v7031 = vpop.xlane.xlu0 %7030
  %v7032 = vadd.f32 %v6916, %v6918
  %7033 = vadd.xlane.f32.xlu0 %v7032
  %v7034 = vpop.xlane.xlu0 %7033
  %v7035 = vadd.f32 %v6920, %v6922
  %7036 = vadd.xlane.f32.xlu0 %v7035
  %v7037 = vpop.xlane.xlu0 %7036
  %v7038 = vadd.f32 %v6924, %v6926
  %7039 = vadd.xlane.f32.xlu0 %v7038
  %v7040 = vpop.xlane.xlu0 %7039
  %v7041 = vadd.f32 %v6928, %v6930
  %7042 = vadd.xlane.f32.xlu0 %v7041
  %v7043 = vpop.xlane.xlu0 %7042
  %v7044 = vadd.f32 %v6932, %v6934
  %7045 = vadd.xlane.f32.xlu0 %v7044
  %v7046 = vpop.xlane.xlu0 %7045
  %v7047 = vadd.f32 %v6936, %v6938
  %7048 = vadd.xlane.f32.xlu0 %v7047
  %v7049 = vpop.xlane.xlu0 %7048
  %v7050 = vadd.f32 %v6940, %v6942
  %7051 = vadd.xlane.f32.xlu0 %v7050
  %v7052 = vpop.xlane.xlu0 %7051
  %v7053 = vadd.f32 %v6944, %v6946
  %7054 = vadd.xlane.f32.xlu0 %v7053
  %v7055 = vpop.xlane.xlu0 %7054
  %v7056 = vadd.f32 %v6948, %v6950
  %7057 = vadd.xlane.f32.xlu0 %v7056
  %v7058 = vpop.xlane.xlu0 %7057
  %v7059 = vadd.f32 %v6952, %v6954
  %7060 = vadd.xlane.f32.xlu0 %v7059
  %v7061 = vpop.xlane.xlu0 %7060
  %v7062 = vadd.f32 %v6956, %v6958
  %7063 = vadd.xlane.f32.xlu0 %v7062
  %v7064 = vpop.xlane.xlu0 %7063
  %v7065 = vadd.f32 %v6960, %v6962
  %7066 = vadd.xlane.f32.xlu0 %v7065
  %v7067 = vpop.xlane.xlu0 %7066
  %v7068 = vadd.f32 %v6964, %v6966
  %7069 = vadd.xlane.f32.xlu0 %v7068
  %v7070 = vpop.xlane.xlu0 %7069
  %v7071 = vadd.f32 %v6968, %v6970
  %7072 = vadd.xlane.f32.xlu0 %v7071
  %v7073 = vpop.xlane.xlu0 %7072
  %v7074 = vadd.f32 %v6972, %v6974
  %7075 = vadd.xlane.f32.xlu0 %v7074
  %v7076 = vpop.xlane.xlu0 %7075
  %v7077 = vadd.f32 %v6976, %v6978
  %7078 = vadd.xlane.f32.xlu0 %v7077
  %v7079 = vpop.xlane.xlu0 %7078
  %v7080 = vadd.f32 %v6980, %v6982
  %7081 = vadd.xlane.f32.xlu0 %v7080
  %v7082 = vpop.xlane.xlu0 %7081
  %v7083 = vadd.f32 %v6984, %v6986
  %7084 = vadd.xlane.f32.xlu0 %v7083
  %v7085 = vpop.xlane.xlu0 %7084
  %v7086 = vadd.f32 %v6988, %v6990
  %7087 = vadd.xlane.f32.xlu0 %v7086
  %v7088 = vpop.xlane.xlu0 %7087
  %v7089 = vadd.f32 %v6992, %v6994
  %7090 = vadd.xlane.f32.xlu0 %v7089
  %v7091 = vpop.xlane.xlu0 %7090
  %v7092 = vadd.f32 %v6996, %v6998
  %7093 = vadd.xlane.f32.xlu0 %v7092
  %v7094 = vpop.xlane.xlu0 %7093
  %v7095 = vrcp.pop %v7001
  %v7096 = vmul.f32 %v6872, %v7095
  %v7097 = vmul.f32 %v6874, %v7095
  %v7098 = vrcp.pop %v7004
  %v7099 = vmul.f32 %v6876, %v7098
  %v7100 = vmul.f32 %v6878, %v7098
  %v7101 = vrcp.pop %v7007
  %v7102 = vmul.f32 %v6880, %v7101
  %v7103 = vmul.f32 %v6882, %v7101
  %v7104 = vrcp.pop %v7010
  %v7105 = vmul.f32 %v6884, %v7104
  %v7106 = vmul.f32 %v6886, %v7104
  %v7107 = vrcp.pop %v7013
  %v7108 = vmul.f32 %v6888, %v7107
  %v7109 = vmul.f32 %v6890, %v7107
  %v7110 = vrcp.pop %v7016
  %v7111 = vmul.f32 %v6892, %v7110
  %v7112 = vmul.f32 %v6894, %v7110
  %v7113 = vrcp.pop %v7019
  %v7114 = vmul.f32 %v6896, %v7113
  %v7115 = vmul.f32 %v6898, %v7113
  %v7116 = vrcp.pop %v7022
  %v7117 = vmul.f32 %v6900, %v7116
  %v7118 = vmul.f32 %v6902, %v7116
  %v7119 = vrcp.pop %v7025
  %v7120 = vmul.f32 %v6904, %v7119
  %v7121 = vmul.f32 %v6906, %v7119
  %v7122 = vrcp.pop %v7028
  %v7123 = vmul.f32 %v6908, %v7122
  %v7124 = vmul.f32 %v6910, %v7122
  %v7125 = vrcp.pop %v7031
  %v7126 = vmul.f32 %v6912, %v7125
  %v7127 = vmul.f32 %v6914, %v7125
  %v7128 = vrcp.pop %v7034
  %v7129 = vmul.f32 %v6916, %v7128
  %v7130 = vmul.f32 %v6918, %v7128
  %v7131 = vrcp.pop %v7037
  %v7132 = vmul.f32 %v6920, %v7131
  %v7133 = vmul.f32 %v6922, %v7131
  %v7134 = vrcp.pop %v7040
  %v7135 = vmul.f32 %v6924, %v7134
  %v7136 = vmul.f32 %v6926, %v7134
  %v7137 = vrcp.pop %v7043
  %v7138 = vmul.f32 %v6928, %v7137
  %v7139 = vmul.f32 %v6930, %v7137
  %v7140 = vrcp.pop %v7046
  %v7141 = vmul.f32 %v6932, %v7140
  %v7142 = vmul.f32 %v6934, %v7140
  %v7143 = vrcp.pop %v7049
  %v7144 = vmul.f32 %v6936, %v7143
  %v7145 = vmul.f32 %v6938, %v7143
  %v7146 = vrcp.pop %v7052
  %v7147 = vmul.f32 %v6940, %v7146
  %v7148 = vmul.f32 %v6942, %v7146
  %v7149 = vrcp.pop %v7055
  %v7150 = vmul.f32 %v6944, %v7149
  %v7151 = vmul.f32 %v6946, %v7149
  %v7152 = vrcp.pop %v7058
  %v7153 = vmul.f32 %v6948, %v7152
  %v7154 = vmul.f32 %v6950, %v7152
  %v7155 = vrcp.pop %v7061
  %v7156 = vmul.f32 %v6952, %v7155
  %v7157 = vmul.f32 %v6954, %v7155
  %v7158 = vrcp.pop %v7064
  %v7159 = vmul.f32 %v6956, %v7158
  %v7160 = vmul.f32 %v6958, %v7158
  %v7161 = vrcp.pop %v7067
  %v7162 = vmul.f32 %v6960, %v7161
  %v7163 = vmul.f32 %v6962, %v7161
  %v7164 = vrcp.pop %v7070
  %v7165 = vmul.f32 %v6964, %v7164
  %v7166 = vmul.f32 %v6966, %v7164
  %v7167 = vrcp.pop %v7073
  %v7168 = vmul.f32 %v6968, %v7167
  %v7169 = vmul.f32 %v6970, %v7167
  %v7170 = vrcp.pop %v7076
  %v7171 = vmul.f32 %v6972, %v7170
  %v7172 = vmul.f32 %v6974, %v7170
  %v7173 = vrcp.pop %v7079
  %v7174 = vmul.f32 %v6976, %v7173
  %v7175 = vmul.f32 %v6978, %v7173
  %v7176 = vrcp.pop %v7082
  %v7177 = vmul.f32 %v6980, %v7176
  %v7178 = vmul.f32 %v6982, %v7176
  %v7179 = vrcp.pop %v7085
  %v7180 = vmul.f32 %v6984, %v7179
  %v7181 = vmul.f32 %v6986, %v7179
  %v7182 = vrcp.pop %v7088
  %v7183 = vmul.f32 %v6988, %v7182
  %v7184 = vmul.f32 %v6990, %v7182
  %v7185 = vrcp.pop %v7091
  %v7186 = vmul.f32 %v6992, %v7185
  %v7187 = vmul.f32 %v6994, %v7185
  %v7188 = vrcp.pop %v7094
  %v7189 = vmul.f32 %v6996, %v7188
  %v7190 = vmul.f32 %v6998, %v7188
  %v7191 = vpack.c.bf16 %v7099, %v7096
  %v7192 = vpack.c.bf16 %v7100, %v7097
  %v7193 = vpack.c.bf16 %v7105, %v7102
  %v7194 = vpack.c.bf16 %v7106, %v7103
  %v7195 = vpack.c.bf16 %v7111, %v7108
  %v7196 = vpack.c.bf16 %v7112, %v7109
  %v7197 = vpack.c.bf16 %v7117, %v7114
  %v7198 = vpack.c.bf16 %v7118, %v7115
  %v7199 = vpack.c.bf16 %v7123, %v7120
  %v7200 = vpack.c.bf16 %v7124, %v7121
  %v7201 = vpack.c.bf16 %v7129, %v7126
  %v7202 = vpack.c.bf16 %v7130, %v7127
  %v7203 = vpack.c.bf16 %v7135, %v7132
  %v7204 = vpack.c.bf16 %v7136, %v7133
  %v7205 = vpack.c.bf16 %v7141, %v7138
  %v7206 = vpack.c.bf16 %v7142, %v7139
  %v7207 = vpack.c.bf16 %v7147, %v7144
  %v7208 = vpack.c.bf16 %v7148, %v7145
  %v7209 = vpack.c.bf16 %v7153, %v7150
  %v7210 = vpack.c.bf16 %v7154, %v7151
  %v7211 = vpack.c.bf16 %v7159, %v7156
  %v7212 = vpack.c.bf16 %v7160, %v7157
  %v7213 = vpack.c.bf16 %v7165, %v7162
  %v7214 = vpack.c.bf16 %v7166, %v7163
  %v7215 = vpack.c.bf16 %v7171, %v7168
  %v7216 = vpack.c.bf16 %v7172, %v7169
  %v7217 = vpack.c.bf16 %v7177, %v7174
  %v7218 = vpack.c.bf16 %v7178, %v7175
  %v7219 = vpack.c.bf16 %v7183, %v7180
  %v7220 = vpack.c.bf16 %v7184, %v7181
  %v7221 = vpack.c.bf16 %v7189, %v7186
  %v7222 = vpack.c.bf16 %v7190, %v7187
  %7223 = vrot.lane.b32.xlu0 %v6358, 48
  %v7224 = vpop.permute.xlu0 %7223
  %7225 = vrot.lane.b32.xlu0 %v6359, 48
  %v7226 = vpop.permute.xlu0 %7225
  %7227 = vrot.lane.b32.xlu0 %v6360, 48
  %v7228 = vpop.permute.xlu0 %7227
  %7229 = vrot.lane.b32.xlu0 %v6361, 48
  %v7230 = vpop.permute.xlu0 %7229
  %7231 = vrot.lane.b32.xlu0 %v6362, 48
  %v7232 = vpop.permute.xlu0 %7231
  %7233 = vrot.lane.b32.xlu0 %v6363, 48
  %v7234 = vpop.permute.xlu0 %7233
  %7235 = vrot.lane.b32.xlu0 %v6364, 48
  %v7236 = vpop.permute.xlu0 %7235
  %7237 = vrot.lane.b32.xlu0 %v6365, 48
  %v7238 = vpop.permute.xlu0 %7237
  %7239 = vrot.lane.b32.xlu0 %v6366, 48
  %v7240 = vpop.permute.xlu0 %7239
  %7241 = vrot.lane.b32.xlu0 %v6367, 48
  %v7242 = vpop.permute.xlu0 %7241
  %7243 = vrot.lane.b32.xlu0 %v6368, 48
  %v7244 = vpop.permute.xlu0 %7243
  %7245 = vrot.lane.b32.xlu0 %v6369, 48
  %v7246 = vpop.permute.xlu0 %7245
  %7247 = vrot.lane.b32.xlu0 %v6370, 48
  %v7248 = vpop.permute.xlu0 %7247
  %7249 = vrot.lane.b32.xlu0 %v6371, 48
  %v7250 = vpop.permute.xlu0 %7249
  %7251 = vrot.lane.b32.xlu0 %v6372, 48
  %v7252 = vpop.permute.xlu0 %7251
  %7253 = vrot.lane.b32.xlu0 %v6373, 48
  %v7254 = vpop.permute.xlu0 %7253
  %7271 = vmatprep.subr.bf16.mxu0 0
  %7272 = vmatpush1.bf16.msra.mxu0 %v7238
  %7273 = vmatprep.subr.bf16.mxu0 0
  %7274 = vmatpush1.bf16.msra.mxu0 %v7236
  %7275 = vmatprep.subr.bf16.mxu0 0
  %7276 = vmatpush1.bf16.msra.mxu0 %v7234
  %7277 = vmatprep.subr.bf16.mxu0 0
  %7278 = vmatpush1.bf16.msra.mxu0 %v7232
  %7279 = vmatprep.subr.bf16.mxu0 0
  %7280 = vmatpush1.bf16.msra.mxu0 %v7230
  %7281 = vmatprep.subr.bf16.mxu0 0
  %7282 = vmatpush1.bf16.msra.mxu0 %v7228
  %7283 = vmatprep.subr.bf16.mxu0 0
  %7284 = vmatpush1.bf16.msra.mxu0 %v7226
  %7285 = vmatprep.subr.bf16.mxu0 0
  %7286 = vmatpush1.bf16.msra.mxu0 %v7224
  %7287 = vmatprep.subr.bf16.mxu0 0
  %7288 = vmatpush2.bf16.msra.mxu0 %v7254
  %7289 = vmatprep.subr.bf16.mxu0 0
  %7290 = vmatpush2.bf16.msra.mxu0 %v7252
  %7291 = vmatprep.subr.bf16.mxu0 0
  %7292 = vmatpush2.bf16.msra.mxu0 %v7250
  %7293 = vmatprep.subr.bf16.mxu0 0
  %7294 = vmatpush2.bf16.msra.mxu0 %v7248
  %7295 = vmatprep.subr.bf16.mxu0 0
  %7296 = vmatpush2.bf16.msra.mxu0 %v7246
  %7297 = vmatprep.subr.bf16.mxu0 0
  %7298 = vmatpush2.bf16.msra.mxu0 %v7244
  %7299 = vmatprep.subr.bf16.mxu0 0
  %7300 = vmatpush2.bf16.msra.mxu0 %v7242
  %7301 = vmatprep.subr.bf16.mxu0 0
  %7302 = vmatpush2.bf16.msra.mxu0 %v7240
  %7303 = vmatprep.mubr.bf16.mxu0 %v7192
  %7304 = vmatmul.mubr.bf16.gmra.mxu0 %v7191
  %v7305 = vpop.f32.mrf.mxu0
  %v7306 = vadd.f32 0.0, %v7305
  %v7307 = vpop.f32.mrf.mxu0
  %v7308 = vpop.f32.mrf.mxu0
  %v7309 = vadd.f32 0.0, %v7308
  %v7310 = vpop.f32.mrf.mxu0
  %7311 = vmatprep.mubr.bf16.mxu0 %v7194
  %7312 = vmatmul.mubr.bf16.gmra.mxu0 %v7193
  %v7313 = vpop.f32.mrf.mxu0
  %v7314 = vadd.f32 0.0, %v7313
  %v7315 = vpop.f32.mrf.mxu0
  %v7316 = vpop.f32.mrf.mxu0
  %v7317 = vadd.f32 0.0, %v7316
  %v7318 = vpop.f32.mrf.mxu0
  %7319 = vmatprep.mubr.bf16.mxu0 %v7196
  %7320 = vmatmul.mubr.bf16.gmra.mxu0 %v7195
  %v7321 = vpop.f32.mrf.mxu0
  %v7322 = vadd.f32 0.0, %v7321
  %v7323 = vpop.f32.mrf.mxu0
  %v7324 = vpop.f32.mrf.mxu0
  %v7325 = vadd.f32 0.0, %v7324
  %v7326 = vpop.f32.mrf.mxu0
  %7327 = vmatprep.mubr.bf16.mxu0 %v7198
  %7328 = vmatmul.mubr.bf16.gmra.mxu0 %v7197
  %v7329 = vpop.f32.mrf.mxu0
  %v7330 = vadd.f32 0.0, %v7329
  %v7331 = vpop.f32.mrf.mxu0
  %v7332 = vpop.f32.mrf.mxu0
  %v7333 = vadd.f32 0.0, %v7332
  %v7334 = vpop.f32.mrf.mxu0
  %7335 = vmatprep.mubr.bf16.mxu0 %v7200
  %7336 = vmatmul.mubr.bf16.gmra.mxu0 %v7199
  %v7337 = vpop.f32.mrf.mxu0
  %v7338 = vadd.f32 0.0, %v7337
  %v7339 = vpop.f32.mrf.mxu0
  %v7340 = vpop.f32.mrf.mxu0
  %v7341 = vadd.f32 0.0, %v7340
  %v7342 = vpop.f32.mrf.mxu0
  %7343 = vmatprep.mubr.bf16.mxu0 %v7202
  %7344 = vmatmul.mubr.bf16.gmra.mxu0 %v7201
  %v7345 = vpop.f32.mrf.mxu0
  %v7346 = vadd.f32 0.0, %v7345
  %v7347 = vpop.f32.mrf.mxu0
  %v7348 = vpop.f32.mrf.mxu0
  %v7349 = vadd.f32 0.0, %v7348
  %v7350 = vpop.f32.mrf.mxu0
  %7351 = vmatprep.mubr.bf16.mxu0 %v7204
  %7352 = vmatmul.mubr.bf16.gmra.mxu0 %v7203
  %v7353 = vpop.f32.mrf.mxu0
  %v7354 = vadd.f32 0.0, %v7353
  %v7355 = vpop.f32.mrf.mxu0
  %v7356 = vpop.f32.mrf.mxu0
  %v7357 = vadd.f32 0.0, %v7356
  %v7358 = vpop.f32.mrf.mxu0
  %7359 = vmatprep.mubr.bf16.mxu0 %v7206
  %7360 = vmatmul.mubr.bf16.gmra.mxu0 %v7205
  %v7361 = vpop.f32.mrf.mxu0
  %v7362 = vadd.f32 0.0, %v7361
  %v7363 = vpop.f32.mrf.mxu0
  %v7364 = vpop.f32.mrf.mxu0
  %v7365 = vadd.f32 0.0, %v7364
  %v7366 = vpop.f32.mrf.mxu0
  %7367 = vmatprep.mubr.bf16.mxu0 %v7208
  %7368 = vmatmul.mubr.bf16.gmra.mxu0 %v7207
  %v7369 = vpop.f32.mrf.mxu0
  %v7370 = vadd.f32 0.0, %v7369
  %v7371 = vpop.f32.mrf.mxu0
  %v7372 = vpop.f32.mrf.mxu0
  %v7373 = vadd.f32 0.0, %v7372
  %v7374 = vpop.f32.mrf.mxu0
  %7375 = vmatprep.mubr.bf16.mxu0 %v7210
  %7376 = vmatmul.mubr.bf16.gmra.mxu0 %v7209
  %v7377 = vpop.f32.mrf.mxu0
  %v7378 = vadd.f32 0.0, %v7377
  %v7379 = vpop.f32.mrf.mxu0
  %v7380 = vpop.f32.mrf.mxu0
  %v7381 = vadd.f32 0.0, %v7380
  %v7382 = vpop.f32.mrf.mxu0
  %7383 = vmatprep.mubr.bf16.mxu0 %v7212
  %7384 = vmatmul.mubr.bf16.gmra.mxu0 %v7211
  %v7385 = vpop.f32.mrf.mxu0
  %v7386 = vadd.f32 0.0, %v7385
  %v7387 = vpop.f32.mrf.mxu0
  %v7388 = vpop.f32.mrf.mxu0
  %v7389 = vadd.f32 0.0, %v7388
  %v7390 = vpop.f32.mrf.mxu0
  %7391 = vmatprep.mubr.bf16.mxu0 %v7214
  %7392 = vmatmul.mubr.bf16.gmra.mxu0 %v7213
  %v7393 = vpop.f32.mrf.mxu0
  %v7394 = vadd.f32 0.0, %v7393
  %v7395 = vpop.f32.mrf.mxu0
  %v7396 = vpop.f32.mrf.mxu0
  %v7397 = vadd.f32 0.0, %v7396
  %v7398 = vpop.f32.mrf.mxu0
  %7399 = vmatprep.mubr.bf16.mxu0 %v7216
  %7400 = vmatmul.mubr.bf16.gmra.mxu0 %v7215
  %v7401 = vpop.f32.mrf.mxu0
  %v7402 = vadd.f32 0.0, %v7401
  %v7403 = vpop.f32.mrf.mxu0
  %v7404 = vpop.f32.mrf.mxu0
  %v7405 = vadd.f32 0.0, %v7404
  %v7406 = vpop.f32.mrf.mxu0
  %7407 = vmatprep.mubr.bf16.mxu0 %v7218
  %7408 = vmatmul.mubr.bf16.gmra.mxu0 %v7217
  %v7409 = vpop.f32.mrf.mxu0
  %v7410 = vadd.f32 0.0, %v7409
  %v7411 = vpop.f32.mrf.mxu0
  %v7412 = vpop.f32.mrf.mxu0
  %v7413 = vadd.f32 0.0, %v7412
  %v7414 = vpop.f32.mrf.mxu0
  %7415 = vmatprep.mubr.bf16.mxu0 %v7220
  %7416 = vmatmul.mubr.bf16.gmra.mxu0 %v7219
  %v7417 = vpop.f32.mrf.mxu0
  %v7418 = vadd.f32 0.0, %v7417
  %v7419 = vpop.f32.mrf.mxu0
  %v7420 = vpop.f32.mrf.mxu0
  %v7421 = vadd.f32 0.0, %v7420
  %v7422 = vpop.f32.mrf.mxu0
  %7423 = vmatprep.mubr.bf16.mxu0 %v7222
  %7424 = vmatmul.mubr.bf16.gmra.mxu0 %v7221
  %v7425 = vpop.f32.mrf.mxu0
  %v7426 = vadd.f32 0.0, %v7425
  %v7427 = vpop.f32.mrf.mxu0
  %v7428 = vpop.f32.mrf.mxu0
  %v7429 = vadd.f32 0.0, %v7428
  %v7430 = vpop.f32.mrf.mxu0
  %7431 = vdwg.mxu0
  %7440 = vrot.lane.b32.xlu0 %v7338, 10
  %v7441 = vpop.permute.xlu0 %7440
  %7442 = vrot.lane.b32.xlu0 %v7341, 10
  %v7443 = vpop.permute.xlu0 %7442
  %7444 = vrot.lane.b32.xlu0 %v7346, 10
  %v7445 = vpop.permute.xlu0 %7444
  %7446 = vrot.lane.b32.xlu0 %v7349, 10
  %v7447 = vpop.permute.xlu0 %7446
  %7448 = vrot.lane.b32.xlu0 %v7354, 10
  %v7449 = vpop.permute.xlu0 %7448
  %7450 = vrot.lane.b32.xlu0 %v7357, 10
  %v7451 = vpop.permute.xlu0 %7450
  %7452 = vrot.lane.b32.xlu0 %v7362, 10
  %v7453 = vpop.permute.xlu0 %7452
  %7454 = vrot.lane.b32.xlu0 %v7365, 10
  %v7455 = vpop.permute.xlu0 %7454
  %7472 = vrot.lane.b32.xlu0 %v7370, 20
  %v7473 = vpop.permute.xlu0 %7472
  %7474 = vrot.lane.b32.xlu0 %v7373, 20
  %v7475 = vpop.permute.xlu0 %7474
  %7476 = vrot.lane.b32.xlu0 %v7378, 20
  %v7477 = vpop.permute.xlu0 %7476
  %7478 = vrot.lane.b32.xlu0 %v7381, 20
  %v7479 = vpop.permute.xlu0 %7478
  %7480 = vrot.lane.b32.xlu0 %v7386, 20
  %v7481 = vpop.permute.xlu0 %7480
  %7482 = vrot.lane.b32.xlu0 %v7389, 20
  %v7483 = vpop.permute.xlu0 %7482
  %7484 = vrot.lane.b32.xlu0 %v7394, 20
  %v7485 = vpop.permute.xlu0 %7484
  %7486 = vrot.lane.b32.xlu0 %v7397, 20
  %v7487 = vpop.permute.xlu0 %7486
  %7504 = vrot.lane.b32.xlu0 %v7402, 30
  %v7505 = vpop.permute.xlu0 %7504
  %7506 = vrot.lane.b32.xlu0 %v7405, 30
  %v7507 = vpop.permute.xlu0 %7506
  %7508 = vrot.lane.b32.xlu0 %v7410, 30
  %v7509 = vpop.permute.xlu0 %7508
  %7510 = vrot.lane.b32.xlu0 %v7413, 30
  %v7511 = vpop.permute.xlu0 %7510
  %7512 = vrot.lane.b32.xlu0 %v7418, 30
  %v7513 = vpop.permute.xlu0 %7512
  %7514 = vrot.lane.b32.xlu0 %v7421, 30
  %v7515 = vpop.permute.xlu0 %7514
  %7516 = vrot.lane.b32.xlu0 %v7426, 30
  %v7517 = vpop.permute.xlu0 %7516
  %7518 = vrot.lane.b32.xlu0 %v7429, 30
  %v7519 = vpop.permute.xlu0 %7518
  %v7528 = vsel %vm473, %v7306, %v7441
  %v7529 = vsel %vm473, %v7309, %v7443
  %v7530 = vsel %vm473, %v7314, %v7445
  %v7531 = vsel %vm473, %v7317, %v7447
  %v7532 = vsel %vm473, %v7322, %v7449
  %v7533 = vsel %vm473, %v7325, %v7451
  %v7534 = vsel %vm473, %v7330, %v7453
  %v7535 = vsel %vm473, %v7333, %v7455
  %v7536 = vsel %vm1588, %v7528, %v7473
  %v7537 = vsel %vm1588, %v7529, %v7475
  %v7538 = vsel %vm1588, %v7530, %v7477
  %v7539 = vsel %vm1588, %v7531, %v7479
  %v7540 = vsel %vm1588, %v7532, %v7481
  %v7541 = vsel %vm1588, %v7533, %v7483
  %v7542 = vsel %vm1588, %v7534, %v7485
  %v7543 = vsel %vm1588, %v7535, %v7487
  %v7544 = vsel %vm1597, %v7536, %v7505
  %v7545 = vsel %vm1597, %v7537, %v7507
  %v7546 = vsel %vm1597, %v7538, %v7509
  %v7547 = vsel %vm1597, %v7539, %v7511
  %v7548 = vsel %vm1597, %v7540, %v7513
  %v7549 = vsel %vm1597, %v7541, %v7515
  %v7550 = vsel %vm1597, %v7542, %v7517
  %v7551 = vsel %vm1597, %v7543, %v7519
  %v7552 = vpack.c.bf16 %v7545, %v7544
  %v7553 = vpack.c.bf16 %v7547, %v7546
  %v7554 = vpack.c.bf16 %v7549, %v7548
  %v7555 = vpack.c.bf16 %v7551, %v7550
  %v7556 = vld [vmem:[%s1 + $0x104] sm:$0xf]
  %v7557 = vld [vmem:[%s1 + $0x108] sm:$0xf]
  %v7558 = vld [vmem:[%s1 + $0x10c] sm:$0xf]
  %v7559 = vld [vmem:[%s1 + $0x110] sm:$0xf]
  %v7560 = vld [vmem:[%s1 + $0x114] sm:$0xf]
  %v7561 = vlaneseq
  %v7562 = vshrl.u32 %v7561, 7
  %v7563 = vsub.s32 1, %v7562
  %v7564 = vrot.slane %v21, %v7563
  %v7570 = vunpack.c.l.b16 %v7556
  %v7571 = vunpack.c.l.b16 %v7557
  %v7572 = vunpack.c.l.b16 %v7558
  %v7573 = vunpack.c.l.b16 %v7559
  %v7574 = vunpack.c.l.b16 %v7560
  %v7575 = vpack.c.b16 %v7571, %v7570
  %v7576 = vpack.c.b16 %v7573, %v7572
  %v7577 = vpack.c.b16 %v7574, %v7574
  %v7581 = vsel %vm94, %v7552, 0
  %v7584 = vsel %vm94, %v7553, 0
  %v7587 = vsel %vm94, %v7554, 0
  %v7590 = vsel %vm94, %v7555, 0
  %v7593 = vsel %vm260, %v7577, 0
  %7595 = vmatprep.subr.bf16.mxu0 0
  %7596 = vmatpush1.bf16.msra.mxu0 0
  %7597 = vmatprep.subr.bf16.mxu0 0
  %7598 = vmatpush1.bf16.msra.mxu0 0
  %7599 = vmatprep.subr.bf16.mxu0 0
  %7600 = vmatpush1.bf16.msra.mxu0 0
  %7601 = vmatprep.subr.bf16.mxu0 0
  %7602 = vmatpush1.bf16.msra.mxu0 0
  %7603 = vmatprep.subr.bf16.mxu0 0
  %7604 = vmatpush1.bf16.msra.mxu0 0
  %7605 = vmatprep.subr.bf16.mxu0 0
  %7606 = vmatpush1.bf16.msra.mxu0 %v7593
  %7607 = vmatprep.subr.bf16.mxu0 0
  %7608 = vmatpush1.bf16.msra.mxu0 %v7576
  %7609 = vmatprep.subr.bf16.mxu0 0
  %7610 = vmatpush1.bf16.msra.mxu0 %v7575
  %7611 = vmatprep.subr.bf16.mxu0 0
  %7612 = vmatpush2.bf16.msra.mxu0 0
  %7613 = vmatprep.subr.bf16.mxu0 0
  %7614 = vmatpush2.bf16.msra.mxu0 0
  %7615 = vmatprep.subr.bf16.mxu0 0
  %7616 = vmatpush2.bf16.msra.mxu0 0
  %7617 = vmatprep.subr.bf16.mxu0 0
  %7618 = vmatpush2.bf16.msra.mxu0 0
  %7619 = vmatprep.subr.bf16.mxu0 0
  %7620 = vmatpush2.bf16.msra.mxu0 0
  %7621 = vmatprep.subr.bf16.mxu0 0
  %7622 = vmatpush2.bf16.msra.mxu0 0
  %7623 = vmatprep.subr.bf16.mxu0 0
  %7624 = vmatpush2.bf16.msra.mxu0 0
  %7625 = vmatprep.subr.bf16.mxu0 0
  %7626 = vmatpush2.bf16.msra.mxu0 0
  %7627 = vmatprep.mubr.bf16.mxu0 0
  %7628 = vmatmul.mubr.bf16.gmra.mxu0 %v7581
  %v7629 = vpop.f32.mrf.mxu0
  %v7630 = vadd.f32 %v7564, %v7629
  %v7631 = vpop.f32.mrf.mxu0
  %v7632 = vpop.f32.mrf.mxu0
  %v7633 = vadd.f32 %v7564, %v7632
  %v7634 = vpop.f32.mrf.mxu0
  %7635 = vmatprep.mubr.bf16.mxu0 0
  %7636 = vmatmul.mubr.bf16.gmra.mxu0 %v7584
  %v7637 = vpop.f32.mrf.mxu0
  %v7638 = vadd.f32 %v7564, %v7637
  %v7639 = vpop.f32.mrf.mxu0
  %v7640 = vpop.f32.mrf.mxu0
  %v7641 = vadd.f32 %v7564, %v7640
  %v7642 = vpop.f32.mrf.mxu0
  %7643 = vmatprep.mubr.bf16.mxu0 0
  %7644 = vmatmul.mubr.bf16.gmra.mxu0 %v7587
  %v7645 = vpop.f32.mrf.mxu0
  %v7646 = vadd.f32 %v7564, %v7645
  %v7647 = vpop.f32.mrf.mxu0
  %v7648 = vpop.f32.mrf.mxu0
  %v7649 = vadd.f32 %v7564, %v7648
  %v7650 = vpop.f32.mrf.mxu0
  %7651 = vmatprep.mubr.bf16.mxu0 0
  %7652 = vmatmul.mubr.bf16.gmra.mxu0 %v7590
  %v7653 = vpop.f32.mrf.mxu0
  %v7654 = vadd.f32 %v7564, %v7653
  %v7655 = vpop.f32.mrf.mxu0
  %v7656 = vpop.f32.mrf.mxu0
  %v7657 = vadd.f32 %v7564, %v7656
  %v7658 = vpop.f32.mrf.mxu0
  %7659 = vdwg.mxu0
  %v7660 = vadd.f32 %v6166, %v7630
  %v7661 = vadd.f32 %v6167, %v7633
  %v7662 = vadd.f32 %v6168, %v7638
  %v7663 = vadd.f32 %v6169, %v7641
  %v7664 = vadd.f32 %v6170, %v7646
  %v7665 = vadd.f32 %v6171, %v7649
  %v7666 = vadd.f32 %v6172, %v7654
  %v7667 = vadd.f32 %v6173, %v7657
  %v7668 = vsel %vm94, %v7660, 0.0
  %7669 = vadd.xlane.f32.xlu0 %v7668
  %v7670 = vpop.xlane.xlu0 %7669
  %v7671 = vsel %vm94, %v7661, 0.0
  %7672 = vadd.xlane.f32.xlu0 %v7671
  %v7673 = vpop.xlane.xlu0 %7672
  %v7674 = vsel %vm94, %v7662, 0.0
  %7675 = vadd.xlane.f32.xlu0 %v7674
  %v7676 = vpop.xlane.xlu0 %7675
  %v7677 = vsel %vm94, %v7663, 0.0
  %7678 = vadd.xlane.f32.xlu0 %v7677
  %v7679 = vpop.xlane.xlu0 %7678
  %v7680 = vsel %vm94, %v7664, 0.0
  %7681 = vadd.xlane.f32.xlu0 %v7680
  %v7682 = vpop.xlane.xlu0 %7681
  %v7683 = vsel %vm94, %v7665, 0.0
  %7684 = vadd.xlane.f32.xlu0 %v7683
  %v7685 = vpop.xlane.xlu0 %7684
  %v7686 = vsel %vm94, %v7666, 0.0
  %7687 = vadd.xlane.f32.xlu0 %v7686
  %v7688 = vpop.xlane.xlu0 %7687
  %v7689 = vsel %vm94, %v7667, 0.0
  %7690 = vadd.xlane.f32.xlu0 %v7689
  %v7691 = vpop.xlane.xlu0 %7690
  %v7692 = vmul.f32 %v7670, %v119
  %v7693 = vmul.f32 %v7673, %v119
  %v7694 = vmul.f32 %v7676, %v119
  %v7695 = vmul.f32 %v7679, %v119
  %v7696 = vmul.f32 %v7682, %v119
  %v7697 = vmul.f32 %v7685, %v119
  %v7698 = vmul.f32 %v7688, %v119
  %v7699 = vmul.f32 %v7691, %v119
  %v7700 = vsub.f32 %v7660, %v7692
  %v7701 = vsub.f32 %v7661, %v7693
  %v7702 = vsub.f32 %v7662, %v7694
  %v7703 = vsub.f32 %v7663, %v7695
  %v7704 = vsub.f32 %v7664, %v7696
  %v7705 = vsub.f32 %v7665, %v7697
  %v7706 = vsub.f32 %v7666, %v7698
  %v7707 = vsub.f32 %v7667, %v7699
  %v7708 = vmul.f32 %v7700, %v7700
  %v7709 = vmul.f32 %v7701, %v7701
  %v7710 = vmul.f32 %v7702, %v7702
  %v7711 = vmul.f32 %v7703, %v7703
  %v7712 = vmul.f32 %v7704, %v7704
  %v7713 = vmul.f32 %v7705, %v7705
  %v7714 = vmul.f32 %v7706, %v7706
  %v7715 = vmul.f32 %v7707, %v7707
  %v7716 = vsel %vm94, %v7708, 0.0
  %7717 = vadd.xlane.f32.xlu0 %v7716
  %v7718 = vpop.xlane.xlu0 %7717
  %v7719 = vsel %vm94, %v7709, 0.0
  %7720 = vadd.xlane.f32.xlu0 %v7719
  %v7721 = vpop.xlane.xlu0 %7720
  %v7722 = vsel %vm94, %v7710, 0.0
  %7723 = vadd.xlane.f32.xlu0 %v7722
  %v7724 = vpop.xlane.xlu0 %7723
  %v7725 = vsel %vm94, %v7711, 0.0
  %7726 = vadd.xlane.f32.xlu0 %v7725
  %v7727 = vpop.xlane.xlu0 %7726
  %v7728 = vsel %vm94, %v7712, 0.0
  %7729 = vadd.xlane.f32.xlu0 %v7728
  %v7730 = vpop.xlane.xlu0 %7729
  %v7731 = vsel %vm94, %v7713, 0.0
  %7732 = vadd.xlane.f32.xlu0 %v7731
  %v7733 = vpop.xlane.xlu0 %7732
  %v7734 = vsel %vm94, %v7714, 0.0
  %7735 = vadd.xlane.f32.xlu0 %v7734
  %v7736 = vpop.xlane.xlu0 %7735
  %v7737 = vsel %vm94, %v7715, 0.0
  %7738 = vadd.xlane.f32.xlu0 %v7737
  %v7739 = vpop.xlane.xlu0 %7738
  %v7740 = vmul.f32 %v7718, %v119
  %v7741 = vmul.f32 %v7721, %v119
  %v7742 = vmul.f32 %v7724, %v119
  %v7743 = vmul.f32 %v7727, %v119
  %v7744 = vmul.f32 %v7730, %v119
  %v7745 = vmul.f32 %v7733, %v119
  %v7746 = vmul.f32 %v7736, %v119
  %v7747 = vmul.f32 %v7739, %v119
  %v7748 = vadd.f32 %v7740, 1e-05
  %v7749 = vadd.f32 %v7741, 1e-05
  %v7750 = vadd.f32 %v7742, 1e-05
  %v7751 = vadd.f32 %v7743, 1e-05
  %v7752 = vadd.f32 %v7744, 1e-05
  %v7753 = vadd.f32 %v7745, 1e-05
  %v7754 = vadd.f32 %v7746, 1e-05
  %v7755 = vadd.f32 %v7747, 1e-05
  %v7756 = vrsqrt.pop %v7748
  %v7757 = vrsqrt.pop %v7749
  %v7758 = vrsqrt.pop %v7750
  %v7759 = vrsqrt.pop %v7751
  %v7760 = vrsqrt.pop %v7752
  %v7761 = vrsqrt.pop %v7753
  %v7762 = vrsqrt.pop %v7754
  %v7763 = vrsqrt.pop %v7755
  %v7764 = vmul.f32 %v7700, %v7756
  %v7765 = vmul.f32 %v7701, %v7757
  %v7766 = vmul.f32 %v7702, %v7758
  %v7767 = vmul.f32 %v7703, %v7759
  %v7768 = vmul.f32 %v7704, %v7760
  %v7769 = vmul.f32 %v7705, %v7761
  %v7770 = vmul.f32 %v7706, %v7762
  %v7771 = vmul.f32 %v7707, %v7763
  %v7772 = vlaneseq
  %v7773 = vshrl.u32 %v7772, 7
  %v7774 = vsub.s32 7, %v7773
  %v7775 = vrot.slane %v20, %v7774
  %v7776 = vmul.f32 %v7764, %v7775
  %v7777 = vmul.f32 %v7765, %v7775
  %v7778 = vmul.f32 %v7766, %v7775
  %v7779 = vmul.f32 %v7767, %v7775
  %v7780 = vmul.f32 %v7768, %v7775
  %v7781 = vmul.f32 %v7769, %v7775
  %v7782 = vmul.f32 %v7770, %v7775
  %v7783 = vmul.f32 %v7771, %v7775
  %v7784 = vlaneseq
  %v7785 = vshrl.u32 %v7784, 7
  %v7786 = vsub.s32 0, %v7785
  %v7787 = vrot.slane %v21, %v7786
  %v7788 = vadd.f32 %v7776, %v7787
  %v7789 = vadd.f32 %v7777, %v7787
  %v7790 = vadd.f32 %v7778, %v7787
  %v7791 = vadd.f32 %v7779, %v7787
  %v7792 = vadd.f32 %v7780, %v7787
  %v7793 = vadd.f32 %v7781, %v7787
  %v7794 = vadd.f32 %v7782, %v7787
  %v7795 = vadd.f32 %v7783, %v7787
  %v7796 = vpack.c.bf16 %v7789, %v7788
  %v7797 = vpack.c.bf16 %v7791, %v7790
  %v7798 = vpack.c.bf16 %v7793, %v7792
  %v7799 = vpack.c.bf16 %v7795, %v7794
  %v7800 = vld [vmem:[%s1 + $0x118] sm:$0xf]
  %v7801 = vld [vmem:[%s1 + $0x11c] sm:$0xf]
  %v7802 = vld [vmem:[%s1 + $0x120] sm:$0xf]
  %v7803 = vld [vmem:[%s1 + $0x124] sm:$0xf]
  %v7804 = vld [vmem:[%s1 + $0x128] sm:$0xf]
  %v7805 = vlaneseq
  %v7806 = vshrl.u32 %v7805, 7
  %v7807 = vsub.s32 2, %v7806
  %v7808 = vrot.slane %v21, %v7807
  %v7814 = vunpack.c.l.b16 %v7800
  %v7815 = vunpack.c.l.b16 %v7801
  %v7816 = vunpack.c.l.b16 %v7802
  %v7817 = vunpack.c.l.b16 %v7803
  %v7818 = vunpack.c.l.b16 %v7804
  %v7819 = vpack.c.b16 %v7815, %v7814
  %v7820 = vpack.c.b16 %v7817, %v7816
  %v7821 = vpack.c.b16 %v7818, %v7818
  %v7825 = vsel %vm94, %v7796, 0
  %v7828 = vsel %vm94, %v7797, 0
  %v7831 = vsel %vm94, %v7798, 0
  %v7834 = vsel %vm94, %v7799, 0
  %v7837 = vsel %vm260, %v7821, 0
  %7839 = vmatprep.subr.bf16.mxu0 0
  %7840 = vmatpush1.bf16.msra.mxu0 0
  %7841 = vmatprep.subr.bf16.mxu0 0
  %7842 = vmatpush1.bf16.msra.mxu0 0
  %7843 = vmatprep.subr.bf16.mxu0 0
  %7844 = vmatpush1.bf16.msra.mxu0 0
  %7845 = vmatprep.subr.bf16.mxu0 0
  %7846 = vmatpush1.bf16.msra.mxu0 0
  %7847 = vmatprep.subr.bf16.mxu0 0
  %7848 = vmatpush1.bf16.msra.mxu0 0
  %7849 = vmatprep.subr.bf16.mxu0 0
  %7850 = vmatpush1.bf16.msra.mxu0 %v7837
  %7851 = vmatprep.subr.bf16.mxu0 0
  %7852 = vmatpush1.bf16.msra.mxu0 %v7820
  %7853 = vmatprep.subr.bf16.mxu0 0
  %7854 = vmatpush1.bf16.msra.mxu0 %v7819
  %7855 = vmatprep.subr.bf16.mxu0 0
  %7856 = vmatpush2.bf16.msra.mxu0 0
  %7857 = vmatprep.subr.bf16.mxu0 0
  %7858 = vmatpush2.bf16.msra.mxu0 0
  %7859 = vmatprep.subr.bf16.mxu0 0
  %7860 = vmatpush2.bf16.msra.mxu0 0
  %7861 = vmatprep.subr.bf16.mxu0 0
  %7862 = vmatpush2.bf16.msra.mxu0 0
  %7863 = vmatprep.subr.bf16.mxu0 0
  %7864 = vmatpush2.bf16.msra.mxu0 0
  %7865 = vmatprep.subr.bf16.mxu0 0
  %7866 = vmatpush2.bf16.msra.mxu0 0
  %7867 = vmatprep.subr.bf16.mxu0 0
  %7868 = vmatpush2.bf16.msra.mxu0 0
  %7869 = vmatprep.subr.bf16.mxu0 0
  %7870 = vmatpush2.bf16.msra.mxu0 0
  %7871 = vmatprep.mubr.bf16.mxu0 0
  %7872 = vmatmul.mubr.bf16.gmra.mxu0 %v7825
  %v7873 = vpop.f32.mrf.mxu0
  %v7874 = vadd.f32 %v7808, %v7873
  %v7875 = vpop.f32.mrf.mxu0
  %v7876 = vpop.f32.mrf.mxu0
  %v7877 = vadd.f32 %v7808, %v7876
  %v7878 = vpop.f32.mrf.mxu0
  %7879 = vmatprep.mubr.bf16.mxu0 0
  %7880 = vmatmul.mubr.bf16.gmra.mxu0 %v7828
  %v7881 = vpop.f32.mrf.mxu0
  %v7882 = vadd.f32 %v7808, %v7881
  %v7883 = vpop.f32.mrf.mxu0
  %v7884 = vpop.f32.mrf.mxu0
  %v7885 = vadd.f32 %v7808, %v7884
  %v7886 = vpop.f32.mrf.mxu0
  %7887 = vmatprep.mubr.bf16.mxu0 0
  %7888 = vmatmul.mubr.bf16.gmra.mxu0 %v7831
  %v7889 = vpop.f32.mrf.mxu0
  %v7890 = vadd.f32 %v7808, %v7889
  %v7891 = vpop.f32.mrf.mxu0
  %v7892 = vpop.f32.mrf.mxu0
  %v7893 = vadd.f32 %v7808, %v7892
  %v7894 = vpop.f32.mrf.mxu0
  %7895 = vmatprep.mubr.bf16.mxu0 0
  %7896 = vmatmul.mubr.bf16.gmra.mxu0 %v7834
  %v7897 = vpop.f32.mrf.mxu0
  %v7898 = vadd.f32 %v7808, %v7897
  %v7899 = vpop.f32.mrf.mxu0
  %v7900 = vpop.f32.mrf.mxu0
  %v7901 = vadd.f32 %v7808, %v7900
  %v7902 = vpop.f32.mrf.mxu0
  %7903 = vdwg.mxu0
  %v7904 = vmax.f32 %v7874, 0.0
  %v7905 = vmax.f32 %v7877, 0.0
  %v7906 = vmax.f32 %v7882, 0.0
  %v7907 = vmax.f32 %v7885, 0.0
  %v7908 = vmax.f32 %v7890, 0.0
  %v7909 = vmax.f32 %v7893, 0.0
  %v7910 = vmax.f32 %v7898, 0.0
  %v7911 = vmax.f32 %v7901, 0.0
  %v7912 = vpack.c.bf16 %v7905, %v7904
  %v7913 = vpack.c.bf16 %v7907, %v7906
  %v7914 = vpack.c.bf16 %v7909, %v7908
  %v7915 = vpack.c.bf16 %v7911, %v7910
  %v7916 = vld [vmem:[%s1 + $0x12c] sm:$0xf]
  %v7917 = vld [vmem:[%s1 + $0x130] sm:$0xf]
  %v7918 = vld [vmem:[%s1 + $0x134] sm:$0xf]
  %v7919 = vld [vmem:[%s1 + $0x138] sm:$0xf]
  %v7920 = vld [vmem:[%s1 + $0x13c] sm:$0xf]
  %v7921 = vlaneseq
  %v7922 = vshrl.u32 %v7921, 7
  %v7923 = vsub.s32 3, %v7922
  %v7924 = vrot.slane %v21, %v7923
  %v7930 = vunpack.c.l.b16 %v7916
  %v7931 = vunpack.c.l.b16 %v7917
  %v7932 = vunpack.c.l.b16 %v7918
  %v7933 = vunpack.c.l.b16 %v7919
  %v7934 = vunpack.c.l.b16 %v7920
  %v7935 = vpack.c.b16 %v7931, %v7930
  %v7936 = vpack.c.b16 %v7933, %v7932
  %v7937 = vpack.c.b16 %v7934, %v7934
  %v7941 = vsel %vm94, %v7912, 0
  %v7944 = vsel %vm94, %v7913, 0
  %v7947 = vsel %vm94, %v7914, 0
  %v7950 = vsel %vm94, %v7915, 0
  %v7953 = vsel %vm260, %v7937, 0
  %7955 = vmatprep.subr.bf16.mxu0 0
  %7956 = vmatpush1.bf16.msra.mxu0 0
  %7957 = vmatprep.subr.bf16.mxu0 0
  %7958 = vmatpush1.bf16.msra.mxu0 0
  %7959 = vmatprep.subr.bf16.mxu0 0
  %7960 = vmatpush1.bf16.msra.mxu0 0
  %7961 = vmatprep.subr.bf16.mxu0 0
  %7962 = vmatpush1.bf16.msra.mxu0 0
  %7963 = vmatprep.subr.bf16.mxu0 0
  %7964 = vmatpush1.bf16.msra.mxu0 0
  %7965 = vmatprep.subr.bf16.mxu0 0
  %7966 = vmatpush1.bf16.msra.mxu0 %v7953
  %7967 = vmatprep.subr.bf16.mxu0 0
  %7968 = vmatpush1.bf16.msra.mxu0 %v7936
  %7969 = vmatprep.subr.bf16.mxu0 0
  %7970 = vmatpush1.bf16.msra.mxu0 %v7935
  %7971 = vmatprep.subr.bf16.mxu0 0
  %7972 = vmatpush2.bf16.msra.mxu0 0
  %7973 = vmatprep.subr.bf16.mxu0 0
  %7974 = vmatpush2.bf16.msra.mxu0 0
  %7975 = vmatprep.subr.bf16.mxu0 0
  %7976 = vmatpush2.bf16.msra.mxu0 0
  %7977 = vmatprep.subr.bf16.mxu0 0
  %7978 = vmatpush2.bf16.msra.mxu0 0
  %7979 = vmatprep.subr.bf16.mxu0 0
  %7980 = vmatpush2.bf16.msra.mxu0 0
  %7981 = vmatprep.subr.bf16.mxu0 0
  %7982 = vmatpush2.bf16.msra.mxu0 0
  %7983 = vmatprep.subr.bf16.mxu0 0
  %7984 = vmatpush2.bf16.msra.mxu0 0
  %7985 = vmatprep.subr.bf16.mxu0 0
  %7986 = vmatpush2.bf16.msra.mxu0 0
  %7987 = vmatprep.mubr.bf16.mxu0 0
  %7988 = vmatmul.mubr.bf16.gmra.mxu0 %v7941
  %v7989 = vpop.f32.mrf.mxu0
  %v7990 = vadd.f32 %v7924, %v7989
  %v7991 = vpop.f32.mrf.mxu0
  %v7992 = vpop.f32.mrf.mxu0
  %v7993 = vadd.f32 %v7924, %v7992
  %v7994 = vpop.f32.mrf.mxu0
  %7995 = vmatprep.mubr.bf16.mxu0 0
  %7996 = vmatmul.mubr.bf16.gmra.mxu0 %v7944
  %v7997 = vpop.f32.mrf.mxu0
  %v7998 = vadd.f32 %v7924, %v7997
  %v7999 = vpop.f32.mrf.mxu0
  %v8000 = vpop.f32.mrf.mxu0
  %v8001 = vadd.f32 %v7924, %v8000
  %v8002 = vpop.f32.mrf.mxu0
  %8003 = vmatprep.mubr.bf16.mxu0 0
  %8004 = vmatmul.mubr.bf16.gmra.mxu0 %v7947
  %v8005 = vpop.f32.mrf.mxu0
  %v8006 = vadd.f32 %v7924, %v8005
  %v8007 = vpop.f32.mrf.mxu0
  %v8008 = vpop.f32.mrf.mxu0
  %v8009 = vadd.f32 %v7924, %v8008
  %v8010 = vpop.f32.mrf.mxu0
  %8011 = vmatprep.mubr.bf16.mxu0 0
  %8012 = vmatmul.mubr.bf16.gmra.mxu0 %v7950
  %v8013 = vpop.f32.mrf.mxu0
  %v8014 = vadd.f32 %v7924, %v8013
  %v8015 = vpop.f32.mrf.mxu0
  %v8016 = vpop.f32.mrf.mxu0
  %v8017 = vadd.f32 %v7924, %v8016
  %v8018 = vpop.f32.mrf.mxu0
  %8019 = vdwg.mxu0
  %v8020 = vadd.f32 %v7788, %v7990
  %v8021 = vadd.f32 %v7789, %v7993
  %v8022 = vadd.f32 %v7790, %v7998
  %v8023 = vadd.f32 %v7791, %v8001
  %v8024 = vadd.f32 %v7792, %v8006
  %v8025 = vadd.f32 %v7793, %v8009
  %v8026 = vadd.f32 %v7794, %v8014
  %v8027 = vadd.f32 %v7795, %v8017
  %v8028 = vsel %vm94, %v8020, 0.0
  %8029 = vadd.xlane.f32.xlu0 %v8028
  %v8030 = vpop.xlane.xlu0 %8029
  %v8031 = vsel %vm94, %v8021, 0.0
  %8032 = vadd.xlane.f32.xlu0 %v8031
  %v8033 = vpop.xlane.xlu0 %8032
  %v8034 = vsel %vm94, %v8022, 0.0
  %8035 = vadd.xlane.f32.xlu0 %v8034
  %v8036 = vpop.xlane.xlu0 %8035
  %v8037 = vsel %vm94, %v8023, 0.0
  %8038 = vadd.xlane.f32.xlu0 %v8037
  %v8039 = vpop.xlane.xlu0 %8038
  %v8040 = vsel %vm94, %v8024, 0.0
  %8041 = vadd.xlane.f32.xlu0 %v8040
  %v8042 = vpop.xlane.xlu0 %8041
  %v8043 = vsel %vm94, %v8025, 0.0
  %8044 = vadd.xlane.f32.xlu0 %v8043
  %v8045 = vpop.xlane.xlu0 %8044
  %v8046 = vsel %vm94, %v8026, 0.0
  %8047 = vadd.xlane.f32.xlu0 %v8046
  %v8048 = vpop.xlane.xlu0 %8047
  %v8049 = vsel %vm94, %v8027, 0.0
  %8050 = vadd.xlane.f32.xlu0 %v8049
  %v8051 = vpop.xlane.xlu0 %8050
  %v8052 = vmul.f32 %v8030, %v119
  %v8053 = vmul.f32 %v8033, %v119
  %v8054 = vmul.f32 %v8036, %v119
  %v8055 = vmul.f32 %v8039, %v119
  %v8056 = vmul.f32 %v8042, %v119
  %v8057 = vmul.f32 %v8045, %v119
  %v8058 = vmul.f32 %v8048, %v119
  %v8059 = vmul.f32 %v8051, %v119
  %v8060 = vsub.f32 %v8020, %v8052
  %v8061 = vsub.f32 %v8021, %v8053
  %v8062 = vsub.f32 %v8022, %v8054
  %v8063 = vsub.f32 %v8023, %v8055
  %v8064 = vsub.f32 %v8024, %v8056
  %v8065 = vsub.f32 %v8025, %v8057
  %v8066 = vsub.f32 %v8026, %v8058
  %v8067 = vsub.f32 %v8027, %v8059
  %v8068 = vmul.f32 %v8060, %v8060
  %v8069 = vmul.f32 %v8061, %v8061
  %v8070 = vmul.f32 %v8062, %v8062
  %v8071 = vmul.f32 %v8063, %v8063
  %v8072 = vmul.f32 %v8064, %v8064
  %v8073 = vmul.f32 %v8065, %v8065
  %v8074 = vmul.f32 %v8066, %v8066
  %v8075 = vmul.f32 %v8067, %v8067
  %v8076 = vsel %vm94, %v8068, 0.0
  %8077 = vadd.xlane.f32.xlu0 %v8076
  %v8078 = vpop.xlane.xlu0 %8077
  %v8079 = vsel %vm94, %v8069, 0.0
  %8080 = vadd.xlane.f32.xlu0 %v8079
  %v8081 = vpop.xlane.xlu0 %8080
  %v8082 = vsel %vm94, %v8070, 0.0
  %8083 = vadd.xlane.f32.xlu0 %v8082
  %v8084 = vpop.xlane.xlu0 %8083
  %v8085 = vsel %vm94, %v8071, 0.0
  %8086 = vadd.xlane.f32.xlu0 %v8085
  %v8087 = vpop.xlane.xlu0 %8086
  %v8088 = vsel %vm94, %v8072, 0.0
  %8089 = vadd.xlane.f32.xlu0 %v8088
  %v8090 = vpop.xlane.xlu0 %8089
  %v8091 = vsel %vm94, %v8073, 0.0
  %8092 = vadd.xlane.f32.xlu0 %v8091
  %v8093 = vpop.xlane.xlu0 %8092
  %v8094 = vsel %vm94, %v8074, 0.0
  %8095 = vadd.xlane.f32.xlu0 %v8094
  %v8096 = vpop.xlane.xlu0 %8095
  %v8097 = vsel %vm94, %v8075, 0.0
  %8098 = vadd.xlane.f32.xlu0 %v8097
  %v8099 = vpop.xlane.xlu0 %8098
  %v8100 = vmul.f32 %v8078, %v119
  %v8101 = vmul.f32 %v8081, %v119
  %v8102 = vmul.f32 %v8084, %v119
  %v8103 = vmul.f32 %v8087, %v119
  %v8104 = vmul.f32 %v8090, %v119
  %v8105 = vmul.f32 %v8093, %v119
  %v8106 = vmul.f32 %v8096, %v119
  %v8107 = vmul.f32 %v8099, %v119
  %v8108 = vadd.f32 %v8100, 1e-05
  %v8109 = vadd.f32 %v8101, 1e-05
  %v8110 = vadd.f32 %v8102, 1e-05
  %v8111 = vadd.f32 %v8103, 1e-05
  %v8112 = vadd.f32 %v8104, 1e-05
  %v8113 = vadd.f32 %v8105, 1e-05
  %v8114 = vadd.f32 %v8106, 1e-05
  %v8115 = vadd.f32 %v8107, 1e-05
  %v8116 = vrsqrt.pop %v8108
  %v8117 = vrsqrt.pop %v8109
  %v8118 = vrsqrt.pop %v8110
  %v8119 = vrsqrt.pop %v8111
  %v8120 = vrsqrt.pop %v8112
  %v8121 = vrsqrt.pop %v8113
  %v8122 = vrsqrt.pop %v8114
  %v8123 = vrsqrt.pop %v8115
  %v8124 = vmul.f32 %v8060, %v8116
  %v8125 = vmul.f32 %v8061, %v8117
  %v8126 = vmul.f32 %v8062, %v8118
  %v8127 = vmul.f32 %v8063, %v8119
  %v8128 = vmul.f32 %v8064, %v8120
  %v8129 = vmul.f32 %v8065, %v8121
  %v8130 = vmul.f32 %v8066, %v8122
  %v8131 = vmul.f32 %v8067, %v8123
  %v8132 = vlaneseq
  %v8133 = vshrl.u32 %v8132, 7
  %v8134 = vsub.s32 4, %v8133
  %v8135 = vrot.slane %v21, %v8134
  %v8136 = vmul.f32 %v8124, %v8135
  %v8137 = vmul.f32 %v8125, %v8135
  %v8138 = vmul.f32 %v8126, %v8135
  %v8139 = vmul.f32 %v8127, %v8135
  %v8140 = vmul.f32 %v8128, %v8135
  %v8141 = vmul.f32 %v8129, %v8135
  %v8142 = vmul.f32 %v8130, %v8135
  %v8143 = vmul.f32 %v8131, %v8135
  %v8144 = vlaneseq
  %v8145 = vshrl.u32 %v8144, 7
  %v8146 = vsub.s32 5, %v8145
  %v8147 = vrot.slane %v21, %v8146
  %v8148 = vadd.f32 %v8136, %v8147
  %v8149 = vadd.f32 %v8137, %v8147
  %v8150 = vadd.f32 %v8138, %v8147
  %v8151 = vadd.f32 %v8139, %v8147
  %v8152 = vadd.f32 %v8140, %v8147
  %v8153 = vadd.f32 %v8141, %v8147
  %v8154 = vadd.f32 %v8142, %v8147
  %v8155 = vadd.f32 %v8143, %v8147
  %v8156 = vpack.c.bf16 %v8149, %v8148
  %v8157 = vpack.c.bf16 %v8151, %v8150
  %v8158 = vpack.c.bf16 %v8153, %v8152
  %v8159 = vpack.c.bf16 %v8155, %v8154
  %v8160 = vld [vmem:[%s1 + $0x140] sm:$0xf]
  %v8161 = vld [vmem:[%s1 + $0x144] sm:$0xf]
  %v8162 = vld [vmem:[%s1 + $0x148] sm:$0xf]
  %v8163 = vld [vmem:[%s1 + $0x14c] sm:$0xf]
  %v8164 = vld [vmem:[%s1 + $0x150] sm:$0xf]
  %v8165 = vlaneseq
  %v8166 = vshrl.u32 %v8165, 7
  %v8167 = vsub.s32 6, %v8166
  %v8168 = vrot.slane %v21, %v8167
  %v8174 = vunpack.c.l.b16 %v8160
  %v8175 = vunpack.c.l.b16 %v8161
  %v8176 = vunpack.c.l.b16 %v8162
  %v8177 = vunpack.c.l.b16 %v8163
  %v8178 = vunpack.c.l.b16 %v8164
  %v8179 = vpack.c.b16 %v8175, %v8174
  %v8180 = vpack.c.b16 %v8177, %v8176
  %v8181 = vpack.c.b16 %v8178, %v8178
  %v8185 = vsel %vm94, %v8156, 0
  %v8188 = vsel %vm94, %v8157, 0
  %v8191 = vsel %vm94, %v8158, 0
  %v8194 = vsel %vm94, %v8159, 0
  %v8197 = vsel %vm260, %v8181, 0
  %8199 = vmatprep.subr.bf16.mxu0 0
  %8200 = vmatpush1.bf16.msra.mxu0 0
  %8201 = vmatprep.subr.bf16.mxu0 0
  %8202 = vmatpush1.bf16.msra.mxu0 0
  %8203 = vmatprep.subr.bf16.mxu0 0
  %8204 = vmatpush1.bf16.msra.mxu0 0
  %8205 = vmatprep.subr.bf16.mxu0 0
  %8206 = vmatpush1.bf16.msra.mxu0 0
  %8207 = vmatprep.subr.bf16.mxu0 0
  %8208 = vmatpush1.bf16.msra.mxu0 0
  %8209 = vmatprep.subr.bf16.mxu0 0
  %8210 = vmatpush1.bf16.msra.mxu0 %v8197
  %8211 = vmatprep.subr.bf16.mxu0 0
  %8212 = vmatpush1.bf16.msra.mxu0 %v8180
  %8213 = vmatprep.subr.bf16.mxu0 0
  %8214 = vmatpush1.bf16.msra.mxu0 %v8179
  %8215 = vmatprep.subr.bf16.mxu0 0
  %8216 = vmatpush2.bf16.msra.mxu0 0
  %8217 = vmatprep.subr.bf16.mxu0 0
  %8218 = vmatpush2.bf16.msra.mxu0 0
  %8219 = vmatprep.subr.bf16.mxu0 0
  %8220 = vmatpush2.bf16.msra.mxu0 0
  %8221 = vmatprep.subr.bf16.mxu0 0
  %8222 = vmatpush2.bf16.msra.mxu0 0
  %8223 = vmatprep.subr.bf16.mxu0 0
  %8224 = vmatpush2.bf16.msra.mxu0 0
  %8225 = vmatprep.subr.bf16.mxu0 0
  %8226 = vmatpush2.bf16.msra.mxu0 0
  %8227 = vmatprep.subr.bf16.mxu0 0
  %8228 = vmatpush2.bf16.msra.mxu0 0
  %8229 = vmatprep.subr.bf16.mxu0 0
  %8230 = vmatpush2.bf16.msra.mxu0 0
  %8231 = vmatprep.mubr.bf16.mxu0 0
  %8232 = vmatmul.mubr.bf16.gmra.mxu0 %v8185
  %v8233 = vpop.f32.mrf.mxu0
  %v8234 = vadd.f32 %v8168, %v8233
  %v8235 = vpop.f32.mrf.mxu0
  %v8236 = vpop.f32.mrf.mxu0
  %v8237 = vadd.f32 %v8168, %v8236
  %v8238 = vpop.f32.mrf.mxu0
  %8239 = vmatprep.mubr.bf16.mxu0 0
  %8240 = vmatmul.mubr.bf16.gmra.mxu0 %v8188
  %v8241 = vpop.f32.mrf.mxu0
  %v8242 = vadd.f32 %v8168, %v8241
  %v8243 = vpop.f32.mrf.mxu0
  %v8244 = vpop.f32.mrf.mxu0
  %v8245 = vadd.f32 %v8168, %v8244
  %v8246 = vpop.f32.mrf.mxu0
  %8247 = vmatprep.mubr.bf16.mxu0 0
  %8248 = vmatmul.mubr.bf16.gmra.mxu0 %v8191
  %v8249 = vpop.f32.mrf.mxu0
  %v8250 = vadd.f32 %v8168, %v8249
  %v8251 = vpop.f32.mrf.mxu0
  %v8252 = vpop.f32.mrf.mxu0
  %v8253 = vadd.f32 %v8168, %v8252
  %v8254 = vpop.f32.mrf.mxu0
  %8255 = vmatprep.mubr.bf16.mxu0 0
  %8256 = vmatmul.mubr.bf16.gmra.mxu0 %v8194
  %v8257 = vpop.f32.mrf.mxu0
  %v8258 = vadd.f32 %v8168, %v8257
  %v8259 = vpop.f32.mrf.mxu0
  %v8260 = vpop.f32.mrf.mxu0
  %v8261 = vadd.f32 %v8168, %v8260
  %v8262 = vpop.f32.mrf.mxu0
  %8263 = vdwg.mxu0
  %8264 = vst [vmem:[%s4] sm:$0xff] %v8234
  %8265 = vst [vmem:[%s4 + $0x8] sm:$0xff] %v8237
  %8266 = vst [vmem:[%s4 + $0x10] sm:$0xff] %v8242
  %8267 = vst [vmem:[%s4 + $0x18] sm:$0xff] %v8245
  %8268 = vst [vmem:[%s4 + $0x20] sm:$0xff] %v8250
  %8269 = vst [vmem:[%s4 + $0x28] sm:$0xff] %v8253
  %8270 = vst [vmem:[%s4 + $0x30] sm:$0xff] %v8258
  %8271 = vst [vmem:[%s4 + $0x38] sm:$0xff] %v8261
  // Predicated region
  $region18: #{encoder_forward.1} parent=0 // pred_check
    _
  $region19: #{encoder_forward.1} parent=0 // pred_check_branch
    %8273 = sbr.rel (0) target = $region21
  $region20: #{encoder_forward.1} parent=0 // pred_region
    _
  $region21: #{encoder_forward.1} parent=0 // pred_fallthru
    _
  // Predicated region
  $region22: #{encoder_forward.1} parent=0 // pred_check
    _
  $region23: #{encoder_forward.1} parent=0 // pred_check_branch
    %8275 = sbr.rel (0) target = $region25
  $region24: #{encoder_forward.1} parent=0 // pred_region
    _
  $region25: #{encoder_forward.1} parent=0 // pred_fallthru
    _

</llo_original>
